<compile_context>
chip_gen: v5e
topology: v5e:2x2
jax: 0.10.0
libtpu: 0.0.40
codegen_flags: <defaults>
</compile_context>

<pallas_src>
import functools

import jax
import jax.numpy as jnp
from jax.experimental import pallas as pl
from jax.experimental.pallas import tpu as pltpu


def _round_up(x, m):
    return ((x + m - 1) // m) * m


def _bce_with_logits(z, y):
    # torch.nn.BCEWithLogitsLoss elementwise: max(z,0) - z*y + log(1+exp(-|z|))
    return jnp.maximum(z, 0.0) - z * y + jnp.log(1.0 + jnp.exp(-jnp.abs(z)))


def _sim_loss_kernel(cmap_ref, slt_ref, x_ref, t_ref, w_ref, out_ref, *,
                     width, chunk, pos_val_for_all_neg, neg_val_for_all_pos):
    x = x_ref[...].astype(jnp.float32)          # (TB, Np)
    t = t_ref[...].astype(jnp.float32)          # (TB, Np) in {0,1}; 0 on padded lanes
    w = w_ref[...].astype(jnp.float32)          # (TB, 1) per-map validity
    n = x.shape[-1]

    # grid-invariant per-lane constants (built in the wrapper, DMA'd once,
    # resident across all grid steps via a constant index_map)
    cmap = cmap_ref[...]
    lane_f = cmap[0:1, :]          # flat lane index (f32 exact; N << 2^24)
    hkey = cmap[1:2, :]            # row*(W+2)+col: horizontal adjacency key
    row_f = cmap[2:3, :]           # row index: vertical adjacency key
    lane_valid = cmap[3:4, :]      # 1.0 for real (un-padded) lanes
    slt = slt_ref[...]             # (Np, Np) bf16, slt[src, dst] = 1 if src < dst

    # ---- (GaussianBlur(3, sigma=3)(target*255) > 0)  ==  3x3 binary dilation ----
    # Separable max filter: horizontal pass (shifts +-1), then vertical pass
    # (shifts +-W) on the intermediate.  Border / wrap validity masks come from
    # rolling the (1, Np) key rows with the *same* roll, so the result is
    # correct regardless of the pltpu.roll direction convention.
    # (Degenerate H==2 wrap behaves as in the previous version; H,W >= 3 assumed.)
    def masked_roll(v, shift, key_row):
        v_sh = pltpu.roll(v, shift, axis=1)
        key_sh = pltpu.roll(key_row, shift, axis=1)
        ok = (jnp.abs(key_sh - key_row) <= 1.0).astype(jnp.float32)   # (1, Np)
        return v_sh * ok

    horiz = t
    for s in (1 % n, (n - 1) % n):            # +-1 (mod n)
        if s:
            horiz = jnp.maximum(horiz, masked_roll(t, s, hkey))
    vert = horiz
    for s in (width % n, (n - width) % n):    # +-W (mod n)
        if s:
            vert = jnp.maximum(vert, masked_roll(horiz, s, row_f))
    dil = (vert > 0.0).astype(jnp.float32)    # (TB, Np) dilated target

    # ---- dup[b, i] = vals_b[i mod Q_b], vals_b = x[b][sel[b] > 0] (raster order) ----
    def duplicate(sel):
        q = jnp.sum(sel, axis=-1, keepdims=True)          # (TB, 1) selected count
        q_safe = jnp.maximum(q, 1.0)
        # exclusive prefix count of selected elements; bf16 0/1 products with f32
        # accumulation are exact, and M = TILE_B rows land on the MXU.
        rank = jnp.dot(sel.astype(jnp.bfloat16), slt,
                       preferred_element_type=jnp.float32)            # (TB, Np)
        # i mod Q_b.  Exact: lane_f, q are small integers (N << 2^24) in f32.
        imod = lane_f - jnp.floor(lane_f / q_safe) * q_safe           # (TB, Np)
        xm = (x * sel)[:, None, :]                                    # (TB, 1, Np)
        # Destination-chunked one-hot gather: never materializes (TB, Np, Np).
        # Unselected sources may alias a rank but contribute 0 via x*sel.
        parts = []
        for c0 in range(0, n, chunk):
            imod_c = imod[:, c0:c0 + chunk]                           # (TB, C)
            eq = (rank[:, None, :] == imod_c[:, :, None]).astype(jnp.float32)
            dup_c = jnp.einsum('bqd,bkd->bqk', xm, eq,
                               preferred_element_type=jnp.float32)    # (TB, 1, C)
            parts.append(dup_c[:, 0, :])
        dup = parts[0] if len(parts) == 1 else jnp.concatenate(parts, axis=-1)
        return dup, q

    # ---- duplicated_pos (from the original target) ----
    pos_mask = (t > 0.0).astype(jnp.float32)
    dup_pos, n_pos = duplicate(pos_mask)
    dup_pos = jnp.where(n_pos < 0.5, jnp.float32(pos_val_for_all_neg), dup_pos)

    # ---- duplicated_false_pos (from the dilated target) ----
    neg_mask = (1.0 - dil) * lane_valid       # padded lanes never count as negatives
    fp_mask = jnp.where(x > 0.0, neg_mask, 0.0)
    n_neg = jnp.sum(neg_mask, axis=-1, keepdims=True)
    n_fp = jnp.sum(fp_mask, axis=-1, keepdims=True)
    sel_fp = jnp.where(n_fp > 0.5, fp_mask, neg_mask)
    dup_fp, _ = duplicate(sel_fp)
    dup_fp = jnp.where(n_neg < 0.5, jnp.float32(neg_val_for_all_pos), dup_fp)

    # ---- per-element BCE-with-logits terms, masked and reduced over TILE_B ----
    wv = w * lane_valid                                               # (TB, Np)
    bce_sim = _bce_with_logits(dup_pos * x, t)                        # vs target
    bce_ones = _bce_with_logits(dup_pos, 1.0)                         # vs ones
    bce_fp = _bce_with_logits(dup_pos * dup_fp, 0.0)                  # vs zeros

    # three direct row stores (no sublane concat / relayout)
    out_ref[0, 0:1, :] = jnp.sum(bce_sim * wv, axis=0, keepdims=True)
    out_ref[0, 1:2, :] = jnp.sum(bce_ones * wv, axis=0, keepdims=True)
    out_ref[0, 2:3, :] = jnp.sum(bce_fp * wv, axis=0, keepdims=True)


def _vmem_budget_bytes():
    try:
        cap = int(pltpu.get_tpu_info().vmem_capacity_bytes)
    except Exception:
        cap = 64 * 1024 * 1024        # assume the smallest (v7x per-TC VMEM)
    # leave headroom for the pipeline's double buffers / compiler scratch
    return max(32 * 1024 * 1024, min(cap * 3 // 4, 100 * 1024 * 1024))


def _choose_tile_b(bc, n_pad, chunk, budget):
    """Largest sublane-aligned TILE_B that fits the VMEM budget (>=2 grid steps
    when bc allows it, so the 'parallel' grid axis can use both v7x TCs)."""
    tb_cap = min(256, _round_up(bc, 8))
    if bc >= 16:
        tb_cap = min(tb_cap, _round_up((bc + 1) // 2, 8))
    cand = tb_cap
    while cand > 8:
        est = (2 * n_pad * n_pad * 2            # slt (bf16), double-buffered
               + 2 * 8 * n_pad * 4              # cmap
               + 4 * cand * n_pad * 4           # x & t blocks, double-buffered
               + 2 * cand * chunk * n_pad * 4   # one-hot chunk + compare temporaries
               + 24 * cand * n_pad * 4          # assorted (TB, N) f32 temporaries
               + 2 * 3 * n_pad * 4)             # output block
        if est <= budget:
            break
        cand -= 8
    return cand


@functools.partial(jax.jit, static_argnames=("alpha", "beta"))
def sim_loss(input_nchw, target_nchw, alpha=0.6, beta=0.0):
    bs, nc, H, W = input_nchw.shape
    N = H * W
    BC = bs * nc

    N_pad = _round_up(N, 128)
    CHUNK = min(N_pad, 256)
    budget = _vmem_budget_bytes()
    TILE_B = _choose_tile_b(BC, N_pad, CHUNK, budget)
    BC_pad = _round_up(BC, TILE_B)
    num_blocks = BC_pad // TILE_B

    x = input_nchw.reshape(BC, N).astype(jnp.float32)
    t = target_nchw.reshape(BC, N).astype(jnp.float32)
    if BC_pad != BC or N_pad != N:
        x = jnp.pad(x, ((0, BC_pad - BC), (0, N_pad - N)))
        t = jnp.pad(t, ((0, BC_pad - BC), (0, N_pad - N)))
    # per-map validity weights so padded maps do not contribute to the sums
    w = (jnp.arange(BC_pad, dtype=jnp.int32) < BC).astype(jnp.float32)[:, None]

    # grid-invariant constants (hoisted out of the kernel; DMA'd once)
    lane = jnp.arange(N_pad, dtype=jnp.int32)
    row_idx = lane // W
    col_idx = lane % W
    zeros = jnp.zeros((N_pad,), jnp.float32)
    cmap = jnp.stack(
        [lane.astype(jnp.float32),                              # flat lane index
         (row_idx * (W + 2) + col_idx).astype(jnp.float32),     # horiz adjacency key
         row_idx.astype(jnp.float32),                           # vert adjacency key
         (lane < N).astype(jnp.float32),                        # lane validity
         zeros, zeros, zeros, zeros], axis=0)                   # (8, N_pad)
    slt = (lane[:, None] < lane[None, :]).astype(jnp.bfloat16)  # (N_pad, N_pad)

    kernel = functools.partial(_sim_loss_kernel, width=W, chunk=CHUNK,
                               pos_val_for_all_neg=5.0,
                               neg_val_for_all_pos=-5.0)

    partials = pl.pallas_call(
        kernel,
        out_shape=jax.ShapeDtypeStruct((num_blocks, 3, N_pad), jnp.float32),
        grid_spec=pltpu.PrefetchScalarGridSpec(
            num_scalar_prefetch=0,
            grid=(num_blocks,),
            in_specs=[pl.BlockSpec((8, N_pad), lambda i: (0, 0)),       # cmap (resident)
                      pl.BlockSpec((N_pad, N_pad), lambda i: (0, 0)),   # slt (resident)
                      pl.BlockSpec((TILE_B, N_pad), lambda i: (i, 0)),  # x
                      pl.BlockSpec((TILE_B, N_pad), lambda i: (i, 0)),  # t
                      pl.BlockSpec((TILE_B, 1), lambda i: (i, 0))],     # w
            out_specs=pl.BlockSpec((1, 3, N_pad), lambda i: (i, 0, 0)),
        ),
        compiler_params=pltpu.CompilerParams(
            dimension_semantics=("parallel",),
            vmem_limit_bytes=budget),
    )(cmap, slt, x, t, w)

    total = float(BC * N)
    means = jnp.sum(partials, axis=(0, 2)) / total   # [mean_sim, mean_ones, mean_fp]
    loss = means[0] + means[1]                        # sim_loss
    if alpha > 0:
        loss = loss + alpha * means[2]                # + alpha * aug_sim_loss_false_pos
    # TODO(synk): beta > 0 false-negative branch not implemented (module default beta=0).
    return loss


if __name__ == "__main__":
    key = jax.random.PRNGKey(0)
    k1, k2 = jax.random.split(key)
    bs, nc, H, W = 2, 4, 16, 16

    x = jax.random.normal(k1, (bs, nc, H, W), dtype=jnp.float32)
    t = (jax.random.uniform(k2, (bs, nc, H, W)) > 0.7).astype(jnp.float32)
    # the module asserts both classes are present; make that deterministic
    t = t.at[0, 0, 0, 0].set(1.0).at[0, 0, 0, 1].set(0.0)

    loss = sim_loss(x, t, alpha=0.6, beta=0.0)
    jax.block_until_ready(loss)
    assert loss.shape == () and bool(jnp.isfinite(loss))
    print("KERNEL_OK")
</pallas_src>

<mosaic_0001>
module attributes {stable_mosaic.version = 11 : i64} {
  func.func @_sim_loss_kernel(%arg0: i32, %arg1: memref<8x256xf32, #tpu.memory_space<vmem>>, %arg2: memref<256x256xbf16, #tpu.memory_space<vmem>>, %arg3: memref<8x256xf32, #tpu.memory_space<vmem>>, %arg4: memref<8x256xf32, #tpu.memory_space<vmem>>, %arg5: memref<8x1xf32, #tpu.memory_space<vmem>>, %arg6: memref<1x3x256xf32, #tpu.memory_space<vmem>>) attributes {dimension_semantics = [#tpu.dimension_semantics<parallel>], iteration_bounds = array<i64: 1>, scalar_prefetch = 0 : i64, scratch_operands = 0 : i64, tpu.core_type = #tpu.core_type<tc>, window_params = [{pipeline_mode = #tpu.pipeline_mode<synchronous>, transform_indices = @transform_0, window_bounds = array<i64: 8, 256>}, {pipeline_mode = #tpu.pipeline_mode<synchronous>, transform_indices = @transform_1, window_bounds = array<i64: 256, 256>}, {transform_indices = @transform_2, window_bounds = array<i64: 8, 256>}, {transform_indices = @transform_3, window_bounds = array<i64: 8, 256>}, {transform_indices = @transform_4, window_bounds = array<i64: 8, 1>}, {transform_indices = @transform_5, window_bounds = array<i64: 1, 3, 256>}]} {
    %c0 = arith.constant 0 : index
    %c0_0 = arith.constant 0 : index
    %0 = vector.load %arg3[%c0, %c0_0] : memref<8x256xf32, #tpu.memory_space<vmem>>, vector<8x256xf32>
    %c0_1 = arith.constant 0 : index
    %c0_2 = arith.constant 0 : index
    %1 = vector.load %arg4[%c0_1, %c0_2] : memref<8x256xf32, #tpu.memory_space<vmem>>, vector<8x256xf32>
    %c0_3 = arith.constant 0 : index
    %c0_4 = arith.constant 0 : index
    %2 = vector.load %arg5[%c0_3, %c0_4] : memref<8x1xf32, #tpu.memory_space<vmem>>, vector<8x1xf32>
    %c0_5 = arith.constant 0 : index
    %c0_6 = arith.constant 0 : index
    %3 = vector.load %arg1[%c0_5, %c0_6] : memref<8x256xf32, #tpu.memory_space<vmem>>, vector<8x256xf32>
    %4 = vector.extract_strided_slice %3 {offsets = [0, 0], sizes = [1, 256], strides = [1, 1]} : vector<8x256xf32> to vector<1x256xf32>
    %5 = vector.extract_strided_slice %3 {offsets = [1, 0], sizes = [1, 256], strides = [1, 1]} : vector<8x256xf32> to vector<1x256xf32>
    %6 = vector.extract_strided_slice %3 {offsets = [2, 0], sizes = [1, 256], strides = [1, 1]} : vector<8x256xf32> to vector<1x256xf32>
    %7 = vector.extract_strided_slice %3 {offsets = [3, 0], sizes = [1, 256], strides = [1, 1]} : vector<8x256xf32> to vector<1x256xf32>
    %c0_7 = arith.constant 0 : index
    %c0_8 = arith.constant 0 : index
    %8 = vector.load %arg2[%c0_7, %c0_8] : memref<256x256xbf16, #tpu.memory_space<vmem>>, vector<256x256xbf16>
    %c1_i32 = arith.constant 1 : i32
    %9 = tpu.dynamic_rotate %1 by %c1_i32 dim 1 : vector<8x256xf32>, i32 -> vector<8x256xf32>
    %c1_i32_9 = arith.constant 1 : i32
    %10 = tpu.dynamic_rotate %5 by %c1_i32_9 dim 1 : vector<1x256xf32>, i32 -> vector<1x256xf32>
    %11 = arith.subf %10, %5 : vector<1x256xf32>
    %12 = math.absf %11 : vector<1x256xf32>
    %cst = arith.constant 1.000000e+00 : f32
    %13 = vector.broadcast %cst : f32 to vector<1x256xf32>
    %14 = arith.cmpf ole, %12, %13 : vector<1x256xf32>
    %15 = arith.extui %14 : vector<1x256xi1> to vector<1x256xi32>
    %16 = arith.sitofp %15 : vector<1x256xi32> to vector<1x256xf32>
    %17 = vector.broadcast %16 : vector<1x256xf32> to vector<8x256xf32>
    %18 = arith.mulf %9, %17 : vector<8x256xf32>
    %19 = arith.maximumf %1, %18 : vector<8x256xf32>
    %c255_i32 = arith.constant 255 : i32
    %20 = tpu.dynamic_rotate %1 by %c255_i32 dim 1 : vector<8x256xf32>, i32 -> vector<8x256xf32>
    %c255_i32_10 = arith.constant 255 : i32
    %21 = tpu.dynamic_rotate %5 by %c255_i32_10 dim 1 : vector<1x256xf32>, i32 -> vector<1x256xf32>
    %22 = arith.subf %21, %5 : vector<1x256xf32>
    %23 = math.absf %22 : vector<1x256xf32>
    %cst_11 = arith.constant 1.000000e+00 : f32
    %24 = vector.broadcast %cst_11 : f32 to vector<1x256xf32>
    %25 = arith.cmpf ole, %23, %24 : vector<1x256xf32>
    %26 = arith.extui %25 : vector<1x256xi1> to vector<1x256xi32>
    %27 = arith.sitofp %26 : vector<1x256xi32> to vector<1x256xf32>
    %28 = vector.broadcast %27 : vector<1x256xf32> to vector<8x256xf32>
    %29 = arith.mulf %20, %28 : vector<8x256xf32>
    %30 = arith.maximumf %19, %29 : vector<8x256xf32>
    %c16_i32 = arith.constant 16 : i32
    %31 = tpu.dynamic_rotate %30 by %c16_i32 dim 1 : vector<8x256xf32>, i32 -> vector<8x256xf32>
    %c16_i32_12 = arith.constant 16 : i32
    %32 = tpu.dynamic_rotate %6 by %c16_i32_12 dim 1 : vector<1x256xf32>, i32 -> vector<1x256xf32>
    %33 = arith.subf %32, %6 : vector<1x256xf32>
    %34 = math.absf %33 : vector<1x256xf32>
    %cst_13 = arith.constant 1.000000e+00 : f32
    %35 = vector.broadcast %cst_13 : f32 to vector<1x256xf32>
    %36 = arith.cmpf ole, %34, %35 : vector<1x256xf32>
    %37 = arith.extui %36 : vector<1x256xi1> to vector<1x256xi32>
    %38 = arith.sitofp %37 : vector<1x256xi32> to vector<1x256xf32>
    %39 = vector.broadcast %38 : vector<1x256xf32> to vector<8x256xf32>
    %40 = arith.mulf %31, %39 : vector<8x256xf32>
    %41 = arith.maximumf %30, %40 : vector<8x256xf32>
    %c240_i32 = arith.constant 240 : i32
    %42 = tpu.dynamic_rotate %30 by %c240_i32 dim 1 : vector<8x256xf32>, i32 -> vector<8x256xf32>
    %c240_i32_14 = arith.constant 240 : i32
    %43 = tpu.dynamic_rotate %6 by %c240_i32_14 dim 1 : vector<1x256xf32>, i32 -> vector<1x256xf32>
    %44 = arith.subf %43, %6 : vector<1x256xf32>
    %45 = math.absf %44 : vector<1x256xf32>
    %cst_15 = arith.constant 1.000000e+00 : f32
    %46 = vector.broadcast %cst_15 : f32 to vector<1x256xf32>
    %47 = arith.cmpf ole, %45, %46 : vector<1x256xf32>
    %48 = arith.extui %47 : vector<1x256xi1> to vector<1x256xi32>
    %49 = arith.sitofp %48 : vector<1x256xi32> to vector<1x256xf32>
    %50 = vector.broadcast %49 : vector<1x256xf32> to vector<8x256xf32>
    %51 = arith.mulf %42, %50 : vector<8x256xf32>
    %52 = arith.maximumf %41, %51 : vector<8x256xf32>
    %cst_16 = arith.constant 0.000000e+00 : f32
    %53 = vector.broadcast %cst_16 : f32 to vector<8x256xf32>
    %54 = arith.cmpf ogt, %52, %53 : vector<8x256xf32>
    %55 = arith.extui %54 : vector<8x256xi1> to vector<8x256xi32>
    %56 = arith.sitofp %55 : vector<8x256xi32> to vector<8x256xf32>
    %cst_17 = arith.constant 0.000000e+00 : f32
    %57 = vector.broadcast %cst_17 : f32 to vector<8x256xf32>
    %58 = arith.cmpf ogt, %1, %57 : vector<8x256xf32>
    %59 = arith.extui %58 : vector<8x256xi1> to vector<8x256xi32>
    %60 = arith.sitofp %59 : vector<8x256xi32> to vector<8x256xf32>
    %cst_18 = arith.constant dense<0.000000e+00> : vector<8xf32>
    %61 = vector.multi_reduction <add>, %60, %cst_18 [1] : vector<8x256xf32> to vector<8xf32>
    %62 = vector.shape_cast %61 : vector<8xf32> to vector<8x1xf32>
    %cst_19 = arith.constant 1.000000e+00 : f32
    %63 = vector.broadcast %cst_19 : f32 to vector<8x1xf32>
    %64 = arith.maximumf %62, %63 : vector<8x1xf32>
    %65 = arith.truncf %60 : vector<8x256xf32> to vector<8x256xbf16>
    %cst_20 = arith.constant dense<0.000000e+00> : vector<8x256xf32>
    %66 = tpu.matmul %65, %8, %cst_20 {dimension_numbers = #tpu.dot_dimension_numbers<[1], [0], [0], [1], [0, 0, 1, 1], [], []>} : vector<8x256xbf16>, vector<256x256xbf16>, vector<8x256xf32> -> vector<8x256xf32>
    %67 = vector.broadcast %4 : vector<1x256xf32> to vector<8x256xf32>
    %68 = vector.broadcast %64 : vector<8x1xf32> to vector<8x256xf32>
    %69 = arith.divf %67, %68 : vector<8x256xf32>
    %70 = math.floor %69 : vector<8x256xf32>
    %71 = vector.broadcast %64 : vector<8x1xf32> to vector<8x256xf32>
    %72 = arith.mulf %70, %71 : vector<8x256xf32>
    %73 = vector.broadcast %4 : vector<1x256xf32> to vector<8x256xf32>
    %74 = arith.subf %73, %72 : vector<8x256xf32>
    %75 = arith.mulf %0, %60 : vector<8x256xf32>
    %76 = vector.shape_cast %75 : vector<8x256xf32> to vector<8x1x256xf32>
    %77 = vector.shape_cast %66 : vector<8x256xf32> to vector<8x1x256xf32>
    %78 = vector.shape_cast %74 : vector<8x256xf32> to vector<8x256x1xf32>
    %79 = vector.broadcast %77 : vector<8x1x256xf32> to vector<8x256x256xf32>
    %80 = vector.broadcast %78 : vector<8x256x1xf32> to vector<8x256x256xf32>
    %81 = arith.cmpf oeq, %79, %80 : vector<8x256x256xf32>
    %82 = arith.extui %81 : vector<8x256x256xi1> to vector<8x256x256xi32>
    %83 = arith.sitofp %82 : vector<8x256x256xi32> to vector<8x256x256xf32>
    "tpu.trace_start"() <{level = 10 : i32, message = "bqd,bkd->bqk"}> : () -> ()
    %cst_21 = arith.constant dense<0.000000e+00> : vector<8x1x256xf32>
    %84 = tpu.matmul %76, %83, %cst_21 {dimension_numbers = #tpu.dot_dimension_numbers<[2], [2], [1], [1], [0, 0, 0, 1, 1, 1], [0], [0]>} : vector<8x1x256xf32>, vector<8x256x256xf32>, vector<8x1x256xf32> -> vector<8x1x256xf32>
    "tpu.trace_stop"() : () -> ()
    %85 = vector.shape_cast %84 : vector<8x1x256xf32> to vector<8x256xf32>
    %cst_22 = arith.constant 5.000000e-01 : f32
    %86 = vector.broadcast %cst_22 : f32 to vector<8x1xf32>
    %87 = arith.cmpf olt, %62, %86 : vector<8x1xf32>
    %cst_23 = arith.constant 5.000000e+00 : f32
    %88 = vector.shape_cast %87 : vector<8x1xi1> to vector<8x1xi1>
    %89 = vector.broadcast %88 : vector<8x1xi1> to vector<8x256xi1>
    %90 = vector.broadcast %cst_23 : f32 to vector<8x256xf32>
    %91 = arith.select %89, %90, %85 : vector<8x256xi1>, vector<8x256xf32>
    %cst_24 = arith.constant 1.000000e+00 : f32
    %92 = vector.broadcast %cst_24 : f32 to vector<8x256xf32>
    %93 = arith.subf %92, %56 : vector<8x256xf32>
    %94 = vector.broadcast %7 : vector<1x256xf32> to vector<8x256xf32>
    %95 = arith.mulf %93, %94 : vector<8x256xf32>
    %cst_25 = arith.constant 0.000000e+00 : f32
    %96 = vector.broadcast %cst_25 : f32 to vector<8x256xf32>
    %97 = arith.cmpf ogt, %0, %96 : vector<8x256xf32>
    %cst_26 = arith.constant 0.000000e+00 : f32
    %98 = vector.broadcast %cst_26 : f32 to vector<8x256xf32>
    %99 = arith.select %97, %95, %98 : vector<8x256xi1>, vector<8x256xf32>
    %cst_27 = arith.constant dense<0.000000e+00> : vector<8xf32>
    %100 = vector.multi_reduction <add>, %95, %cst_27 [1] : vector<8x256xf32> to vector<8xf32>
    %101 = vector.shape_cast %100 : vector<8xf32> to vector<8x1xf32>
    %cst_28 = arith.constant dense<0.000000e+00> : vector<8xf32>
    %102 = vector.multi_reduction <add>, %99, %cst_28 [1] : vector<8x256xf32> to vector<8xf32>
    %103 = vector.shape_cast %102 : vector<8xf32> to vector<8x1xf32>
    %cst_29 = arith.constant 5.000000e-01 : f32
    %104 = vector.broadcast %cst_29 : f32 to vector<8x1xf32>
    %105 = arith.cmpf ogt, %103, %104 : vector<8x1xf32>
    %106 = vector.shape_cast %105 : vector<8x1xi1> to vector<8x1xi1>
    %107 = vector.broadcast %106 : vector<8x1xi1> to vector<8x256xi1>
    %108 = arith.select %107, %99, %95 : vector<8x256xi1>, vector<8x256xf32>
    %cst_30 = arith.constant dense<0.000000e+00> : vector<8xf32>
    %109 = vector.multi_reduction <add>, %108, %cst_30 [1] : vector<8x256xf32> to vector<8xf32>
    %110 = vector.shape_cast %109 : vector<8xf32> to vector<8x1xf32>
    %cst_31 = arith.constant 1.000000e+00 : f32
    %111 = vector.broadcast %cst_31 : f32 to vector<8x1xf32>
    %112 = arith.maximumf %110, %111 : vector<8x1xf32>
    %113 = arith.truncf %108 : vector<8x256xf32> to vector<8x256xbf16>
    %cst_32 = arith.constant dense<0.000000e+00> : vector<8x256xf32>
    %114 = tpu.matmul %113, %8, %cst_32 {dimension_numbers = #tpu.dot_dimension_numbers<[1], [0], [0], [1], [0, 0, 1, 1], [], []>} : vector<8x256xbf16>, vector<256x256xbf16>, vector<8x256xf32> -> vector<8x256xf32>
    %115 = vector.broadcast %4 : vector<1x256xf32> to vector<8x256xf32>
    %116 = vector.broadcast %112 : vector<8x1xf32> to vector<8x256xf32>
    %117 = arith.divf %115, %116 : vector<8x256xf32>
    %118 = math.floor %117 : vector<8x256xf32>
    %119 = vector.broadcast %112 : vector<8x1xf32> to vector<8x256xf32>
    %120 = arith.mulf %118, %119 : vector<8x256xf32>
    %121 = vector.broadcast %4 : vector<1x256xf32> to vector<8x256xf32>
    %122 = arith.subf %121, %120 : vector<8x256xf32>
    %123 = arith.mulf %0, %108 : vector<8x256xf32>
    %124 = vector.shape_cast %123 : vector<8x256xf32> to vector<8x1x256xf32>
    %125 = vector.shape_cast %114 : vector<8x256xf32> to vector<8x1x256xf32>
    %126 = vector.shape_cast %122 : vector<8x256xf32> to vector<8x256x1xf32>
    %127 = vector.broadcast %125 : vector<8x1x256xf32> to vector<8x256x256xf32>
    %128 = vector.broadcast %126 : vector<8x256x1xf32> to vector<8x256x256xf32>
    %129 = arith.cmpf oeq, %127, %128 : vector<8x256x256xf32>
    %130 = arith.extui %129 : vector<8x256x256xi1> to vector<8x256x256xi32>
    %131 = arith.sitofp %130 : vector<8x256x256xi32> to vector<8x256x256xf32>
    "tpu.trace_start"() <{level = 10 : i32, message = "bqd,bkd->bqk"}> : () -> ()
    %cst_33 = arith.constant dense<0.000000e+00> : vector<8x1x256xf32>
    %132 = tpu.matmul %124, %131, %cst_33 {dimension_numbers = #tpu.dot_dimension_numbers<[2], [2], [1], [1], [0, 0, 0, 1, 1, 1], [0], [0]>} : vector<8x1x256xf32>, vector<8x256x256xf32>, vector<8x1x256xf32> -> vector<8x1x256xf32>
    "tpu.trace_stop"() : () -> ()
    %133 = vector.shape_cast %132 : vector<8x1x256xf32> to vector<8x256xf32>
    %cst_34 = arith.constant 5.000000e-01 : f32
    %134 = vector.broadcast %cst_34 : f32 to vector<8x1xf32>
    %135 = arith.cmpf olt, %101, %134 : vector<8x1xf32>
    %cst_35 = arith.constant -5.000000e+00 : f32
    %136 = vector.shape_cast %135 : vector<8x1xi1> to vector<8x1xi1>
    %137 = vector.broadcast %136 : vector<8x1xi1> to vector<8x256xi1>
    %138 = vector.broadcast %cst_35 : f32 to vector<8x256xf32>
    %139 = arith.select %137, %138, %133 : vector<8x256xi1>, vector<8x256xf32>
    %140 = vector.broadcast %2 : vector<8x1xf32> to vector<8x256xf32>
    %141 = vector.broadcast %7 : vector<1x256xf32> to vector<8x256xf32>
    %142 = arith.mulf %140, %141 : vector<8x256xf32>
    %143 = arith.mulf %91, %0 : vector<8x256xf32>
    %cst_36 = arith.constant 0.000000e+00 : f32
    %144 = vector.broadcast %cst_36 : f32 to vector<8x256xf32>
    %145 = arith.maximumf %143, %144 : vector<8x256xf32>
    %146 = arith.mulf %143, %1 : vector<8x256xf32>
    %147 = arith.subf %145, %146 : vector<8x256xf32>
    %148 = math.absf %143 : vector<8x256xf32>
    %cst_37 = arith.constant 0.000000e+00 : f32
    %149 = vector.broadcast %cst_37 : f32 to vector<8x256xf32>
    %150 = arith.subf %149, %148 : vector<8x256xf32>
    %151 = math.exp %150 : vector<8x256xf32>
    %cst_38 = arith.constant 1.000000e+00 : f32
    %152 = vector.broadcast %cst_38 : f32 to vector<8x256xf32>
    %153 = arith.addf %152, %151 : vector<8x256xf32>
    %154 = math.log %153 : vector<8x256xf32>
    %155 = arith.addf %147, %154 : vector<8x256xf32>
    %cst_39 = arith.constant 0.000000e+00 : f32
    %156 = vector.broadcast %cst_39 : f32 to vector<8x256xf32>
    %157 = arith.maximumf %91, %156 : vector<8x256xf32>
    %cst_40 = arith.constant 1.000000e+00 : f32
    %158 = vector.broadcast %cst_40 : f32 to vector<8x256xf32>
    %159 = arith.mulf %91, %158 : vector<8x256xf32>
    %160 = arith.subf %157, %159 : vector<8x256xf32>
    %161 = math.absf %91 : vector<8x256xf32>
    %cst_41 = arith.constant 0.000000e+00 : f32
    %162 = vector.broadcast %cst_41 : f32 to vector<8x256xf32>
    %163 = arith.subf %162, %161 : vector<8x256xf32>
    %164 = math.exp %163 : vector<8x256xf32>
    %cst_42 = arith.constant 1.000000e+00 : f32
    %165 = vector.broadcast %cst_42 : f32 to vector<8x256xf32>
    %166 = arith.addf %165, %164 : vector<8x256xf32>
    %167 = math.log %166 : vector<8x256xf32>
    %168 = arith.addf %160, %167 : vector<8x256xf32>
    %169 = arith.mulf %91, %139 : vector<8x256xf32>
    %cst_43 = arith.constant 0.000000e+00 : f32
    %170 = vector.broadcast %cst_43 : f32 to vector<8x256xf32>
    %171 = arith.maximumf %169, %170 : vector<8x256xf32>
    %cst_44 = arith.constant 0.000000e+00 : f32
    %172 = vector.broadcast %cst_44 : f32 to vector<8x256xf32>
    %173 = arith.mulf %169, %172 : vector<8x256xf32>
    %174 = arith.subf %171, %173 : vector<8x256xf32>
    %175 = math.absf %169 : vector<8x256xf32>
    %cst_45 = arith.constant 0.000000e+00 : f32
    %176 = vector.broadcast %cst_45 : f32 to vector<8x256xf32>
    %177 = arith.subf %176, %175 : vector<8x256xf32>
    %178 = math.exp %177 : vector<8x256xf32>
    %cst_46 = arith.constant 1.000000e+00 : f32
    %179 = vector.broadcast %cst_46 : f32 to vector<8x256xf32>
    %180 = arith.addf %179, %178 : vector<8x256xf32>
    %181 = math.log %180 : vector<8x256xf32>
    %182 = arith.addf %174, %181 : vector<8x256xf32>
    %183 = arith.mulf %155, %142 : vector<8x256xf32>
    %cst_47 = arith.constant dense<0.000000e+00> : vector<256xf32>
    %184 = vector.multi_reduction <add>, %183, %cst_47 [0] : vector<8x256xf32> to vector<256xf32>
    %185 = vector.shape_cast %184 : vector<256xf32> to vector<1x256xf32>
    %c0_48 = arith.constant 0 : index
    %c0_49 = arith.constant 0 : index
    %c0_50 = arith.constant 0 : index
    %186 = vector.load %arg6[%c0_48, %c0_49, %c0_50] : memref<1x3x256xf32, #tpu.memory_space<vmem>>, vector<1x1x256xf32>
    %187 = vector.shape_cast %186 : vector<1x1x256xf32> to vector<1x256xf32>
    %188 = vector.shape_cast %185 : vector<1x256xf32> to vector<1x1x256xf32>
    tpu.vector_store %arg6[%c0_48, %c0_49, %c0_50], %188 {strides = array<i32>} : memref<1x3x256xf32, #tpu.memory_space<vmem>>, vector<1x1x256xf32>,
    %189 = arith.mulf %168, %142 : vector<8x256xf32>
    %cst_51 = arith.constant dense<0.000000e+00> : vector<256xf32>
    %190 = vector.multi_reduction <add>, %189, %cst_51 [0] : vector<8x256xf32> to vector<256xf32>
    %191 = vector.shape_cast %190 : vector<256xf32> to vector<1x256xf32>
    %c0_52 = arith.constant 0 : index
    %c1 = arith.constant 1 : index
    %c0_53 = arith.constant 0 : index
    %192 = vector.load %arg6[%c0_52, %c1, %c0_53] : memref<1x3x256xf32, #tpu.memory_space<vmem>>, vector<1x1x256xf32>
    %193 = vector.shape_cast %192 : vector<1x1x256xf32> to vector<1x256xf32>
    %194 = vector.shape_cast %191 : vector<1x256xf32> to vector<1x1x256xf32>
    tpu.vector_store %arg6[%c0_52, %c1, %c0_53], %194 {strides = array<i32>} : memref<1x3x256xf32, #tpu.memory_space<vmem>>, vector<1x1x256xf32>,
    %195 = arith.mulf %182, %142 : vector<8x256xf32>
    %cst_54 = arith.constant dense<0.000000e+00> : vector<256xf32>
    %196 = vector.multi_reduction <add>, %195, %cst_54 [0] : vector<8x256xf32> to vector<256xf32>
    %197 = vector.shape_cast %196 : vector<256xf32> to vector<1x256xf32>
    %c0_55 = arith.constant 0 : index
    %c2 = arith.constant 2 : index
    %c0_56 = arith.constant 0 : index
    %198 = vector.load %arg6[%c0_55, %c2, %c0_56] : memref<1x3x256xf32, #tpu.memory_space<vmem>>, vector<1x1x256xf32>
    %199 = vector.shape_cast %198 : vector<1x1x256xf32> to vector<1x256xf32>
    %200 = vector.shape_cast %197 : vector<1x256xf32> to vector<1x1x256xf32>
    tpu.vector_store %arg6[%c0_55, %c2, %c0_56], %200 {strides = array<i32>} : memref<1x3x256xf32, #tpu.memory_space<vmem>>, vector<1x1x256xf32>,
    return
  }
  func.func @transform_0(%arg0: i32) -> (i32, i32) {
    %c0_i32 = arith.constant 0 : i32
    %c0_i32_0 = arith.constant 0 : i32
    %c0_i32_1 = arith.constant 0 : i32
    return %c0_i32, %c0_i32_0 : i32, i32
  }
  func.func @transform_1(%arg0: i32) -> (i32, i32) {
    %c0_i32 = arith.constant 0 : i32
    %c0_i32_0 = arith.constant 0 : i32
    %c0_i32_1 = arith.constant 0 : i32
    return %c0_i32, %c0_i32_0 : i32, i32
  }
  func.func @transform_2(%arg0: i32) -> (i32, i32) {
    %c0_i32 = arith.constant 0 : i32
    %c0_i32_0 = arith.constant 0 : i32
    return %arg0, %c0_i32 : i32, i32
  }
  func.func @transform_3(%arg0: i32) -> (i32, i32) {
    %c0_i32 = arith.constant 0 : i32
    %c0_i32_0 = arith.constant 0 : i32
    return %arg0, %c0_i32 : i32, i32
  }
  func.func @transform_4(%arg0: i32) -> (i32, i32) {
    %c0_i32 = arith.constant 0 : i32
    %c0_i32_0 = arith.constant 0 : i32
    return %arg0, %c0_i32 : i32, i32
  }
  func.func @transform_5(%arg0: i32) -> (i32, i32, i32) {
    %c0_i32 = arith.constant 0 : i32
    %c0_i32_0 = arith.constant 0 : i32
    %c0_i32_1 = arith.constant 0 : i32
    return %arg0, %c0_i32, %c0_i32_0 : i32, i32, i32
  }
}

</mosaic_0001>

<llo_original>
// kernel: sim_loss.1
$region0: #{sim_loss.1}
  #allocation0 [shape = 'u32[]', space=smem, size = 0x4, offset = 0x4, fixed_abs, tag = 'smem constant byte address 0x4 - core index']
  #allocation1 [shape = 'u32[72,128]{1,0:T(1,128)}', space=vmem, size = 0x9000, scoped, tag = 'internal scratch']
  %s0 = inlined_call_operand.vmem [shape: f32[8,256], index: 0, kind: input, shape index: {}]
  %s1 = inlined_call_operand.vmem [shape: bf16[256,256], index: 1, kind: input, shape index: {}]
  %s2 = inlined_call_operand.vmem [shape: f32[8,256], index: 2, kind: input, shape index: {}]
  %s3 = inlined_call_operand.vmem [shape: f32[8,256], index: 3, kind: input, shape index: {}]
  %s4 = inlined_call_operand.vmem [shape: f32[8,1], index: 4, kind: input, shape index: {}]
  %s5 = inlined_call_operand.vmem [shape: f32[1,3,256], index: 5, kind: output, shape index: {}]
  %s6 = sld [smem:[#allocation0]]
  $region30: #{sim_loss.1} parent=0
    _
  %s8 = ssub.s32 1, %s6
  %s9 = scalar_select 0, %s8, %s6
  // Predicated region
  $region2: #{sim_loss.1} parent=0 // pred_check
    _
  $region3: #{sim_loss.1} parent=0 // pred_check_branch
    %11 = sbr.rel (0) target = $region5
  $region4: #{sim_loss.1} parent=0 // pred_region
    _
  $region5: #{sim_loss.1} parent=0 // pred_fallthru
    _
  // Predicated region
  $region6: #{sim_loss.1} parent=0 // pred_check
    _
  $region7: #{sim_loss.1} parent=0 // pred_check_branch
    %13 = sbr.rel (0) target = $region9
  $region8: #{sim_loss.1} parent=0 // pred_region
    _
  $region9: #{sim_loss.1} parent=0 // pred_fallthru
    _
  // Predicated region
  $region10: #{sim_loss.1} parent=0 // pred_check
    _
  $region11: #{sim_loss.1} parent=0 // pred_check_branch
    %15 = sbr.rel (0) target = $region13
  $region12: #{sim_loss.1} parent=0 // pred_region
    _
  $region13: #{sim_loss.1} parent=0 // pred_fallthru
    _
  // Predicated region
  $region14: #{sim_loss.1} parent=0 // pred_check
    _
  $region15: #{sim_loss.1} parent=0 // pred_check_branch
    %17 = sbr.rel (0) target = $region17
  $region16: #{sim_loss.1} parent=0 // pred_region
    _
  $region17: #{sim_loss.1} parent=0 // pred_fallthru
    _
  // Predicated region
  $region18: #{sim_loss.1} parent=0 // pred_check
    _
  $region19: #{sim_loss.1} parent=0 // pred_check_branch
    %19 = sbr.rel (0) target = $region21
  $region20: #{sim_loss.1} parent=0 // pred_region
    _
  $region21: #{sim_loss.1} parent=0 // pred_fallthru
    _
  %v20 = vld [vmem:[%s2] sm:$0xff]
  %v21 = vld [vmem:[%s2 + $0x8] sm:$0xff]
  %v22 = vld [vmem:[%s3] sm:$0xff]
  %v23 = vld [vmem:[%s3 + $0x8] sm:$0xff]
  %v24 = vld [vmem:[%s4] sm:$0xff]
  %v25 = vld [vmem:[%s0] sm:$0xff]
  %v26 = vld [vmem:[%s0 + $0x8] sm:$0xff]
  %v27 = vld [vmem:[%s1] sm:$0xff]
  %v28 = vld [vmem:[%s1 + $0x8] sm:$0xff]
  %v29 = vld [vmem:[%s1 + $0x10] sm:$0xff]
  %v30 = vld [vmem:[%s1 + $0x18] sm:$0xff]
  %v31 = vld [vmem:[%s1 + $0x20] sm:$0xff]
  %v32 = vld [vmem:[%s1 + $0x28] sm:$0xff]
  %v33 = vld [vmem:[%s1 + $0x30] sm:$0xff]
  %v34 = vld [vmem:[%s1 + $0x38] sm:$0xff]
  %v35 = vld [vmem:[%s1 + $0x40] sm:$0xff]
  %v36 = vld [vmem:[%s1 + $0x48] sm:$0xff]
  %v37 = vld [vmem:[%s1 + $0x50] sm:$0xff]
  %v38 = vld [vmem:[%s1 + $0x58] sm:$0xff]
  %v39 = vld [vmem:[%s1 + $0x60] sm:$0xff]
  %v40 = vld [vmem:[%s1 + $0x68] sm:$0xff]
  %v41 = vld [vmem:[%s1 + $0x70] sm:$0xff]
  %v42 = vld [vmem:[%s1 + $0x78] sm:$0xff]
  %v43 = vld [vmem:[%s1 + $0x80] sm:$0xff]
  %v44 = vld [vmem:[%s1 + $0x88] sm:$0xff]
  %v45 = vld [vmem:[%s1 + $0x90] sm:$0xff]
  %v46 = vld [vmem:[%s1 + $0x98] sm:$0xff]
  %v47 = vld [vmem:[%s1 + $0xa0] sm:$0xff]
  %v48 = vld [vmem:[%s1 + $0xa8] sm:$0xff]
  %v49 = vld [vmem:[%s1 + $0xb0] sm:$0xff]
  %v50 = vld [vmem:[%s1 + $0xb8] sm:$0xff]
  %v51 = vld [vmem:[%s1 + $0xc0] sm:$0xff]
  %v52 = vld [vmem:[%s1 + $0xc8] sm:$0xff]
  %v53 = vld [vmem:[%s1 + $0xd0] sm:$0xff]
  %v54 = vld [vmem:[%s1 + $0xd8] sm:$0xff]
  %v55 = vld [vmem:[%s1 + $0xe0] sm:$0xff]
  %v56 = vld [vmem:[%s1 + $0xe8] sm:$0xff]
  %v57 = vld [vmem:[%s1 + $0xf0] sm:$0xff]
  %v58 = vld [vmem:[%s1 + $0xf8] sm:$0xff]
  %59 = vrot.lane.b32.xlu0 %v22, 1
  %v60 = vpop.permute.xlu0 %59
  %61 = vrot.lane.b32.xlu0 %v23, 1
  %v62 = vpop.permute.xlu0 %61
  %v63 = vlaneseq
  %v64 = vand.u32 %v63, 127
  %vm65 = vcmp.lt.s32.totalorder %v64, 1
  %v66 = vsel %vm65, %v60, %v62
  %v67 = vsel %vm65, %v62, %v60
  %v70 = vrot.slane %v25, 1
  %v71 = vrot.slane %v26, 1
  %74 = vrot.lane.b32.xlu0 %v70, 1
  %v75 = vpop.permute.xlu0 %74
  %76 = vrot.lane.b32.xlu0 %v71, 1
  %v77 = vpop.permute.xlu0 %76
  %v78 = vsel %vm65, %v75, %v77
  %v79 = vsel %vm65, %v77, %v75
  %v80 = vsub.f32 %v79, %v70
  %v81 = vsub.f32 %v78, %v71
  %v82 = vand.u32 2147483647, %v80
  %v83 = vand.u32 2147483647, %v81
  %vm84 = vcmp.le.f32.partialorder %v82, 1.0
  %vm85 = vcmp.le.f32.partialorder %v83, 1.0
  %v86 = vsel %vm84, 1, 0
  %v87 = vsel %vm85, 1, 0
  %v88 = vcvt.s32.f32 %v86
  %v89 = vcvt.s32.f32 %v87
  %v90 = vperm.slane %v88, 0
  %v91 = vperm.slane %v89, 0
  %v92 = vmul.f32 %v67, %v90
  %v93 = vmul.f32 %v66, %v91
  %v94 = vmax.f32 %v22, %v92
  %v95 = vmax.f32 %v23, %v93
  %96 = vrot.lane.b32.xlu0 %v22, 127
  %v97 = vpop.permute.xlu0 %96
  %98 = vrot.lane.b32.xlu0 %v23, 127
  %v99 = vpop.permute.xlu0 %98
  %vm100 = vcmp.lt.s32.totalorder %v64, 127
  %v101 = vsel %vm100, %v97, %v99
  %v102 = vsel %vm100, %v99, %v97
  %103 = vrot.lane.b32.xlu0 %v70, 127
  %v104 = vpop.permute.xlu0 %103
  %105 = vrot.lane.b32.xlu0 %v71, 127
  %v106 = vpop.permute.xlu0 %105
  %v107 = vsel %vm100, %v104, %v106
  %v108 = vsel %vm100, %v106, %v104
  %v109 = vsub.f32 %v107, %v70
  %v110 = vsub.f32 %v108, %v71
  %v111 = vand.u32 2147483647, %v109
  %v112 = vand.u32 2147483647, %v110
  %vm113 = vcmp.le.f32.partialorder %v111, 1.0
  %vm114 = vcmp.le.f32.partialorder %v112, 1.0
  %v115 = vsel %vm113, 1, 0
  %v116 = vsel %vm114, 1, 0
  %v117 = vcvt.s32.f32 %v115
  %v118 = vcvt.s32.f32 %v116
  %v119 = vperm.slane %v117, 0
  %v120 = vperm.slane %v118, 0
  %v121 = vmul.f32 %v101, %v119
  %v122 = vmul.f32 %v102, %v120
  %v123 = vmax.f32 %v94, %v121
  %v124 = vmax.f32 %v95, %v122
  %125 = vrot.lane.b32.xlu0 %v123, 16
  %v126 = vpop.permute.xlu0 %125
  %127 = vrot.lane.b32.xlu0 %v124, 16
  %v128 = vpop.permute.xlu0 %127
  %vm129 = vcmp.lt.s32.totalorder %v64, 16
  %v130 = vsel %vm129, %v126, %v128
  %v131 = vsel %vm129, %v128, %v126
  %v132 = vrot.slane %v25, 2
  %v133 = vrot.slane %v26, 2
  %136 = vrot.lane.b32.xlu0 %v132, 16
  %v137 = vpop.permute.xlu0 %136
  %138 = vrot.lane.b32.xlu0 %v133, 16
  %v139 = vpop.permute.xlu0 %138
  %v140 = vsel %vm129, %v137, %v139
  %v141 = vsel %vm129, %v139, %v137
  %v142 = vsub.f32 %v141, %v132
  %v143 = vsub.f32 %v140, %v133
  %v144 = vand.u32 2147483647, %v142
  %v145 = vand.u32 2147483647, %v143
  %vm146 = vcmp.le.f32.partialorder %v144, 1.0
  %vm147 = vcmp.le.f32.partialorder %v145, 1.0
  %v148 = vsel %vm146, 1, 0
  %v149 = vsel %vm147, 1, 0
  %v150 = vcvt.s32.f32 %v148
  %v151 = vcvt.s32.f32 %v149
  %v152 = vperm.slane %v150, 0
  %v153 = vperm.slane %v151, 0
  %v154 = vmul.f32 %v131, %v152
  %v155 = vmul.f32 %v130, %v153
  %v156 = vmax.f32 %v123, %v154
  %v157 = vmax.f32 %v124, %v155
  %158 = vrot.lane.b32.xlu0 %v123, 112
  %v159 = vpop.permute.xlu0 %158
  %160 = vrot.lane.b32.xlu0 %v124, 112
  %v161 = vpop.permute.xlu0 %160
  %vm162 = vcmp.lt.s32.totalorder %v64, 112
  %v163 = vsel %vm162, %v159, %v161
  %v164 = vsel %vm162, %v161, %v159
  %165 = vrot.lane.b32.xlu0 %v132, 112
  %v166 = vpop.permute.xlu0 %165
  %167 = vrot.lane.b32.xlu0 %v133, 112
  %v168 = vpop.permute.xlu0 %167
  %v169 = vsel %vm162, %v166, %v168
  %v170 = vsel %vm162, %v168, %v166
  %v171 = vsub.f32 %v169, %v132
  %v172 = vsub.f32 %v170, %v133
  %v173 = vand.u32 2147483647, %v171
  %v174 = vand.u32 2147483647, %v172
  %vm175 = vcmp.le.f32.partialorder %v173, 1.0
  %vm176 = vcmp.le.f32.partialorder %v174, 1.0
  %v177 = vsel %vm175, 1, 0
  %v178 = vsel %vm176, 1, 0
  %v179 = vcvt.s32.f32 %v177
  %v180 = vcvt.s32.f32 %v178
  %v181 = vperm.slane %v179, 0
  %v182 = vperm.slane %v180, 0
  %v183 = vmul.f32 %v163, %v181
  %v184 = vmul.f32 %v164, %v182
  %v185 = vmax.f32 %v156, %v183
  %v186 = vmax.f32 %v157, %v184
  %vm187 = vcmp.gt.f32.partialorder %v185, 0.0
  %vm188 = vcmp.gt.f32.partialorder %v186, 0.0
  %v189 = vsel %vm187, 1, 0
  %v190 = vsel %vm188, 1, 0
  %v191 = vcvt.s32.f32 %v189
  %v192 = vcvt.s32.f32 %v190
  %vm193 = vcmp.gt.f32.partialorder %v22, 0.0
  %vm194 = vcmp.gt.f32.partialorder %v23, 0.0
  %v195 = vsel %vm193, 1, 0
  %v196 = vsel %vm194, 1, 0
  %v197 = vcvt.s32.f32 %v195
  %v198 = vcvt.s32.f32 %v196
  %v199 = vadd.f32 %v197, %v198
  %200 = vadd.xlane.f32.xlu0 %v199
  %v201 = vpop.xlane.xlu0 %200
  %v202 = vmax.f32 %v201, 1.0
  %v203 = vpack.c.bf16 %v197, %v197
  %v204 = vpack.c.bf16 %v198, %v198
  %v237 = vunpack.c.l.b16 %v27
  %v238 = vunpack.c.h.b16 %v27
  %v239 = vunpack.c.l.b16 %v28
  %v240 = vunpack.c.h.b16 %v28
  %v241 = vunpack.c.l.b16 %v29
  %v242 = vunpack.c.h.b16 %v29
  %v243 = vunpack.c.l.b16 %v30
  %v244 = vunpack.c.h.b16 %v30
  %v245 = vunpack.c.l.b16 %v31
  %v246 = vunpack.c.h.b16 %v31
  %v247 = vunpack.c.l.b16 %v32
  %v248 = vunpack.c.h.b16 %v32
  %v249 = vunpack.c.l.b16 %v33
  %v250 = vunpack.c.h.b16 %v33
  %v251 = vunpack.c.l.b16 %v34
  %v252 = vunpack.c.h.b16 %v34
  %v253 = vunpack.c.l.b16 %v35
  %v254 = vunpack.c.h.b16 %v35
  %v255 = vunpack.c.l.b16 %v36
  %v256 = vunpack.c.h.b16 %v36
  %v257 = vunpack.c.l.b16 %v37
  %v258 = vunpack.c.h.b16 %v37
  %v259 = vunpack.c.l.b16 %v38
  %v260 = vunpack.c.h.b16 %v38
  %v261 = vunpack.c.l.b16 %v39
  %v262 = vunpack.c.h.b16 %v39
  %v263 = vunpack.c.l.b16 %v40
  %v264 = vunpack.c.h.b16 %v40
  %v265 = vunpack.c.l.b16 %v41
  %v266 = vunpack.c.h.b16 %v41
  %v267 = vunpack.c.l.b16 %v42
  %v268 = vunpack.c.h.b16 %v42
  %v269 = vunpack.c.l.b16 %v43
  %v270 = vunpack.c.h.b16 %v43
  %v271 = vunpack.c.l.b16 %v44
  %v272 = vunpack.c.h.b16 %v44
  %v273 = vunpack.c.l.b16 %v45
  %v274 = vunpack.c.h.b16 %v45
  %v275 = vunpack.c.l.b16 %v46
  %v276 = vunpack.c.h.b16 %v46
  %v277 = vunpack.c.l.b16 %v47
  %v278 = vunpack.c.h.b16 %v47
  %v279 = vunpack.c.l.b16 %v48
  %v280 = vunpack.c.h.b16 %v48
  %v281 = vunpack.c.l.b16 %v49
  %v282 = vunpack.c.h.b16 %v49
  %v283 = vunpack.c.l.b16 %v50
  %v284 = vunpack.c.h.b16 %v50
  %v285 = vunpack.c.l.b16 %v51
  %v286 = vunpack.c.h.b16 %v51
  %v287 = vunpack.c.l.b16 %v52
  %v288 = vunpack.c.h.b16 %v52
  %v289 = vunpack.c.l.b16 %v53
  %v290 = vunpack.c.h.b16 %v53
  %v291 = vunpack.c.l.b16 %v54
  %v292 = vunpack.c.h.b16 %v54
  %v293 = vunpack.c.l.b16 %v55
  %v294 = vunpack.c.h.b16 %v55
  %v295 = vunpack.c.l.b16 %v56
  %v296 = vunpack.c.h.b16 %v56
  %v297 = vunpack.c.l.b16 %v57
  %v298 = vunpack.c.h.b16 %v57
  %v299 = vunpack.c.l.b16 %v58
  %v300 = vunpack.c.h.b16 %v58
  %v301 = vpack.c.b16 %v239, %v237
  %v302 = vpack.c.b16 %v240, %v238
  %v303 = vpack.c.b16 %v243, %v241
  %v304 = vpack.c.b16 %v244, %v242
  %v305 = vpack.c.b16 %v247, %v245
  %v306 = vpack.c.b16 %v248, %v246
  %v307 = vpack.c.b16 %v251, %v249
  %v308 = vpack.c.b16 %v252, %v250
  %v309 = vpack.c.b16 %v255, %v253
  %v310 = vpack.c.b16 %v256, %v254
  %v311 = vpack.c.b16 %v259, %v257
  %v312 = vpack.c.b16 %v260, %v258
  %v313 = vpack.c.b16 %v263, %v261
  %v314 = vpack.c.b16 %v264, %v262
  %v315 = vpack.c.b16 %v267, %v265
  %v316 = vpack.c.b16 %v268, %v266
  %v317 = vpack.c.b16 %v271, %v269
  %v318 = vpack.c.b16 %v272, %v270
  %v319 = vpack.c.b16 %v275, %v273
  %v320 = vpack.c.b16 %v276, %v274
  %v321 = vpack.c.b16 %v279, %v277
  %v322 = vpack.c.b16 %v280, %v278
  %v323 = vpack.c.b16 %v283, %v281
  %v324 = vpack.c.b16 %v284, %v282
  %v325 = vpack.c.b16 %v287, %v285
  %v326 = vpack.c.b16 %v288, %v286
  %v327 = vpack.c.b16 %v291, %v289
  %v328 = vpack.c.b16 %v292, %v290
  %v329 = vpack.c.b16 %v295, %v293
  %v330 = vpack.c.b16 %v296, %v294
  %v331 = vpack.c.b16 %v299, %v297
  %v332 = vpack.c.b16 %v300, %v298
  %365 = vmatpush.bf16.msra.mxu0 %v315
  %366 = vmatpush.bf16.msra.mxu0 %v313
  %367 = vmatpush.bf16.msra.mxu0 %v311
  %368 = vmatpush.bf16.msra.mxu0 %v309
  %369 = vmatpush.bf16.msra.mxu0 %v307
  %370 = vmatpush.bf16.msra.mxu0 %v305
  %371 = vmatpush.bf16.msra.mxu0 %v303
  %372 = vmatpush.bf16.msra.mxu0 %v301
  %373 = vmatmul.bf16.gmra.mxu0 %v203
  %v374 = vpop.f32.mrf.mxu0
  %v375 = vadd.f32 0.0, %v374
  %v376 = vpop.f32.mrf.mxu0
  %377 = vdwg.mxu0
  %378 = vmatpush.bf16.msra.mxu0 %v331
  %379 = vmatpush.bf16.msra.mxu0 %v329
  %380 = vmatpush.bf16.msra.mxu0 %v327
  %381 = vmatpush.bf16.msra.mxu0 %v325
  %382 = vmatpush.bf16.msra.mxu0 %v323
  %383 = vmatpush.bf16.msra.mxu0 %v321
  %384 = vmatpush.bf16.msra.mxu0 %v319
  %385 = vmatpush.bf16.msra.mxu0 %v317
  %386 = vmatmul.bf16.gmra.mxu0 %v204
  %v387 = vpop.f32.mrf.mxu0
  %v388 = vadd.f32 %v375, %v387
  %v389 = vpop.f32.mrf.mxu0
  %390 = vdwg.mxu0
  %391 = vmatpush.bf16.msra.mxu0 %v316
  %392 = vmatpush.bf16.msra.mxu0 %v314
  %393 = vmatpush.bf16.msra.mxu0 %v312
  %394 = vmatpush.bf16.msra.mxu0 %v310
  %395 = vmatpush.bf16.msra.mxu0 %v308
  %396 = vmatpush.bf16.msra.mxu0 %v306
  %397 = vmatpush.bf16.msra.mxu0 %v304
  %398 = vmatpush.bf16.msra.mxu0 %v302
  %399 = vmatmul.bf16.gmra.mxu0 %v203
  %v400 = vpop.f32.mrf.mxu0
  %v401 = vadd.f32 0.0, %v400
  %v402 = vpop.f32.mrf.mxu0
  %403 = vdwg.mxu0
  %404 = vmatpush.bf16.msra.mxu0 %v332
  %405 = vmatpush.bf16.msra.mxu0 %v330
  %406 = vmatpush.bf16.msra.mxu0 %v328
  %407 = vmatpush.bf16.msra.mxu0 %v326
  %408 = vmatpush.bf16.msra.mxu0 %v324
  %409 = vmatpush.bf16.msra.mxu0 %v322
  %410 = vmatpush.bf16.msra.mxu0 %v320
  %411 = vmatpush.bf16.msra.mxu0 %v318
  %412 = vmatmul.bf16.gmra.mxu0 %v204
  %v413 = vpop.f32.mrf.mxu0
  %v414 = vadd.f32 %v401, %v413
  %v415 = vpop.f32.mrf.mxu0
  %416 = vdwg.mxu0
  %v417 = vperm.slane %v25, 0
  %v418 = vperm.slane %v26, 0
  %v419 = vrcp.pop %v202
  %v420 = vmul.f32 %v202, %v419
  %v421 = vsub.f32 1.0, %v420
  %v422 = vmul.f32 %v419, %v421
  %v423 = vadd.f32 %v419, %v422
  %vm424 = vweird.f32 %v202
  %vm425 = vweird.f32 %v419
  %vm426 = vmor %vm424, %vm425
  %v427 = vsel %vm426, %v419, %v423
  %v428 = vand.u32 2147483647, %v202
  %vm429 = vcmp.eq.f32.partialorder %v428, 8.507059e+37
  %v430 = vand.u32 %v202, 2147483648
  %v431 = vor.u32 1.1754944e-38, %v430
  %v432 = vsel %vm429, %v431, %v427
  %v433 = vmul.f32 %v417, %v432
  %v434 = vmul.f32 %v418, %v432
  %v435 = vfloor.f32 %v433
  %v436 = vfloor.f32 %v434
  %v437 = vmul.f32 %v435, %v202
  %v438 = vmul.f32 %v436, %v202
  %v439 = vsub.f32 %v417, %v437
  %v440 = vsub.f32 %v418, %v438
  %v441 = vmul.f32 %v20, %v197
  %v442 = vmul.f32 %v21, %v198
  %v445 = vrot.slane %v442, 7
  %vm446 = vcmask 1040384
  %v447 = vsel %vm446, %v441, %v445
  %vm448 = vcmask 1041409
  %v449 = vsel %vm448, %v441, %v445
  %v450 = vrot.slane %v449, 1
  %vm451 = vcmask 1042434
  %v452 = vsel %vm451, %v441, %v445
  %v453 = vrot.slane %v452, 2
  %vm454 = vcmask 1043459
  %v455 = vsel %vm454, %v441, %v445
  %v456 = vrot.slane %v455, 3
  %vm457 = vcmask 1044484
  %v458 = vsel %vm457, %v441, %v445
  %v459 = vrot.slane %v458, 4
  %vm460 = vcmask 1045509
  %v461 = vsel %vm460, %v441, %v445
  %v462 = vrot.slane %v461, 5
  %vm463 = vcmask 1046534
  %v464 = vsel %vm463, %v441, %v445
  %v465 = vrot.slane %v464, 6
  %vm466 = vcmask 1046528
  %v467 = vsel %vm466, %v445, %v441
  %v468 = vrot.slane %v467, 7
  %v471 = vrot.slane %v414, 7
  %v472 = vsel %vm446, %v388, %v471
  %v473 = vsel %vm448, %v388, %v471
  %v474 = vrot.slane %v473, 1
  %v475 = vsel %vm451, %v388, %v471
  %v476 = vrot.slane %v475, 2
  %v477 = vsel %vm454, %v388, %v471
  %v478 = vrot.slane %v477, 3
  %v479 = vsel %vm457, %v388, %v471
  %v480 = vrot.slane %v479, 4
  %v481 = vsel %vm460, %v388, %v471
  %v482 = vrot.slane %v481, 5
  %v483 = vsel %vm463, %v388, %v471
  %v484 = vrot.slane %v483, 6
  %v485 = vsel %vm466, %v471, %v388
  %v486 = vrot.slane %v485, 7
  %v487 = vperm.slane %v439, 0
  %v488 = vlaneseq
  %v489 = vshrl.u32 %v488, 7
  %491 = vset.pattern.permute.xlu0 %v489
  %492 = vperm.xlu0 %491, %v487
  %v493 = vpop.permute.xlu0 %492
  %v494 = vlaneseq
  %v495 = vshrl.u32 %v494, 7
  %v496 = vadd.s32 %v495, 8
  %497 = vset.pattern.permute.xlu0 %v496
  %498 = vperm.xlu0 %497, %v487
  %v499 = vpop.permute.xlu0 %498
  %v500 = vlaneseq
  %v501 = vshrl.u32 %v500, 7
  %v502 = vadd.s32 %v501, 16
  %503 = vset.pattern.permute.xlu0 %v502
  %504 = vperm.xlu0 %503, %v487
  %v505 = vpop.permute.xlu0 %504
  %v506 = vlaneseq
  %v507 = vshrl.u32 %v506, 7
  %v508 = vadd.s32 %v507, 24
  %509 = vset.pattern.permute.xlu0 %v508
  %510 = vperm.xlu0 %509, %v487
  %v511 = vpop.permute.xlu0 %510
  %v512 = vlaneseq
  %v513 = vshrl.u32 %v512, 7
  %v514 = vadd.s32 %v513, 32
  %515 = vset.pattern.permute.xlu0 %v514
  %516 = vperm.xlu0 %515, %v487
  %v517 = vpop.permute.xlu0 %516
  %v518 = vlaneseq
  %v519 = vshrl.u32 %v518, 7
  %v520 = vadd.s32 %v519, 40
  %521 = vset.pattern.permute.xlu0 %v520
  %522 = vperm.xlu0 %521, %v487
  %v523 = vpop.permute.xlu0 %522
  %v524 = vlaneseq
  %v525 = vshrl.u32 %v524, 7
  %v526 = vadd.s32 %v525, 48
  %527 = vset.pattern.permute.xlu0 %v526
  %528 = vperm.xlu0 %527, %v487
  %v529 = vpop.permute.xlu0 %528
  %v530 = vlaneseq
  %v531 = vshrl.u32 %v530, 7
  %v532 = vadd.s32 %v531, 56
  %533 = vset.pattern.permute.xlu0 %v532
  %534 = vperm.xlu0 %533, %v487
  %v535 = vpop.permute.xlu0 %534
  %v536 = vlaneseq
  %v537 = vshrl.u32 %v536, 7
  %v538 = vadd.s32 %v537, 64
  %539 = vset.pattern.permute.xlu0 %v538
  %540 = vperm.xlu0 %539, %v487
  %v541 = vpop.permute.xlu0 %540
  %v542 = vlaneseq
  %v543 = vshrl.u32 %v542, 7
  %v544 = vadd.s32 %v543, 72
  %545 = vset.pattern.permute.xlu0 %v544
  %546 = vperm.xlu0 %545, %v487
  %v547 = vpop.permute.xlu0 %546
  %v548 = vlaneseq
  %v549 = vshrl.u32 %v548, 7
  %v550 = vadd.s32 %v549, 80
  %551 = vset.pattern.permute.xlu0 %v550
  %552 = vperm.xlu0 %551, %v487
  %v553 = vpop.permute.xlu0 %552
  %v554 = vlaneseq
  %v555 = vshrl.u32 %v554, 7
  %v556 = vadd.s32 %v555, 88
  %557 = vset.pattern.permute.xlu0 %v556
  %558 = vperm.xlu0 %557, %v487
  %v559 = vpop.permute.xlu0 %558
  %v560 = vlaneseq
  %v561 = vshrl.u32 %v560, 7
  %v562 = vadd.s32 %v561, 96
  %563 = vset.pattern.permute.xlu0 %v562
  %564 = vperm.xlu0 %563, %v487
  %v565 = vpop.permute.xlu0 %564
  %v566 = vlaneseq
  %v567 = vshrl.u32 %v566, 7
  %v568 = vadd.s32 %v567, 104
  %569 = vset.pattern.permute.xlu0 %v568
  %570 = vperm.xlu0 %569, %v487
  %v571 = vpop.permute.xlu0 %570
  %v572 = vlaneseq
  %v573 = vshrl.u32 %v572, 7
  %v574 = vadd.s32 %v573, 112
  %575 = vset.pattern.permute.xlu0 %v574
  %576 = vperm.xlu0 %575, %v487
  %v577 = vpop.permute.xlu0 %576
  %v578 = vlaneseq
  %v579 = vshrl.u32 %v578, 7
  %v580 = vadd.s32 %v579, 120
  %581 = vset.pattern.permute.xlu0 %v580
  %582 = vperm.xlu0 %581, %v487
  %v583 = vpop.permute.xlu0 %582
  %v584 = vperm.slane %v440, 0
  %v585 = vlaneseq
  %v586 = vshrl.u32 %v585, 7
  %588 = vset.pattern.permute.xlu0 %v586
  %589 = vperm.xlu0 %588, %v584
  %v590 = vpop.permute.xlu0 %589
  %v591 = vlaneseq
  %v592 = vshrl.u32 %v591, 7
  %v593 = vadd.s32 %v592, 8
  %594 = vset.pattern.permute.xlu0 %v593
  %595 = vperm.xlu0 %594, %v584
  %v596 = vpop.permute.xlu0 %595
  %v597 = vlaneseq
  %v598 = vshrl.u32 %v597, 7
  %v599 = vadd.s32 %v598, 16
  %600 = vset.pattern.permute.xlu0 %v599
  %601 = vperm.xlu0 %600, %v584
  %v602 = vpop.permute.xlu0 %601
  %v603 = vlaneseq
  %v604 = vshrl.u32 %v603, 7
  %v605 = vadd.s32 %v604, 24
  %606 = vset.pattern.permute.xlu0 %v605
  %607 = vperm.xlu0 %606, %v584
  %v608 = vpop.permute.xlu0 %607
  %v609 = vlaneseq
  %v610 = vshrl.u32 %v609, 7
  %v611 = vadd.s32 %v610, 32
  %612 = vset.pattern.permute.xlu0 %v611
  %613 = vperm.xlu0 %612, %v584
  %v614 = vpop.permute.xlu0 %613
  %v615 = vlaneseq
  %v616 = vshrl.u32 %v615, 7
  %v617 = vadd.s32 %v616, 40
  %618 = vset.pattern.permute.xlu0 %v617
  %619 = vperm.xlu0 %618, %v584
  %v620 = vpop.permute.xlu0 %619
  %v621 = vlaneseq
  %v622 = vshrl.u32 %v621, 7
  %v623 = vadd.s32 %v622, 48
  %624 = vset.pattern.permute.xlu0 %v623
  %625 = vperm.xlu0 %624, %v584
  %v626 = vpop.permute.xlu0 %625
  %v627 = vlaneseq
  %v628 = vshrl.u32 %v627, 7
  %v629 = vadd.s32 %v628, 56
  %630 = vset.pattern.permute.xlu0 %v629
  %631 = vperm.xlu0 %630, %v584
  %v632 = vpop.permute.xlu0 %631
  %v633 = vlaneseq
  %v634 = vshrl.u32 %v633, 7
  %v635 = vadd.s32 %v634, 64
  %636 = vset.pattern.permute.xlu0 %v635
  %637 = vperm.xlu0 %636, %v584
  %v638 = vpop.permute.xlu0 %637
  %v639 = vlaneseq
  %v640 = vshrl.u32 %v639, 7
  %v641 = vadd.s32 %v640, 72
  %642 = vset.pattern.permute.xlu0 %v641
  %643 = vperm.xlu0 %642, %v584
  %v644 = vpop.permute.xlu0 %643
  %v645 = vlaneseq
  %v646 = vshrl.u32 %v645, 7
  %v647 = vadd.s32 %v646, 80
  %648 = vset.pattern.permute.xlu0 %v647
  %649 = vperm.xlu0 %648, %v584
  %v650 = vpop.permute.xlu0 %649
  %v651 = vlaneseq
  %v652 = vshrl.u32 %v651, 7
  %v653 = vadd.s32 %v652, 88
  %654 = vset.pattern.permute.xlu0 %v653
  %655 = vperm.xlu0 %654, %v584
  %v656 = vpop.permute.xlu0 %655
  %v657 = vlaneseq
  %v658 = vshrl.u32 %v657, 7
  %v659 = vadd.s32 %v658, 96
  %660 = vset.pattern.permute.xlu0 %v659
  %661 = vperm.xlu0 %660, %v584
  %v662 = vpop.permute.xlu0 %661
  %v663 = vlaneseq
  %v664 = vshrl.u32 %v663, 7
  %v665 = vadd.s32 %v664, 104
  %666 = vset.pattern.permute.xlu0 %v665
  %667 = vperm.xlu0 %666, %v584
  %v668 = vpop.permute.xlu0 %667
  %v669 = vlaneseq
  %v670 = vshrl.u32 %v669, 7
  %v671 = vadd.s32 %v670, 112
  %672 = vset.pattern.permute.xlu0 %v671
  %673 = vperm.xlu0 %672, %v584
  %v674 = vpop.permute.xlu0 %673
  %v675 = vlaneseq
  %v676 = vshrl.u32 %v675, 7
  %v677 = vadd.s32 %v676, 120
  %678 = vset.pattern.permute.xlu0 %v677
  %679 = vperm.xlu0 %678, %v584
  %v680 = vpop.permute.xlu0 %679
  %v681 = vperm.slane %v439, 1
  %v682 = vlaneseq
  %v683 = vshrl.u32 %v682, 7
  %685 = vset.pattern.permute.xlu0 %v683
  %686 = vperm.xlu0 %685, %v681
  %v687 = vpop.permute.xlu0 %686
  %v688 = vlaneseq
  %v689 = vshrl.u32 %v688, 7
  %v690 = vadd.s32 %v689, 8
  %691 = vset.pattern.permute.xlu0 %v690
  %692 = vperm.xlu0 %691, %v681
  %v693 = vpop.permute.xlu0 %692
  %v694 = vlaneseq
  %v695 = vshrl.u32 %v694, 7
  %v696 = vadd.s32 %v695, 16
  %697 = vset.pattern.permute.xlu0 %v696
  %698 = vperm.xlu0 %697, %v681
  %v699 = vpop.permute.xlu0 %698
  %v700 = vlaneseq
  %v701 = vshrl.u32 %v700, 7
  %v702 = vadd.s32 %v701, 24
  %703 = vset.pattern.permute.xlu0 %v702
  %704 = vperm.xlu0 %703, %v681
  %v705 = vpop.permute.xlu0 %704
  %v706 = vlaneseq
  %v707 = vshrl.u32 %v706, 7
  %v708 = vadd.s32 %v707, 32
  %709 = vset.pattern.permute.xlu0 %v708
  %710 = vperm.xlu0 %709, %v681
  %v711 = vpop.permute.xlu0 %710
  %v712 = vlaneseq
  %v713 = vshrl.u32 %v712, 7
  %v714 = vadd.s32 %v713, 40
  %715 = vset.pattern.permute.xlu0 %v714
  %716 = vperm.xlu0 %715, %v681
  %v717 = vpop.permute.xlu0 %716
  %v718 = vlaneseq
  %v719 = vshrl.u32 %v718, 7
  %v720 = vadd.s32 %v719, 48
  %721 = vset.pattern.permute.xlu0 %v720
  %722 = vperm.xlu0 %721, %v681
  %v723 = vpop.permute.xlu0 %722
  %v724 = vlaneseq
  %v725 = vshrl.u32 %v724, 7
  %v726 = vadd.s32 %v725, 56
  %727 = vset.pattern.permute.xlu0 %v726
  %728 = vperm.xlu0 %727, %v681
  %v729 = vpop.permute.xlu0 %728
  %v730 = vlaneseq
  %v731 = vshrl.u32 %v730, 7
  %v732 = vadd.s32 %v731, 64
  %733 = vset.pattern.permute.xlu0 %v732
  %734 = vperm.xlu0 %733, %v681
  %v735 = vpop.permute.xlu0 %734
  %v736 = vlaneseq
  %v737 = vshrl.u32 %v736, 7
  %v738 = vadd.s32 %v737, 72
  %739 = vset.pattern.permute.xlu0 %v738
  %740 = vperm.xlu0 %739, %v681
  %v741 = vpop.permute.xlu0 %740
  %v742 = vlaneseq
  %v743 = vshrl.u32 %v742, 7
  %v744 = vadd.s32 %v743, 80
  %745 = vset.pattern.permute.xlu0 %v744
  %746 = vperm.xlu0 %745, %v681
  %v747 = vpop.permute.xlu0 %746
  %v748 = vlaneseq
  %v749 = vshrl.u32 %v748, 7
  %v750 = vadd.s32 %v749, 88
  %751 = vset.pattern.permute.xlu0 %v750
  %752 = vperm.xlu0 %751, %v681
  %v753 = vpop.permute.xlu0 %752
  %v754 = vlaneseq
  %v755 = vshrl.u32 %v754, 7
  %v756 = vadd.s32 %v755, 96
  %757 = vset.pattern.permute.xlu0 %v756
  %758 = vperm.xlu0 %757, %v681
  %v759 = vpop.permute.xlu0 %758
  %v760 = vlaneseq
  %v761 = vshrl.u32 %v760, 7
  %v762 = vadd.s32 %v761, 104
  %763 = vset.pattern.permute.xlu0 %v762
  %764 = vperm.xlu0 %763, %v681
  %v765 = vpop.permute.xlu0 %764
  %v766 = vlaneseq
  %v767 = vshrl.u32 %v766, 7
  %v768 = vadd.s32 %v767, 112
  %769 = vset.pattern.permute.xlu0 %v768
  %770 = vperm.xlu0 %769, %v681
  %v771 = vpop.permute.xlu0 %770
  %v772 = vlaneseq
  %v773 = vshrl.u32 %v772, 7
  %v774 = vadd.s32 %v773, 120
  %775 = vset.pattern.permute.xlu0 %v774
  %776 = vperm.xlu0 %775, %v681
  %v777 = vpop.permute.xlu0 %776
  %v778 = vperm.slane %v440, 1
  %v779 = vlaneseq
  %v780 = vshrl.u32 %v779, 7
  %782 = vset.pattern.permute.xlu0 %v780
  %783 = vperm.xlu0 %782, %v778
  %v784 = vpop.permute.xlu0 %783
  %v785 = vlaneseq
  %v786 = vshrl.u32 %v785, 7
  %v787 = vadd.s32 %v786, 8
  %788 = vset.pattern.permute.xlu0 %v787
  %789 = vperm.xlu0 %788, %v778
  %v790 = vpop.permute.xlu0 %789
  %v791 = vlaneseq
  %v792 = vshrl.u32 %v791, 7
  %v793 = vadd.s32 %v792, 16
  %794 = vset.pattern.permute.xlu0 %v793
  %795 = vperm.xlu0 %794, %v778
  %v796 = vpop.permute.xlu0 %795
  %v797 = vlaneseq
  %v798 = vshrl.u32 %v797, 7
  %v799 = vadd.s32 %v798, 24
  %800 = vset.pattern.permute.xlu0 %v799
  %801 = vperm.xlu0 %800, %v778
  %v802 = vpop.permute.xlu0 %801
  %v803 = vlaneseq
  %v804 = vshrl.u32 %v803, 7
  %v805 = vadd.s32 %v804, 32
  %806 = vset.pattern.permute.xlu0 %v805
  %807 = vperm.xlu0 %806, %v778
  %v808 = vpop.permute.xlu0 %807
  %v809 = vlaneseq
  %v810 = vshrl.u32 %v809, 7
  %v811 = vadd.s32 %v810, 40
  %812 = vset.pattern.permute.xlu0 %v811
  %813 = vperm.xlu0 %812, %v778
  %v814 = vpop.permute.xlu0 %813
  %v815 = vlaneseq
  %v816 = vshrl.u32 %v815, 7
  %v817 = vadd.s32 %v816, 48
  %818 = vset.pattern.permute.xlu0 %v817
  %819 = vperm.xlu0 %818, %v778
  %v820 = vpop.permute.xlu0 %819
  %v821 = vlaneseq
  %v822 = vshrl.u32 %v821, 7
  %v823 = vadd.s32 %v822, 56
  %824 = vset.pattern.permute.xlu0 %v823
  %825 = vperm.xlu0 %824, %v778
  %v826 = vpop.permute.xlu0 %825
  %v827 = vlaneseq
  %v828 = vshrl.u32 %v827, 7
  %v829 = vadd.s32 %v828, 64
  %830 = vset.pattern.permute.xlu0 %v829
  %831 = vperm.xlu0 %830, %v778
  %v832 = vpop.permute.xlu0 %831
  %v833 = vlaneseq
  %v834 = vshrl.u32 %v833, 7
  %v835 = vadd.s32 %v834, 72
  %836 = vset.pattern.permute.xlu0 %v835
  %837 = vperm.xlu0 %836, %v778
  %v838 = vpop.permute.xlu0 %837
  %v839 = vlaneseq
  %v840 = vshrl.u32 %v839, 7
  %v841 = vadd.s32 %v840, 80
  %842 = vset.pattern.permute.xlu0 %v841
  %843 = vperm.xlu0 %842, %v778
  %v844 = vpop.permute.xlu0 %843
  %v845 = vlaneseq
  %v846 = vshrl.u32 %v845, 7
  %v847 = vadd.s32 %v846, 88
  %848 = vset.pattern.permute.xlu0 %v847
  %849 = vperm.xlu0 %848, %v778
  %v850 = vpop.permute.xlu0 %849
  %v851 = vlaneseq
  %v852 = vshrl.u32 %v851, 7
  %v853 = vadd.s32 %v852, 96
  %854 = vset.pattern.permute.xlu0 %v853
  %855 = vperm.xlu0 %854, %v778
  %v856 = vpop.permute.xlu0 %855
  %v857 = vlaneseq
  %v858 = vshrl.u32 %v857, 7
  %v859 = vadd.s32 %v858, 104
  %860 = vset.pattern.permute.xlu0 %v859
  %861 = vperm.xlu0 %860, %v778
  %v862 = vpop.permute.xlu0 %861
  %v863 = vlaneseq
  %v864 = vshrl.u32 %v863, 7
  %v865 = vadd.s32 %v864, 112
  %866 = vset.pattern.permute.xlu0 %v865
  %867 = vperm.xlu0 %866, %v778
  %v868 = vpop.permute.xlu0 %867
  %v869 = vlaneseq
  %v870 = vshrl.u32 %v869, 7
  %v871 = vadd.s32 %v870, 120
  %872 = vset.pattern.permute.xlu0 %v871
  %873 = vperm.xlu0 %872, %v778
  %v874 = vpop.permute.xlu0 %873
  %v875 = vperm.slane %v439, 2
  %v876 = vlaneseq
  %v877 = vshrl.u32 %v876, 7
  %879 = vset.pattern.permute.xlu0 %v877
  %880 = vperm.xlu0 %879, %v875
  %v881 = vpop.permute.xlu0 %880
  %v882 = vlaneseq
  %v883 = vshrl.u32 %v882, 7
  %v884 = vadd.s32 %v883, 8
  %885 = vset.pattern.permute.xlu0 %v884
  %886 = vperm.xlu0 %885, %v875
  %v887 = vpop.permute.xlu0 %886
  %v888 = vlaneseq
  %v889 = vshrl.u32 %v888, 7
  %v890 = vadd.s32 %v889, 16
  %891 = vset.pattern.permute.xlu0 %v890
  %892 = vperm.xlu0 %891, %v875
  %v893 = vpop.permute.xlu0 %892
  %v894 = vlaneseq
  %v895 = vshrl.u32 %v894, 7
  %v896 = vadd.s32 %v895, 24
  %897 = vset.pattern.permute.xlu0 %v896
  %898 = vperm.xlu0 %897, %v875
  %v899 = vpop.permute.xlu0 %898
  %v900 = vlaneseq
  %v901 = vshrl.u32 %v900, 7
  %v902 = vadd.s32 %v901, 32
  %903 = vset.pattern.permute.xlu0 %v902
  %904 = vperm.xlu0 %903, %v875
  %v905 = vpop.permute.xlu0 %904
  %v906 = vlaneseq
  %v907 = vshrl.u32 %v906, 7
  %v908 = vadd.s32 %v907, 40
  %909 = vset.pattern.permute.xlu0 %v908
  %910 = vperm.xlu0 %909, %v875
  %v911 = vpop.permute.xlu0 %910
  %v912 = vlaneseq
  %v913 = vshrl.u32 %v912, 7
  %v914 = vadd.s32 %v913, 48
  %915 = vset.pattern.permute.xlu0 %v914
  %916 = vperm.xlu0 %915, %v875
  %v917 = vpop.permute.xlu0 %916
  %v918 = vlaneseq
  %v919 = vshrl.u32 %v918, 7
  %v920 = vadd.s32 %v919, 56
  %921 = vset.pattern.permute.xlu0 %v920
  %922 = vperm.xlu0 %921, %v875
  %v923 = vpop.permute.xlu0 %922
  %v924 = vlaneseq
  %v925 = vshrl.u32 %v924, 7
  %v926 = vadd.s32 %v925, 64
  %927 = vset.pattern.permute.xlu0 %v926
  %928 = vperm.xlu0 %927, %v875
  %v929 = vpop.permute.xlu0 %928
  %v930 = vlaneseq
  %v931 = vshrl.u32 %v930, 7
  %v932 = vadd.s32 %v931, 72
  %933 = vset.pattern.permute.xlu0 %v932
  %934 = vperm.xlu0 %933, %v875
  %v935 = vpop.permute.xlu0 %934
  %v936 = vlaneseq
  %v937 = vshrl.u32 %v936, 7
  %v938 = vadd.s32 %v937, 80
  %939 = vset.pattern.permute.xlu0 %v938
  %940 = vperm.xlu0 %939, %v875
  %v941 = vpop.permute.xlu0 %940
  %v942 = vlaneseq
  %v943 = vshrl.u32 %v942, 7
  %v944 = vadd.s32 %v943, 88
  %945 = vset.pattern.permute.xlu0 %v944
  %946 = vperm.xlu0 %945, %v875
  %v947 = vpop.permute.xlu0 %946
  %v948 = vlaneseq
  %v949 = vshrl.u32 %v948, 7
  %v950 = vadd.s32 %v949, 96
  %951 = vset.pattern.permute.xlu0 %v950
  %952 = vperm.xlu0 %951, %v875
  %v953 = vpop.permute.xlu0 %952
  %v954 = vlaneseq
  %v955 = vshrl.u32 %v954, 7
  %v956 = vadd.s32 %v955, 104
  %957 = vset.pattern.permute.xlu0 %v956
  %958 = vperm.xlu0 %957, %v875
  %v959 = vpop.permute.xlu0 %958
  %v960 = vlaneseq
  %v961 = vshrl.u32 %v960, 7
  %v962 = vadd.s32 %v961, 112
  %963 = vset.pattern.permute.xlu0 %v962
  %964 = vperm.xlu0 %963, %v875
  %v965 = vpop.permute.xlu0 %964
  %v966 = vlaneseq
  %v967 = vshrl.u32 %v966, 7
  %v968 = vadd.s32 %v967, 120
  %969 = vset.pattern.permute.xlu0 %v968
  %970 = vperm.xlu0 %969, %v875
  %v971 = vpop.permute.xlu0 %970
  %v972 = vperm.slane %v440, 2
  %v973 = vlaneseq
  %v974 = vshrl.u32 %v973, 7
  %976 = vset.pattern.permute.xlu0 %v974
  %977 = vperm.xlu0 %976, %v972
  %v978 = vpop.permute.xlu0 %977
  %v979 = vlaneseq
  %v980 = vshrl.u32 %v979, 7
  %v981 = vadd.s32 %v980, 8
  %982 = vset.pattern.permute.xlu0 %v981
  %983 = vperm.xlu0 %982, %v972
  %v984 = vpop.permute.xlu0 %983
  %v985 = vlaneseq
  %v986 = vshrl.u32 %v985, 7
  %v987 = vadd.s32 %v986, 16
  %988 = vset.pattern.permute.xlu0 %v987
  %989 = vperm.xlu0 %988, %v972
  %v990 = vpop.permute.xlu0 %989
  %v991 = vlaneseq
  %v992 = vshrl.u32 %v991, 7
  %v993 = vadd.s32 %v992, 24
  %994 = vset.pattern.permute.xlu0 %v993
  %995 = vperm.xlu0 %994, %v972
  %v996 = vpop.permute.xlu0 %995
  %v997 = vlaneseq
  %v998 = vshrl.u32 %v997, 7
  %v999 = vadd.s32 %v998, 32
  %1000 = vset.pattern.permute.xlu0 %v999
  %1001 = vperm.xlu0 %1000, %v972
  %v1002 = vpop.permute.xlu0 %1001
  %v1003 = vlaneseq
  %v1004 = vshrl.u32 %v1003, 7
  %v1005 = vadd.s32 %v1004, 40
  %1006 = vset.pattern.permute.xlu0 %v1005
  %1007 = vperm.xlu0 %1006, %v972
  %v1008 = vpop.permute.xlu0 %1007
  %v1009 = vlaneseq
  %v1010 = vshrl.u32 %v1009, 7
  %v1011 = vadd.s32 %v1010, 48
  %1012 = vset.pattern.permute.xlu0 %v1011
  %1013 = vperm.xlu0 %1012, %v972
  %v1014 = vpop.permute.xlu0 %1013
  %v1015 = vlaneseq
  %v1016 = vshrl.u32 %v1015, 7
  %v1017 = vadd.s32 %v1016, 56
  %1018 = vset.pattern.permute.xlu0 %v1017
  %1019 = vperm.xlu0 %1018, %v972
  %v1020 = vpop.permute.xlu0 %1019
  %v1021 = vlaneseq
  %v1022 = vshrl.u32 %v1021, 7
  %v1023 = vadd.s32 %v1022, 64
  %1024 = vset.pattern.permute.xlu0 %v1023
  %1025 = vperm.xlu0 %1024, %v972
  %v1026 = vpop.permute.xlu0 %1025
  %v1027 = vlaneseq
  %v1028 = vshrl.u32 %v1027, 7
  %v1029 = vadd.s32 %v1028, 72
  %1030 = vset.pattern.permute.xlu0 %v1029
  %1031 = vperm.xlu0 %1030, %v972
  %v1032 = vpop.permute.xlu0 %1031
  %v1033 = vlaneseq
  %v1034 = vshrl.u32 %v1033, 7
  %v1035 = vadd.s32 %v1034, 80
  %1036 = vset.pattern.permute.xlu0 %v1035
  %1037 = vperm.xlu0 %1036, %v972
  %v1038 = vpop.permute.xlu0 %1037
  %v1039 = vlaneseq
  %v1040 = vshrl.u32 %v1039, 7
  %v1041 = vadd.s32 %v1040, 88
  %1042 = vset.pattern.permute.xlu0 %v1041
  %1043 = vperm.xlu0 %1042, %v972
  %v1044 = vpop.permute.xlu0 %1043
  %v1045 = vlaneseq
  %v1046 = vshrl.u32 %v1045, 7
  %v1047 = vadd.s32 %v1046, 96
  %1048 = vset.pattern.permute.xlu0 %v1047
  %1049 = vperm.xlu0 %1048, %v972
  %v1050 = vpop.permute.xlu0 %1049
  %v1051 = vlaneseq
  %v1052 = vshrl.u32 %v1051, 7
  %v1053 = vadd.s32 %v1052, 104
  %1054 = vset.pattern.permute.xlu0 %v1053
  %1055 = vperm.xlu0 %1054, %v972
  %v1056 = vpop.permute.xlu0 %1055
  %v1057 = vlaneseq
  %v1058 = vshrl.u32 %v1057, 7
  %v1059 = vadd.s32 %v1058, 112
  %1060 = vset.pattern.permute.xlu0 %v1059
  %1061 = vperm.xlu0 %1060, %v972
  %v1062 = vpop.permute.xlu0 %1061
  %v1063 = vlaneseq
  %v1064 = vshrl.u32 %v1063, 7
  %v1065 = vadd.s32 %v1064, 120
  %1066 = vset.pattern.permute.xlu0 %v1065
  %1067 = vperm.xlu0 %1066, %v972
  %v1068 = vpop.permute.xlu0 %1067
  %v1069 = vperm.slane %v439, 3
  %v1070 = vlaneseq
  %v1071 = vshrl.u32 %v1070, 7
  %1073 = vset.pattern.permute.xlu0 %v1071
  %1074 = vperm.xlu0 %1073, %v1069
  %v1075 = vpop.permute.xlu0 %1074
  %v1076 = vlaneseq
  %v1077 = vshrl.u32 %v1076, 7
  %v1078 = vadd.s32 %v1077, 8
  %1079 = vset.pattern.permute.xlu0 %v1078
  %1080 = vperm.xlu0 %1079, %v1069
  %v1081 = vpop.permute.xlu0 %1080
  %v1082 = vlaneseq
  %v1083 = vshrl.u32 %v1082, 7
  %v1084 = vadd.s32 %v1083, 16
  %1085 = vset.pattern.permute.xlu0 %v1084
  %1086 = vperm.xlu0 %1085, %v1069
  %v1087 = vpop.permute.xlu0 %1086
  %v1088 = vlaneseq
  %v1089 = vshrl.u32 %v1088, 7
  %v1090 = vadd.s32 %v1089, 24
  %1091 = vset.pattern.permute.xlu0 %v1090
  %1092 = vperm.xlu0 %1091, %v1069
  %v1093 = vpop.permute.xlu0 %1092
  %v1094 = vlaneseq
  %v1095 = vshrl.u32 %v1094, 7
  %v1096 = vadd.s32 %v1095, 32
  %1097 = vset.pattern.permute.xlu0 %v1096
  %1098 = vperm.xlu0 %1097, %v1069
  %v1099 = vpop.permute.xlu0 %1098
  %v1100 = vlaneseq
  %v1101 = vshrl.u32 %v1100, 7
  %v1102 = vadd.s32 %v1101, 40
  %1103 = vset.pattern.permute.xlu0 %v1102
  %1104 = vperm.xlu0 %1103, %v1069
  %v1105 = vpop.permute.xlu0 %1104
  %v1106 = vlaneseq
  %v1107 = vshrl.u32 %v1106, 7
  %v1108 = vadd.s32 %v1107, 48
  %1109 = vset.pattern.permute.xlu0 %v1108
  %1110 = vperm.xlu0 %1109, %v1069
  %v1111 = vpop.permute.xlu0 %1110
  %v1112 = vlaneseq
  %v1113 = vshrl.u32 %v1112, 7
  %v1114 = vadd.s32 %v1113, 56
  %1115 = vset.pattern.permute.xlu0 %v1114
  %1116 = vperm.xlu0 %1115, %v1069
  %v1117 = vpop.permute.xlu0 %1116
  %v1118 = vlaneseq
  %v1119 = vshrl.u32 %v1118, 7
  %v1120 = vadd.s32 %v1119, 64
  %1121 = vset.pattern.permute.xlu0 %v1120
  %1122 = vperm.xlu0 %1121, %v1069
  %v1123 = vpop.permute.xlu0 %1122
  %v1124 = vlaneseq
  %v1125 = vshrl.u32 %v1124, 7
  %v1126 = vadd.s32 %v1125, 72
  %1127 = vset.pattern.permute.xlu0 %v1126
  %1128 = vperm.xlu0 %1127, %v1069
  %v1129 = vpop.permute.xlu0 %1128
  %v1130 = vlaneseq
  %v1131 = vshrl.u32 %v1130, 7
  %v1132 = vadd.s32 %v1131, 80
  %1133 = vset.pattern.permute.xlu0 %v1132
  %1134 = vperm.xlu0 %1133, %v1069
  %v1135 = vpop.permute.xlu0 %1134
  %v1136 = vlaneseq
  %v1137 = vshrl.u32 %v1136, 7
  %v1138 = vadd.s32 %v1137, 88
  %1139 = vset.pattern.permute.xlu0 %v1138
  %1140 = vperm.xlu0 %1139, %v1069
  %v1141 = vpop.permute.xlu0 %1140
  %v1142 = vlaneseq
  %v1143 = vshrl.u32 %v1142, 7
  %v1144 = vadd.s32 %v1143, 96
  %1145 = vset.pattern.permute.xlu0 %v1144
  %1146 = vperm.xlu0 %1145, %v1069
  %v1147 = vpop.permute.xlu0 %1146
  %v1148 = vlaneseq
  %v1149 = vshrl.u32 %v1148, 7
  %v1150 = vadd.s32 %v1149, 104
  %1151 = vset.pattern.permute.xlu0 %v1150
  %1152 = vperm.xlu0 %1151, %v1069
  %v1153 = vpop.permute.xlu0 %1152
  %v1154 = vlaneseq
  %v1155 = vshrl.u32 %v1154, 7
  %v1156 = vadd.s32 %v1155, 112
  %1157 = vset.pattern.permute.xlu0 %v1156
  %1158 = vperm.xlu0 %1157, %v1069
  %v1159 = vpop.permute.xlu0 %1158
  %v1160 = vlaneseq
  %v1161 = vshrl.u32 %v1160, 7
  %v1162 = vadd.s32 %v1161, 120
  %1163 = vset.pattern.permute.xlu0 %v1162
  %1164 = vperm.xlu0 %1163, %v1069
  %v1165 = vpop.permute.xlu0 %1164
  %v1166 = vperm.slane %v440, 3
  %v1167 = vlaneseq
  %v1168 = vshrl.u32 %v1167, 7
  %1170 = vset.pattern.permute.xlu0 %v1168
  %1171 = vperm.xlu0 %1170, %v1166
  %v1172 = vpop.permute.xlu0 %1171
  %v1173 = vlaneseq
  %v1174 = vshrl.u32 %v1173, 7
  %v1175 = vadd.s32 %v1174, 8
  %1176 = vset.pattern.permute.xlu0 %v1175
  %1177 = vperm.xlu0 %1176, %v1166
  %v1178 = vpop.permute.xlu0 %1177
  %v1179 = vlaneseq
  %v1180 = vshrl.u32 %v1179, 7
  %v1181 = vadd.s32 %v1180, 16
  %1182 = vset.pattern.permute.xlu0 %v1181
  %1183 = vperm.xlu0 %1182, %v1166
  %v1184 = vpop.permute.xlu0 %1183
  %v1185 = vlaneseq
  %v1186 = vshrl.u32 %v1185, 7
  %v1187 = vadd.s32 %v1186, 24
  %1188 = vset.pattern.permute.xlu0 %v1187
  %1189 = vperm.xlu0 %1188, %v1166
  %v1190 = vpop.permute.xlu0 %1189
  %v1191 = vlaneseq
  %v1192 = vshrl.u32 %v1191, 7
  %v1193 = vadd.s32 %v1192, 32
  %1194 = vset.pattern.permute.xlu0 %v1193
  %1195 = vperm.xlu0 %1194, %v1166
  %v1196 = vpop.permute.xlu0 %1195
  %v1197 = vlaneseq
  %v1198 = vshrl.u32 %v1197, 7
  %v1199 = vadd.s32 %v1198, 40
  %1200 = vset.pattern.permute.xlu0 %v1199
  %1201 = vperm.xlu0 %1200, %v1166
  %v1202 = vpop.permute.xlu0 %1201
  %v1203 = vlaneseq
  %v1204 = vshrl.u32 %v1203, 7
  %v1205 = vadd.s32 %v1204, 48
  %1206 = vset.pattern.permute.xlu0 %v1205
  %1207 = vperm.xlu0 %1206, %v1166
  %v1208 = vpop.permute.xlu0 %1207
  %v1209 = vlaneseq
  %v1210 = vshrl.u32 %v1209, 7
  %v1211 = vadd.s32 %v1210, 56
  %1212 = vset.pattern.permute.xlu0 %v1211
  %1213 = vperm.xlu0 %1212, %v1166
  %v1214 = vpop.permute.xlu0 %1213
  %v1215 = vlaneseq
  %v1216 = vshrl.u32 %v1215, 7
  %v1217 = vadd.s32 %v1216, 64
  %1218 = vset.pattern.permute.xlu0 %v1217
  %1219 = vperm.xlu0 %1218, %v1166
  %v1220 = vpop.permute.xlu0 %1219
  %v1221 = vlaneseq
  %v1222 = vshrl.u32 %v1221, 7
  %v1223 = vadd.s32 %v1222, 72
  %1224 = vset.pattern.permute.xlu0 %v1223
  %1225 = vperm.xlu0 %1224, %v1166
  %v1226 = vpop.permute.xlu0 %1225
  %v1227 = vlaneseq
  %v1228 = vshrl.u32 %v1227, 7
  %v1229 = vadd.s32 %v1228, 80
  %1230 = vset.pattern.permute.xlu0 %v1229
  %1231 = vperm.xlu0 %1230, %v1166
  %v1232 = vpop.permute.xlu0 %1231
  %v1233 = vlaneseq
  %v1234 = vshrl.u32 %v1233, 7
  %v1235 = vadd.s32 %v1234, 88
  %1236 = vset.pattern.permute.xlu0 %v1235
  %1237 = vperm.xlu0 %1236, %v1166
  %v1238 = vpop.permute.xlu0 %1237
  %v1239 = vlaneseq
  %v1240 = vshrl.u32 %v1239, 7
  %v1241 = vadd.s32 %v1240, 96
  %1242 = vset.pattern.permute.xlu0 %v1241
  %1243 = vperm.xlu0 %1242, %v1166
  %v1244 = vpop.permute.xlu0 %1243
  %v1245 = vlaneseq
  %v1246 = vshrl.u32 %v1245, 7
  %v1247 = vadd.s32 %v1246, 104
  %1248 = vset.pattern.permute.xlu0 %v1247
  %1249 = vperm.xlu0 %1248, %v1166
  %v1250 = vpop.permute.xlu0 %1249
  %v1251 = vlaneseq
  %v1252 = vshrl.u32 %v1251, 7
  %v1253 = vadd.s32 %v1252, 112
  %1254 = vset.pattern.permute.xlu0 %v1253
  %1255 = vperm.xlu0 %1254, %v1166
  %v1256 = vpop.permute.xlu0 %1255
  %v1257 = vlaneseq
  %v1258 = vshrl.u32 %v1257, 7
  %v1259 = vadd.s32 %v1258, 120
  %1260 = vset.pattern.permute.xlu0 %v1259
  %1261 = vperm.xlu0 %1260, %v1166
  %v1262 = vpop.permute.xlu0 %1261
  %v1263 = vperm.slane %v439, 4
  %v1264 = vlaneseq
  %v1265 = vshrl.u32 %v1264, 7
  %1267 = vset.pattern.permute.xlu0 %v1265
  %1268 = vperm.xlu0 %1267, %v1263
  %v1269 = vpop.permute.xlu0 %1268
  %v1270 = vlaneseq
  %v1271 = vshrl.u32 %v1270, 7
  %v1272 = vadd.s32 %v1271, 8
  %1273 = vset.pattern.permute.xlu0 %v1272
  %1274 = vperm.xlu0 %1273, %v1263
  %v1275 = vpop.permute.xlu0 %1274
  %v1276 = vlaneseq
  %v1277 = vshrl.u32 %v1276, 7
  %v1278 = vadd.s32 %v1277, 16
  %1279 = vset.pattern.permute.xlu0 %v1278
  %1280 = vperm.xlu0 %1279, %v1263
  %v1281 = vpop.permute.xlu0 %1280
  %v1282 = vlaneseq
  %v1283 = vshrl.u32 %v1282, 7
  %v1284 = vadd.s32 %v1283, 24
  %1285 = vset.pattern.permute.xlu0 %v1284
  %1286 = vperm.xlu0 %1285, %v1263
  %v1287 = vpop.permute.xlu0 %1286
  %v1288 = vlaneseq
  %v1289 = vshrl.u32 %v1288, 7
  %v1290 = vadd.s32 %v1289, 32
  %1291 = vset.pattern.permute.xlu0 %v1290
  %1292 = vperm.xlu0 %1291, %v1263
  %v1293 = vpop.permute.xlu0 %1292
  %v1294 = vlaneseq
  %v1295 = vshrl.u32 %v1294, 7
  %v1296 = vadd.s32 %v1295, 40
  %1297 = vset.pattern.permute.xlu0 %v1296
  %1298 = vperm.xlu0 %1297, %v1263
  %v1299 = vpop.permute.xlu0 %1298
  %v1300 = vlaneseq
  %v1301 = vshrl.u32 %v1300, 7
  %v1302 = vadd.s32 %v1301, 48
  %1303 = vset.pattern.permute.xlu0 %v1302
  %1304 = vperm.xlu0 %1303, %v1263
  %v1305 = vpop.permute.xlu0 %1304
  %v1306 = vlaneseq
  %v1307 = vshrl.u32 %v1306, 7
  %v1308 = vadd.s32 %v1307, 56
  %1309 = vset.pattern.permute.xlu0 %v1308
  %1310 = vperm.xlu0 %1309, %v1263
  %v1311 = vpop.permute.xlu0 %1310
  %v1312 = vlaneseq
  %v1313 = vshrl.u32 %v1312, 7
  %v1314 = vadd.s32 %v1313, 64
  %1315 = vset.pattern.permute.xlu0 %v1314
  %1316 = vperm.xlu0 %1315, %v1263
  %v1317 = vpop.permute.xlu0 %1316
  %v1318 = vlaneseq
  %v1319 = vshrl.u32 %v1318, 7
  %v1320 = vadd.s32 %v1319, 72
  %1321 = vset.pattern.permute.xlu0 %v1320
  %1322 = vperm.xlu0 %1321, %v1263
  %v1323 = vpop.permute.xlu0 %1322
  %v1324 = vlaneseq
  %v1325 = vshrl.u32 %v1324, 7
  %v1326 = vadd.s32 %v1325, 80
  %1327 = vset.pattern.permute.xlu0 %v1326
  %1328 = vperm.xlu0 %1327, %v1263
  %v1329 = vpop.permute.xlu0 %1328
  %v1330 = vlaneseq
  %v1331 = vshrl.u32 %v1330, 7
  %v1332 = vadd.s32 %v1331, 88
  %1333 = vset.pattern.permute.xlu0 %v1332
  %1334 = vperm.xlu0 %1333, %v1263
  %v1335 = vpop.permute.xlu0 %1334
  %v1336 = vlaneseq
  %v1337 = vshrl.u32 %v1336, 7
  %v1338 = vadd.s32 %v1337, 96
  %1339 = vset.pattern.permute.xlu0 %v1338
  %1340 = vperm.xlu0 %1339, %v1263
  %v1341 = vpop.permute.xlu0 %1340
  %v1342 = vlaneseq
  %v1343 = vshrl.u32 %v1342, 7
  %v1344 = vadd.s32 %v1343, 104
  %1345 = vset.pattern.permute.xlu0 %v1344
  %1346 = vperm.xlu0 %1345, %v1263
  %v1347 = vpop.permute.xlu0 %1346
  %v1348 = vlaneseq
  %v1349 = vshrl.u32 %v1348, 7
  %v1350 = vadd.s32 %v1349, 112
  %1351 = vset.pattern.permute.xlu0 %v1350
  %1352 = vperm.xlu0 %1351, %v1263
  %v1353 = vpop.permute.xlu0 %1352
  %v1354 = vlaneseq
  %v1355 = vshrl.u32 %v1354, 7
  %v1356 = vadd.s32 %v1355, 120
  %1357 = vset.pattern.permute.xlu0 %v1356
  %1358 = vperm.xlu0 %1357, %v1263
  %v1359 = vpop.permute.xlu0 %1358
  %v1360 = vperm.slane %v440, 4
  %v1361 = vlaneseq
  %v1362 = vshrl.u32 %v1361, 7
  %1364 = vset.pattern.permute.xlu0 %v1362
  %1365 = vperm.xlu0 %1364, %v1360
  %v1366 = vpop.permute.xlu0 %1365
  %v1367 = vlaneseq
  %v1368 = vshrl.u32 %v1367, 7
  %v1369 = vadd.s32 %v1368, 8
  %1370 = vset.pattern.permute.xlu0 %v1369
  %1371 = vperm.xlu0 %1370, %v1360
  %v1372 = vpop.permute.xlu0 %1371
  %v1373 = vlaneseq
  %v1374 = vshrl.u32 %v1373, 7
  %v1375 = vadd.s32 %v1374, 16
  %1376 = vset.pattern.permute.xlu0 %v1375
  %1377 = vperm.xlu0 %1376, %v1360
  %v1378 = vpop.permute.xlu0 %1377
  %v1379 = vlaneseq
  %v1380 = vshrl.u32 %v1379, 7
  %v1381 = vadd.s32 %v1380, 24
  %1382 = vset.pattern.permute.xlu0 %v1381
  %1383 = vperm.xlu0 %1382, %v1360
  %v1384 = vpop.permute.xlu0 %1383
  %v1385 = vlaneseq
  %v1386 = vshrl.u32 %v1385, 7
  %v1387 = vadd.s32 %v1386, 32
  %1388 = vset.pattern.permute.xlu0 %v1387
  %1389 = vperm.xlu0 %1388, %v1360
  %v1390 = vpop.permute.xlu0 %1389
  %v1391 = vlaneseq
  %v1392 = vshrl.u32 %v1391, 7
  %v1393 = vadd.s32 %v1392, 40
  %1394 = vset.pattern.permute.xlu0 %v1393
  %1395 = vperm.xlu0 %1394, %v1360
  %v1396 = vpop.permute.xlu0 %1395
  %v1397 = vlaneseq
  %v1398 = vshrl.u32 %v1397, 7
  %v1399 = vadd.s32 %v1398, 48
  %1400 = vset.pattern.permute.xlu0 %v1399
  %1401 = vperm.xlu0 %1400, %v1360
  %v1402 = vpop.permute.xlu0 %1401
  %v1403 = vlaneseq
  %v1404 = vshrl.u32 %v1403, 7
  %v1405 = vadd.s32 %v1404, 56
  %1406 = vset.pattern.permute.xlu0 %v1405
  %1407 = vperm.xlu0 %1406, %v1360
  %v1408 = vpop.permute.xlu0 %1407
  %v1409 = vlaneseq
  %v1410 = vshrl.u32 %v1409, 7
  %v1411 = vadd.s32 %v1410, 64
  %1412 = vset.pattern.permute.xlu0 %v1411
  %1413 = vperm.xlu0 %1412, %v1360
  %v1414 = vpop.permute.xlu0 %1413
  %v1415 = vlaneseq
  %v1416 = vshrl.u32 %v1415, 7
  %v1417 = vadd.s32 %v1416, 72
  %1418 = vset.pattern.permute.xlu0 %v1417
  %1419 = vperm.xlu0 %1418, %v1360
  %v1420 = vpop.permute.xlu0 %1419
  %v1421 = vlaneseq
  %v1422 = vshrl.u32 %v1421, 7
  %v1423 = vadd.s32 %v1422, 80
  %1424 = vset.pattern.permute.xlu0 %v1423
  %1425 = vperm.xlu0 %1424, %v1360
  %v1426 = vpop.permute.xlu0 %1425
  %v1427 = vlaneseq
  %v1428 = vshrl.u32 %v1427, 7
  %v1429 = vadd.s32 %v1428, 88
  %1430 = vset.pattern.permute.xlu0 %v1429
  %1431 = vperm.xlu0 %1430, %v1360
  %v1432 = vpop.permute.xlu0 %1431
  %v1433 = vlaneseq
  %v1434 = vshrl.u32 %v1433, 7
  %v1435 = vadd.s32 %v1434, 96
  %1436 = vset.pattern.permute.xlu0 %v1435
  %1437 = vperm.xlu0 %1436, %v1360
  %v1438 = vpop.permute.xlu0 %1437
  %v1439 = vlaneseq
  %v1440 = vshrl.u32 %v1439, 7
  %v1441 = vadd.s32 %v1440, 104
  %1442 = vset.pattern.permute.xlu0 %v1441
  %1443 = vperm.xlu0 %1442, %v1360
  %v1444 = vpop.permute.xlu0 %1443
  %v1445 = vlaneseq
  %v1446 = vshrl.u32 %v1445, 7
  %v1447 = vadd.s32 %v1446, 112
  %1448 = vset.pattern.permute.xlu0 %v1447
  %1449 = vperm.xlu0 %1448, %v1360
  %v1450 = vpop.permute.xlu0 %1449
  %v1451 = vlaneseq
  %v1452 = vshrl.u32 %v1451, 7
  %v1453 = vadd.s32 %v1452, 120
  %1454 = vset.pattern.permute.xlu0 %v1453
  %1455 = vperm.xlu0 %1454, %v1360
  %v1456 = vpop.permute.xlu0 %1455
  %v1457 = vperm.slane %v439, 5
  %v1458 = vlaneseq
  %v1459 = vshrl.u32 %v1458, 7
  %1461 = vset.pattern.permute.xlu0 %v1459
  %1462 = vperm.xlu0 %1461, %v1457
  %v1463 = vpop.permute.xlu0 %1462
  %v1464 = vlaneseq
  %v1465 = vshrl.u32 %v1464, 7
  %v1466 = vadd.s32 %v1465, 8
  %1467 = vset.pattern.permute.xlu0 %v1466
  %1468 = vperm.xlu0 %1467, %v1457
  %v1469 = vpop.permute.xlu0 %1468
  %v1470 = vlaneseq
  %v1471 = vshrl.u32 %v1470, 7
  %v1472 = vadd.s32 %v1471, 16
  %1473 = vset.pattern.permute.xlu0 %v1472
  %1474 = vperm.xlu0 %1473, %v1457
  %v1475 = vpop.permute.xlu0 %1474
  %v1476 = vlaneseq
  %v1477 = vshrl.u32 %v1476, 7
  %v1478 = vadd.s32 %v1477, 24
  %1479 = vset.pattern.permute.xlu0 %v1478
  %1480 = vperm.xlu0 %1479, %v1457
  %v1481 = vpop.permute.xlu0 %1480
  %v1482 = vlaneseq
  %v1483 = vshrl.u32 %v1482, 7
  %v1484 = vadd.s32 %v1483, 32
  %1485 = vset.pattern.permute.xlu0 %v1484
  %1486 = vperm.xlu0 %1485, %v1457
  %v1487 = vpop.permute.xlu0 %1486
  %v1488 = vlaneseq
  %v1489 = vshrl.u32 %v1488, 7
  %v1490 = vadd.s32 %v1489, 40
  %1491 = vset.pattern.permute.xlu0 %v1490
  %1492 = vperm.xlu0 %1491, %v1457
  %v1493 = vpop.permute.xlu0 %1492
  %v1494 = vlaneseq
  %v1495 = vshrl.u32 %v1494, 7
  %v1496 = vadd.s32 %v1495, 48
  %1497 = vset.pattern.permute.xlu0 %v1496
  %1498 = vperm.xlu0 %1497, %v1457
  %v1499 = vpop.permute.xlu0 %1498
  %v1500 = vlaneseq
  %v1501 = vshrl.u32 %v1500, 7
  %v1502 = vadd.s32 %v1501, 56
  %1503 = vset.pattern.permute.xlu0 %v1502
  %1504 = vperm.xlu0 %1503, %v1457
  %v1505 = vpop.permute.xlu0 %1504
  %v1506 = vlaneseq
  %v1507 = vshrl.u32 %v1506, 7
  %v1508 = vadd.s32 %v1507, 64
  %1509 = vset.pattern.permute.xlu0 %v1508
  %1510 = vperm.xlu0 %1509, %v1457
  %v1511 = vpop.permute.xlu0 %1510
  %v1512 = vlaneseq
  %v1513 = vshrl.u32 %v1512, 7
  %v1514 = vadd.s32 %v1513, 72
  %1515 = vset.pattern.permute.xlu0 %v1514
  %1516 = vperm.xlu0 %1515, %v1457
  %v1517 = vpop.permute.xlu0 %1516
  %v1518 = vlaneseq
  %v1519 = vshrl.u32 %v1518, 7
  %v1520 = vadd.s32 %v1519, 80
  %1521 = vset.pattern.permute.xlu0 %v1520
  %1522 = vperm.xlu0 %1521, %v1457
  %v1523 = vpop.permute.xlu0 %1522
  %v1524 = vlaneseq
  %v1525 = vshrl.u32 %v1524, 7
  %v1526 = vadd.s32 %v1525, 88
  %1527 = vset.pattern.permute.xlu0 %v1526
  %1528 = vperm.xlu0 %1527, %v1457
  %v1529 = vpop.permute.xlu0 %1528
  %v1530 = vlaneseq
  %v1531 = vshrl.u32 %v1530, 7
  %v1532 = vadd.s32 %v1531, 96
  %1533 = vset.pattern.permute.xlu0 %v1532
  %1534 = vperm.xlu0 %1533, %v1457
  %v1535 = vpop.permute.xlu0 %1534
  %v1536 = vlaneseq
  %v1537 = vshrl.u32 %v1536, 7
  %v1538 = vadd.s32 %v1537, 104
  %1539 = vset.pattern.permute.xlu0 %v1538
  %1540 = vperm.xlu0 %1539, %v1457
  %v1541 = vpop.permute.xlu0 %1540
  %v1542 = vlaneseq
  %v1543 = vshrl.u32 %v1542, 7
  %v1544 = vadd.s32 %v1543, 112
  %1545 = vset.pattern.permute.xlu0 %v1544
  %1546 = vperm.xlu0 %1545, %v1457
  %v1547 = vpop.permute.xlu0 %1546
  %v1548 = vlaneseq
  %v1549 = vshrl.u32 %v1548, 7
  %v1550 = vadd.s32 %v1549, 120
  %1551 = vset.pattern.permute.xlu0 %v1550
  %1552 = vperm.xlu0 %1551, %v1457
  %v1553 = vpop.permute.xlu0 %1552
  %v1554 = vperm.slane %v440, 5
  %v1555 = vlaneseq
  %v1556 = vshrl.u32 %v1555, 7
  %1558 = vset.pattern.permute.xlu0 %v1556
  %1559 = vperm.xlu0 %1558, %v1554
  %v1560 = vpop.permute.xlu0 %1559
  %v1561 = vlaneseq
  %v1562 = vshrl.u32 %v1561, 7
  %v1563 = vadd.s32 %v1562, 8
  %1564 = vset.pattern.permute.xlu0 %v1563
  %1565 = vperm.xlu0 %1564, %v1554
  %v1566 = vpop.permute.xlu0 %1565
  %v1567 = vlaneseq
  %v1568 = vshrl.u32 %v1567, 7
  %v1569 = vadd.s32 %v1568, 16
  %1570 = vset.pattern.permute.xlu0 %v1569
  %1571 = vperm.xlu0 %1570, %v1554
  %v1572 = vpop.permute.xlu0 %1571
  %v1573 = vlaneseq
  %v1574 = vshrl.u32 %v1573, 7
  %v1575 = vadd.s32 %v1574, 24
  %1576 = vset.pattern.permute.xlu0 %v1575
  %1577 = vperm.xlu0 %1576, %v1554
  %v1578 = vpop.permute.xlu0 %1577
  %v1579 = vlaneseq
  %v1580 = vshrl.u32 %v1579, 7
  %v1581 = vadd.s32 %v1580, 32
  %1582 = vset.pattern.permute.xlu0 %v1581
  %1583 = vperm.xlu0 %1582, %v1554
  %v1584 = vpop.permute.xlu0 %1583
  %v1585 = vlaneseq
  %v1586 = vshrl.u32 %v1585, 7
  %v1587 = vadd.s32 %v1586, 40
  %1588 = vset.pattern.permute.xlu0 %v1587
  %1589 = vperm.xlu0 %1588, %v1554
  %v1590 = vpop.permute.xlu0 %1589
  %v1591 = vlaneseq
  %v1592 = vshrl.u32 %v1591, 7
  %v1593 = vadd.s32 %v1592, 48
  %1594 = vset.pattern.permute.xlu0 %v1593
  %1595 = vperm.xlu0 %1594, %v1554
  %v1596 = vpop.permute.xlu0 %1595
  %v1597 = vlaneseq
  %v1598 = vshrl.u32 %v1597, 7
  %v1599 = vadd.s32 %v1598, 56
  %1600 = vset.pattern.permute.xlu0 %v1599
  %1601 = vperm.xlu0 %1600, %v1554
  %v1602 = vpop.permute.xlu0 %1601
  %v1603 = vlaneseq
  %v1604 = vshrl.u32 %v1603, 7
  %v1605 = vadd.s32 %v1604, 64
  %1606 = vset.pattern.permute.xlu0 %v1605
  %1607 = vperm.xlu0 %1606, %v1554
  %v1608 = vpop.permute.xlu0 %1607
  %v1609 = vlaneseq
  %v1610 = vshrl.u32 %v1609, 7
  %v1611 = vadd.s32 %v1610, 72
  %1612 = vset.pattern.permute.xlu0 %v1611
  %1613 = vperm.xlu0 %1612, %v1554
  %v1614 = vpop.permute.xlu0 %1613
  %v1615 = vlaneseq
  %v1616 = vshrl.u32 %v1615, 7
  %v1617 = vadd.s32 %v1616, 80
  %1618 = vset.pattern.permute.xlu0 %v1617
  %1619 = vperm.xlu0 %1618, %v1554
  %v1620 = vpop.permute.xlu0 %1619
  %v1621 = vlaneseq
  %v1622 = vshrl.u32 %v1621, 7
  %v1623 = vadd.s32 %v1622, 88
  %1624 = vset.pattern.permute.xlu0 %v1623
  %1625 = vperm.xlu0 %1624, %v1554
  %v1626 = vpop.permute.xlu0 %1625
  %v1627 = vlaneseq
  %v1628 = vshrl.u32 %v1627, 7
  %v1629 = vadd.s32 %v1628, 96
  %1630 = vset.pattern.permute.xlu0 %v1629
  %1631 = vperm.xlu0 %1630, %v1554
  %v1632 = vpop.permute.xlu0 %1631
  %v1633 = vlaneseq
  %v1634 = vshrl.u32 %v1633, 7
  %v1635 = vadd.s32 %v1634, 104
  %1636 = vset.pattern.permute.xlu0 %v1635
  %1637 = vperm.xlu0 %1636, %v1554
  %v1638 = vpop.permute.xlu0 %1637
  %v1639 = vlaneseq
  %v1640 = vshrl.u32 %v1639, 7
  %v1641 = vadd.s32 %v1640, 112
  %1642 = vset.pattern.permute.xlu0 %v1641
  %1643 = vperm.xlu0 %1642, %v1554
  %v1644 = vpop.permute.xlu0 %1643
  %v1645 = vlaneseq
  %v1646 = vshrl.u32 %v1645, 7
  %v1647 = vadd.s32 %v1646, 120
  %1648 = vset.pattern.permute.xlu0 %v1647
  %1649 = vperm.xlu0 %1648, %v1554
  %v1650 = vpop.permute.xlu0 %1649
  %v1651 = vperm.slane %v439, 6
  %v1652 = vlaneseq
  %v1653 = vshrl.u32 %v1652, 7
  %1655 = vset.pattern.permute.xlu0 %v1653
  %1656 = vperm.xlu0 %1655, %v1651
  %v1657 = vpop.permute.xlu0 %1656
  %v1658 = vlaneseq
  %v1659 = vshrl.u32 %v1658, 7
  %v1660 = vadd.s32 %v1659, 8
  %1661 = vset.pattern.permute.xlu0 %v1660
  %1662 = vperm.xlu0 %1661, %v1651
  %v1663 = vpop.permute.xlu0 %1662
  %v1664 = vlaneseq
  %v1665 = vshrl.u32 %v1664, 7
  %v1666 = vadd.s32 %v1665, 16
  %1667 = vset.pattern.permute.xlu0 %v1666
  %1668 = vperm.xlu0 %1667, %v1651
  %v1669 = vpop.permute.xlu0 %1668
  %v1670 = vlaneseq
  %v1671 = vshrl.u32 %v1670, 7
  %v1672 = vadd.s32 %v1671, 24
  %1673 = vset.pattern.permute.xlu0 %v1672
  %1674 = vperm.xlu0 %1673, %v1651
  %v1675 = vpop.permute.xlu0 %1674
  %v1676 = vlaneseq
  %v1677 = vshrl.u32 %v1676, 7
  %v1678 = vadd.s32 %v1677, 32
  %1679 = vset.pattern.permute.xlu0 %v1678
  %1680 = vperm.xlu0 %1679, %v1651
  %v1681 = vpop.permute.xlu0 %1680
  %v1682 = vlaneseq
  %v1683 = vshrl.u32 %v1682, 7
  %v1684 = vadd.s32 %v1683, 40
  %1685 = vset.pattern.permute.xlu0 %v1684
  %1686 = vperm.xlu0 %1685, %v1651
  %v1687 = vpop.permute.xlu0 %1686
  %v1688 = vlaneseq
  %v1689 = vshrl.u32 %v1688, 7
  %v1690 = vadd.s32 %v1689, 48
  %1691 = vset.pattern.permute.xlu0 %v1690
  %1692 = vperm.xlu0 %1691, %v1651
  %v1693 = vpop.permute.xlu0 %1692
  %v1694 = vlaneseq
  %v1695 = vshrl.u32 %v1694, 7
  %v1696 = vadd.s32 %v1695, 56
  %1697 = vset.pattern.permute.xlu0 %v1696
  %1698 = vperm.xlu0 %1697, %v1651
  %v1699 = vpop.permute.xlu0 %1698
  %v1700 = vlaneseq
  %v1701 = vshrl.u32 %v1700, 7
  %v1702 = vadd.s32 %v1701, 64
  %1703 = vset.pattern.permute.xlu0 %v1702
  %1704 = vperm.xlu0 %1703, %v1651
  %v1705 = vpop.permute.xlu0 %1704
  %v1706 = vlaneseq
  %v1707 = vshrl.u32 %v1706, 7
  %v1708 = vadd.s32 %v1707, 72
  %1709 = vset.pattern.permute.xlu0 %v1708
  %1710 = vperm.xlu0 %1709, %v1651
  %v1711 = vpop.permute.xlu0 %1710
  %v1712 = vlaneseq
  %v1713 = vshrl.u32 %v1712, 7
  %v1714 = vadd.s32 %v1713, 80
  %1715 = vset.pattern.permute.xlu0 %v1714
  %1716 = vperm.xlu0 %1715, %v1651
  %v1717 = vpop.permute.xlu0 %1716
  %v1718 = vlaneseq
  %v1719 = vshrl.u32 %v1718, 7
  %v1720 = vadd.s32 %v1719, 88
  %1721 = vset.pattern.permute.xlu0 %v1720
  %1722 = vperm.xlu0 %1721, %v1651
  %v1723 = vpop.permute.xlu0 %1722
  %v1724 = vlaneseq
  %v1725 = vshrl.u32 %v1724, 7
  %v1726 = vadd.s32 %v1725, 96
  %1727 = vset.pattern.permute.xlu0 %v1726
  %1728 = vperm.xlu0 %1727, %v1651
  %v1729 = vpop.permute.xlu0 %1728
  %v1730 = vlaneseq
  %v1731 = vshrl.u32 %v1730, 7
  %v1732 = vadd.s32 %v1731, 104
  %1733 = vset.pattern.permute.xlu0 %v1732
  %1734 = vperm.xlu0 %1733, %v1651
  %v1735 = vpop.permute.xlu0 %1734
  %v1736 = vlaneseq
  %v1737 = vshrl.u32 %v1736, 7
  %v1738 = vadd.s32 %v1737, 112
  %1739 = vset.pattern.permute.xlu0 %v1738
  %1740 = vperm.xlu0 %1739, %v1651
  %v1741 = vpop.permute.xlu0 %1740
  %v1742 = vlaneseq
  %v1743 = vshrl.u32 %v1742, 7
  %v1744 = vadd.s32 %v1743, 120
  %1745 = vset.pattern.permute.xlu0 %v1744
  %1746 = vperm.xlu0 %1745, %v1651
  %v1747 = vpop.permute.xlu0 %1746
  %v1748 = vperm.slane %v440, 6
  %v1749 = vlaneseq
  %v1750 = vshrl.u32 %v1749, 7
  %1752 = vset.pattern.permute.xlu0 %v1750
  %1753 = vperm.xlu0 %1752, %v1748
  %v1754 = vpop.permute.xlu0 %1753
  %v1755 = vlaneseq
  %v1756 = vshrl.u32 %v1755, 7
  %v1757 = vadd.s32 %v1756, 8
  %1758 = vset.pattern.permute.xlu0 %v1757
  %1759 = vperm.xlu0 %1758, %v1748
  %v1760 = vpop.permute.xlu0 %1759
  %v1761 = vlaneseq
  %v1762 = vshrl.u32 %v1761, 7
  %v1763 = vadd.s32 %v1762, 16
  %1764 = vset.pattern.permute.xlu0 %v1763
  %1765 = vperm.xlu0 %1764, %v1748
  %v1766 = vpop.permute.xlu0 %1765
  %v1767 = vlaneseq
  %v1768 = vshrl.u32 %v1767, 7
  %v1769 = vadd.s32 %v1768, 24
  %1770 = vset.pattern.permute.xlu0 %v1769
  %1771 = vperm.xlu0 %1770, %v1748
  %v1772 = vpop.permute.xlu0 %1771
  %v1773 = vlaneseq
  %v1774 = vshrl.u32 %v1773, 7
  %v1775 = vadd.s32 %v1774, 32
  %1776 = vset.pattern.permute.xlu0 %v1775
  %1777 = vperm.xlu0 %1776, %v1748
  %v1778 = vpop.permute.xlu0 %1777
  %v1779 = vlaneseq
  %v1780 = vshrl.u32 %v1779, 7
  %v1781 = vadd.s32 %v1780, 40
  %1782 = vset.pattern.permute.xlu0 %v1781
  %1783 = vperm.xlu0 %1782, %v1748
  %v1784 = vpop.permute.xlu0 %1783
  %v1785 = vlaneseq
  %v1786 = vshrl.u32 %v1785, 7
  %v1787 = vadd.s32 %v1786, 48
  %1788 = vset.pattern.permute.xlu0 %v1787
  %1789 = vperm.xlu0 %1788, %v1748
  %v1790 = vpop.permute.xlu0 %1789
  %v1791 = vlaneseq
  %v1792 = vshrl.u32 %v1791, 7
  %v1793 = vadd.s32 %v1792, 56
  %1794 = vset.pattern.permute.xlu0 %v1793
  %1795 = vperm.xlu0 %1794, %v1748
  %v1796 = vpop.permute.xlu0 %1795
  %v1797 = vlaneseq
  %v1798 = vshrl.u32 %v1797, 7
  %v1799 = vadd.s32 %v1798, 64
  %1800 = vset.pattern.permute.xlu0 %v1799
  %1801 = vperm.xlu0 %1800, %v1748
  %v1802 = vpop.permute.xlu0 %1801
  %v1803 = vlaneseq
  %v1804 = vshrl.u32 %v1803, 7
  %v1805 = vadd.s32 %v1804, 72
  %1806 = vset.pattern.permute.xlu0 %v1805
  %1807 = vperm.xlu0 %1806, %v1748
  %v1808 = vpop.permute.xlu0 %1807
  %v1809 = vlaneseq
  %v1810 = vshrl.u32 %v1809, 7
  %v1811 = vadd.s32 %v1810, 80
  %1812 = vset.pattern.permute.xlu0 %v1811
  %1813 = vperm.xlu0 %1812, %v1748
  %v1814 = vpop.permute.xlu0 %1813
  %v1815 = vlaneseq
  %v1816 = vshrl.u32 %v1815, 7
  %v1817 = vadd.s32 %v1816, 88
  %1818 = vset.pattern.permute.xlu0 %v1817
  %1819 = vperm.xlu0 %1818, %v1748
  %v1820 = vpop.permute.xlu0 %1819
  %v1821 = vlaneseq
  %v1822 = vshrl.u32 %v1821, 7
  %v1823 = vadd.s32 %v1822, 96
  %1824 = vset.pattern.permute.xlu0 %v1823
  %1825 = vperm.xlu0 %1824, %v1748
  %v1826 = vpop.permute.xlu0 %1825
  %v1827 = vlaneseq
  %v1828 = vshrl.u32 %v1827, 7
  %v1829 = vadd.s32 %v1828, 104
  %1830 = vset.pattern.permute.xlu0 %v1829
  %1831 = vperm.xlu0 %1830, %v1748
  %v1832 = vpop.permute.xlu0 %1831
  %v1833 = vlaneseq
  %v1834 = vshrl.u32 %v1833, 7
  %v1835 = vadd.s32 %v1834, 112
  %1836 = vset.pattern.permute.xlu0 %v1835
  %1837 = vperm.xlu0 %1836, %v1748
  %v1838 = vpop.permute.xlu0 %1837
  %v1839 = vlaneseq
  %v1840 = vshrl.u32 %v1839, 7
  %v1841 = vadd.s32 %v1840, 120
  %1842 = vset.pattern.permute.xlu0 %v1841
  %1843 = vperm.xlu0 %1842, %v1748
  %v1844 = vpop.permute.xlu0 %1843
  %v1845 = vperm.slane %v439, 7
  %v1846 = vlaneseq
  %v1847 = vshrl.u32 %v1846, 7
  %1849 = vset.pattern.permute.xlu0 %v1847
  %1850 = vperm.xlu0 %1849, %v1845
  %v1851 = vpop.permute.xlu0 %1850
  %v1852 = vlaneseq
  %v1853 = vshrl.u32 %v1852, 7
  %v1854 = vadd.s32 %v1853, 8
  %1855 = vset.pattern.permute.xlu0 %v1854
  %1856 = vperm.xlu0 %1855, %v1845
  %v1857 = vpop.permute.xlu0 %1856
  %v1858 = vlaneseq
  %v1859 = vshrl.u32 %v1858, 7
  %v1860 = vadd.s32 %v1859, 16
  %1861 = vset.pattern.permute.xlu0 %v1860
  %1862 = vperm.xlu0 %1861, %v1845
  %v1863 = vpop.permute.xlu0 %1862
  %v1864 = vlaneseq
  %v1865 = vshrl.u32 %v1864, 7
  %v1866 = vadd.s32 %v1865, 24
  %1867 = vset.pattern.permute.xlu0 %v1866
  %1868 = vperm.xlu0 %1867, %v1845
  %v1869 = vpop.permute.xlu0 %1868
  %v1870 = vlaneseq
  %v1871 = vshrl.u32 %v1870, 7
  %v1872 = vadd.s32 %v1871, 32
  %1873 = vset.pattern.permute.xlu0 %v1872
  %1874 = vperm.xlu0 %1873, %v1845
  %v1875 = vpop.permute.xlu0 %1874
  %v1876 = vlaneseq
  %v1877 = vshrl.u32 %v1876, 7
  %v1878 = vadd.s32 %v1877, 40
  %1879 = vset.pattern.permute.xlu0 %v1878
  %1880 = vperm.xlu0 %1879, %v1845
  %v1881 = vpop.permute.xlu0 %1880
  %v1882 = vlaneseq
  %v1883 = vshrl.u32 %v1882, 7
  %v1884 = vadd.s32 %v1883, 48
  %1885 = vset.pattern.permute.xlu0 %v1884
  %1886 = vperm.xlu0 %1885, %v1845
  %v1887 = vpop.permute.xlu0 %1886
  %v1888 = vlaneseq
  %v1889 = vshrl.u32 %v1888, 7
  %v1890 = vadd.s32 %v1889, 56
  %1891 = vset.pattern.permute.xlu0 %v1890
  %1892 = vperm.xlu0 %1891, %v1845
  %v1893 = vpop.permute.xlu0 %1892
  %v1894 = vlaneseq
  %v1895 = vshrl.u32 %v1894, 7
  %v1896 = vadd.s32 %v1895, 64
  %1897 = vset.pattern.permute.xlu0 %v1896
  %1898 = vperm.xlu0 %1897, %v1845
  %v1899 = vpop.permute.xlu0 %1898
  %v1900 = vlaneseq
  %v1901 = vshrl.u32 %v1900, 7
  %v1902 = vadd.s32 %v1901, 72
  %1903 = vset.pattern.permute.xlu0 %v1902
  %1904 = vperm.xlu0 %1903, %v1845
  %v1905 = vpop.permute.xlu0 %1904
  %v1906 = vlaneseq
  %v1907 = vshrl.u32 %v1906, 7
  %v1908 = vadd.s32 %v1907, 80
  %1909 = vset.pattern.permute.xlu0 %v1908
  %1910 = vperm.xlu0 %1909, %v1845
  %v1911 = vpop.permute.xlu0 %1910
  %v1912 = vlaneseq
  %v1913 = vshrl.u32 %v1912, 7
  %v1914 = vadd.s32 %v1913, 88
  %1915 = vset.pattern.permute.xlu0 %v1914
  %1916 = vperm.xlu0 %1915, %v1845
  %v1917 = vpop.permute.xlu0 %1916
  %v1918 = vlaneseq
  %v1919 = vshrl.u32 %v1918, 7
  %v1920 = vadd.s32 %v1919, 96
  %1921 = vset.pattern.permute.xlu0 %v1920
  %1922 = vperm.xlu0 %1921, %v1845
  %v1923 = vpop.permute.xlu0 %1922
  %v1924 = vlaneseq
  %v1925 = vshrl.u32 %v1924, 7
  %v1926 = vadd.s32 %v1925, 104
  %1927 = vset.pattern.permute.xlu0 %v1926
  %1928 = vperm.xlu0 %1927, %v1845
  %v1929 = vpop.permute.xlu0 %1928
  %v1930 = vlaneseq
  %v1931 = vshrl.u32 %v1930, 7
  %v1932 = vadd.s32 %v1931, 112
  %1933 = vset.pattern.permute.xlu0 %v1932
  %1934 = vperm.xlu0 %1933, %v1845
  %v1935 = vpop.permute.xlu0 %1934
  %v1936 = vlaneseq
  %v1937 = vshrl.u32 %v1936, 7
  %v1938 = vadd.s32 %v1937, 120
  %1939 = vset.pattern.permute.xlu0 %v1938
  %1940 = vperm.xlu0 %1939, %v1845
  %v1941 = vpop.permute.xlu0 %1940
  %v1942 = vperm.slane %v440, 7
  %v1943 = vlaneseq
  %v1944 = vshrl.u32 %v1943, 7
  %1946 = vset.pattern.permute.xlu0 %v1944
  %1947 = vperm.xlu0 %1946, %v1942
  %v1948 = vpop.permute.xlu0 %1947
  %v1949 = vlaneseq
  %v1950 = vshrl.u32 %v1949, 7
  %v1951 = vadd.s32 %v1950, 8
  %1952 = vset.pattern.permute.xlu0 %v1951
  %1953 = vperm.xlu0 %1952, %v1942
  %v1954 = vpop.permute.xlu0 %1953
  %v1955 = vlaneseq
  %v1956 = vshrl.u32 %v1955, 7
  %v1957 = vadd.s32 %v1956, 16
  %1958 = vset.pattern.permute.xlu0 %v1957
  %1959 = vperm.xlu0 %1958, %v1942
  %v1960 = vpop.permute.xlu0 %1959
  %v1961 = vlaneseq
  %v1962 = vshrl.u32 %v1961, 7
  %v1963 = vadd.s32 %v1962, 24
  %1964 = vset.pattern.permute.xlu0 %v1963
  %1965 = vperm.xlu0 %1964, %v1942
  %v1966 = vpop.permute.xlu0 %1965
  %v1967 = vlaneseq
  %v1968 = vshrl.u32 %v1967, 7
  %v1969 = vadd.s32 %v1968, 32
  %1970 = vset.pattern.permute.xlu0 %v1969
  %1971 = vperm.xlu0 %1970, %v1942
  %v1972 = vpop.permute.xlu0 %1971
  %v1973 = vlaneseq
  %v1974 = vshrl.u32 %v1973, 7
  %v1975 = vadd.s32 %v1974, 40
  %1976 = vset.pattern.permute.xlu0 %v1975
  %1977 = vperm.xlu0 %1976, %v1942
  %v1978 = vpop.permute.xlu0 %1977
  %v1979 = vlaneseq
  %v1980 = vshrl.u32 %v1979, 7
  %v1981 = vadd.s32 %v1980, 48
  %1982 = vset.pattern.permute.xlu0 %v1981
  %1983 = vperm.xlu0 %1982, %v1942
  %v1984 = vpop.permute.xlu0 %1983
  %v1985 = vlaneseq
  %v1986 = vshrl.u32 %v1985, 7
  %v1987 = vadd.s32 %v1986, 56
  %1988 = vset.pattern.permute.xlu0 %v1987
  %1989 = vperm.xlu0 %1988, %v1942
  %v1990 = vpop.permute.xlu0 %1989
  %v1991 = vlaneseq
  %v1992 = vshrl.u32 %v1991, 7
  %v1993 = vadd.s32 %v1992, 64
  %1994 = vset.pattern.permute.xlu0 %v1993
  %1995 = vperm.xlu0 %1994, %v1942
  %v1996 = vpop.permute.xlu0 %1995
  %v1997 = vlaneseq
  %v1998 = vshrl.u32 %v1997, 7
  %v1999 = vadd.s32 %v1998, 72
  %2000 = vset.pattern.permute.xlu0 %v1999
  %2001 = vperm.xlu0 %2000, %v1942
  %v2002 = vpop.permute.xlu0 %2001
  %v2003 = vlaneseq
  %v2004 = vshrl.u32 %v2003, 7
  %v2005 = vadd.s32 %v2004, 80
  %2006 = vset.pattern.permute.xlu0 %v2005
  %2007 = vperm.xlu0 %2006, %v1942
  %v2008 = vpop.permute.xlu0 %2007
  %v2009 = vlaneseq
  %v2010 = vshrl.u32 %v2009, 7
  %v2011 = vadd.s32 %v2010, 88
  %2012 = vset.pattern.permute.xlu0 %v2011
  %2013 = vperm.xlu0 %2012, %v1942
  %v2014 = vpop.permute.xlu0 %2013
  %v2015 = vlaneseq
  %v2016 = vshrl.u32 %v2015, 7
  %v2017 = vadd.s32 %v2016, 96
  %2018 = vset.pattern.permute.xlu0 %v2017
  %2019 = vperm.xlu0 %2018, %v1942
  %v2020 = vpop.permute.xlu0 %2019
  %v2021 = vlaneseq
  %v2022 = vshrl.u32 %v2021, 7
  %v2023 = vadd.s32 %v2022, 104
  %2024 = vset.pattern.permute.xlu0 %v2023
  %2025 = vperm.xlu0 %2024, %v1942
  %v2026 = vpop.permute.xlu0 %2025
  %v2027 = vlaneseq
  %v2028 = vshrl.u32 %v2027, 7
  %v2029 = vadd.s32 %v2028, 112
  %2030 = vset.pattern.permute.xlu0 %v2029
  %2031 = vperm.xlu0 %2030, %v1942
  %v2032 = vpop.permute.xlu0 %2031
  %v2033 = vlaneseq
  %v2034 = vshrl.u32 %v2033, 7
  %v2035 = vadd.s32 %v2034, 120
  %2036 = vset.pattern.permute.xlu0 %v2035
  %2037 = vperm.xlu0 %2036, %v1942
  %v2038 = vpop.permute.xlu0 %2037
  %v2039 = vperm.slane %v472, 0
  %v2040 = vperm.slane %v472, 1
  %v2041 = vperm.slane %v474, 0
  %v2042 = vperm.slane %v474, 1
  %v2043 = vperm.slane %v476, 0
  %v2044 = vperm.slane %v476, 1
  %v2045 = vperm.slane %v478, 0
  %v2046 = vperm.slane %v478, 1
  %v2047 = vperm.slane %v480, 0
  %v2048 = vperm.slane %v480, 1
  %v2049 = vperm.slane %v482, 0
  %v2050 = vperm.slane %v482, 1
  %v2051 = vperm.slane %v484, 0
  %v2052 = vperm.slane %v484, 1
  %v2053 = vperm.slane %v486, 0
  %v2054 = vperm.slane %v486, 1
  %vm2071 = vcmp.eq.f32.partialorder %v2039, %v493
  %vm2072 = vcmp.eq.f32.partialorder %v2040, %v493
  %vm2073 = vcmp.eq.f32.partialorder %v2039, %v499
  %vm2074 = vcmp.eq.f32.partialorder %v2040, %v499
  %vm2075 = vcmp.eq.f32.partialorder %v2039, %v505
  %vm2076 = vcmp.eq.f32.partialorder %v2040, %v505
  %vm2077 = vcmp.eq.f32.partialorder %v2039, %v511
  %vm2078 = vcmp.eq.f32.partialorder %v2040, %v511
  %vm2079 = vcmp.eq.f32.partialorder %v2039, %v517
  %vm2080 = vcmp.eq.f32.partialorder %v2040, %v517
  %vm2081 = vcmp.eq.f32.partialorder %v2039, %v523
  %vm2082 = vcmp.eq.f32.partialorder %v2040, %v523
  %vm2083 = vcmp.eq.f32.partialorder %v2039, %v529
  %vm2084 = vcmp.eq.f32.partialorder %v2040, %v529
  %vm2085 = vcmp.eq.f32.partialorder %v2039, %v535
  %vm2086 = vcmp.eq.f32.partialorder %v2040, %v535
  %vm2087 = vcmp.eq.f32.partialorder %v2039, %v541
  %vm2088 = vcmp.eq.f32.partialorder %v2040, %v541
  %vm2089 = vcmp.eq.f32.partialorder %v2039, %v547
  %vm2090 = vcmp.eq.f32.partialorder %v2040, %v547
  %vm2091 = vcmp.eq.f32.partialorder %v2039, %v553
  %vm2092 = vcmp.eq.f32.partialorder %v2040, %v553
  %vm2093 = vcmp.eq.f32.partialorder %v2039, %v559
  %vm2094 = vcmp.eq.f32.partialorder %v2040, %v559
  %vm2095 = vcmp.eq.f32.partialorder %v2039, %v565
  %vm2096 = vcmp.eq.f32.partialorder %v2040, %v565
  %vm2097 = vcmp.eq.f32.partialorder %v2039, %v571
  %vm2098 = vcmp.eq.f32.partialorder %v2040, %v571
  %vm2099 = vcmp.eq.f32.partialorder %v2039, %v577
  %vm2100 = vcmp.eq.f32.partialorder %v2040, %v577
  %vm2101 = vcmp.eq.f32.partialorder %v2039, %v583
  %vm2102 = vcmp.eq.f32.partialorder %v2040, %v583
  %vm2103 = vcmp.eq.f32.partialorder %v2039, %v590
  %vm2104 = vcmp.eq.f32.partialorder %v2040, %v590
  %vm2105 = vcmp.eq.f32.partialorder %v2039, %v596
  %vm2106 = vcmp.eq.f32.partialorder %v2040, %v596
  %vm2107 = vcmp.eq.f32.partialorder %v2039, %v602
  %vm2108 = vcmp.eq.f32.partialorder %v2040, %v602
  %vm2109 = vcmp.eq.f32.partialorder %v2039, %v608
  %vm2110 = vcmp.eq.f32.partialorder %v2040, %v608
  %vm2111 = vcmp.eq.f32.partialorder %v2039, %v614
  %vm2112 = vcmp.eq.f32.partialorder %v2040, %v614
  %vm2113 = vcmp.eq.f32.partialorder %v2039, %v620
  %vm2114 = vcmp.eq.f32.partialorder %v2040, %v620
  %vm2115 = vcmp.eq.f32.partialorder %v2039, %v626
  %vm2116 = vcmp.eq.f32.partialorder %v2040, %v626
  %vm2117 = vcmp.eq.f32.partialorder %v2039, %v632
  %vm2118 = vcmp.eq.f32.partialorder %v2040, %v632
  %vm2119 = vcmp.eq.f32.partialorder %v2039, %v638
  %vm2120 = vcmp.eq.f32.partialorder %v2040, %v638
  %vm2121 = vcmp.eq.f32.partialorder %v2039, %v644
  %vm2122 = vcmp.eq.f32.partialorder %v2040, %v644
  %vm2123 = vcmp.eq.f32.partialorder %v2039, %v650
  %vm2124 = vcmp.eq.f32.partialorder %v2040, %v650
  %vm2125 = vcmp.eq.f32.partialorder %v2039, %v656
  %vm2126 = vcmp.eq.f32.partialorder %v2040, %v656
  %vm2127 = vcmp.eq.f32.partialorder %v2039, %v662
  %vm2128 = vcmp.eq.f32.partialorder %v2040, %v662
  %vm2129 = vcmp.eq.f32.partialorder %v2039, %v668
  %vm2130 = vcmp.eq.f32.partialorder %v2040, %v668
  %vm2131 = vcmp.eq.f32.partialorder %v2039, %v674
  %vm2132 = vcmp.eq.f32.partialorder %v2040, %v674
  %vm2133 = vcmp.eq.f32.partialorder %v2039, %v680
  %vm2134 = vcmp.eq.f32.partialorder %v2040, %v680
  %vm2135 = vcmp.eq.f32.partialorder %v2041, %v687
  %vm2136 = vcmp.eq.f32.partialorder %v2042, %v687
  %vm2137 = vcmp.eq.f32.partialorder %v2041, %v693
  %vm2138 = vcmp.eq.f32.partialorder %v2042, %v693
  %vm2139 = vcmp.eq.f32.partialorder %v2041, %v699
  %vm2140 = vcmp.eq.f32.partialorder %v2042, %v699
  %vm2141 = vcmp.eq.f32.partialorder %v2041, %v705
  %vm2142 = vcmp.eq.f32.partialorder %v2042, %v705
  %vm2143 = vcmp.eq.f32.partialorder %v2041, %v711
  %vm2144 = vcmp.eq.f32.partialorder %v2042, %v711
  %vm2145 = vcmp.eq.f32.partialorder %v2041, %v717
  %vm2146 = vcmp.eq.f32.partialorder %v2042, %v717
  %vm2147 = vcmp.eq.f32.partialorder %v2041, %v723
  %vm2148 = vcmp.eq.f32.partialorder %v2042, %v723
  %vm2149 = vcmp.eq.f32.partialorder %v2041, %v729
  %vm2150 = vcmp.eq.f32.partialorder %v2042, %v729
  %vm2151 = vcmp.eq.f32.partialorder %v2041, %v735
  %vm2152 = vcmp.eq.f32.partialorder %v2042, %v735
  %vm2153 = vcmp.eq.f32.partialorder %v2041, %v741
  %vm2154 = vcmp.eq.f32.partialorder %v2042, %v741
  %vm2155 = vcmp.eq.f32.partialorder %v2041, %v747
  %vm2156 = vcmp.eq.f32.partialorder %v2042, %v747
  %vm2157 = vcmp.eq.f32.partialorder %v2041, %v753
  %vm2158 = vcmp.eq.f32.partialorder %v2042, %v753
  %vm2159 = vcmp.eq.f32.partialorder %v2041, %v759
  %vm2160 = vcmp.eq.f32.partialorder %v2042, %v759
  %vm2161 = vcmp.eq.f32.partialorder %v2041, %v765
  %vm2162 = vcmp.eq.f32.partialorder %v2042, %v765
  %vm2163 = vcmp.eq.f32.partialorder %v2041, %v771
  %vm2164 = vcmp.eq.f32.partialorder %v2042, %v771
  %vm2165 = vcmp.eq.f32.partialorder %v2041, %v777
  %vm2166 = vcmp.eq.f32.partialorder %v2042, %v777
  %vm2167 = vcmp.eq.f32.partialorder %v2041, %v784
  %vm2168 = vcmp.eq.f32.partialorder %v2042, %v784
  %vm2169 = vcmp.eq.f32.partialorder %v2041, %v790
  %vm2170 = vcmp.eq.f32.partialorder %v2042, %v790
  %vm2171 = vcmp.eq.f32.partialorder %v2041, %v796
  %vm2172 = vcmp.eq.f32.partialorder %v2042, %v796
  %vm2173 = vcmp.eq.f32.partialorder %v2041, %v802
  %vm2174 = vcmp.eq.f32.partialorder %v2042, %v802
  %vm2175 = vcmp.eq.f32.partialorder %v2041, %v808
  %vm2176 = vcmp.eq.f32.partialorder %v2042, %v808
  %vm2177 = vcmp.eq.f32.partialorder %v2041, %v814
  %vm2178 = vcmp.eq.f32.partialorder %v2042, %v814
  %vm2179 = vcmp.eq.f32.partialorder %v2041, %v820
  %vm2180 = vcmp.eq.f32.partialorder %v2042, %v820
  %vm2181 = vcmp.eq.f32.partialorder %v2041, %v826
  %vm2182 = vcmp.eq.f32.partialorder %v2042, %v826
  %vm2183 = vcmp.eq.f32.partialorder %v2041, %v832
  %vm2184 = vcmp.eq.f32.partialorder %v2042, %v832
  %vm2185 = vcmp.eq.f32.partialorder %v2041, %v838
  %vm2186 = vcmp.eq.f32.partialorder %v2042, %v838
  %vm2187 = vcmp.eq.f32.partialorder %v2041, %v844
  %vm2188 = vcmp.eq.f32.partialorder %v2042, %v844
  %vm2189 = vcmp.eq.f32.partialorder %v2041, %v850
  %vm2190 = vcmp.eq.f32.partialorder %v2042, %v850
  %vm2191 = vcmp.eq.f32.partialorder %v2041, %v856
  %vm2192 = vcmp.eq.f32.partialorder %v2042, %v856
  %vm2193 = vcmp.eq.f32.partialorder %v2041, %v862
  %vm2194 = vcmp.eq.f32.partialorder %v2042, %v862
  %vm2195 = vcmp.eq.f32.partialorder %v2041, %v868
  %vm2196 = vcmp.eq.f32.partialorder %v2042, %v868
  %vm2197 = vcmp.eq.f32.partialorder %v2041, %v874
  %vm2198 = vcmp.eq.f32.partialorder %v2042, %v874
  %vm2199 = vcmp.eq.f32.partialorder %v2043, %v881
  %vm2200 = vcmp.eq.f32.partialorder %v2044, %v881
  %vm2201 = vcmp.eq.f32.partialorder %v2043, %v887
  %vm2202 = vcmp.eq.f32.partialorder %v2044, %v887
  %vm2203 = vcmp.eq.f32.partialorder %v2043, %v893
  %vm2204 = vcmp.eq.f32.partialorder %v2044, %v893
  %vm2205 = vcmp.eq.f32.partialorder %v2043, %v899
  %vm2206 = vcmp.eq.f32.partialorder %v2044, %v899
  %vm2207 = vcmp.eq.f32.partialorder %v2043, %v905
  %vm2208 = vcmp.eq.f32.partialorder %v2044, %v905
  %vm2209 = vcmp.eq.f32.partialorder %v2043, %v911
  %vm2210 = vcmp.eq.f32.partialorder %v2044, %v911
  %vm2211 = vcmp.eq.f32.partialorder %v2043, %v917
  %vm2212 = vcmp.eq.f32.partialorder %v2044, %v917
  %vm2213 = vcmp.eq.f32.partialorder %v2043, %v923
  %vm2214 = vcmp.eq.f32.partialorder %v2044, %v923
  %vm2215 = vcmp.eq.f32.partialorder %v2043, %v929
  %vm2216 = vcmp.eq.f32.partialorder %v2044, %v929
  %vm2217 = vcmp.eq.f32.partialorder %v2043, %v935
  %vm2218 = vcmp.eq.f32.partialorder %v2044, %v935
  %vm2219 = vcmp.eq.f32.partialorder %v2043, %v941
  %vm2220 = vcmp.eq.f32.partialorder %v2044, %v941
  %vm2221 = vcmp.eq.f32.partialorder %v2043, %v947
  %vm2222 = vcmp.eq.f32.partialorder %v2044, %v947
  %vm2223 = vcmp.eq.f32.partialorder %v2043, %v953
  %vm2224 = vcmp.eq.f32.partialorder %v2044, %v953
  %vm2225 = vcmp.eq.f32.partialorder %v2043, %v959
  %vm2226 = vcmp.eq.f32.partialorder %v2044, %v959
  %vm2227 = vcmp.eq.f32.partialorder %v2043, %v965
  %vm2228 = vcmp.eq.f32.partialorder %v2044, %v965
  %vm2229 = vcmp.eq.f32.partialorder %v2043, %v971
  %vm2230 = vcmp.eq.f32.partialorder %v2044, %v971
  %vm2231 = vcmp.eq.f32.partialorder %v2043, %v978
  %vm2232 = vcmp.eq.f32.partialorder %v2044, %v978
  %vm2233 = vcmp.eq.f32.partialorder %v2043, %v984
  %vm2234 = vcmp.eq.f32.partialorder %v2044, %v984
  %vm2235 = vcmp.eq.f32.partialorder %v2043, %v990
  %vm2236 = vcmp.eq.f32.partialorder %v2044, %v990
  %vm2237 = vcmp.eq.f32.partialorder %v2043, %v996
  %vm2238 = vcmp.eq.f32.partialorder %v2044, %v996
  %vm2239 = vcmp.eq.f32.partialorder %v2043, %v1002
  %vm2240 = vcmp.eq.f32.partialorder %v2044, %v1002
  %vm2241 = vcmp.eq.f32.partialorder %v2043, %v1008
  %vm2242 = vcmp.eq.f32.partialorder %v2044, %v1008
  %vm2243 = vcmp.eq.f32.partialorder %v2043, %v1014
  %vm2244 = vcmp.eq.f32.partialorder %v2044, %v1014
  %vm2245 = vcmp.eq.f32.partialorder %v2043, %v1020
  %vm2246 = vcmp.eq.f32.partialorder %v2044, %v1020
  %vm2247 = vcmp.eq.f32.partialorder %v2043, %v1026
  %vm2248 = vcmp.eq.f32.partialorder %v2044, %v1026
  %vm2249 = vcmp.eq.f32.partialorder %v2043, %v1032
  %vm2250 = vcmp.eq.f32.partialorder %v2044, %v1032
  %vm2251 = vcmp.eq.f32.partialorder %v2043, %v1038
  %vm2252 = vcmp.eq.f32.partialorder %v2044, %v1038
  %vm2253 = vcmp.eq.f32.partialorder %v2043, %v1044
  %vm2254 = vcmp.eq.f32.partialorder %v2044, %v1044
  %vm2255 = vcmp.eq.f32.partialorder %v2043, %v1050
  %vm2256 = vcmp.eq.f32.partialorder %v2044, %v1050
  %vm2257 = vcmp.eq.f32.partialorder %v2043, %v1056
  %vm2258 = vcmp.eq.f32.partialorder %v2044, %v1056
  %vm2259 = vcmp.eq.f32.partialorder %v2043, %v1062
  %vm2260 = vcmp.eq.f32.partialorder %v2044, %v1062
  %vm2261 = vcmp.eq.f32.partialorder %v2043, %v1068
  %vm2262 = vcmp.eq.f32.partialorder %v2044, %v1068
  %vm2263 = vcmp.eq.f32.partialorder %v2045, %v1075
  %vm2264 = vcmp.eq.f32.partialorder %v2046, %v1075
  %vm2265 = vcmp.eq.f32.partialorder %v2045, %v1081
  %vm2266 = vcmp.eq.f32.partialorder %v2046, %v1081
  %vm2267 = vcmp.eq.f32.partialorder %v2045, %v1087
  %vm2268 = vcmp.eq.f32.partialorder %v2046, %v1087
  %vm2269 = vcmp.eq.f32.partialorder %v2045, %v1093
  %vm2270 = vcmp.eq.f32.partialorder %v2046, %v1093
  %vm2271 = vcmp.eq.f32.partialorder %v2045, %v1099
  %vm2272 = vcmp.eq.f32.partialorder %v2046, %v1099
  %vm2273 = vcmp.eq.f32.partialorder %v2045, %v1105
  %vm2274 = vcmp.eq.f32.partialorder %v2046, %v1105
  %vm2275 = vcmp.eq.f32.partialorder %v2045, %v1111
  %vm2276 = vcmp.eq.f32.partialorder %v2046, %v1111
  %vm2277 = vcmp.eq.f32.partialorder %v2045, %v1117
  %vm2278 = vcmp.eq.f32.partialorder %v2046, %v1117
  %vm2279 = vcmp.eq.f32.partialorder %v2045, %v1123
  %vm2280 = vcmp.eq.f32.partialorder %v2046, %v1123
  %vm2281 = vcmp.eq.f32.partialorder %v2045, %v1129
  %vm2282 = vcmp.eq.f32.partialorder %v2046, %v1129
  %vm2283 = vcmp.eq.f32.partialorder %v2045, %v1135
  %vm2284 = vcmp.eq.f32.partialorder %v2046, %v1135
  %vm2285 = vcmp.eq.f32.partialorder %v2045, %v1141
  %vm2286 = vcmp.eq.f32.partialorder %v2046, %v1141
  %vm2287 = vcmp.eq.f32.partialorder %v2045, %v1147
  %vm2288 = vcmp.eq.f32.partialorder %v2046, %v1147
  %vm2289 = vcmp.eq.f32.partialorder %v2045, %v1153
  %vm2290 = vcmp.eq.f32.partialorder %v2046, %v1153
  %vm2291 = vcmp.eq.f32.partialorder %v2045, %v1159
  %vm2292 = vcmp.eq.f32.partialorder %v2046, %v1159
  %vm2293 = vcmp.eq.f32.partialorder %v2045, %v1165
  %vm2294 = vcmp.eq.f32.partialorder %v2046, %v1165
  %vm2295 = vcmp.eq.f32.partialorder %v2045, %v1172
  %vm2296 = vcmp.eq.f32.partialorder %v2046, %v1172
  %vm2297 = vcmp.eq.f32.partialorder %v2045, %v1178
  %vm2298 = vcmp.eq.f32.partialorder %v2046, %v1178
  %vm2299 = vcmp.eq.f32.partialorder %v2045, %v1184
  %vm2300 = vcmp.eq.f32.partialorder %v2046, %v1184
  %vm2301 = vcmp.eq.f32.partialorder %v2045, %v1190
  %vm2302 = vcmp.eq.f32.partialorder %v2046, %v1190
  %vm2303 = vcmp.eq.f32.partialorder %v2045, %v1196
  %vm2304 = vcmp.eq.f32.partialorder %v2046, %v1196
  %vm2305 = vcmp.eq.f32.partialorder %v2045, %v1202
  %vm2306 = vcmp.eq.f32.partialorder %v2046, %v1202
  %vm2307 = vcmp.eq.f32.partialorder %v2045, %v1208
  %vm2308 = vcmp.eq.f32.partialorder %v2046, %v1208
  %vm2309 = vcmp.eq.f32.partialorder %v2045, %v1214
  %vm2310 = vcmp.eq.f32.partialorder %v2046, %v1214
  %vm2311 = vcmp.eq.f32.partialorder %v2045, %v1220
  %vm2312 = vcmp.eq.f32.partialorder %v2046, %v1220
  %vm2313 = vcmp.eq.f32.partialorder %v2045, %v1226
  %vm2314 = vcmp.eq.f32.partialorder %v2046, %v1226
  %vm2315 = vcmp.eq.f32.partialorder %v2045, %v1232
  %vm2316 = vcmp.eq.f32.partialorder %v2046, %v1232
  %vm2317 = vcmp.eq.f32.partialorder %v2045, %v1238
  %vm2318 = vcmp.eq.f32.partialorder %v2046, %v1238
  %vm2319 = vcmp.eq.f32.partialorder %v2045, %v1244
  %vm2320 = vcmp.eq.f32.partialorder %v2046, %v1244
  %vm2321 = vcmp.eq.f32.partialorder %v2045, %v1250
  %vm2322 = vcmp.eq.f32.partialorder %v2046, %v1250
  %vm2323 = vcmp.eq.f32.partialorder %v2045, %v1256
  %vm2324 = vcmp.eq.f32.partialorder %v2046, %v1256
  %vm2325 = vcmp.eq.f32.partialorder %v2045, %v1262
  %vm2326 = vcmp.eq.f32.partialorder %v2046, %v1262
  %vm2327 = vcmp.eq.f32.partialorder %v2047, %v1269
  %vm2328 = vcmp.eq.f32.partialorder %v2048, %v1269
  %vm2329 = vcmp.eq.f32.partialorder %v2047, %v1275
  %vm2330 = vcmp.eq.f32.partialorder %v2048, %v1275
  %vm2331 = vcmp.eq.f32.partialorder %v2047, %v1281
  %vm2332 = vcmp.eq.f32.partialorder %v2048, %v1281
  %vm2333 = vcmp.eq.f32.partialorder %v2047, %v1287
  %vm2334 = vcmp.eq.f32.partialorder %v2048, %v1287
  %vm2335 = vcmp.eq.f32.partialorder %v2047, %v1293
  %vm2336 = vcmp.eq.f32.partialorder %v2048, %v1293
  %vm2337 = vcmp.eq.f32.partialorder %v2047, %v1299
  %vm2338 = vcmp.eq.f32.partialorder %v2048, %v1299
  %vm2339 = vcmp.eq.f32.partialorder %v2047, %v1305
  %vm2340 = vcmp.eq.f32.partialorder %v2048, %v1305
  %vm2341 = vcmp.eq.f32.partialorder %v2047, %v1311
  %vm2342 = vcmp.eq.f32.partialorder %v2048, %v1311
  %vm2343 = vcmp.eq.f32.partialorder %v2047, %v1317
  %vm2344 = vcmp.eq.f32.partialorder %v2048, %v1317
  %vm2345 = vcmp.eq.f32.partialorder %v2047, %v1323
  %vm2346 = vcmp.eq.f32.partialorder %v2048, %v1323
  %vm2347 = vcmp.eq.f32.partialorder %v2047, %v1329
  %vm2348 = vcmp.eq.f32.partialorder %v2048, %v1329
  %vm2349 = vcmp.eq.f32.partialorder %v2047, %v1335
  %vm2350 = vcmp.eq.f32.partialorder %v2048, %v1335
  %vm2351 = vcmp.eq.f32.partialorder %v2047, %v1341
  %vm2352 = vcmp.eq.f32.partialorder %v2048, %v1341
  %vm2353 = vcmp.eq.f32.partialorder %v2047, %v1347
  %vm2354 = vcmp.eq.f32.partialorder %v2048, %v1347
  %vm2355 = vcmp.eq.f32.partialorder %v2047, %v1353
  %vm2356 = vcmp.eq.f32.partialorder %v2048, %v1353
  %vm2357 = vcmp.eq.f32.partialorder %v2047, %v1359
  %vm2358 = vcmp.eq.f32.partialorder %v2048, %v1359
  %vm2359 = vcmp.eq.f32.partialorder %v2047, %v1366
  %vm2360 = vcmp.eq.f32.partialorder %v2048, %v1366
  %vm2361 = vcmp.eq.f32.partialorder %v2047, %v1372
  %vm2362 = vcmp.eq.f32.partialorder %v2048, %v1372
  %vm2363 = vcmp.eq.f32.partialorder %v2047, %v1378
  %vm2364 = vcmp.eq.f32.partialorder %v2048, %v1378
  %vm2365 = vcmp.eq.f32.partialorder %v2047, %v1384
  %vm2366 = vcmp.eq.f32.partialorder %v2048, %v1384
  %vm2367 = vcmp.eq.f32.partialorder %v2047, %v1390
  %vm2368 = vcmp.eq.f32.partialorder %v2048, %v1390
  %vm2369 = vcmp.eq.f32.partialorder %v2047, %v1396
  %vm2370 = vcmp.eq.f32.partialorder %v2048, %v1396
  %vm2371 = vcmp.eq.f32.partialorder %v2047, %v1402
  %vm2372 = vcmp.eq.f32.partialorder %v2048, %v1402
  %vm2373 = vcmp.eq.f32.partialorder %v2047, %v1408
  %vm2374 = vcmp.eq.f32.partialorder %v2048, %v1408
  %vm2375 = vcmp.eq.f32.partialorder %v2047, %v1414
  %vm2376 = vcmp.eq.f32.partialorder %v2048, %v1414
  %vm2377 = vcmp.eq.f32.partialorder %v2047, %v1420
  %vm2378 = vcmp.eq.f32.partialorder %v2048, %v1420
  %vm2379 = vcmp.eq.f32.partialorder %v2047, %v1426
  %vm2380 = vcmp.eq.f32.partialorder %v2048, %v1426
  %vm2381 = vcmp.eq.f32.partialorder %v2047, %v1432
  %vm2382 = vcmp.eq.f32.partialorder %v2048, %v1432
  %vm2383 = vcmp.eq.f32.partialorder %v2047, %v1438
  %vm2384 = vcmp.eq.f32.partialorder %v2048, %v1438
  %vm2385 = vcmp.eq.f32.partialorder %v2047, %v1444
  %vm2386 = vcmp.eq.f32.partialorder %v2048, %v1444
  %vm2387 = vcmp.eq.f32.partialorder %v2047, %v1450
  %vm2388 = vcmp.eq.f32.partialorder %v2048, %v1450
  %vm2389 = vcmp.eq.f32.partialorder %v2047, %v1456
  %vm2390 = vcmp.eq.f32.partialorder %v2048, %v1456
  %vm2391 = vcmp.eq.f32.partialorder %v2049, %v1463
  %vm2392 = vcmp.eq.f32.partialorder %v2050, %v1463
  %vm2393 = vcmp.eq.f32.partialorder %v2049, %v1469
  %vm2394 = vcmp.eq.f32.partialorder %v2050, %v1469
  %vm2395 = vcmp.eq.f32.partialorder %v2049, %v1475
  %vm2396 = vcmp.eq.f32.partialorder %v2050, %v1475
  %vm2397 = vcmp.eq.f32.partialorder %v2049, %v1481
  %vm2398 = vcmp.eq.f32.partialorder %v2050, %v1481
  %vm2399 = vcmp.eq.f32.partialorder %v2049, %v1487
  %vm2400 = vcmp.eq.f32.partialorder %v2050, %v1487
  %vm2401 = vcmp.eq.f32.partialorder %v2049, %v1493
  %vm2402 = vcmp.eq.f32.partialorder %v2050, %v1493
  %vm2403 = vcmp.eq.f32.partialorder %v2049, %v1499
  %vm2404 = vcmp.eq.f32.partialorder %v2050, %v1499
  %vm2405 = vcmp.eq.f32.partialorder %v2049, %v1505
  %vm2406 = vcmp.eq.f32.partialorder %v2050, %v1505
  %vm2407 = vcmp.eq.f32.partialorder %v2049, %v1511
  %vm2408 = vcmp.eq.f32.partialorder %v2050, %v1511
  %vm2409 = vcmp.eq.f32.partialorder %v2049, %v1517
  %vm2410 = vcmp.eq.f32.partialorder %v2050, %v1517
  %vm2411 = vcmp.eq.f32.partialorder %v2049, %v1523
  %vm2412 = vcmp.eq.f32.partialorder %v2050, %v1523
  %vm2413 = vcmp.eq.f32.partialorder %v2049, %v1529
  %vm2414 = vcmp.eq.f32.partialorder %v2050, %v1529
  %vm2415 = vcmp.eq.f32.partialorder %v2049, %v1535
  %vm2416 = vcmp.eq.f32.partialorder %v2050, %v1535
  %vm2417 = vcmp.eq.f32.partialorder %v2049, %v1541
  %vm2418 = vcmp.eq.f32.partialorder %v2050, %v1541
  %vm2419 = vcmp.eq.f32.partialorder %v2049, %v1547
  %vm2420 = vcmp.eq.f32.partialorder %v2050, %v1547
  %vm2421 = vcmp.eq.f32.partialorder %v2049, %v1553
  %vm2422 = vcmp.eq.f32.partialorder %v2050, %v1553
  %vm2423 = vcmp.eq.f32.partialorder %v2049, %v1560
  %vm2424 = vcmp.eq.f32.partialorder %v2050, %v1560
  %vm2425 = vcmp.eq.f32.partialorder %v2049, %v1566
  %vm2426 = vcmp.eq.f32.partialorder %v2050, %v1566
  %vm2427 = vcmp.eq.f32.partialorder %v2049, %v1572
  %vm2428 = vcmp.eq.f32.partialorder %v2050, %v1572
  %vm2429 = vcmp.eq.f32.partialorder %v2049, %v1578
  %vm2430 = vcmp.eq.f32.partialorder %v2050, %v1578
  %vm2431 = vcmp.eq.f32.partialorder %v2049, %v1584
  %vm2432 = vcmp.eq.f32.partialorder %v2050, %v1584
  %vm2433 = vcmp.eq.f32.partialorder %v2049, %v1590
  %vm2434 = vcmp.eq.f32.partialorder %v2050, %v1590
  %vm2435 = vcmp.eq.f32.partialorder %v2049, %v1596
  %vm2436 = vcmp.eq.f32.partialorder %v2050, %v1596
  %vm2437 = vcmp.eq.f32.partialorder %v2049, %v1602
  %vm2438 = vcmp.eq.f32.partialorder %v2050, %v1602
  %vm2439 = vcmp.eq.f32.partialorder %v2049, %v1608
  %vm2440 = vcmp.eq.f32.partialorder %v2050, %v1608
  %vm2441 = vcmp.eq.f32.partialorder %v2049, %v1614
  %vm2442 = vcmp.eq.f32.partialorder %v2050, %v1614
  %vm2443 = vcmp.eq.f32.partialorder %v2049, %v1620
  %vm2444 = vcmp.eq.f32.partialorder %v2050, %v1620
  %vm2445 = vcmp.eq.f32.partialorder %v2049, %v1626
  %vm2446 = vcmp.eq.f32.partialorder %v2050, %v1626
  %vm2447 = vcmp.eq.f32.partialorder %v2049, %v1632
  %vm2448 = vcmp.eq.f32.partialorder %v2050, %v1632
  %vm2449 = vcmp.eq.f32.partialorder %v2049, %v1638
  %vm2450 = vcmp.eq.f32.partialorder %v2050, %v1638
  %vm2451 = vcmp.eq.f32.partialorder %v2049, %v1644
  %vm2452 = vcmp.eq.f32.partialorder %v2050, %v1644
  %vm2453 = vcmp.eq.f32.partialorder %v2049, %v1650
  %vm2454 = vcmp.eq.f32.partialorder %v2050, %v1650
  %vm2455 = vcmp.eq.f32.partialorder %v2051, %v1657
  %vm2456 = vcmp.eq.f32.partialorder %v2052, %v1657
  %vm2457 = vcmp.eq.f32.partialorder %v2051, %v1663
  %vm2458 = vcmp.eq.f32.partialorder %v2052, %v1663
  %vm2459 = vcmp.eq.f32.partialorder %v2051, %v1669
  %vm2460 = vcmp.eq.f32.partialorder %v2052, %v1669
  %vm2461 = vcmp.eq.f32.partialorder %v2051, %v1675
  %vm2462 = vcmp.eq.f32.partialorder %v2052, %v1675
  %vm2463 = vcmp.eq.f32.partialorder %v2051, %v1681
  %vm2464 = vcmp.eq.f32.partialorder %v2052, %v1681
  %vm2465 = vcmp.eq.f32.partialorder %v2051, %v1687
  %vm2466 = vcmp.eq.f32.partialorder %v2052, %v1687
  %vm2467 = vcmp.eq.f32.partialorder %v2051, %v1693
  %vm2468 = vcmp.eq.f32.partialorder %v2052, %v1693
  %vm2469 = vcmp.eq.f32.partialorder %v2051, %v1699
  %vm2470 = vcmp.eq.f32.partialorder %v2052, %v1699
  %vm2471 = vcmp.eq.f32.partialorder %v2051, %v1705
  %vm2472 = vcmp.eq.f32.partialorder %v2052, %v1705
  %vm2473 = vcmp.eq.f32.partialorder %v2051, %v1711
  %vm2474 = vcmp.eq.f32.partialorder %v2052, %v1711
  %vm2475 = vcmp.eq.f32.partialorder %v2051, %v1717
  %vm2476 = vcmp.eq.f32.partialorder %v2052, %v1717
  %vm2477 = vcmp.eq.f32.partialorder %v2051, %v1723
  %vm2478 = vcmp.eq.f32.partialorder %v2052, %v1723
  %vm2479 = vcmp.eq.f32.partialorder %v2051, %v1729
  %vm2480 = vcmp.eq.f32.partialorder %v2052, %v1729
  %vm2481 = vcmp.eq.f32.partialorder %v2051, %v1735
  %vm2482 = vcmp.eq.f32.partialorder %v2052, %v1735
  %vm2483 = vcmp.eq.f32.partialorder %v2051, %v1741
  %vm2484 = vcmp.eq.f32.partialorder %v2052, %v1741
  %vm2485 = vcmp.eq.f32.partialorder %v2051, %v1747
  %vm2486 = vcmp.eq.f32.partialorder %v2052, %v1747
  %vm2487 = vcmp.eq.f32.partialorder %v2051, %v1754
  %vm2488 = vcmp.eq.f32.partialorder %v2052, %v1754
  %vm2489 = vcmp.eq.f32.partialorder %v2051, %v1760
  %vm2490 = vcmp.eq.f32.partialorder %v2052, %v1760
  %vm2491 = vcmp.eq.f32.partialorder %v2051, %v1766
  %vm2492 = vcmp.eq.f32.partialorder %v2052, %v1766
  %vm2493 = vcmp.eq.f32.partialorder %v2051, %v1772
  %vm2494 = vcmp.eq.f32.partialorder %v2052, %v1772
  %vm2495 = vcmp.eq.f32.partialorder %v2051, %v1778
  %vm2496 = vcmp.eq.f32.partialorder %v2052, %v1778
  %vm2497 = vcmp.eq.f32.partialorder %v2051, %v1784
  %vm2498 = vcmp.eq.f32.partialorder %v2052, %v1784
  %vm2499 = vcmp.eq.f32.partialorder %v2051, %v1790
  %vm2500 = vcmp.eq.f32.partialorder %v2052, %v1790
  %vm2501 = vcmp.eq.f32.partialorder %v2051, %v1796
  %vm2502 = vcmp.eq.f32.partialorder %v2052, %v1796
  %vm2503 = vcmp.eq.f32.partialorder %v2051, %v1802
  %vm2504 = vcmp.eq.f32.partialorder %v2052, %v1802
  %vm2505 = vcmp.eq.f32.partialorder %v2051, %v1808
  %vm2506 = vcmp.eq.f32.partialorder %v2052, %v1808
  %vm2507 = vcmp.eq.f32.partialorder %v2051, %v1814
  %vm2508 = vcmp.eq.f32.partialorder %v2052, %v1814
  %vm2509 = vcmp.eq.f32.partialorder %v2051, %v1820
  %vm2510 = vcmp.eq.f32.partialorder %v2052, %v1820
  %vm2511 = vcmp.eq.f32.partialorder %v2051, %v1826
  %vm2512 = vcmp.eq.f32.partialorder %v2052, %v1826
  %vm2513 = vcmp.eq.f32.partialorder %v2051, %v1832
  %vm2514 = vcmp.eq.f32.partialorder %v2052, %v1832
  %vm2515 = vcmp.eq.f32.partialorder %v2051, %v1838
  %vm2516 = vcmp.eq.f32.partialorder %v2052, %v1838
  %vm2517 = vcmp.eq.f32.partialorder %v2051, %v1844
  %vm2518 = vcmp.eq.f32.partialorder %v2052, %v1844
  %vm2519 = vcmp.eq.f32.partialorder %v2053, %v1851
  %vm2520 = vcmp.eq.f32.partialorder %v2054, %v1851
  %vm2521 = vcmp.eq.f32.partialorder %v2053, %v1857
  %vm2522 = vcmp.eq.f32.partialorder %v2054, %v1857
  %vm2523 = vcmp.eq.f32.partialorder %v2053, %v1863
  %vm2524 = vcmp.eq.f32.partialorder %v2054, %v1863
  %vm2525 = vcmp.eq.f32.partialorder %v2053, %v1869
  %vm2526 = vcmp.eq.f32.partialorder %v2054, %v1869
  %vm2527 = vcmp.eq.f32.partialorder %v2053, %v1875
  %vm2528 = vcmp.eq.f32.partialorder %v2054, %v1875
  %vm2529 = vcmp.eq.f32.partialorder %v2053, %v1881
  %vm2530 = vcmp.eq.f32.partialorder %v2054, %v1881
  %vm2531 = vcmp.eq.f32.partialorder %v2053, %v1887
  %vm2532 = vcmp.eq.f32.partialorder %v2054, %v1887
  %vm2533 = vcmp.eq.f32.partialorder %v2053, %v1893
  %vm2534 = vcmp.eq.f32.partialorder %v2054, %v1893
  %vm2535 = vcmp.eq.f32.partialorder %v2053, %v1899
  %vm2536 = vcmp.eq.f32.partialorder %v2054, %v1899
  %vm2537 = vcmp.eq.f32.partialorder %v2053, %v1905
  %vm2538 = vcmp.eq.f32.partialorder %v2054, %v1905
  %vm2539 = vcmp.eq.f32.partialorder %v2053, %v1911
  %vm2540 = vcmp.eq.f32.partialorder %v2054, %v1911
  %vm2541 = vcmp.eq.f32.partialorder %v2053, %v1917
  %vm2542 = vcmp.eq.f32.partialorder %v2054, %v1917
  %vm2543 = vcmp.eq.f32.partialorder %v2053, %v1923
  %vm2544 = vcmp.eq.f32.partialorder %v2054, %v1923
  %vm2545 = vcmp.eq.f32.partialorder %v2053, %v1929
  %vm2546 = vcmp.eq.f32.partialorder %v2054, %v1929
  %vm2547 = vcmp.eq.f32.partialorder %v2053, %v1935
  %vm2548 = vcmp.eq.f32.partialorder %v2054, %v1935
  %vm2549 = vcmp.eq.f32.partialorder %v2053, %v1941
  %vm2550 = vcmp.eq.f32.partialorder %v2054, %v1941
  %vm2551 = vcmp.eq.f32.partialorder %v2053, %v1948
  %vm2552 = vcmp.eq.f32.partialorder %v2054, %v1948
  %vm2553 = vcmp.eq.f32.partialorder %v2053, %v1954
  %vm2554 = vcmp.eq.f32.partialorder %v2054, %v1954
  %vm2555 = vcmp.eq.f32.partialorder %v2053, %v1960
  %vm2556 = vcmp.eq.f32.partialorder %v2054, %v1960
  %vm2557 = vcmp.eq.f32.partialorder %v2053, %v1966
  %vm2558 = vcmp.eq.f32.partialorder %v2054, %v1966
  %vm2559 = vcmp.eq.f32.partialorder %v2053, %v1972
  %vm2560 = vcmp.eq.f32.partialorder %v2054, %v1972
  %vm2561 = vcmp.eq.f32.partialorder %v2053, %v1978
  %vm2562 = vcmp.eq.f32.partialorder %v2054, %v1978
  %vm2563 = vcmp.eq.f32.partialorder %v2053, %v1984
  %vm2564 = vcmp.eq.f32.partialorder %v2054, %v1984
  %vm2565 = vcmp.eq.f32.partialorder %v2053, %v1990
  %vm2566 = vcmp.eq.f32.partialorder %v2054, %v1990
  %vm2567 = vcmp.eq.f32.partialorder %v2053, %v1996
  %vm2568 = vcmp.eq.f32.partialorder %v2054, %v1996
  %vm2569 = vcmp.eq.f32.partialorder %v2053, %v2002
  %vm2570 = vcmp.eq.f32.partialorder %v2054, %v2002
  %vm2571 = vcmp.eq.f32.partialorder %v2053, %v2008
  %vm2572 = vcmp.eq.f32.partialorder %v2054, %v2008
  %vm2573 = vcmp.eq.f32.partialorder %v2053, %v2014
  %vm2574 = vcmp.eq.f32.partialorder %v2054, %v2014
  %vm2575 = vcmp.eq.f32.partialorder %v2053, %v2020
  %vm2576 = vcmp.eq.f32.partialorder %v2054, %v2020
  %vm2577 = vcmp.eq.f32.partialorder %v2053, %v2026
  %vm2578 = vcmp.eq.f32.partialorder %v2054, %v2026
  %vm2579 = vcmp.eq.f32.partialorder %v2053, %v2032
  %vm2580 = vcmp.eq.f32.partialorder %v2054, %v2032
  %vm2581 = vcmp.eq.f32.partialorder %v2053, %v2038
  %vm2582 = vcmp.eq.f32.partialorder %v2054, %v2038
  %v2583 = vsel %vm2071, 1, 0
  %v2584 = vsel %vm2072, 1, 0
  %v2585 = vsel %vm2073, 1, 0
  %v2586 = vsel %vm2074, 1, 0
  %v2587 = vsel %vm2075, 1, 0
  %v2588 = vsel %vm2076, 1, 0
  %v2589 = vsel %vm2077, 1, 0
  %v2590 = vsel %vm2078, 1, 0
  %v2591 = vsel %vm2079, 1, 0
  %v2592 = vsel %vm2080, 1, 0
  %v2593 = vsel %vm2081, 1, 0
  %v2594 = vsel %vm2082, 1, 0
  %v2595 = vsel %vm2083, 1, 0
  %v2596 = vsel %vm2084, 1, 0
  %v2597 = vsel %vm2085, 1, 0
  %v2598 = vsel %vm2086, 1, 0
  %v2599 = vsel %vm2087, 1, 0
  %v2600 = vsel %vm2088, 1, 0
  %v2601 = vsel %vm2089, 1, 0
  %v2602 = vsel %vm2090, 1, 0
  %v2603 = vsel %vm2091, 1, 0
  %v2604 = vsel %vm2092, 1, 0
  %v2605 = vsel %vm2093, 1, 0
  %v2606 = vsel %vm2094, 1, 0
  %v2607 = vsel %vm2095, 1, 0
  %v2608 = vsel %vm2096, 1, 0
  %v2609 = vsel %vm2097, 1, 0
  %v2610 = vsel %vm2098, 1, 0
  %v2611 = vsel %vm2099, 1, 0
  %v2612 = vsel %vm2100, 1, 0
  %v2613 = vsel %vm2101, 1, 0
  %v2614 = vsel %vm2102, 1, 0
  %v2615 = vsel %vm2103, 1, 0
  %v2616 = vsel %vm2104, 1, 0
  %v2617 = vsel %vm2105, 1, 0
  %v2618 = vsel %vm2106, 1, 0
  %v2619 = vsel %vm2107, 1, 0
  %v2620 = vsel %vm2108, 1, 0
  %v2621 = vsel %vm2109, 1, 0
  %v2622 = vsel %vm2110, 1, 0
  %v2623 = vsel %vm2111, 1, 0
  %v2624 = vsel %vm2112, 1, 0
  %v2625 = vsel %vm2113, 1, 0
  %v2626 = vsel %vm2114, 1, 0
  %v2627 = vsel %vm2115, 1, 0
  %v2628 = vsel %vm2116, 1, 0
  %v2629 = vsel %vm2117, 1, 0
  %v2630 = vsel %vm2118, 1, 0
  %v2631 = vsel %vm2119, 1, 0
  %v2632 = vsel %vm2120, 1, 0
  %v2633 = vsel %vm2121, 1, 0
  %v2634 = vsel %vm2122, 1, 0
  %v2635 = vsel %vm2123, 1, 0
  %v2636 = vsel %vm2124, 1, 0
  %v2637 = vsel %vm2125, 1, 0
  %v2638 = vsel %vm2126, 1, 0
  %v2639 = vsel %vm2127, 1, 0
  %v2640 = vsel %vm2128, 1, 0
  %v2641 = vsel %vm2129, 1, 0
  %v2642 = vsel %vm2130, 1, 0
  %v2643 = vsel %vm2131, 1, 0
  %v2644 = vsel %vm2132, 1, 0
  %v2645 = vsel %vm2133, 1, 0
  %v2646 = vsel %vm2134, 1, 0
  %v2647 = vsel %vm2135, 1, 0
  %v2648 = vsel %vm2136, 1, 0
  %v2649 = vsel %vm2137, 1, 0
  %v2650 = vsel %vm2138, 1, 0
  %v2651 = vsel %vm2139, 1, 0
  %v2652 = vsel %vm2140, 1, 0
  %v2653 = vsel %vm2141, 1, 0
  %v2654 = vsel %vm2142, 1, 0
  %v2655 = vsel %vm2143, 1, 0
  %v2656 = vsel %vm2144, 1, 0
  %v2657 = vsel %vm2145, 1, 0
  %v2658 = vsel %vm2146, 1, 0
  %v2659 = vsel %vm2147, 1, 0
  %v2660 = vsel %vm2148, 1, 0
  %v2661 = vsel %vm2149, 1, 0
  %v2662 = vsel %vm2150, 1, 0
  %v2663 = vsel %vm2151, 1, 0
  %v2664 = vsel %vm2152, 1, 0
  %v2665 = vsel %vm2153, 1, 0
  %v2666 = vsel %vm2154, 1, 0
  %v2667 = vsel %vm2155, 1, 0
  %v2668 = vsel %vm2156, 1, 0
  %v2669 = vsel %vm2157, 1, 0
  %v2670 = vsel %vm2158, 1, 0
  %v2671 = vsel %vm2159, 1, 0
  %v2672 = vsel %vm2160, 1, 0
  %v2673 = vsel %vm2161, 1, 0
  %v2674 = vsel %vm2162, 1, 0
  %v2675 = vsel %vm2163, 1, 0
  %v2676 = vsel %vm2164, 1, 0
  %v2677 = vsel %vm2165, 1, 0
  %v2678 = vsel %vm2166, 1, 0
  %v2679 = vsel %vm2167, 1, 0
  %v2680 = vsel %vm2168, 1, 0
  %v2681 = vsel %vm2169, 1, 0
  %v2682 = vsel %vm2170, 1, 0
  %v2683 = vsel %vm2171, 1, 0
  %v2684 = vsel %vm2172, 1, 0
  %v2685 = vsel %vm2173, 1, 0
  %v2686 = vsel %vm2174, 1, 0
  %v2687 = vsel %vm2175, 1, 0
  %v2688 = vsel %vm2176, 1, 0
  %v2689 = vsel %vm2177, 1, 0
  %v2690 = vsel %vm2178, 1, 0
  %v2691 = vsel %vm2179, 1, 0
  %v2692 = vsel %vm2180, 1, 0
  %v2693 = vsel %vm2181, 1, 0
  %v2694 = vsel %vm2182, 1, 0
  %v2695 = vsel %vm2183, 1, 0
  %v2696 = vsel %vm2184, 1, 0
  %v2697 = vsel %vm2185, 1, 0
  %v2698 = vsel %vm2186, 1, 0
  %v2699 = vsel %vm2187, 1, 0
  %v2700 = vsel %vm2188, 1, 0
  %v2701 = vsel %vm2189, 1, 0
  %v2702 = vsel %vm2190, 1, 0
  %v2703 = vsel %vm2191, 1, 0
  %v2704 = vsel %vm2192, 1, 0
  %v2705 = vsel %vm2193, 1, 0
  %v2706 = vsel %vm2194, 1, 0
  %v2707 = vsel %vm2195, 1, 0
  %v2708 = vsel %vm2196, 1, 0
  %v2709 = vsel %vm2197, 1, 0
  %v2710 = vsel %vm2198, 1, 0
  %v2711 = vsel %vm2199, 1, 0
  %v2712 = vsel %vm2200, 1, 0
  %v2713 = vsel %vm2201, 1, 0
  %v2714 = vsel %vm2202, 1, 0
  %v2715 = vsel %vm2203, 1, 0
  %v2716 = vsel %vm2204, 1, 0
  %v2717 = vsel %vm2205, 1, 0
  %v2718 = vsel %vm2206, 1, 0
  %v2719 = vsel %vm2207, 1, 0
  %v2720 = vsel %vm2208, 1, 0
  %v2721 = vsel %vm2209, 1, 0
  %v2722 = vsel %vm2210, 1, 0
  %v2723 = vsel %vm2211, 1, 0
  %v2724 = vsel %vm2212, 1, 0
  %v2725 = vsel %vm2213, 1, 0
  %v2726 = vsel %vm2214, 1, 0
  %v2727 = vsel %vm2215, 1, 0
  %v2728 = vsel %vm2216, 1, 0
  %v2729 = vsel %vm2217, 1, 0
  %v2730 = vsel %vm2218, 1, 0
  %v2731 = vsel %vm2219, 1, 0
  %v2732 = vsel %vm2220, 1, 0
  %v2733 = vsel %vm2221, 1, 0
  %v2734 = vsel %vm2222, 1, 0
  %v2735 = vsel %vm2223, 1, 0
  %v2736 = vsel %vm2224, 1, 0
  %v2737 = vsel %vm2225, 1, 0
  %v2738 = vsel %vm2226, 1, 0
  %v2739 = vsel %vm2227, 1, 0
  %v2740 = vsel %vm2228, 1, 0
  %v2741 = vsel %vm2229, 1, 0
  %v2742 = vsel %vm2230, 1, 0
  %v2743 = vsel %vm2231, 1, 0
  %v2744 = vsel %vm2232, 1, 0
  %v2745 = vsel %vm2233, 1, 0
  %v2746 = vsel %vm2234, 1, 0
  %v2747 = vsel %vm2235, 1, 0
  %v2748 = vsel %vm2236, 1, 0
  %v2749 = vsel %vm2237, 1, 0
  %v2750 = vsel %vm2238, 1, 0
  %v2751 = vsel %vm2239, 1, 0
  %v2752 = vsel %vm2240, 1, 0
  %v2753 = vsel %vm2241, 1, 0
  %v2754 = vsel %vm2242, 1, 0
  %v2755 = vsel %vm2243, 1, 0
  %v2756 = vsel %vm2244, 1, 0
  %v2757 = vsel %vm2245, 1, 0
  %v2758 = vsel %vm2246, 1, 0
  %v2759 = vsel %vm2247, 1, 0
  %v2760 = vsel %vm2248, 1, 0
  %v2761 = vsel %vm2249, 1, 0
  %v2762 = vsel %vm2250, 1, 0
  %v2763 = vsel %vm2251, 1, 0
  %v2764 = vsel %vm2252, 1, 0
  %v2765 = vsel %vm2253, 1, 0
  %v2766 = vsel %vm2254, 1, 0
  %v2767 = vsel %vm2255, 1, 0
  %v2768 = vsel %vm2256, 1, 0
  %v2769 = vsel %vm2257, 1, 0
  %v2770 = vsel %vm2258, 1, 0
  %v2771 = vsel %vm2259, 1, 0
  %v2772 = vsel %vm2260, 1, 0
  %v2773 = vsel %vm2261, 1, 0
  %v2774 = vsel %vm2262, 1, 0
  %v2775 = vsel %vm2263, 1, 0
  %v2776 = vsel %vm2264, 1, 0
  %v2777 = vsel %vm2265, 1, 0
  %v2778 = vsel %vm2266, 1, 0
  %v2779 = vsel %vm2267, 1, 0
  %v2780 = vsel %vm2268, 1, 0
  %v2781 = vsel %vm2269, 1, 0
  %v2782 = vsel %vm2270, 1, 0
  %v2783 = vsel %vm2271, 1, 0
  %v2784 = vsel %vm2272, 1, 0
  %v2785 = vsel %vm2273, 1, 0
  %v2786 = vsel %vm2274, 1, 0
  %v2787 = vsel %vm2275, 1, 0
  %v2788 = vsel %vm2276, 1, 0
  %v2789 = vsel %vm2277, 1, 0
  %v2790 = vsel %vm2278, 1, 0
  %v2791 = vsel %vm2279, 1, 0
  %v2792 = vsel %vm2280, 1, 0
  %v2793 = vsel %vm2281, 1, 0
  %v2794 = vsel %vm2282, 1, 0
  %v2795 = vsel %vm2283, 1, 0
  %v2796 = vsel %vm2284, 1, 0
  %v2797 = vsel %vm2285, 1, 0
  %v2798 = vsel %vm2286, 1, 0
  %v2799 = vsel %vm2287, 1, 0
  %v2800 = vsel %vm2288, 1, 0
  %v2801 = vsel %vm2289, 1, 0
  %v2802 = vsel %vm2290, 1, 0
  %v2803 = vsel %vm2291, 1, 0
  %v2804 = vsel %vm2292, 1, 0
  %v2805 = vsel %vm2293, 1, 0
  %v2806 = vsel %vm2294, 1, 0
  %v2807 = vsel %vm2295, 1, 0
  %v2808 = vsel %vm2296, 1, 0
  %v2809 = vsel %vm2297, 1, 0
  %v2810 = vsel %vm2298, 1, 0
  %v2811 = vsel %vm2299, 1, 0
  %v2812 = vsel %vm2300, 1, 0
  %v2813 = vsel %vm2301, 1, 0
  %v2814 = vsel %vm2302, 1, 0
  %v2815 = vsel %vm2303, 1, 0
  %v2816 = vsel %vm2304, 1, 0
  %v2817 = vsel %vm2305, 1, 0
  %v2818 = vsel %vm2306, 1, 0
  %v2819 = vsel %vm2307, 1, 0
  %v2820 = vsel %vm2308, 1, 0
  %v2821 = vsel %vm2309, 1, 0
  %v2822 = vsel %vm2310, 1, 0
  %v2823 = vsel %vm2311, 1, 0
  %v2824 = vsel %vm2312, 1, 0
  %v2825 = vsel %vm2313, 1, 0
  %v2826 = vsel %vm2314, 1, 0
  %v2827 = vsel %vm2315, 1, 0
  %v2828 = vsel %vm2316, 1, 0
  %v2829 = vsel %vm2317, 1, 0
  %v2830 = vsel %vm2318, 1, 0
  %v2831 = vsel %vm2319, 1, 0
  %v2832 = vsel %vm2320, 1, 0
  %v2833 = vsel %vm2321, 1, 0
  %v2834 = vsel %vm2322, 1, 0
  %v2835 = vsel %vm2323, 1, 0
  %v2836 = vsel %vm2324, 1, 0
  %v2837 = vsel %vm2325, 1, 0
  %v2838 = vsel %vm2326, 1, 0
  %v2839 = vsel %vm2327, 1, 0
  %v2840 = vsel %vm2328, 1, 0
  %v2841 = vsel %vm2329, 1, 0
  %v2842 = vsel %vm2330, 1, 0
  %v2843 = vsel %vm2331, 1, 0
  %v2844 = vsel %vm2332, 1, 0
  %v2845 = vsel %vm2333, 1, 0
  %v2846 = vsel %vm2334, 1, 0
  %v2847 = vsel %vm2335, 1, 0
  %v2848 = vsel %vm2336, 1, 0
  %v2849 = vsel %vm2337, 1, 0
  %v2850 = vsel %vm2338, 1, 0
  %v2851 = vsel %vm2339, 1, 0
  %v2852 = vsel %vm2340, 1, 0
  %v2853 = vsel %vm2341, 1, 0
  %v2854 = vsel %vm2342, 1, 0
  %v2855 = vsel %vm2343, 1, 0
  %v2856 = vsel %vm2344, 1, 0
  %v2857 = vsel %vm2345, 1, 0
  %v2858 = vsel %vm2346, 1, 0
  %v2859 = vsel %vm2347, 1, 0
  %v2860 = vsel %vm2348, 1, 0
  %v2861 = vsel %vm2349, 1, 0
  %v2862 = vsel %vm2350, 1, 0
  %v2863 = vsel %vm2351, 1, 0
  %v2864 = vsel %vm2352, 1, 0
  %v2865 = vsel %vm2353, 1, 0
  %v2866 = vsel %vm2354, 1, 0
  %v2867 = vsel %vm2355, 1, 0
  %v2868 = vsel %vm2356, 1, 0
  %v2869 = vsel %vm2357, 1, 0
  %v2870 = vsel %vm2358, 1, 0
  %v2871 = vsel %vm2359, 1, 0
  %v2872 = vsel %vm2360, 1, 0
  %v2873 = vsel %vm2361, 1, 0
  %v2874 = vsel %vm2362, 1, 0
  %v2875 = vsel %vm2363, 1, 0
  %v2876 = vsel %vm2364, 1, 0
  %v2877 = vsel %vm2365, 1, 0
  %v2878 = vsel %vm2366, 1, 0
  %v2879 = vsel %vm2367, 1, 0
  %v2880 = vsel %vm2368, 1, 0
  %v2881 = vsel %vm2369, 1, 0
  %v2882 = vsel %vm2370, 1, 0
  %v2883 = vsel %vm2371, 1, 0
  %v2884 = vsel %vm2372, 1, 0
  %v2885 = vsel %vm2373, 1, 0
  %v2886 = vsel %vm2374, 1, 0
  %v2887 = vsel %vm2375, 1, 0
  %v2888 = vsel %vm2376, 1, 0
  %v2889 = vsel %vm2377, 1, 0
  %v2890 = vsel %vm2378, 1, 0
  %v2891 = vsel %vm2379, 1, 0
  %v2892 = vsel %vm2380, 1, 0
  %v2893 = vsel %vm2381, 1, 0
  %v2894 = vsel %vm2382, 1, 0
  %v2895 = vsel %vm2383, 1, 0
  %v2896 = vsel %vm2384, 1, 0
  %v2897 = vsel %vm2385, 1, 0
  %v2898 = vsel %vm2386, 1, 0
  %v2899 = vsel %vm2387, 1, 0
  %v2900 = vsel %vm2388, 1, 0
  %v2901 = vsel %vm2389, 1, 0
  %v2902 = vsel %vm2390, 1, 0
  %v2903 = vsel %vm2391, 1, 0
  %v2904 = vsel %vm2392, 1, 0
  %v2905 = vsel %vm2393, 1, 0
  %v2906 = vsel %vm2394, 1, 0
  %v2907 = vsel %vm2395, 1, 0
  %v2908 = vsel %vm2396, 1, 0
  %v2909 = vsel %vm2397, 1, 0
  %v2910 = vsel %vm2398, 1, 0
  %v2911 = vsel %vm2399, 1, 0
  %v2912 = vsel %vm2400, 1, 0
  %v2913 = vsel %vm2401, 1, 0
  %v2914 = vsel %vm2402, 1, 0
  %v2915 = vsel %vm2403, 1, 0
  %v2916 = vsel %vm2404, 1, 0
  %v2917 = vsel %vm2405, 1, 0
  %v2918 = vsel %vm2406, 1, 0
  %v2919 = vsel %vm2407, 1, 0
  %v2920 = vsel %vm2408, 1, 0
  %v2921 = vsel %vm2409, 1, 0
  %v2922 = vsel %vm2410, 1, 0
  %v2923 = vsel %vm2411, 1, 0
  %v2924 = vsel %vm2412, 1, 0
  %v2925 = vsel %vm2413, 1, 0
  %v2926 = vsel %vm2414, 1, 0
  %v2927 = vsel %vm2415, 1, 0
  %v2928 = vsel %vm2416, 1, 0
  %v2929 = vsel %vm2417, 1, 0
  %v2930 = vsel %vm2418, 1, 0
  %v2931 = vsel %vm2419, 1, 0
  %v2932 = vsel %vm2420, 1, 0
  %v2933 = vsel %vm2421, 1, 0
  %v2934 = vsel %vm2422, 1, 0
  %v2935 = vsel %vm2423, 1, 0
  %v2936 = vsel %vm2424, 1, 0
  %v2937 = vsel %vm2425, 1, 0
  %v2938 = vsel %vm2426, 1, 0
  %v2939 = vsel %vm2427, 1, 0
  %v2940 = vsel %vm2428, 1, 0
  %v2941 = vsel %vm2429, 1, 0
  %v2942 = vsel %vm2430, 1, 0
  %v2943 = vsel %vm2431, 1, 0
  %v2944 = vsel %vm2432, 1, 0
  %v2945 = vsel %vm2433, 1, 0
  %v2946 = vsel %vm2434, 1, 0
  %v2947 = vsel %vm2435, 1, 0
  %v2948 = vsel %vm2436, 1, 0
  %v2949 = vsel %vm2437, 1, 0
  %v2950 = vsel %vm2438, 1, 0
  %v2951 = vsel %vm2439, 1, 0
  %v2952 = vsel %vm2440, 1, 0
  %v2953 = vsel %vm2441, 1, 0
  %v2954 = vsel %vm2442, 1, 0
  %v2955 = vsel %vm2443, 1, 0
  %v2956 = vsel %vm2444, 1, 0
  %v2957 = vsel %vm2445, 1, 0
  %v2958 = vsel %vm2446, 1, 0
  %v2959 = vsel %vm2447, 1, 0
  %v2960 = vsel %vm2448, 1, 0
  %v2961 = vsel %vm2449, 1, 0
  %v2962 = vsel %vm2450, 1, 0
  %v2963 = vsel %vm2451, 1, 0
  %v2964 = vsel %vm2452, 1, 0
  %v2965 = vsel %vm2453, 1, 0
  %v2966 = vsel %vm2454, 1, 0
  %v2967 = vsel %vm2455, 1, 0
  %v2968 = vsel %vm2456, 1, 0
  %v2969 = vsel %vm2457, 1, 0
  %v2970 = vsel %vm2458, 1, 0
  %v2971 = vsel %vm2459, 1, 0
  %v2972 = vsel %vm2460, 1, 0
  %v2973 = vsel %vm2461, 1, 0
  %v2974 = vsel %vm2462, 1, 0
  %v2975 = vsel %vm2463, 1, 0
  %v2976 = vsel %vm2464, 1, 0
  %v2977 = vsel %vm2465, 1, 0
  %v2978 = vsel %vm2466, 1, 0
  %v2979 = vsel %vm2467, 1, 0
  %v2980 = vsel %vm2468, 1, 0
  %v2981 = vsel %vm2469, 1, 0
  %v2982 = vsel %vm2470, 1, 0
  %v2983 = vsel %vm2471, 1, 0
  %v2984 = vsel %vm2472, 1, 0
  %v2985 = vsel %vm2473, 1, 0
  %v2986 = vsel %vm2474, 1, 0
  %v2987 = vsel %vm2475, 1, 0
  %v2988 = vsel %vm2476, 1, 0
  %v2989 = vsel %vm2477, 1, 0
  %v2990 = vsel %vm2478, 1, 0
  %v2991 = vsel %vm2479, 1, 0
  %v2992 = vsel %vm2480, 1, 0
  %v2993 = vsel %vm2481, 1, 0
  %v2994 = vsel %vm2482, 1, 0
  %v2995 = vsel %vm2483, 1, 0
  %v2996 = vsel %vm2484, 1, 0
  %v2997 = vsel %vm2485, 1, 0
  %v2998 = vsel %vm2486, 1, 0
  %v2999 = vsel %vm2487, 1, 0
  %v3000 = vsel %vm2488, 1, 0
  %v3001 = vsel %vm2489, 1, 0
  %v3002 = vsel %vm2490, 1, 0
  %v3003 = vsel %vm2491, 1, 0
  %v3004 = vsel %vm2492, 1, 0
  %v3005 = vsel %vm2493, 1, 0
  %v3006 = vsel %vm2494, 1, 0
  %v3007 = vsel %vm2495, 1, 0
  %v3008 = vsel %vm2496, 1, 0
  %v3009 = vsel %vm2497, 1, 0
  %v3010 = vsel %vm2498, 1, 0
  %v3011 = vsel %vm2499, 1, 0
  %v3012 = vsel %vm2500, 1, 0
  %v3013 = vsel %vm2501, 1, 0
  %v3014 = vsel %vm2502, 1, 0
  %v3015 = vsel %vm2503, 1, 0
  %v3016 = vsel %vm2504, 1, 0
  %v3017 = vsel %vm2505, 1, 0
  %v3018 = vsel %vm2506, 1, 0
  %v3019 = vsel %vm2507, 1, 0
  %v3020 = vsel %vm2508, 1, 0
  %v3021 = vsel %vm2509, 1, 0
  %v3022 = vsel %vm2510, 1, 0
  %v3023 = vsel %vm2511, 1, 0
  %v3024 = vsel %vm2512, 1, 0
  %v3025 = vsel %vm2513, 1, 0
  %v3026 = vsel %vm2514, 1, 0
  %v3027 = vsel %vm2515, 1, 0
  %v3028 = vsel %vm2516, 1, 0
  %v3029 = vsel %vm2517, 1, 0
  %v3030 = vsel %vm2518, 1, 0
  %v3031 = vsel %vm2519, 1, 0
  %v3032 = vsel %vm2520, 1, 0
  %v3033 = vsel %vm2521, 1, 0
  %v3034 = vsel %vm2522, 1, 0
  %v3035 = vsel %vm2523, 1, 0
  %v3036 = vsel %vm2524, 1, 0
  %v3037 = vsel %vm2525, 1, 0
  %v3038 = vsel %vm2526, 1, 0
  %v3039 = vsel %vm2527, 1, 0
  %v3040 = vsel %vm2528, 1, 0
  %v3041 = vsel %vm2529, 1, 0
  %v3042 = vsel %vm2530, 1, 0
  %v3043 = vsel %vm2531, 1, 0
  %v3044 = vsel %vm2532, 1, 0
  %v3045 = vsel %vm2533, 1, 0
  %v3046 = vsel %vm2534, 1, 0
  %v3047 = vsel %vm2535, 1, 0
  %v3048 = vsel %vm2536, 1, 0
  %v3049 = vsel %vm2537, 1, 0
  %v3050 = vsel %vm2538, 1, 0
  %v3051 = vsel %vm2539, 1, 0
  %v3052 = vsel %vm2540, 1, 0
  %v3053 = vsel %vm2541, 1, 0
  %v3054 = vsel %vm2542, 1, 0
  %v3055 = vsel %vm2543, 1, 0
  %v3056 = vsel %vm2544, 1, 0
  %v3057 = vsel %vm2545, 1, 0
  %v3058 = vsel %vm2546, 1, 0
  %v3059 = vsel %vm2547, 1, 0
  %v3060 = vsel %vm2548, 1, 0
  %v3061 = vsel %vm2549, 1, 0
  %v3062 = vsel %vm2550, 1, 0
  %v3063 = vsel %vm2551, 1, 0
  %v3064 = vsel %vm2552, 1, 0
  %v3065 = vsel %vm2553, 1, 0
  %v3066 = vsel %vm2554, 1, 0
  %v3067 = vsel %vm2555, 1, 0
  %v3068 = vsel %vm2556, 1, 0
  %v3069 = vsel %vm2557, 1, 0
  %v3070 = vsel %vm2558, 1, 0
  %v3071 = vsel %vm2559, 1, 0
  %v3072 = vsel %vm2560, 1, 0
  %v3073 = vsel %vm2561, 1, 0
  %v3074 = vsel %vm2562, 1, 0
  %v3075 = vsel %vm2563, 1, 0
  %v3076 = vsel %vm2564, 1, 0
  %v3077 = vsel %vm2565, 1, 0
  %v3078 = vsel %vm2566, 1, 0
  %v3079 = vsel %vm2567, 1, 0
  %v3080 = vsel %vm2568, 1, 0
  %v3081 = vsel %vm2569, 1, 0
  %v3082 = vsel %vm2570, 1, 0
  %v3083 = vsel %vm2571, 1, 0
  %v3084 = vsel %vm2572, 1, 0
  %v3085 = vsel %vm2573, 1, 0
  %v3086 = vsel %vm2574, 1, 0
  %v3087 = vsel %vm2575, 1, 0
  %v3088 = vsel %vm2576, 1, 0
  %v3089 = vsel %vm2577, 1, 0
  %v3090 = vsel %vm2578, 1, 0
  %v3091 = vsel %vm2579, 1, 0
  %v3092 = vsel %vm2580, 1, 0
  %v3093 = vsel %vm2581, 1, 0
  %v3094 = vsel %vm2582, 1, 0
  %v3095 = vcvt.s32.f32 %v2583
  %v3096 = vcvt.s32.f32 %v2584
  %v3097 = vcvt.s32.f32 %v2585
  %v3098 = vcvt.s32.f32 %v2586
  %v3099 = vcvt.s32.f32 %v2587
  %v3100 = vcvt.s32.f32 %v2588
  %v3101 = vcvt.s32.f32 %v2589
  %v3102 = vcvt.s32.f32 %v2590
  %v3103 = vcvt.s32.f32 %v2591
  %v3104 = vcvt.s32.f32 %v2592
  %v3105 = vcvt.s32.f32 %v2593
  %v3106 = vcvt.s32.f32 %v2594
  %v3107 = vcvt.s32.f32 %v2595
  %v3108 = vcvt.s32.f32 %v2596
  %v3109 = vcvt.s32.f32 %v2597
  %v3110 = vcvt.s32.f32 %v2598
  %v3111 = vcvt.s32.f32 %v2599
  %v3112 = vcvt.s32.f32 %v2600
  %v3113 = vcvt.s32.f32 %v2601
  %v3114 = vcvt.s32.f32 %v2602
  %v3115 = vcvt.s32.f32 %v2603
  %v3116 = vcvt.s32.f32 %v2604
  %v3117 = vcvt.s32.f32 %v2605
  %v3118 = vcvt.s32.f32 %v2606
  %v3119 = vcvt.s32.f32 %v2607
  %v3120 = vcvt.s32.f32 %v2608
  %v3121 = vcvt.s32.f32 %v2609
  %v3122 = vcvt.s32.f32 %v2610
  %v3123 = vcvt.s32.f32 %v2611
  %v3124 = vcvt.s32.f32 %v2612
  %v3125 = vcvt.s32.f32 %v2613
  %v3126 = vcvt.s32.f32 %v2614
  %v3127 = vcvt.s32.f32 %v2615
  %v3128 = vcvt.s32.f32 %v2616
  %v3129 = vcvt.s32.f32 %v2617
  %v3130 = vcvt.s32.f32 %v2618
  %v3131 = vcvt.s32.f32 %v2619
  %v3132 = vcvt.s32.f32 %v2620
  %v3133 = vcvt.s32.f32 %v2621
  %v3134 = vcvt.s32.f32 %v2622
  %v3135 = vcvt.s32.f32 %v2623
  %v3136 = vcvt.s32.f32 %v2624
  %v3137 = vcvt.s32.f32 %v2625
  %v3138 = vcvt.s32.f32 %v2626
  %v3139 = vcvt.s32.f32 %v2627
  %v3140 = vcvt.s32.f32 %v2628
  %v3141 = vcvt.s32.f32 %v2629
  %v3142 = vcvt.s32.f32 %v2630
  %v3143 = vcvt.s32.f32 %v2631
  %v3144 = vcvt.s32.f32 %v2632
  %v3145 = vcvt.s32.f32 %v2633
  %v3146 = vcvt.s32.f32 %v2634
  %v3147 = vcvt.s32.f32 %v2635
  %v3148 = vcvt.s32.f32 %v2636
  %v3149 = vcvt.s32.f32 %v2637
  %v3150 = vcvt.s32.f32 %v2638
  %v3151 = vcvt.s32.f32 %v2639
  %v3152 = vcvt.s32.f32 %v2640
  %v3153 = vcvt.s32.f32 %v2641
  %v3154 = vcvt.s32.f32 %v2642
  %v3155 = vcvt.s32.f32 %v2643
  %v3156 = vcvt.s32.f32 %v2644
  %v3157 = vcvt.s32.f32 %v2645
  %v3158 = vcvt.s32.f32 %v2646
  %v3159 = vcvt.s32.f32 %v2647
  %v3160 = vcvt.s32.f32 %v2648
  %v3161 = vcvt.s32.f32 %v2649
  %v3162 = vcvt.s32.f32 %v2650
  %v3163 = vcvt.s32.f32 %v2651
  %v3164 = vcvt.s32.f32 %v2652
  %v3165 = vcvt.s32.f32 %v2653
  %v3166 = vcvt.s32.f32 %v2654
  %v3167 = vcvt.s32.f32 %v2655
  %v3168 = vcvt.s32.f32 %v2656
  %v3169 = vcvt.s32.f32 %v2657
  %v3170 = vcvt.s32.f32 %v2658
  %v3171 = vcvt.s32.f32 %v2659
  %v3172 = vcvt.s32.f32 %v2660
  %v3173 = vcvt.s32.f32 %v2661
  %v3174 = vcvt.s32.f32 %v2662
  %v3175 = vcvt.s32.f32 %v2663
  %v3176 = vcvt.s32.f32 %v2664
  %v3177 = vcvt.s32.f32 %v2665
  %v3178 = vcvt.s32.f32 %v2666
  %v3179 = vcvt.s32.f32 %v2667
  %v3180 = vcvt.s32.f32 %v2668
  %v3181 = vcvt.s32.f32 %v2669
  %v3182 = vcvt.s32.f32 %v2670
  %v3183 = vcvt.s32.f32 %v2671
  %v3184 = vcvt.s32.f32 %v2672
  %v3185 = vcvt.s32.f32 %v2673
  %v3186 = vcvt.s32.f32 %v2674
  %v3187 = vcvt.s32.f32 %v2675
  %v3188 = vcvt.s32.f32 %v2676
  %v3189 = vcvt.s32.f32 %v2677
  %v3190 = vcvt.s32.f32 %v2678
  %v3191 = vcvt.s32.f32 %v2679
  %v3192 = vcvt.s32.f32 %v2680
  %v3193 = vcvt.s32.f32 %v2681
  %v3194 = vcvt.s32.f32 %v2682
  %v3195 = vcvt.s32.f32 %v2683
  %v3196 = vcvt.s32.f32 %v2684
  %v3197 = vcvt.s32.f32 %v2685
  %v3198 = vcvt.s32.f32 %v2686
  %v3199 = vcvt.s32.f32 %v2687
  %v3200 = vcvt.s32.f32 %v2688
  %v3201 = vcvt.s32.f32 %v2689
  %v3202 = vcvt.s32.f32 %v2690
  %v3203 = vcvt.s32.f32 %v2691
  %v3204 = vcvt.s32.f32 %v2692
  %v3205 = vcvt.s32.f32 %v2693
  %v3206 = vcvt.s32.f32 %v2694
  %v3207 = vcvt.s32.f32 %v2695
  %v3208 = vcvt.s32.f32 %v2696
  %v3209 = vcvt.s32.f32 %v2697
  %v3210 = vcvt.s32.f32 %v2698
  %v3211 = vcvt.s32.f32 %v2699
  %v3212 = vcvt.s32.f32 %v2700
  %v3213 = vcvt.s32.f32 %v2701
  %v3214 = vcvt.s32.f32 %v2702
  %v3215 = vcvt.s32.f32 %v2703
  %v3216 = vcvt.s32.f32 %v2704
  %v3217 = vcvt.s32.f32 %v2705
  %v3218 = vcvt.s32.f32 %v2706
  %v3219 = vcvt.s32.f32 %v2707
  %v3220 = vcvt.s32.f32 %v2708
  %v3221 = vcvt.s32.f32 %v2709
  %v3222 = vcvt.s32.f32 %v2710
  %v3223 = vcvt.s32.f32 %v2711
  %v3224 = vcvt.s32.f32 %v2712
  %v3225 = vcvt.s32.f32 %v2713
  %v3226 = vcvt.s32.f32 %v2714
  %v3227 = vcvt.s32.f32 %v2715
  %v3228 = vcvt.s32.f32 %v2716
  %v3229 = vcvt.s32.f32 %v2717
  %v3230 = vcvt.s32.f32 %v2718
  %v3231 = vcvt.s32.f32 %v2719
  %v3232 = vcvt.s32.f32 %v2720
  %v3233 = vcvt.s32.f32 %v2721
  %v3234 = vcvt.s32.f32 %v2722
  %v3235 = vcvt.s32.f32 %v2723
  %v3236 = vcvt.s32.f32 %v2724
  %v3237 = vcvt.s32.f32 %v2725
  %v3238 = vcvt.s32.f32 %v2726
  %v3239 = vcvt.s32.f32 %v2727
  %v3240 = vcvt.s32.f32 %v2728
  %v3241 = vcvt.s32.f32 %v2729
  %v3242 = vcvt.s32.f32 %v2730
  %v3243 = vcvt.s32.f32 %v2731
  %v3244 = vcvt.s32.f32 %v2732
  %v3245 = vcvt.s32.f32 %v2733
  %v3246 = vcvt.s32.f32 %v2734
  %v3247 = vcvt.s32.f32 %v2735
  %v3248 = vcvt.s32.f32 %v2736
  %v3249 = vcvt.s32.f32 %v2737
  %v3250 = vcvt.s32.f32 %v2738
  %v3251 = vcvt.s32.f32 %v2739
  %v3252 = vcvt.s32.f32 %v2740
  %v3253 = vcvt.s32.f32 %v2741
  %v3254 = vcvt.s32.f32 %v2742
  %v3255 = vcvt.s32.f32 %v2743
  %v3256 = vcvt.s32.f32 %v2744
  %v3257 = vcvt.s32.f32 %v2745
  %v3258 = vcvt.s32.f32 %v2746
  %v3259 = vcvt.s32.f32 %v2747
  %v3260 = vcvt.s32.f32 %v2748
  %v3261 = vcvt.s32.f32 %v2749
  %v3262 = vcvt.s32.f32 %v2750
  %v3263 = vcvt.s32.f32 %v2751
  %v3264 = vcvt.s32.f32 %v2752
  %v3265 = vcvt.s32.f32 %v2753
  %v3266 = vcvt.s32.f32 %v2754
  %v3267 = vcvt.s32.f32 %v2755
  %v3268 = vcvt.s32.f32 %v2756
  %v3269 = vcvt.s32.f32 %v2757
  %v3270 = vcvt.s32.f32 %v2758
  %v3271 = vcvt.s32.f32 %v2759
  %v3272 = vcvt.s32.f32 %v2760
  %v3273 = vcvt.s32.f32 %v2761
  %v3274 = vcvt.s32.f32 %v2762
  %v3275 = vcvt.s32.f32 %v2763
  %v3276 = vcvt.s32.f32 %v2764
  %v3277 = vcvt.s32.f32 %v2765
  %v3278 = vcvt.s32.f32 %v2766
  %v3279 = vcvt.s32.f32 %v2767
  %v3280 = vcvt.s32.f32 %v2768
  %v3281 = vcvt.s32.f32 %v2769
  %v3282 = vcvt.s32.f32 %v2770
  %v3283 = vcvt.s32.f32 %v2771
  %v3284 = vcvt.s32.f32 %v2772
  %v3285 = vcvt.s32.f32 %v2773
  %v3286 = vcvt.s32.f32 %v2774
  %v3287 = vcvt.s32.f32 %v2775
  %v3288 = vcvt.s32.f32 %v2776
  %v3289 = vcvt.s32.f32 %v2777
  %v3290 = vcvt.s32.f32 %v2778
  %v3291 = vcvt.s32.f32 %v2779
  %v3292 = vcvt.s32.f32 %v2780
  %v3293 = vcvt.s32.f32 %v2781
  %v3294 = vcvt.s32.f32 %v2782
  %v3295 = vcvt.s32.f32 %v2783
  %v3296 = vcvt.s32.f32 %v2784
  %v3297 = vcvt.s32.f32 %v2785
  %v3298 = vcvt.s32.f32 %v2786
  %v3299 = vcvt.s32.f32 %v2787
  %v3300 = vcvt.s32.f32 %v2788
  %v3301 = vcvt.s32.f32 %v2789
  %v3302 = vcvt.s32.f32 %v2790
  %v3303 = vcvt.s32.f32 %v2791
  %v3304 = vcvt.s32.f32 %v2792
  %v3305 = vcvt.s32.f32 %v2793
  %v3306 = vcvt.s32.f32 %v2794
  %v3307 = vcvt.s32.f32 %v2795
  %v3308 = vcvt.s32.f32 %v2796
  %v3309 = vcvt.s32.f32 %v2797
  %v3310 = vcvt.s32.f32 %v2798
  %v3311 = vcvt.s32.f32 %v2799
  %v3312 = vcvt.s32.f32 %v2800
  %v3313 = vcvt.s32.f32 %v2801
  %v3314 = vcvt.s32.f32 %v2802
  %v3315 = vcvt.s32.f32 %v2803
  %v3316 = vcvt.s32.f32 %v2804
  %v3317 = vcvt.s32.f32 %v2805
  %v3318 = vcvt.s32.f32 %v2806
  %v3319 = vcvt.s32.f32 %v2807
  %v3320 = vcvt.s32.f32 %v2808
  %v3321 = vcvt.s32.f32 %v2809
  %v3322 = vcvt.s32.f32 %v2810
  %v3323 = vcvt.s32.f32 %v2811
  %v3324 = vcvt.s32.f32 %v2812
  %v3325 = vcvt.s32.f32 %v2813
  %v3326 = vcvt.s32.f32 %v2814
  %v3327 = vcvt.s32.f32 %v2815
  %v3328 = vcvt.s32.f32 %v2816
  %v3329 = vcvt.s32.f32 %v2817
  %v3330 = vcvt.s32.f32 %v2818
  %v3331 = vcvt.s32.f32 %v2819
  %v3332 = vcvt.s32.f32 %v2820
  %v3333 = vcvt.s32.f32 %v2821
  %v3334 = vcvt.s32.f32 %v2822
  %v3335 = vcvt.s32.f32 %v2823
  %v3336 = vcvt.s32.f32 %v2824
  %v3337 = vcvt.s32.f32 %v2825
  %v3338 = vcvt.s32.f32 %v2826
  %v3339 = vcvt.s32.f32 %v2827
  %v3340 = vcvt.s32.f32 %v2828
  %v3341 = vcvt.s32.f32 %v2829
  %v3342 = vcvt.s32.f32 %v2830
  %v3343 = vcvt.s32.f32 %v2831
  %v3344 = vcvt.s32.f32 %v2832
  %v3345 = vcvt.s32.f32 %v2833
  %v3346 = vcvt.s32.f32 %v2834
  %v3347 = vcvt.s32.f32 %v2835
  %v3348 = vcvt.s32.f32 %v2836
  %v3349 = vcvt.s32.f32 %v2837
  %v3350 = vcvt.s32.f32 %v2838
  %v3351 = vcvt.s32.f32 %v2839
  %v3352 = vcvt.s32.f32 %v2840
  %v3353 = vcvt.s32.f32 %v2841
  %v3354 = vcvt.s32.f32 %v2842
  %v3355 = vcvt.s32.f32 %v2843
  %v3356 = vcvt.s32.f32 %v2844
  %v3357 = vcvt.s32.f32 %v2845
  %v3358 = vcvt.s32.f32 %v2846
  %v3359 = vcvt.s32.f32 %v2847
  %v3360 = vcvt.s32.f32 %v2848
  %v3361 = vcvt.s32.f32 %v2849
  %v3362 = vcvt.s32.f32 %v2850
  %v3363 = vcvt.s32.f32 %v2851
  %v3364 = vcvt.s32.f32 %v2852
  %v3365 = vcvt.s32.f32 %v2853
  %v3366 = vcvt.s32.f32 %v2854
  %v3367 = vcvt.s32.f32 %v2855
  %v3368 = vcvt.s32.f32 %v2856
  %v3369 = vcvt.s32.f32 %v2857
  %v3370 = vcvt.s32.f32 %v2858
  %v3371 = vcvt.s32.f32 %v2859
  %v3372 = vcvt.s32.f32 %v2860
  %v3373 = vcvt.s32.f32 %v2861
  %v3374 = vcvt.s32.f32 %v2862
  %v3375 = vcvt.s32.f32 %v2863
  %v3376 = vcvt.s32.f32 %v2864
  %v3377 = vcvt.s32.f32 %v2865
  %v3378 = vcvt.s32.f32 %v2866
  %v3379 = vcvt.s32.f32 %v2867
  %v3380 = vcvt.s32.f32 %v2868
  %v3381 = vcvt.s32.f32 %v2869
  %v3382 = vcvt.s32.f32 %v2870
  %v3383 = vcvt.s32.f32 %v2871
  %v3384 = vcvt.s32.f32 %v2872
  %v3385 = vcvt.s32.f32 %v2873
  %v3386 = vcvt.s32.f32 %v2874
  %v3387 = vcvt.s32.f32 %v2875
  %v3388 = vcvt.s32.f32 %v2876
  %v3389 = vcvt.s32.f32 %v2877
  %v3390 = vcvt.s32.f32 %v2878
  %v3391 = vcvt.s32.f32 %v2879
  %v3392 = vcvt.s32.f32 %v2880
  %v3393 = vcvt.s32.f32 %v2881
  %v3394 = vcvt.s32.f32 %v2882
  %v3395 = vcvt.s32.f32 %v2883
  %v3396 = vcvt.s32.f32 %v2884
  %v3397 = vcvt.s32.f32 %v2885
  %v3398 = vcvt.s32.f32 %v2886
  %v3399 = vcvt.s32.f32 %v2887
  %v3400 = vcvt.s32.f32 %v2888
  %v3401 = vcvt.s32.f32 %v2889
  %v3402 = vcvt.s32.f32 %v2890
  %v3403 = vcvt.s32.f32 %v2891
  %v3404 = vcvt.s32.f32 %v2892
  %v3405 = vcvt.s32.f32 %v2893
  %v3406 = vcvt.s32.f32 %v2894
  %v3407 = vcvt.s32.f32 %v2895
  %v3408 = vcvt.s32.f32 %v2896
  %v3409 = vcvt.s32.f32 %v2897
  %v3410 = vcvt.s32.f32 %v2898
  %v3411 = vcvt.s32.f32 %v2899
  %v3412 = vcvt.s32.f32 %v2900
  %v3413 = vcvt.s32.f32 %v2901
  %v3414 = vcvt.s32.f32 %v2902
  %v3415 = vcvt.s32.f32 %v2903
  %v3416 = vcvt.s32.f32 %v2904
  %v3417 = vcvt.s32.f32 %v2905
  %v3418 = vcvt.s32.f32 %v2906
  %v3419 = vcvt.s32.f32 %v2907
  %v3420 = vcvt.s32.f32 %v2908
  %v3421 = vcvt.s32.f32 %v2909
  %v3422 = vcvt.s32.f32 %v2910
  %v3423 = vcvt.s32.f32 %v2911
  %v3424 = vcvt.s32.f32 %v2912
  %v3425 = vcvt.s32.f32 %v2913
  %v3426 = vcvt.s32.f32 %v2914
  %v3427 = vcvt.s32.f32 %v2915
  %v3428 = vcvt.s32.f32 %v2916
  %v3429 = vcvt.s32.f32 %v2917
  %v3430 = vcvt.s32.f32 %v2918
  %v3431 = vcvt.s32.f32 %v2919
  %v3432 = vcvt.s32.f32 %v2920
  %v3433 = vcvt.s32.f32 %v2921
  %v3434 = vcvt.s32.f32 %v2922
  %v3435 = vcvt.s32.f32 %v2923
  %v3436 = vcvt.s32.f32 %v2924
  %v3437 = vcvt.s32.f32 %v2925
  %v3438 = vcvt.s32.f32 %v2926
  %v3439 = vcvt.s32.f32 %v2927
  %v3440 = vcvt.s32.f32 %v2928
  %v3441 = vcvt.s32.f32 %v2929
  %v3442 = vcvt.s32.f32 %v2930
  %v3443 = vcvt.s32.f32 %v2931
  %v3444 = vcvt.s32.f32 %v2932
  %v3445 = vcvt.s32.f32 %v2933
  %v3446 = vcvt.s32.f32 %v2934
  %v3447 = vcvt.s32.f32 %v2935
  %v3448 = vcvt.s32.f32 %v2936
  %v3449 = vcvt.s32.f32 %v2937
  %v3450 = vcvt.s32.f32 %v2938
  %v3451 = vcvt.s32.f32 %v2939
  %v3452 = vcvt.s32.f32 %v2940
  %v3453 = vcvt.s32.f32 %v2941
  %v3454 = vcvt.s32.f32 %v2942
  %v3455 = vcvt.s32.f32 %v2943
  %v3456 = vcvt.s32.f32 %v2944
  %v3457 = vcvt.s32.f32 %v2945
  %v3458 = vcvt.s32.f32 %v2946
  %v3459 = vcvt.s32.f32 %v2947
  %v3460 = vcvt.s32.f32 %v2948
  %v3461 = vcvt.s32.f32 %v2949
  %v3462 = vcvt.s32.f32 %v2950
  %v3463 = vcvt.s32.f32 %v2951
  %v3464 = vcvt.s32.f32 %v2952
  %v3465 = vcvt.s32.f32 %v2953
  %v3466 = vcvt.s32.f32 %v2954
  %v3467 = vcvt.s32.f32 %v2955
  %v3468 = vcvt.s32.f32 %v2956
  %v3469 = vcvt.s32.f32 %v2957
  %v3470 = vcvt.s32.f32 %v2958
  %v3471 = vcvt.s32.f32 %v2959
  %v3472 = vcvt.s32.f32 %v2960
  %v3473 = vcvt.s32.f32 %v2961
  %v3474 = vcvt.s32.f32 %v2962
  %v3475 = vcvt.s32.f32 %v2963
  %v3476 = vcvt.s32.f32 %v2964
  %v3477 = vcvt.s32.f32 %v2965
  %v3478 = vcvt.s32.f32 %v2966
  %v3479 = vcvt.s32.f32 %v2967
  %v3480 = vcvt.s32.f32 %v2968
  %v3481 = vcvt.s32.f32 %v2969
  %v3482 = vcvt.s32.f32 %v2970
  %v3483 = vcvt.s32.f32 %v2971
  %v3484 = vcvt.s32.f32 %v2972
  %v3485 = vcvt.s32.f32 %v2973
  %v3486 = vcvt.s32.f32 %v2974
  %v3487 = vcvt.s32.f32 %v2975
  %v3488 = vcvt.s32.f32 %v2976
  %v3489 = vcvt.s32.f32 %v2977
  %v3490 = vcvt.s32.f32 %v2978
  %v3491 = vcvt.s32.f32 %v2979
  %v3492 = vcvt.s32.f32 %v2980
  %v3493 = vcvt.s32.f32 %v2981
  %v3494 = vcvt.s32.f32 %v2982
  %v3495 = vcvt.s32.f32 %v2983
  %v3496 = vcvt.s32.f32 %v2984
  %v3497 = vcvt.s32.f32 %v2985
  %v3498 = vcvt.s32.f32 %v2986
  %v3499 = vcvt.s32.f32 %v2987
  %v3500 = vcvt.s32.f32 %v2988
  %v3501 = vcvt.s32.f32 %v2989
  %v3502 = vcvt.s32.f32 %v2990
  %v3503 = vcvt.s32.f32 %v2991
  %v3504 = vcvt.s32.f32 %v2992
  %v3505 = vcvt.s32.f32 %v2993
  %v3506 = vcvt.s32.f32 %v2994
  %v3507 = vcvt.s32.f32 %v2995
  %v3508 = vcvt.s32.f32 %v2996
  %v3509 = vcvt.s32.f32 %v2997
  %v3510 = vcvt.s32.f32 %v2998
  %v3511 = vcvt.s32.f32 %v2999
  %v3512 = vcvt.s32.f32 %v3000
  %v3513 = vcvt.s32.f32 %v3001
  %v3514 = vcvt.s32.f32 %v3002
  %v3515 = vcvt.s32.f32 %v3003
  %v3516 = vcvt.s32.f32 %v3004
  %v3517 = vcvt.s32.f32 %v3005
  %v3518 = vcvt.s32.f32 %v3006
  %v3519 = vcvt.s32.f32 %v3007
  %v3520 = vcvt.s32.f32 %v3008
  %v3521 = vcvt.s32.f32 %v3009
  %v3522 = vcvt.s32.f32 %v3010
  %v3523 = vcvt.s32.f32 %v3011
  %v3524 = vcvt.s32.f32 %v3012
  %v3525 = vcvt.s32.f32 %v3013
  %v3526 = vcvt.s32.f32 %v3014
  %v3527 = vcvt.s32.f32 %v3015
  %v3528 = vcvt.s32.f32 %v3016
  %v3529 = vcvt.s32.f32 %v3017
  %v3530 = vcvt.s32.f32 %v3018
  %v3531 = vcvt.s32.f32 %v3019
  %v3532 = vcvt.s32.f32 %v3020
  %v3533 = vcvt.s32.f32 %v3021
  %v3534 = vcvt.s32.f32 %v3022
  %v3535 = vcvt.s32.f32 %v3023
  %v3536 = vcvt.s32.f32 %v3024
  %v3537 = vcvt.s32.f32 %v3025
  %v3538 = vcvt.s32.f32 %v3026
  %v3539 = vcvt.s32.f32 %v3027
  %v3540 = vcvt.s32.f32 %v3028
  %v3541 = vcvt.s32.f32 %v3029
  %v3542 = vcvt.s32.f32 %v3030
  %v3543 = vcvt.s32.f32 %v3031
  %v3544 = vcvt.s32.f32 %v3032
  %v3545 = vcvt.s32.f32 %v3033
  %v3546 = vcvt.s32.f32 %v3034
  %v3547 = vcvt.s32.f32 %v3035
  %v3548 = vcvt.s32.f32 %v3036
  %v3549 = vcvt.s32.f32 %v3037
  %v3550 = vcvt.s32.f32 %v3038
  %v3551 = vcvt.s32.f32 %v3039
  %v3552 = vcvt.s32.f32 %v3040
  %v3553 = vcvt.s32.f32 %v3041
  %v3554 = vcvt.s32.f32 %v3042
  %v3555 = vcvt.s32.f32 %v3043
  %v3556 = vcvt.s32.f32 %v3044
  %v3557 = vcvt.s32.f32 %v3045
  %v3558 = vcvt.s32.f32 %v3046
  %v3559 = vcvt.s32.f32 %v3047
  %v3560 = vcvt.s32.f32 %v3048
  %v3561 = vcvt.s32.f32 %v3049
  %v3562 = vcvt.s32.f32 %v3050
  %v3563 = vcvt.s32.f32 %v3051
  %v3564 = vcvt.s32.f32 %v3052
  %v3565 = vcvt.s32.f32 %v3053
  %v3566 = vcvt.s32.f32 %v3054
  %v3567 = vcvt.s32.f32 %v3055
  %v3568 = vcvt.s32.f32 %v3056
  %v3569 = vcvt.s32.f32 %v3057
  %v3570 = vcvt.s32.f32 %v3058
  %v3571 = vcvt.s32.f32 %v3059
  %v3572 = vcvt.s32.f32 %v3060
  %v3573 = vcvt.s32.f32 %v3061
  %v3574 = vcvt.s32.f32 %v3062
  %v3575 = vcvt.s32.f32 %v3063
  %v3576 = vcvt.s32.f32 %v3064
  %v3577 = vcvt.s32.f32 %v3065
  %v3578 = vcvt.s32.f32 %v3066
  %v3579 = vcvt.s32.f32 %v3067
  %v3580 = vcvt.s32.f32 %v3068
  %v3581 = vcvt.s32.f32 %v3069
  %v3582 = vcvt.s32.f32 %v3070
  %v3583 = vcvt.s32.f32 %v3071
  %v3584 = vcvt.s32.f32 %v3072
  %v3585 = vcvt.s32.f32 %v3073
  %v3586 = vcvt.s32.f32 %v3074
  %v3587 = vcvt.s32.f32 %v3075
  %v3588 = vcvt.s32.f32 %v3076
  %v3589 = vcvt.s32.f32 %v3077
  %v3590 = vcvt.s32.f32 %v3078
  %v3591 = vcvt.s32.f32 %v3079
  %v3592 = vcvt.s32.f32 %v3080
  %v3593 = vcvt.s32.f32 %v3081
  %v3594 = vcvt.s32.f32 %v3082
  %v3595 = vcvt.s32.f32 %v3083
  %v3596 = vcvt.s32.f32 %v3084
  %v3597 = vcvt.s32.f32 %v3085
  %v3598 = vcvt.s32.f32 %v3086
  %v3599 = vcvt.s32.f32 %v3087
  %v3600 = vcvt.s32.f32 %v3088
  %v3601 = vcvt.s32.f32 %v3089
  %v3602 = vcvt.s32.f32 %v3090
  %v3603 = vcvt.s32.f32 %v3091
  %v3604 = vcvt.s32.f32 %v3092
  %v3605 = vcvt.s32.f32 %v3093
  %v3606 = vcvt.s32.f32 %v3094
  %v3607 = vperm.slane %v447, 0
  %v3608 = vperm.slane %v447, 1
  %3611 = vmatpush.xpose.msra.mxu0 %v3125
  %3612 = vmatpush.xpose.msra.mxu0 %v3123
  %3613 = vmatpush.xpose.msra.mxu0 %v3121
  %3614 = vmatpush.xpose.msra.mxu0 %v3119
  %3615 = vmatpush.xpose.msra.mxu0 %v3117
  %3616 = vmatpush.xpose.msra.mxu0 %v3115
  %3617 = vmatpush.xpose.msra.mxu0 %v3113
  %3618 = vmatpush.xpose.msra.mxu0 %v3111
  %3619 = vmatpush.xpose.msra.mxu0 %v3109
  %3620 = vmatpush.xpose.msra.mxu0 %v3107
  %3621 = vmatpush.xpose.msra.mxu0 %v3105
  %3622 = vmatpush.xpose.msra.mxu0 %v3103
  %3623 = vmatpush.xpose.msra.mxu0 %v3101
  %3624 = vmatpush.xpose.msra.mxu0 %v3099
  %3625 = vmatpush.xpose.msra.mxu0 %v3097
  %3626 = vmatpush.xpose.msra.mxu0 %v3095
  %3627 = vmatmul.f32.gmra.mxu0 %v3607
  %v3628 = vpop.f32.mrf.mxu0
  %v3629 = vadd.f32 0.0, %v3628
  %3630 = vdwg.mxu0
  %3631 = vmatpush.xpose.msra.mxu0 %v3126
  %3632 = vmatpush.xpose.msra.mxu0 %v3124
  %3633 = vmatpush.xpose.msra.mxu0 %v3122
  %3634 = vmatpush.xpose.msra.mxu0 %v3120
  %3635 = vmatpush.xpose.msra.mxu0 %v3118
  %3636 = vmatpush.xpose.msra.mxu0 %v3116
  %3637 = vmatpush.xpose.msra.mxu0 %v3114
  %3638 = vmatpush.xpose.msra.mxu0 %v3112
  %3639 = vmatpush.xpose.msra.mxu0 %v3110
  %3640 = vmatpush.xpose.msra.mxu0 %v3108
  %3641 = vmatpush.xpose.msra.mxu0 %v3106
  %3642 = vmatpush.xpose.msra.mxu0 %v3104
  %3643 = vmatpush.xpose.msra.mxu0 %v3102
  %3644 = vmatpush.xpose.msra.mxu0 %v3100
  %3645 = vmatpush.xpose.msra.mxu0 %v3098
  %3646 = vmatpush.xpose.msra.mxu0 %v3096
  %3647 = vmatmul.f32.gmra.mxu0 %v3608
  %v3648 = vpop.f32.mrf.mxu0
  %v3649 = vadd.f32 %v3629, %v3648
  %3650 = vdwg.mxu0
  %3651 = vmatpush.xpose.msra.mxu0 %v3157
  %3652 = vmatpush.xpose.msra.mxu0 %v3155
  %3653 = vmatpush.xpose.msra.mxu0 %v3153
  %3654 = vmatpush.xpose.msra.mxu0 %v3151
  %3655 = vmatpush.xpose.msra.mxu0 %v3149
  %3656 = vmatpush.xpose.msra.mxu0 %v3147
  %3657 = vmatpush.xpose.msra.mxu0 %v3145
  %3658 = vmatpush.xpose.msra.mxu0 %v3143
  %3659 = vmatpush.xpose.msra.mxu0 %v3141
  %3660 = vmatpush.xpose.msra.mxu0 %v3139
  %3661 = vmatpush.xpose.msra.mxu0 %v3137
  %3662 = vmatpush.xpose.msra.mxu0 %v3135
  %3663 = vmatpush.xpose.msra.mxu0 %v3133
  %3664 = vmatpush.xpose.msra.mxu0 %v3131
  %3665 = vmatpush.xpose.msra.mxu0 %v3129
  %3666 = vmatpush.xpose.msra.mxu0 %v3127
  %3667 = vmatmul.f32.gmra.mxu0 %v3607
  %v3668 = vpop.f32.mrf.mxu0
  %v3669 = vadd.f32 0.0, %v3668
  %3670 = vdwg.mxu0
  %3671 = vmatpush.xpose.msra.mxu0 %v3158
  %3672 = vmatpush.xpose.msra.mxu0 %v3156
  %3673 = vmatpush.xpose.msra.mxu0 %v3154
  %3674 = vmatpush.xpose.msra.mxu0 %v3152
  %3675 = vmatpush.xpose.msra.mxu0 %v3150
  %3676 = vmatpush.xpose.msra.mxu0 %v3148
  %3677 = vmatpush.xpose.msra.mxu0 %v3146
  %3678 = vmatpush.xpose.msra.mxu0 %v3144
  %3679 = vmatpush.xpose.msra.mxu0 %v3142
  %3680 = vmatpush.xpose.msra.mxu0 %v3140
  %3681 = vmatpush.xpose.msra.mxu0 %v3138
  %3682 = vmatpush.xpose.msra.mxu0 %v3136
  %3683 = vmatpush.xpose.msra.mxu0 %v3134
  %3684 = vmatpush.xpose.msra.mxu0 %v3132
  %3685 = vmatpush.xpose.msra.mxu0 %v3130
  %3686 = vmatpush.xpose.msra.mxu0 %v3128
  %3687 = vmatmul.f32.gmra.mxu0 %v3608
  %v3688 = vpop.f32.mrf.mxu0
  %v3689 = vadd.f32 %v3669, %v3688
  %3690 = vdwg.mxu0
  %v3691 = vperm.slane %v450, 0
  %v3692 = vperm.slane %v450, 1
  %3695 = vmatpush.xpose.msra.mxu0 %v3189
  %3696 = vmatpush.xpose.msra.mxu0 %v3187
  %3697 = vmatpush.xpose.msra.mxu0 %v3185
  %3698 = vmatpush.xpose.msra.mxu0 %v3183
  %3699 = vmatpush.xpose.msra.mxu0 %v3181
  %3700 = vmatpush.xpose.msra.mxu0 %v3179
  %3701 = vmatpush.xpose.msra.mxu0 %v3177
  %3702 = vmatpush.xpose.msra.mxu0 %v3175
  %3703 = vmatpush.xpose.msra.mxu0 %v3173
  %3704 = vmatpush.xpose.msra.mxu0 %v3171
  %3705 = vmatpush.xpose.msra.mxu0 %v3169
  %3706 = vmatpush.xpose.msra.mxu0 %v3167
  %3707 = vmatpush.xpose.msra.mxu0 %v3165
  %3708 = vmatpush.xpose.msra.mxu0 %v3163
  %3709 = vmatpush.xpose.msra.mxu0 %v3161
  %3710 = vmatpush.xpose.msra.mxu0 %v3159
  %3711 = vmatmul.f32.gmra.mxu0 %v3691
  %v3712 = vpop.f32.mrf.mxu0
  %v3713 = vadd.f32 0.0, %v3712
  %3714 = vdwg.mxu0
  %3715 = vmatpush.xpose.msra.mxu0 %v3190
  %3716 = vmatpush.xpose.msra.mxu0 %v3188
  %3717 = vmatpush.xpose.msra.mxu0 %v3186
  %3718 = vmatpush.xpose.msra.mxu0 %v3184
  %3719 = vmatpush.xpose.msra.mxu0 %v3182
  %3720 = vmatpush.xpose.msra.mxu0 %v3180
  %3721 = vmatpush.xpose.msra.mxu0 %v3178
  %3722 = vmatpush.xpose.msra.mxu0 %v3176
  %3723 = vmatpush.xpose.msra.mxu0 %v3174
  %3724 = vmatpush.xpose.msra.mxu0 %v3172
  %3725 = vmatpush.xpose.msra.mxu0 %v3170
  %3726 = vmatpush.xpose.msra.mxu0 %v3168
  %3727 = vmatpush.xpose.msra.mxu0 %v3166
  %3728 = vmatpush.xpose.msra.mxu0 %v3164
  %3729 = vmatpush.xpose.msra.mxu0 %v3162
  %3730 = vmatpush.xpose.msra.mxu0 %v3160
  %3731 = vmatmul.f32.gmra.mxu0 %v3692
  %v3732 = vpop.f32.mrf.mxu0
  %v3733 = vadd.f32 %v3713, %v3732
  %3734 = vdwg.mxu0
  %3735 = vmatpush.xpose.msra.mxu0 %v3221
  %3736 = vmatpush.xpose.msra.mxu0 %v3219
  %3737 = vmatpush.xpose.msra.mxu0 %v3217
  %3738 = vmatpush.xpose.msra.mxu0 %v3215
  %3739 = vmatpush.xpose.msra.mxu0 %v3213
  %3740 = vmatpush.xpose.msra.mxu0 %v3211
  %3741 = vmatpush.xpose.msra.mxu0 %v3209
  %3742 = vmatpush.xpose.msra.mxu0 %v3207
  %3743 = vmatpush.xpose.msra.mxu0 %v3205
  %3744 = vmatpush.xpose.msra.mxu0 %v3203
  %3745 = vmatpush.xpose.msra.mxu0 %v3201
  %3746 = vmatpush.xpose.msra.mxu0 %v3199
  %3747 = vmatpush.xpose.msra.mxu0 %v3197
  %3748 = vmatpush.xpose.msra.mxu0 %v3195
  %3749 = vmatpush.xpose.msra.mxu0 %v3193
  %3750 = vmatpush.xpose.msra.mxu0 %v3191
  %3751 = vmatmul.f32.gmra.mxu0 %v3691
  %v3752 = vpop.f32.mrf.mxu0
  %v3753 = vadd.f32 0.0, %v3752
  %3754 = vdwg.mxu0
  %3755 = vmatpush.xpose.msra.mxu0 %v3222
  %3756 = vmatpush.xpose.msra.mxu0 %v3220
  %3757 = vmatpush.xpose.msra.mxu0 %v3218
  %3758 = vmatpush.xpose.msra.mxu0 %v3216
  %3759 = vmatpush.xpose.msra.mxu0 %v3214
  %3760 = vmatpush.xpose.msra.mxu0 %v3212
  %3761 = vmatpush.xpose.msra.mxu0 %v3210
  %3762 = vmatpush.xpose.msra.mxu0 %v3208
  %3763 = vmatpush.xpose.msra.mxu0 %v3206
  %3764 = vmatpush.xpose.msra.mxu0 %v3204
  %3765 = vmatpush.xpose.msra.mxu0 %v3202
  %3766 = vmatpush.xpose.msra.mxu0 %v3200
  %3767 = vmatpush.xpose.msra.mxu0 %v3198
  %3768 = vmatpush.xpose.msra.mxu0 %v3196
  %3769 = vmatpush.xpose.msra.mxu0 %v3194
  %3770 = vmatpush.xpose.msra.mxu0 %v3192
  %3771 = vmatmul.f32.gmra.mxu0 %v3692
  %v3772 = vpop.f32.mrf.mxu0
  %v3773 = vadd.f32 %v3753, %v3772
  %3774 = vdwg.mxu0
  %v3775 = vperm.slane %v453, 0
  %v3776 = vperm.slane %v453, 1
  %3779 = vmatpush.xpose.msra.mxu0 %v3253
  %3780 = vmatpush.xpose.msra.mxu0 %v3251
  %3781 = vmatpush.xpose.msra.mxu0 %v3249
  %3782 = vmatpush.xpose.msra.mxu0 %v3247
  %3783 = vmatpush.xpose.msra.mxu0 %v3245
  %3784 = vmatpush.xpose.msra.mxu0 %v3243
  %3785 = vmatpush.xpose.msra.mxu0 %v3241
  %3786 = vmatpush.xpose.msra.mxu0 %v3239
  %3787 = vmatpush.xpose.msra.mxu0 %v3237
  %3788 = vmatpush.xpose.msra.mxu0 %v3235
  %3789 = vmatpush.xpose.msra.mxu0 %v3233
  %3790 = vmatpush.xpose.msra.mxu0 %v3231
  %3791 = vmatpush.xpose.msra.mxu0 %v3229
  %3792 = vmatpush.xpose.msra.mxu0 %v3227
  %3793 = vmatpush.xpose.msra.mxu0 %v3225
  %3794 = vmatpush.xpose.msra.mxu0 %v3223
  %3795 = vmatmul.f32.gmra.mxu0 %v3775
  %v3796 = vpop.f32.mrf.mxu0
  %v3797 = vadd.f32 0.0, %v3796
  %3798 = vdwg.mxu0
  %3799 = vmatpush.xpose.msra.mxu0 %v3254
  %3800 = vmatpush.xpose.msra.mxu0 %v3252
  %3801 = vmatpush.xpose.msra.mxu0 %v3250
  %3802 = vmatpush.xpose.msra.mxu0 %v3248
  %3803 = vmatpush.xpose.msra.mxu0 %v3246
  %3804 = vmatpush.xpose.msra.mxu0 %v3244
  %3805 = vmatpush.xpose.msra.mxu0 %v3242
  %3806 = vmatpush.xpose.msra.mxu0 %v3240
  %3807 = vmatpush.xpose.msra.mxu0 %v3238
  %3808 = vmatpush.xpose.msra.mxu0 %v3236
  %3809 = vmatpush.xpose.msra.mxu0 %v3234
  %3810 = vmatpush.xpose.msra.mxu0 %v3232
  %3811 = vmatpush.xpose.msra.mxu0 %v3230
  %3812 = vmatpush.xpose.msra.mxu0 %v3228
  %3813 = vmatpush.xpose.msra.mxu0 %v3226
  %3814 = vmatpush.xpose.msra.mxu0 %v3224
  %3815 = vmatmul.f32.gmra.mxu0 %v3776
  %v3816 = vpop.f32.mrf.mxu0
  %v3817 = vadd.f32 %v3797, %v3816
  %3818 = vdwg.mxu0
  %3819 = vmatpush.xpose.msra.mxu0 %v3285
  %3820 = vmatpush.xpose.msra.mxu0 %v3283
  %3821 = vmatpush.xpose.msra.mxu0 %v3281
  %3822 = vmatpush.xpose.msra.mxu0 %v3279
  %3823 = vmatpush.xpose.msra.mxu0 %v3277
  %3824 = vmatpush.xpose.msra.mxu0 %v3275
  %3825 = vmatpush.xpose.msra.mxu0 %v3273
  %3826 = vmatpush.xpose.msra.mxu0 %v3271
  %3827 = vmatpush.xpose.msra.mxu0 %v3269
  %3828 = vmatpush.xpose.msra.mxu0 %v3267
  %3829 = vmatpush.xpose.msra.mxu0 %v3265
  %3830 = vmatpush.xpose.msra.mxu0 %v3263
  %3831 = vmatpush.xpose.msra.mxu0 %v3261
  %3832 = vmatpush.xpose.msra.mxu0 %v3259
  %3833 = vmatpush.xpose.msra.mxu0 %v3257
  %3834 = vmatpush.xpose.msra.mxu0 %v3255
  %3835 = vmatmul.f32.gmra.mxu0 %v3775
  %v3836 = vpop.f32.mrf.mxu0
  %v3837 = vadd.f32 0.0, %v3836
  %3838 = vdwg.mxu0
  %3839 = vmatpush.xpose.msra.mxu0 %v3286
  %3840 = vmatpush.xpose.msra.mxu0 %v3284
  %3841 = vmatpush.xpose.msra.mxu0 %v3282
  %3842 = vmatpush.xpose.msra.mxu0 %v3280
  %3843 = vmatpush.xpose.msra.mxu0 %v3278
  %3844 = vmatpush.xpose.msra.mxu0 %v3276
  %3845 = vmatpush.xpose.msra.mxu0 %v3274
  %3846 = vmatpush.xpose.msra.mxu0 %v3272
  %3847 = vmatpush.xpose.msra.mxu0 %v3270
  %3848 = vmatpush.xpose.msra.mxu0 %v3268
  %3849 = vmatpush.xpose.msra.mxu0 %v3266
  %3850 = vmatpush.xpose.msra.mxu0 %v3264
  %3851 = vmatpush.xpose.msra.mxu0 %v3262
  %3852 = vmatpush.xpose.msra.mxu0 %v3260
  %3853 = vmatpush.xpose.msra.mxu0 %v3258
  %3854 = vmatpush.xpose.msra.mxu0 %v3256
  %3855 = vmatmul.f32.gmra.mxu0 %v3776
  %v3856 = vpop.f32.mrf.mxu0
  %v3857 = vadd.f32 %v3837, %v3856
  %3858 = vdwg.mxu0
  %v3859 = vperm.slane %v456, 0
  %v3860 = vperm.slane %v456, 1
  %3863 = vmatpush.xpose.msra.mxu0 %v3317
  %3864 = vmatpush.xpose.msra.mxu0 %v3315
  %3865 = vmatpush.xpose.msra.mxu0 %v3313
  %3866 = vmatpush.xpose.msra.mxu0 %v3311
  %3867 = vmatpush.xpose.msra.mxu0 %v3309
  %3868 = vmatpush.xpose.msra.mxu0 %v3307
  %3869 = vmatpush.xpose.msra.mxu0 %v3305
  %3870 = vmatpush.xpose.msra.mxu0 %v3303
  %3871 = vmatpush.xpose.msra.mxu0 %v3301
  %3872 = vmatpush.xpose.msra.mxu0 %v3299
  %3873 = vmatpush.xpose.msra.mxu0 %v3297
  %3874 = vmatpush.xpose.msra.mxu0 %v3295
  %3875 = vmatpush.xpose.msra.mxu0 %v3293
  %3876 = vmatpush.xpose.msra.mxu0 %v3291
  %3877 = vmatpush.xpose.msra.mxu0 %v3289
  %3878 = vmatpush.xpose.msra.mxu0 %v3287
  %3879 = vmatmul.f32.gmra.mxu0 %v3859
  %v3880 = vpop.f32.mrf.mxu0
  %v3881 = vadd.f32 0.0, %v3880
  %3882 = vdwg.mxu0
  %3883 = vmatpush.xpose.msra.mxu0 %v3318
  %3884 = vmatpush.xpose.msra.mxu0 %v3316
  %3885 = vmatpush.xpose.msra.mxu0 %v3314
  %3886 = vmatpush.xpose.msra.mxu0 %v3312
  %3887 = vmatpush.xpose.msra.mxu0 %v3310
  %3888 = vmatpush.xpose.msra.mxu0 %v3308
  %3889 = vmatpush.xpose.msra.mxu0 %v3306
  %3890 = vmatpush.xpose.msra.mxu0 %v3304
  %3891 = vmatpush.xpose.msra.mxu0 %v3302
  %3892 = vmatpush.xpose.msra.mxu0 %v3300
  %3893 = vmatpush.xpose.msra.mxu0 %v3298
  %3894 = vmatpush.xpose.msra.mxu0 %v3296
  %3895 = vmatpush.xpose.msra.mxu0 %v3294
  %3896 = vmatpush.xpose.msra.mxu0 %v3292
  %3897 = vmatpush.xpose.msra.mxu0 %v3290
  %3898 = vmatpush.xpose.msra.mxu0 %v3288
  %3899 = vmatmul.f32.gmra.mxu0 %v3860
  %v3900 = vpop.f32.mrf.mxu0
  %v3901 = vadd.f32 %v3881, %v3900
  %3902 = vdwg.mxu0
  %3903 = vmatpush.xpose.msra.mxu0 %v3349
  %3904 = vmatpush.xpose.msra.mxu0 %v3347
  %3905 = vmatpush.xpose.msra.mxu0 %v3345
  %3906 = vmatpush.xpose.msra.mxu0 %v3343
  %3907 = vmatpush.xpose.msra.mxu0 %v3341
  %3908 = vmatpush.xpose.msra.mxu0 %v3339
  %3909 = vmatpush.xpose.msra.mxu0 %v3337
  %3910 = vmatpush.xpose.msra.mxu0 %v3335
  %3911 = vmatpush.xpose.msra.mxu0 %v3333
  %3912 = vmatpush.xpose.msra.mxu0 %v3331
  %3913 = vmatpush.xpose.msra.mxu0 %v3329
  %3914 = vmatpush.xpose.msra.mxu0 %v3327
  %3915 = vmatpush.xpose.msra.mxu0 %v3325
  %3916 = vmatpush.xpose.msra.mxu0 %v3323
  %3917 = vmatpush.xpose.msra.mxu0 %v3321
  %3918 = vmatpush.xpose.msra.mxu0 %v3319
  %3919 = vmatmul.f32.gmra.mxu0 %v3859
  %v3920 = vpop.f32.mrf.mxu0
  %v3921 = vadd.f32 0.0, %v3920
  %3922 = vdwg.mxu0
  %3923 = vmatpush.xpose.msra.mxu0 %v3350
  %3924 = vmatpush.xpose.msra.mxu0 %v3348
  %3925 = vmatpush.xpose.msra.mxu0 %v3346
  %3926 = vmatpush.xpose.msra.mxu0 %v3344
  %3927 = vmatpush.xpose.msra.mxu0 %v3342
  %3928 = vmatpush.xpose.msra.mxu0 %v3340
  %3929 = vmatpush.xpose.msra.mxu0 %v3338
  %3930 = vmatpush.xpose.msra.mxu0 %v3336
  %3931 = vmatpush.xpose.msra.mxu0 %v3334
  %3932 = vmatpush.xpose.msra.mxu0 %v3332
  %3933 = vmatpush.xpose.msra.mxu0 %v3330
  %3934 = vmatpush.xpose.msra.mxu0 %v3328
  %3935 = vmatpush.xpose.msra.mxu0 %v3326
  %3936 = vmatpush.xpose.msra.mxu0 %v3324
  %3937 = vmatpush.xpose.msra.mxu0 %v3322
  %3938 = vmatpush.xpose.msra.mxu0 %v3320
  %3939 = vmatmul.f32.gmra.mxu0 %v3860
  %v3940 = vpop.f32.mrf.mxu0
  %v3941 = vadd.f32 %v3921, %v3940
  %3942 = vdwg.mxu0
  %v3943 = vperm.slane %v459, 0
  %v3944 = vperm.slane %v459, 1
  %3947 = vmatpush.xpose.msra.mxu0 %v3381
  %3948 = vmatpush.xpose.msra.mxu0 %v3379
  %3949 = vmatpush.xpose.msra.mxu0 %v3377
  %3950 = vmatpush.xpose.msra.mxu0 %v3375
  %3951 = vmatpush.xpose.msra.mxu0 %v3373
  %3952 = vmatpush.xpose.msra.mxu0 %v3371
  %3953 = vmatpush.xpose.msra.mxu0 %v3369
  %3954 = vmatpush.xpose.msra.mxu0 %v3367
  %3955 = vmatpush.xpose.msra.mxu0 %v3365
  %3956 = vmatpush.xpose.msra.mxu0 %v3363
  %3957 = vmatpush.xpose.msra.mxu0 %v3361
  %3958 = vmatpush.xpose.msra.mxu0 %v3359
  %3959 = vmatpush.xpose.msra.mxu0 %v3357
  %3960 = vmatpush.xpose.msra.mxu0 %v3355
  %3961 = vmatpush.xpose.msra.mxu0 %v3353
  %3962 = vmatpush.xpose.msra.mxu0 %v3351
  %3963 = vmatmul.f32.gmra.mxu0 %v3943
  %v3964 = vpop.f32.mrf.mxu0
  %v3965 = vadd.f32 0.0, %v3964
  %3966 = vdwg.mxu0
  %3967 = vmatpush.xpose.msra.mxu0 %v3382
  %3968 = vmatpush.xpose.msra.mxu0 %v3380
  %3969 = vmatpush.xpose.msra.mxu0 %v3378
  %3970 = vmatpush.xpose.msra.mxu0 %v3376
  %3971 = vmatpush.xpose.msra.mxu0 %v3374
  %3972 = vmatpush.xpose.msra.mxu0 %v3372
  %3973 = vmatpush.xpose.msra.mxu0 %v3370
  %3974 = vmatpush.xpose.msra.mxu0 %v3368
  %3975 = vmatpush.xpose.msra.mxu0 %v3366
  %3976 = vmatpush.xpose.msra.mxu0 %v3364
  %3977 = vmatpush.xpose.msra.mxu0 %v3362
  %3978 = vmatpush.xpose.msra.mxu0 %v3360
  %3979 = vmatpush.xpose.msra.mxu0 %v3358
  %3980 = vmatpush.xpose.msra.mxu0 %v3356
  %3981 = vmatpush.xpose.msra.mxu0 %v3354
  %3982 = vmatpush.xpose.msra.mxu0 %v3352
  %3983 = vmatmul.f32.gmra.mxu0 %v3944
  %v3984 = vpop.f32.mrf.mxu0
  %v3985 = vadd.f32 %v3965, %v3984
  %3986 = vdwg.mxu0
  %3987 = vmatpush.xpose.msra.mxu0 %v3413
  %3988 = vmatpush.xpose.msra.mxu0 %v3411
  %3989 = vmatpush.xpose.msra.mxu0 %v3409
  %3990 = vmatpush.xpose.msra.mxu0 %v3407
  %3991 = vmatpush.xpose.msra.mxu0 %v3405
  %3992 = vmatpush.xpose.msra.mxu0 %v3403
  %3993 = vmatpush.xpose.msra.mxu0 %v3401
  %3994 = vmatpush.xpose.msra.mxu0 %v3399
  %3995 = vmatpush.xpose.msra.mxu0 %v3397
  %3996 = vmatpush.xpose.msra.mxu0 %v3395
  %3997 = vmatpush.xpose.msra.mxu0 %v3393
  %3998 = vmatpush.xpose.msra.mxu0 %v3391
  %3999 = vmatpush.xpose.msra.mxu0 %v3389
  %4000 = vmatpush.xpose.msra.mxu0 %v3387
  %4001 = vmatpush.xpose.msra.mxu0 %v3385
  %4002 = vmatpush.xpose.msra.mxu0 %v3383
  %4003 = vmatmul.f32.gmra.mxu0 %v3943
  %v4004 = vpop.f32.mrf.mxu0
  %v4005 = vadd.f32 0.0, %v4004
  %4006 = vdwg.mxu0
  %4007 = vmatpush.xpose.msra.mxu0 %v3414
  %4008 = vmatpush.xpose.msra.mxu0 %v3412
  %4009 = vmatpush.xpose.msra.mxu0 %v3410
  %4010 = vmatpush.xpose.msra.mxu0 %v3408
  %4011 = vmatpush.xpose.msra.mxu0 %v3406
  %4012 = vmatpush.xpose.msra.mxu0 %v3404
  %4013 = vmatpush.xpose.msra.mxu0 %v3402
  %4014 = vmatpush.xpose.msra.mxu0 %v3400
  %4015 = vmatpush.xpose.msra.mxu0 %v3398
  %4016 = vmatpush.xpose.msra.mxu0 %v3396
  %4017 = vmatpush.xpose.msra.mxu0 %v3394
  %4018 = vmatpush.xpose.msra.mxu0 %v3392
  %4019 = vmatpush.xpose.msra.mxu0 %v3390
  %4020 = vmatpush.xpose.msra.mxu0 %v3388
  %4021 = vmatpush.xpose.msra.mxu0 %v3386
  %4022 = vmatpush.xpose.msra.mxu0 %v3384
  %4023 = vmatmul.f32.gmra.mxu0 %v3944
  %v4024 = vpop.f32.mrf.mxu0
  %v4025 = vadd.f32 %v4005, %v4024
  %4026 = vdwg.mxu0
  %v4027 = vperm.slane %v462, 0
  %v4028 = vperm.slane %v462, 1
  %4031 = vmatpush.xpose.msra.mxu0 %v3445
  %4032 = vmatpush.xpose.msra.mxu0 %v3443
  %4033 = vmatpush.xpose.msra.mxu0 %v3441
  %4034 = vmatpush.xpose.msra.mxu0 %v3439
  %4035 = vmatpush.xpose.msra.mxu0 %v3437
  %4036 = vmatpush.xpose.msra.mxu0 %v3435
  %4037 = vmatpush.xpose.msra.mxu0 %v3433
  %4038 = vmatpush.xpose.msra.mxu0 %v3431
  %4039 = vmatpush.xpose.msra.mxu0 %v3429
  %4040 = vmatpush.xpose.msra.mxu0 %v3427
  %4041 = vmatpush.xpose.msra.mxu0 %v3425
  %4042 = vmatpush.xpose.msra.mxu0 %v3423
  %4043 = vmatpush.xpose.msra.mxu0 %v3421
  %4044 = vmatpush.xpose.msra.mxu0 %v3419
  %4045 = vmatpush.xpose.msra.mxu0 %v3417
  %4046 = vmatpush.xpose.msra.mxu0 %v3415
  %4047 = vmatmul.f32.gmra.mxu0 %v4027
  %v4048 = vpop.f32.mrf.mxu0
  %v4049 = vadd.f32 0.0, %v4048
  %4050 = vdwg.mxu0
  %4051 = vmatpush.xpose.msra.mxu0 %v3446
  %4052 = vmatpush.xpose.msra.mxu0 %v3444
  %4053 = vmatpush.xpose.msra.mxu0 %v3442
  %4054 = vmatpush.xpose.msra.mxu0 %v3440
  %4055 = vmatpush.xpose.msra.mxu0 %v3438
  %4056 = vmatpush.xpose.msra.mxu0 %v3436
  %4057 = vmatpush.xpose.msra.mxu0 %v3434
  %4058 = vmatpush.xpose.msra.mxu0 %v3432
  %4059 = vmatpush.xpose.msra.mxu0 %v3430
  %4060 = vmatpush.xpose.msra.mxu0 %v3428
  %4061 = vmatpush.xpose.msra.mxu0 %v3426
  %4062 = vmatpush.xpose.msra.mxu0 %v3424
  %4063 = vmatpush.xpose.msra.mxu0 %v3422
  %4064 = vmatpush.xpose.msra.mxu0 %v3420
  %4065 = vmatpush.xpose.msra.mxu0 %v3418
  %4066 = vmatpush.xpose.msra.mxu0 %v3416
  %4067 = vmatmul.f32.gmra.mxu0 %v4028
  %v4068 = vpop.f32.mrf.mxu0
  %v4069 = vadd.f32 %v4049, %v4068
  %4070 = vdwg.mxu0
  %4071 = vmatpush.xpose.msra.mxu0 %v3477
  %4072 = vmatpush.xpose.msra.mxu0 %v3475
  %4073 = vmatpush.xpose.msra.mxu0 %v3473
  %4074 = vmatpush.xpose.msra.mxu0 %v3471
  %4075 = vmatpush.xpose.msra.mxu0 %v3469
  %4076 = vmatpush.xpose.msra.mxu0 %v3467
  %4077 = vmatpush.xpose.msra.mxu0 %v3465
  %4078 = vmatpush.xpose.msra.mxu0 %v3463
  %4079 = vmatpush.xpose.msra.mxu0 %v3461
  %4080 = vmatpush.xpose.msra.mxu0 %v3459
  %4081 = vmatpush.xpose.msra.mxu0 %v3457
  %4082 = vmatpush.xpose.msra.mxu0 %v3455
  %4083 = vmatpush.xpose.msra.mxu0 %v3453
  %4084 = vmatpush.xpose.msra.mxu0 %v3451
  %4085 = vmatpush.xpose.msra.mxu0 %v3449
  %4086 = vmatpush.xpose.msra.mxu0 %v3447
  %4087 = vmatmul.f32.gmra.mxu0 %v4027
  %v4088 = vpop.f32.mrf.mxu0
  %v4089 = vadd.f32 0.0, %v4088
  %4090 = vdwg.mxu0
  %4091 = vmatpush.xpose.msra.mxu0 %v3478
  %4092 = vmatpush.xpose.msra.mxu0 %v3476
  %4093 = vmatpush.xpose.msra.mxu0 %v3474
  %4094 = vmatpush.xpose.msra.mxu0 %v3472
  %4095 = vmatpush.xpose.msra.mxu0 %v3470
  %4096 = vmatpush.xpose.msra.mxu0 %v3468
  %4097 = vmatpush.xpose.msra.mxu0 %v3466
  %4098 = vmatpush.xpose.msra.mxu0 %v3464
  %4099 = vmatpush.xpose.msra.mxu0 %v3462
  %4100 = vmatpush.xpose.msra.mxu0 %v3460
  %4101 = vmatpush.xpose.msra.mxu0 %v3458
  %4102 = vmatpush.xpose.msra.mxu0 %v3456
  %4103 = vmatpush.xpose.msra.mxu0 %v3454
  %4104 = vmatpush.xpose.msra.mxu0 %v3452
  %4105 = vmatpush.xpose.msra.mxu0 %v3450
  %4106 = vmatpush.xpose.msra.mxu0 %v3448
  %4107 = vmatmul.f32.gmra.mxu0 %v4028
  %v4108 = vpop.f32.mrf.mxu0
  %v4109 = vadd.f32 %v4089, %v4108
  %4110 = vdwg.mxu0
  %v4111 = vperm.slane %v465, 0
  %v4112 = vperm.slane %v465, 1
  %4115 = vmatpush.xpose.msra.mxu0 %v3509
  %4116 = vmatpush.xpose.msra.mxu0 %v3507
  %4117 = vmatpush.xpose.msra.mxu0 %v3505
  %4118 = vmatpush.xpose.msra.mxu0 %v3503
  %4119 = vmatpush.xpose.msra.mxu0 %v3501
  %4120 = vmatpush.xpose.msra.mxu0 %v3499
  %4121 = vmatpush.xpose.msra.mxu0 %v3497
  %4122 = vmatpush.xpose.msra.mxu0 %v3495
  %4123 = vmatpush.xpose.msra.mxu0 %v3493
  %4124 = vmatpush.xpose.msra.mxu0 %v3491
  %4125 = vmatpush.xpose.msra.mxu0 %v3489
  %4126 = vmatpush.xpose.msra.mxu0 %v3487
  %4127 = vmatpush.xpose.msra.mxu0 %v3485
  %4128 = vmatpush.xpose.msra.mxu0 %v3483
  %4129 = vmatpush.xpose.msra.mxu0 %v3481
  %4130 = vmatpush.xpose.msra.mxu0 %v3479
  %4131 = vmatmul.f32.gmra.mxu0 %v4111
  %v4132 = vpop.f32.mrf.mxu0
  %v4133 = vadd.f32 0.0, %v4132
  %4134 = vdwg.mxu0
  %4135 = vmatpush.xpose.msra.mxu0 %v3510
  %4136 = vmatpush.xpose.msra.mxu0 %v3508
  %4137 = vmatpush.xpose.msra.mxu0 %v3506
  %4138 = vmatpush.xpose.msra.mxu0 %v3504
  %4139 = vmatpush.xpose.msra.mxu0 %v3502
  %4140 = vmatpush.xpose.msra.mxu0 %v3500
  %4141 = vmatpush.xpose.msra.mxu0 %v3498
  %4142 = vmatpush.xpose.msra.mxu0 %v3496
  %4143 = vmatpush.xpose.msra.mxu0 %v3494
  %4144 = vmatpush.xpose.msra.mxu0 %v3492
  %4145 = vmatpush.xpose.msra.mxu0 %v3490
  %4146 = vmatpush.xpose.msra.mxu0 %v3488
  %4147 = vmatpush.xpose.msra.mxu0 %v3486
  %4148 = vmatpush.xpose.msra.mxu0 %v3484
  %4149 = vmatpush.xpose.msra.mxu0 %v3482
  %4150 = vmatpush.xpose.msra.mxu0 %v3480
  %4151 = vmatmul.f32.gmra.mxu0 %v4112
  %v4152 = vpop.f32.mrf.mxu0
  %v4153 = vadd.f32 %v4133, %v4152
  %4154 = vdwg.mxu0
  %4155 = vmatpush.xpose.msra.mxu0 %v3541
  %4156 = vmatpush.xpose.msra.mxu0 %v3539
  %4157 = vmatpush.xpose.msra.mxu0 %v3537
  %4158 = vmatpush.xpose.msra.mxu0 %v3535
  %4159 = vmatpush.xpose.msra.mxu0 %v3533
  %4160 = vmatpush.xpose.msra.mxu0 %v3531
  %4161 = vmatpush.xpose.msra.mxu0 %v3529
  %4162 = vmatpush.xpose.msra.mxu0 %v3527
  %4163 = vmatpush.xpose.msra.mxu0 %v3525
  %4164 = vmatpush.xpose.msra.mxu0 %v3523
  %4165 = vmatpush.xpose.msra.mxu0 %v3521
  %4166 = vmatpush.xpose.msra.mxu0 %v3519
  %4167 = vmatpush.xpose.msra.mxu0 %v3517
  %4168 = vmatpush.xpose.msra.mxu0 %v3515
  %4169 = vmatpush.xpose.msra.mxu0 %v3513
  %4170 = vmatpush.xpose.msra.mxu0 %v3511
  %4171 = vmatmul.f32.gmra.mxu0 %v4111
  %v4172 = vpop.f32.mrf.mxu0
  %v4173 = vadd.f32 0.0, %v4172
  %4174 = vdwg.mxu0
  %4175 = vmatpush.xpose.msra.mxu0 %v3542
  %4176 = vmatpush.xpose.msra.mxu0 %v3540
  %4177 = vmatpush.xpose.msra.mxu0 %v3538
  %4178 = vmatpush.xpose.msra.mxu0 %v3536
  %4179 = vmatpush.xpose.msra.mxu0 %v3534
  %4180 = vmatpush.xpose.msra.mxu0 %v3532
  %4181 = vmatpush.xpose.msra.mxu0 %v3530
  %4182 = vmatpush.xpose.msra.mxu0 %v3528
  %4183 = vmatpush.xpose.msra.mxu0 %v3526
  %4184 = vmatpush.xpose.msra.mxu0 %v3524
  %4185 = vmatpush.xpose.msra.mxu0 %v3522
  %4186 = vmatpush.xpose.msra.mxu0 %v3520
  %4187 = vmatpush.xpose.msra.mxu0 %v3518
  %4188 = vmatpush.xpose.msra.mxu0 %v3516
  %4189 = vmatpush.xpose.msra.mxu0 %v3514
  %4190 = vmatpush.xpose.msra.mxu0 %v3512
  %4191 = vmatmul.f32.gmra.mxu0 %v4112
  %v4192 = vpop.f32.mrf.mxu0
  %v4193 = vadd.f32 %v4173, %v4192
  %4194 = vdwg.mxu0
  %v4195 = vperm.slane %v468, 0
  %v4196 = vperm.slane %v468, 1
  %4199 = vmatpush.xpose.msra.mxu0 %v3573
  %4200 = vmatpush.xpose.msra.mxu0 %v3571
  %4201 = vmatpush.xpose.msra.mxu0 %v3569
  %4202 = vmatpush.xpose.msra.mxu0 %v3567
  %4203 = vmatpush.xpose.msra.mxu0 %v3565
  %4204 = vmatpush.xpose.msra.mxu0 %v3563
  %4205 = vmatpush.xpose.msra.mxu0 %v3561
  %4206 = vmatpush.xpose.msra.mxu0 %v3559
  %4207 = vmatpush.xpose.msra.mxu0 %v3557
  %4208 = vmatpush.xpose.msra.mxu0 %v3555
  %4209 = vmatpush.xpose.msra.mxu0 %v3553
  %4210 = vmatpush.xpose.msra.mxu0 %v3551
  %4211 = vmatpush.xpose.msra.mxu0 %v3549
  %4212 = vmatpush.xpose.msra.mxu0 %v3547
  %4213 = vmatpush.xpose.msra.mxu0 %v3545
  %4214 = vmatpush.xpose.msra.mxu0 %v3543
  %4215 = vmatmul.f32.gmra.mxu0 %v4195
  %v4216 = vpop.f32.mrf.mxu0
  %v4217 = vadd.f32 0.0, %v4216
  %4218 = vdwg.mxu0
  %4219 = vmatpush.xpose.msra.mxu0 %v3574
  %4220 = vmatpush.xpose.msra.mxu0 %v3572
  %4221 = vmatpush.xpose.msra.mxu0 %v3570
  %4222 = vmatpush.xpose.msra.mxu0 %v3568
  %4223 = vmatpush.xpose.msra.mxu0 %v3566
  %4224 = vmatpush.xpose.msra.mxu0 %v3564
  %4225 = vmatpush.xpose.msra.mxu0 %v3562
  %4226 = vmatpush.xpose.msra.mxu0 %v3560
  %4227 = vmatpush.xpose.msra.mxu0 %v3558
  %4228 = vmatpush.xpose.msra.mxu0 %v3556
  %4229 = vmatpush.xpose.msra.mxu0 %v3554
  %4230 = vmatpush.xpose.msra.mxu0 %v3552
  %4231 = vmatpush.xpose.msra.mxu0 %v3550
  %4232 = vmatpush.xpose.msra.mxu0 %v3548
  %4233 = vmatpush.xpose.msra.mxu0 %v3546
  %4234 = vmatpush.xpose.msra.mxu0 %v3544
  %4235 = vmatmul.f32.gmra.mxu0 %v4196
  %v4236 = vpop.f32.mrf.mxu0
  %v4237 = vadd.f32 %v4217, %v4236
  %4238 = vdwg.mxu0
  %4239 = vmatpush.xpose.msra.mxu0 %v3605
  %4240 = vmatpush.xpose.msra.mxu0 %v3603
  %4241 = vmatpush.xpose.msra.mxu0 %v3601
  %4242 = vmatpush.xpose.msra.mxu0 %v3599
  %4243 = vmatpush.xpose.msra.mxu0 %v3597
  %4244 = vmatpush.xpose.msra.mxu0 %v3595
  %4245 = vmatpush.xpose.msra.mxu0 %v3593
  %4246 = vmatpush.xpose.msra.mxu0 %v3591
  %4247 = vmatpush.xpose.msra.mxu0 %v3589
  %4248 = vmatpush.xpose.msra.mxu0 %v3587
  %4249 = vmatpush.xpose.msra.mxu0 %v3585
  %4250 = vmatpush.xpose.msra.mxu0 %v3583
  %4251 = vmatpush.xpose.msra.mxu0 %v3581
  %4252 = vmatpush.xpose.msra.mxu0 %v3579
  %4253 = vmatpush.xpose.msra.mxu0 %v3577
  %4254 = vmatpush.xpose.msra.mxu0 %v3575
  %4255 = vmatmul.f32.gmra.mxu0 %v4195
  %v4256 = vpop.f32.mrf.mxu0
  %v4257 = vadd.f32 0.0, %v4256
  %4258 = vdwg.mxu0
  %4259 = vmatpush.xpose.msra.mxu0 %v3606
  %4260 = vmatpush.xpose.msra.mxu0 %v3604
  %4261 = vmatpush.xpose.msra.mxu0 %v3602
  %4262 = vmatpush.xpose.msra.mxu0 %v3600
  %4263 = vmatpush.xpose.msra.mxu0 %v3598
  %4264 = vmatpush.xpose.msra.mxu0 %v3596
  %4265 = vmatpush.xpose.msra.mxu0 %v3594
  %4266 = vmatpush.xpose.msra.mxu0 %v3592
  %4267 = vmatpush.xpose.msra.mxu0 %v3590
  %4268 = vmatpush.xpose.msra.mxu0 %v3588
  %4269 = vmatpush.xpose.msra.mxu0 %v3586
  %4270 = vmatpush.xpose.msra.mxu0 %v3584
  %4271 = vmatpush.xpose.msra.mxu0 %v3582
  %4272 = vmatpush.xpose.msra.mxu0 %v3580
  %4273 = vmatpush.xpose.msra.mxu0 %v3578
  %4274 = vmatpush.xpose.msra.mxu0 %v3576
  %4275 = vmatmul.f32.gmra.mxu0 %v4196
  %v4276 = vpop.f32.mrf.mxu0
  %v4277 = vadd.f32 %v4257, %v4276
  %4278 = vdwg.mxu0
  %vm4279 = vcmp.lt.f32.partialorder %v201, 0.5
  %v4280 = vsel %vm4279, 1, 0
  %vm4281 = vcmp.eq.s32.totalorder %v4280, 1
  %v4298 = vrot.slane %v3733, 7
  %v4299 = vsel %vm448, %v4298, %v3649
  %v4300 = vrot.slane %v3817, 6
  %v4301 = vsel %vm451, %v4300, %v4299
  %v4302 = vrot.slane %v3901, 5
  %v4303 = vsel %vm454, %v4302, %v4301
  %v4304 = vrot.slane %v3985, 4
  %v4305 = vsel %vm457, %v4304, %v4303
  %v4306 = vrot.slane %v4069, 3
  %v4307 = vsel %vm460, %v4306, %v4305
  %v4308 = vrot.slane %v4153, 2
  %v4309 = vsel %vm463, %v4308, %v4307
  %v4310 = vrot.slane %v4237, 1
  %vm4311 = vcmask 1047559
  %v4312 = vsel %vm4311, %v4310, %v4309
  %v4313 = vrot.slane %v3773, 7
  %v4314 = vsel %vm448, %v4313, %v3689
  %v4315 = vrot.slane %v3857, 6
  %v4316 = vsel %vm451, %v4315, %v4314
  %v4317 = vrot.slane %v3941, 5
  %v4318 = vsel %vm454, %v4317, %v4316
  %v4319 = vrot.slane %v4025, 4
  %v4320 = vsel %vm457, %v4319, %v4318
  %v4321 = vrot.slane %v4109, 3
  %v4322 = vsel %vm460, %v4321, %v4320
  %v4323 = vrot.slane %v4193, 2
  %v4324 = vsel %vm463, %v4323, %v4322
  %v4325 = vrot.slane %v4277, 1
  %v4326 = vsel %vm4311, %v4325, %v4324
  %v4329 = vsel %vm4281, 5.0, %v4312
  %v4330 = vsel %vm4281, 5.0, %v4326
  %v4331 = vsub.f32 1.0, %v191
  %v4332 = vsub.f32 1.0, %v192
  %v4333 = vperm.slane %v25, 3
  %v4334 = vperm.slane %v26, 3
  %v4335 = vmul.f32 %v4331, %v4333
  %v4336 = vmul.f32 %v4332, %v4334
  %vm4337 = vcmp.gt.f32.partialorder %v20, 0.0
  %vm4338 = vcmp.gt.f32.partialorder %v21, 0.0
  %v4339 = vsel %vm4337, %v4335, 0.0
  %v4340 = vsel %vm4338, %v4336, 0.0
  %v4341 = vadd.f32 %v4335, %v4336
  %4342 = vadd.xlane.f32.xlu0 %v4341
  %v4343 = vpop.xlane.xlu0 %4342
  %v4344 = vadd.f32 %v4339, %v4340
  %4345 = vadd.xlane.f32.xlu0 %v4344
  %v4346 = vpop.xlane.xlu0 %4345
  %vm4347 = vcmp.gt.f32.partialorder %v4346, 0.5
  %v4348 = vsel %vm4347, 1, 0
  %vm4349 = vcmp.eq.s32.totalorder %v4348, 1
  %v4350 = vsel %vm4349, %v4339, %v4335
  %v4351 = vsel %vm4349, %v4340, %v4336
  %v4352 = vadd.f32 %v4350, %v4351
  %4353 = vadd.xlane.f32.xlu0 %v4352
  %v4354 = vpop.xlane.xlu0 %4353
  %v4355 = vmax.f32 %v4354, 1.0
  %v4356 = vpack.c.bf16 %v4350, %v4350
  %v4357 = vpack.c.bf16 %v4351, %v4351
  %4358 = vmatpush.bf16.msra.mxu0 %v315
  %4359 = vmatpush.bf16.msra.mxu0 %v313
  %4360 = vmatpush.bf16.msra.mxu0 %v311
  %4361 = vmatpush.bf16.msra.mxu0 %v309
  %4362 = vmatpush.bf16.msra.mxu0 %v307
  %4363 = vmatpush.bf16.msra.mxu0 %v305
  %4364 = vmatpush.bf16.msra.mxu0 %v303
  %4365 = vmatpush.bf16.msra.mxu0 %v301
  %4366 = vmatmul.bf16.gmra.mxu0 %v4356
  %v4367 = vpop.f32.mrf.mxu0
  %v4368 = vadd.f32 0.0, %v4367
  %v4369 = vpop.f32.mrf.mxu0
  %4370 = vdwg.mxu0
  %4371 = vmatpush.bf16.msra.mxu0 %v331
  %4372 = vmatpush.bf16.msra.mxu0 %v329
  %4373 = vmatpush.bf16.msra.mxu0 %v327
  %4374 = vmatpush.bf16.msra.mxu0 %v325
  %4375 = vmatpush.bf16.msra.mxu0 %v323
  %4376 = vmatpush.bf16.msra.mxu0 %v321
  %4377 = vmatpush.bf16.msra.mxu0 %v319
  %4378 = vmatpush.bf16.msra.mxu0 %v317
  %4379 = vmatmul.bf16.gmra.mxu0 %v4357
  %v4380 = vpop.f32.mrf.mxu0
  %v4381 = vadd.f32 %v4368, %v4380
  %v4382 = vpop.f32.mrf.mxu0
  %4383 = vdwg.mxu0
  %4384 = vmatpush.bf16.msra.mxu0 %v316
  %4385 = vmatpush.bf16.msra.mxu0 %v314
  %4386 = vmatpush.bf16.msra.mxu0 %v312
  %4387 = vmatpush.bf16.msra.mxu0 %v310
  %4388 = vmatpush.bf16.msra.mxu0 %v308
  %4389 = vmatpush.bf16.msra.mxu0 %v306
  %4390 = vmatpush.bf16.msra.mxu0 %v304
  %4391 = vmatpush.bf16.msra.mxu0 %v302
  %4392 = vmatmul.bf16.gmra.mxu0 %v4356
  %v4393 = vpop.f32.mrf.mxu0
  %v4394 = vadd.f32 0.0, %v4393
  %v4395 = vpop.f32.mrf.mxu0
  %4396 = vdwg.mxu0
  %4397 = vmatpush.bf16.msra.mxu0 %v332
  %4398 = vmatpush.bf16.msra.mxu0 %v330
  %4399 = vmatpush.bf16.msra.mxu0 %v328
  %4400 = vmatpush.bf16.msra.mxu0 %v326
  %4401 = vmatpush.bf16.msra.mxu0 %v324
  %4402 = vmatpush.bf16.msra.mxu0 %v322
  %4403 = vmatpush.bf16.msra.mxu0 %v320
  %4404 = vmatpush.bf16.msra.mxu0 %v318
  %4405 = vmatmul.bf16.gmra.mxu0 %v4357
  %v4406 = vpop.f32.mrf.mxu0
  %v4407 = vadd.f32 %v4394, %v4406
  %v4408 = vpop.f32.mrf.mxu0
  %4409 = vdwg.mxu0
  %v4410 = vrcp.pop %v4355
  %v4411 = vmul.f32 %v4355, %v4410
  %v4412 = vsub.f32 1.0, %v4411
  %v4413 = vmul.f32 %v4410, %v4412
  %v4414 = vadd.f32 %v4410, %v4413
  %vm4415 = vweird.f32 %v4355
  %vm4416 = vweird.f32 %v4410
  %vm4417 = vmor %vm4415, %vm4416
  %v4418 = vsel %vm4417, %v4410, %v4414
  %v4419 = vand.u32 2147483647, %v4355
  %vm4420 = vcmp.eq.f32.partialorder %v4419, 8.507059e+37
  %v4421 = vand.u32 %v4355, 2147483648
  %v4422 = vor.u32 1.1754944e-38, %v4421
  %v4423 = vsel %vm4420, %v4422, %v4418
  %v4424 = vmul.f32 %v417, %v4423
  %v4425 = vmul.f32 %v418, %v4423
  %v4426 = vfloor.f32 %v4424
  %v4427 = vfloor.f32 %v4425
  %v4428 = vmul.f32 %v4426, %v4355
  %v4429 = vmul.f32 %v4427, %v4355
  %v4430 = vsub.f32 %v417, %v4428
  %v4431 = vsub.f32 %v418, %v4429
  %v4432 = vmul.f32 %v20, %v4350
  %v4433 = vmul.f32 %v21, %v4351
  %v4436 = vrot.slane %v4433, 7
  %v4437 = vsel %vm446, %v4432, %v4436
  %v4438 = vsel %vm448, %v4432, %v4436
  %v4439 = vrot.slane %v4438, 1
  %v4440 = vsel %vm451, %v4432, %v4436
  %v4441 = vrot.slane %v4440, 2
  %v4442 = vsel %vm454, %v4432, %v4436
  %v4443 = vrot.slane %v4442, 3
  %v4444 = vsel %vm457, %v4432, %v4436
  %v4445 = vrot.slane %v4444, 4
  %v4446 = vsel %vm460, %v4432, %v4436
  %v4447 = vrot.slane %v4446, 5
  %v4448 = vsel %vm463, %v4432, %v4436
  %v4449 = vrot.slane %v4448, 6
  %v4450 = vsel %vm466, %v4436, %v4432
  %v4451 = vrot.slane %v4450, 7
  %v4454 = vrot.slane %v4407, 7
  %v4455 = vsel %vm446, %v4381, %v4454
  %v4456 = vsel %vm448, %v4381, %v4454
  %v4457 = vrot.slane %v4456, 1
  %v4458 = vsel %vm451, %v4381, %v4454
  %v4459 = vrot.slane %v4458, 2
  %v4460 = vsel %vm454, %v4381, %v4454
  %v4461 = vrot.slane %v4460, 3
  %v4462 = vsel %vm457, %v4381, %v4454
  %v4463 = vrot.slane %v4462, 4
  %v4464 = vsel %vm460, %v4381, %v4454
  %v4465 = vrot.slane %v4464, 5
  %v4466 = vsel %vm463, %v4381, %v4454
  %v4467 = vrot.slane %v4466, 6
  %v4468 = vsel %vm466, %v4454, %v4381
  %v4469 = vrot.slane %v4468, 7
  %v4470 = vperm.slane %v4430, 0
  %v4471 = vlaneseq
  %v4472 = vshrl.u32 %v4471, 7
  %4474 = vset.pattern.permute.xlu0 %v4472
  %4475 = vperm.xlu0 %4474, %v4470
  %v4476 = vpop.permute.xlu0 %4475
  %v4477 = vlaneseq
  %v4478 = vshrl.u32 %v4477, 7
  %v4479 = vadd.s32 %v4478, 8
  %4480 = vset.pattern.permute.xlu0 %v4479
  %4481 = vperm.xlu0 %4480, %v4470
  %v4482 = vpop.permute.xlu0 %4481
  %v4483 = vlaneseq
  %v4484 = vshrl.u32 %v4483, 7
  %v4485 = vadd.s32 %v4484, 16
  %4486 = vset.pattern.permute.xlu0 %v4485
  %4487 = vperm.xlu0 %4486, %v4470
  %v4488 = vpop.permute.xlu0 %4487
  %v4489 = vlaneseq
  %v4490 = vshrl.u32 %v4489, 7
  %v4491 = vadd.s32 %v4490, 24
  %4492 = vset.pattern.permute.xlu0 %v4491
  %4493 = vperm.xlu0 %4492, %v4470
  %v4494 = vpop.permute.xlu0 %4493
  %v4495 = vlaneseq
  %v4496 = vshrl.u32 %v4495, 7
  %v4497 = vadd.s32 %v4496, 32
  %4498 = vset.pattern.permute.xlu0 %v4497
  %4499 = vperm.xlu0 %4498, %v4470
  %v4500 = vpop.permute.xlu0 %4499
  %v4501 = vlaneseq
  %v4502 = vshrl.u32 %v4501, 7
  %v4503 = vadd.s32 %v4502, 40
  %4504 = vset.pattern.permute.xlu0 %v4503
  %4505 = vperm.xlu0 %4504, %v4470
  %v4506 = vpop.permute.xlu0 %4505
  %v4507 = vlaneseq
  %v4508 = vshrl.u32 %v4507, 7
  %v4509 = vadd.s32 %v4508, 48
  %4510 = vset.pattern.permute.xlu0 %v4509
  %4511 = vperm.xlu0 %4510, %v4470
  %v4512 = vpop.permute.xlu0 %4511
  %v4513 = vlaneseq
  %v4514 = vshrl.u32 %v4513, 7
  %v4515 = vadd.s32 %v4514, 56
  %4516 = vset.pattern.permute.xlu0 %v4515
  %4517 = vperm.xlu0 %4516, %v4470
  %v4518 = vpop.permute.xlu0 %4517
  %v4519 = vlaneseq
  %v4520 = vshrl.u32 %v4519, 7
  %v4521 = vadd.s32 %v4520, 64
  %4522 = vset.pattern.permute.xlu0 %v4521
  %4523 = vperm.xlu0 %4522, %v4470
  %v4524 = vpop.permute.xlu0 %4523
  %v4525 = vlaneseq
  %v4526 = vshrl.u32 %v4525, 7
  %v4527 = vadd.s32 %v4526, 72
  %4528 = vset.pattern.permute.xlu0 %v4527
  %4529 = vperm.xlu0 %4528, %v4470
  %v4530 = vpop.permute.xlu0 %4529
  %v4531 = vlaneseq
  %v4532 = vshrl.u32 %v4531, 7
  %v4533 = vadd.s32 %v4532, 80
  %4534 = vset.pattern.permute.xlu0 %v4533
  %4535 = vperm.xlu0 %4534, %v4470
  %v4536 = vpop.permute.xlu0 %4535
  %v4537 = vlaneseq
  %v4538 = vshrl.u32 %v4537, 7
  %v4539 = vadd.s32 %v4538, 88
  %4540 = vset.pattern.permute.xlu0 %v4539
  %4541 = vperm.xlu0 %4540, %v4470
  %v4542 = vpop.permute.xlu0 %4541
  %v4543 = vlaneseq
  %v4544 = vshrl.u32 %v4543, 7
  %v4545 = vadd.s32 %v4544, 96
  %4546 = vset.pattern.permute.xlu0 %v4545
  %4547 = vperm.xlu0 %4546, %v4470
  %v4548 = vpop.permute.xlu0 %4547
  %v4549 = vlaneseq
  %v4550 = vshrl.u32 %v4549, 7
  %v4551 = vadd.s32 %v4550, 104
  %4552 = vset.pattern.permute.xlu0 %v4551
  %4553 = vperm.xlu0 %4552, %v4470
  %v4554 = vpop.permute.xlu0 %4553
  %v4555 = vlaneseq
  %v4556 = vshrl.u32 %v4555, 7
  %v4557 = vadd.s32 %v4556, 112
  %4558 = vset.pattern.permute.xlu0 %v4557
  %4559 = vperm.xlu0 %4558, %v4470
  %v4560 = vpop.permute.xlu0 %4559
  %v4561 = vlaneseq
  %v4562 = vshrl.u32 %v4561, 7
  %v4563 = vadd.s32 %v4562, 120
  %4564 = vset.pattern.permute.xlu0 %v4563
  %4565 = vperm.xlu0 %4564, %v4470
  %v4566 = vpop.permute.xlu0 %4565
  %v4567 = vperm.slane %v4431, 0
  %v4568 = vlaneseq
  %v4569 = vshrl.u32 %v4568, 7
  %4571 = vset.pattern.permute.xlu0 %v4569
  %4572 = vperm.xlu0 %4571, %v4567
  %v4573 = vpop.permute.xlu0 %4572
  %v4574 = vlaneseq
  %v4575 = vshrl.u32 %v4574, 7
  %v4576 = vadd.s32 %v4575, 8
  %4577 = vset.pattern.permute.xlu0 %v4576
  %4578 = vperm.xlu0 %4577, %v4567
  %v4579 = vpop.permute.xlu0 %4578
  %v4580 = vlaneseq
  %v4581 = vshrl.u32 %v4580, 7
  %v4582 = vadd.s32 %v4581, 16
  %4583 = vset.pattern.permute.xlu0 %v4582
  %4584 = vperm.xlu0 %4583, %v4567
  %v4585 = vpop.permute.xlu0 %4584
  %v4586 = vlaneseq
  %v4587 = vshrl.u32 %v4586, 7
  %v4588 = vadd.s32 %v4587, 24
  %4589 = vset.pattern.permute.xlu0 %v4588
  %4590 = vperm.xlu0 %4589, %v4567
  %v4591 = vpop.permute.xlu0 %4590
  %v4592 = vlaneseq
  %v4593 = vshrl.u32 %v4592, 7
  %v4594 = vadd.s32 %v4593, 32
  %4595 = vset.pattern.permute.xlu0 %v4594
  %4596 = vperm.xlu0 %4595, %v4567
  %v4597 = vpop.permute.xlu0 %4596
  %v4598 = vlaneseq
  %v4599 = vshrl.u32 %v4598, 7
  %v4600 = vadd.s32 %v4599, 40
  %4601 = vset.pattern.permute.xlu0 %v4600
  %4602 = vperm.xlu0 %4601, %v4567
  %v4603 = vpop.permute.xlu0 %4602
  %v4604 = vlaneseq
  %v4605 = vshrl.u32 %v4604, 7
  %v4606 = vadd.s32 %v4605, 48
  %4607 = vset.pattern.permute.xlu0 %v4606
  %4608 = vperm.xlu0 %4607, %v4567
  %v4609 = vpop.permute.xlu0 %4608
  %v4610 = vlaneseq
  %v4611 = vshrl.u32 %v4610, 7
  %v4612 = vadd.s32 %v4611, 56
  %4613 = vset.pattern.permute.xlu0 %v4612
  %4614 = vperm.xlu0 %4613, %v4567
  %v4615 = vpop.permute.xlu0 %4614
  %v4616 = vlaneseq
  %v4617 = vshrl.u32 %v4616, 7
  %v4618 = vadd.s32 %v4617, 64
  %4619 = vset.pattern.permute.xlu0 %v4618
  %4620 = vperm.xlu0 %4619, %v4567
  %v4621 = vpop.permute.xlu0 %4620
  %v4622 = vlaneseq
  %v4623 = vshrl.u32 %v4622, 7
  %v4624 = vadd.s32 %v4623, 72
  %4625 = vset.pattern.permute.xlu0 %v4624
  %4626 = vperm.xlu0 %4625, %v4567
  %v4627 = vpop.permute.xlu0 %4626
  %v4628 = vlaneseq
  %v4629 = vshrl.u32 %v4628, 7
  %v4630 = vadd.s32 %v4629, 80
  %4631 = vset.pattern.permute.xlu0 %v4630
  %4632 = vperm.xlu0 %4631, %v4567
  %v4633 = vpop.permute.xlu0 %4632
  %v4634 = vlaneseq
  %v4635 = vshrl.u32 %v4634, 7
  %v4636 = vadd.s32 %v4635, 88
  %4637 = vset.pattern.permute.xlu0 %v4636
  %4638 = vperm.xlu0 %4637, %v4567
  %v4639 = vpop.permute.xlu0 %4638
  %v4640 = vlaneseq
  %v4641 = vshrl.u32 %v4640, 7
  %v4642 = vadd.s32 %v4641, 96
  %4643 = vset.pattern.permute.xlu0 %v4642
  %4644 = vperm.xlu0 %4643, %v4567
  %v4645 = vpop.permute.xlu0 %4644
  %v4646 = vlaneseq
  %v4647 = vshrl.u32 %v4646, 7
  %v4648 = vadd.s32 %v4647, 104
  %4649 = vset.pattern.permute.xlu0 %v4648
  %4650 = vperm.xlu0 %4649, %v4567
  %v4651 = vpop.permute.xlu0 %4650
  %v4652 = vlaneseq
  %v4653 = vshrl.u32 %v4652, 7
  %v4654 = vadd.s32 %v4653, 112
  %4655 = vset.pattern.permute.xlu0 %v4654
  %4656 = vperm.xlu0 %4655, %v4567
  %v4657 = vpop.permute.xlu0 %4656
  %v4658 = vlaneseq
  %v4659 = vshrl.u32 %v4658, 7
  %v4660 = vadd.s32 %v4659, 120
  %4661 = vset.pattern.permute.xlu0 %v4660
  %4662 = vperm.xlu0 %4661, %v4567
  %v4663 = vpop.permute.xlu0 %4662
  %v4664 = vperm.slane %v4430, 1
  %v4665 = vlaneseq
  %v4666 = vshrl.u32 %v4665, 7
  %4668 = vset.pattern.permute.xlu0 %v4666
  %4669 = vperm.xlu0 %4668, %v4664
  %v4670 = vpop.permute.xlu0 %4669
  %v4671 = vlaneseq
  %v4672 = vshrl.u32 %v4671, 7
  %v4673 = vadd.s32 %v4672, 8
  %4674 = vset.pattern.permute.xlu0 %v4673
  %4675 = vperm.xlu0 %4674, %v4664
  %v4676 = vpop.permute.xlu0 %4675
  %v4677 = vlaneseq
  %v4678 = vshrl.u32 %v4677, 7
  %v4679 = vadd.s32 %v4678, 16
  %4680 = vset.pattern.permute.xlu0 %v4679
  %4681 = vperm.xlu0 %4680, %v4664
  %v4682 = vpop.permute.xlu0 %4681
  %v4683 = vlaneseq
  %v4684 = vshrl.u32 %v4683, 7
  %v4685 = vadd.s32 %v4684, 24
  %4686 = vset.pattern.permute.xlu0 %v4685
  %4687 = vperm.xlu0 %4686, %v4664
  %v4688 = vpop.permute.xlu0 %4687
  %v4689 = vlaneseq
  %v4690 = vshrl.u32 %v4689, 7
  %v4691 = vadd.s32 %v4690, 32
  %4692 = vset.pattern.permute.xlu0 %v4691
  %4693 = vperm.xlu0 %4692, %v4664
  %v4694 = vpop.permute.xlu0 %4693
  %v4695 = vlaneseq
  %v4696 = vshrl.u32 %v4695, 7
  %v4697 = vadd.s32 %v4696, 40
  %4698 = vset.pattern.permute.xlu0 %v4697
  %4699 = vperm.xlu0 %4698, %v4664
  %v4700 = vpop.permute.xlu0 %4699
  %v4701 = vlaneseq
  %v4702 = vshrl.u32 %v4701, 7
  %v4703 = vadd.s32 %v4702, 48
  %4704 = vset.pattern.permute.xlu0 %v4703
  %4705 = vperm.xlu0 %4704, %v4664
  %v4706 = vpop.permute.xlu0 %4705
  %v4707 = vlaneseq
  %v4708 = vshrl.u32 %v4707, 7
  %v4709 = vadd.s32 %v4708, 56
  %4710 = vset.pattern.permute.xlu0 %v4709
  %4711 = vperm.xlu0 %4710, %v4664
  %v4712 = vpop.permute.xlu0 %4711
  %v4713 = vlaneseq
  %v4714 = vshrl.u32 %v4713, 7
  %v4715 = vadd.s32 %v4714, 64
  %4716 = vset.pattern.permute.xlu0 %v4715
  %4717 = vperm.xlu0 %4716, %v4664
  %v4718 = vpop.permute.xlu0 %4717
  %v4719 = vlaneseq
  %v4720 = vshrl.u32 %v4719, 7
  %v4721 = vadd.s32 %v4720, 72
  %4722 = vset.pattern.permute.xlu0 %v4721
  %4723 = vperm.xlu0 %4722, %v4664
  %v4724 = vpop.permute.xlu0 %4723
  %v4725 = vlaneseq
  %v4726 = vshrl.u32 %v4725, 7
  %v4727 = vadd.s32 %v4726, 80
  %4728 = vset.pattern.permute.xlu0 %v4727
  %4729 = vperm.xlu0 %4728, %v4664
  %v4730 = vpop.permute.xlu0 %4729
  %v4731 = vlaneseq
  %v4732 = vshrl.u32 %v4731, 7
  %v4733 = vadd.s32 %v4732, 88
  %4734 = vset.pattern.permute.xlu0 %v4733
  %4735 = vperm.xlu0 %4734, %v4664
  %v4736 = vpop.permute.xlu0 %4735
  %v4737 = vlaneseq
  %v4738 = vshrl.u32 %v4737, 7
  %v4739 = vadd.s32 %v4738, 96
  %4740 = vset.pattern.permute.xlu0 %v4739
  %4741 = vperm.xlu0 %4740, %v4664
  %v4742 = vpop.permute.xlu0 %4741
  %v4743 = vlaneseq
  %v4744 = vshrl.u32 %v4743, 7
  %v4745 = vadd.s32 %v4744, 104
  %4746 = vset.pattern.permute.xlu0 %v4745
  %4747 = vperm.xlu0 %4746, %v4664
  %v4748 = vpop.permute.xlu0 %4747
  %v4749 = vlaneseq
  %v4750 = vshrl.u32 %v4749, 7
  %v4751 = vadd.s32 %v4750, 112
  %4752 = vset.pattern.permute.xlu0 %v4751
  %4753 = vperm.xlu0 %4752, %v4664
  %v4754 = vpop.permute.xlu0 %4753
  %v4755 = vlaneseq
  %v4756 = vshrl.u32 %v4755, 7
  %v4757 = vadd.s32 %v4756, 120
  %4758 = vset.pattern.permute.xlu0 %v4757
  %4759 = vperm.xlu0 %4758, %v4664
  %v4760 = vpop.permute.xlu0 %4759
  %v4761 = vperm.slane %v4431, 1
  %v4762 = vlaneseq
  %v4763 = vshrl.u32 %v4762, 7
  %4765 = vset.pattern.permute.xlu0 %v4763
  %4766 = vperm.xlu0 %4765, %v4761
  %v4767 = vpop.permute.xlu0 %4766
  %v4768 = vlaneseq
  %v4769 = vshrl.u32 %v4768, 7
  %v4770 = vadd.s32 %v4769, 8
  %4771 = vset.pattern.permute.xlu0 %v4770
  %4772 = vperm.xlu0 %4771, %v4761
  %v4773 = vpop.permute.xlu0 %4772
  %v4774 = vlaneseq
  %v4775 = vshrl.u32 %v4774, 7
  %v4776 = vadd.s32 %v4775, 16
  %4777 = vset.pattern.permute.xlu0 %v4776
  %4778 = vperm.xlu0 %4777, %v4761
  %v4779 = vpop.permute.xlu0 %4778
  %v4780 = vlaneseq
  %v4781 = vshrl.u32 %v4780, 7
  %v4782 = vadd.s32 %v4781, 24
  %4783 = vset.pattern.permute.xlu0 %v4782
  %4784 = vperm.xlu0 %4783, %v4761
  %v4785 = vpop.permute.xlu0 %4784
  %v4786 = vlaneseq
  %v4787 = vshrl.u32 %v4786, 7
  %v4788 = vadd.s32 %v4787, 32
  %4789 = vset.pattern.permute.xlu0 %v4788
  %4790 = vperm.xlu0 %4789, %v4761
  %v4791 = vpop.permute.xlu0 %4790
  %v4792 = vlaneseq
  %v4793 = vshrl.u32 %v4792, 7
  %v4794 = vadd.s32 %v4793, 40
  %4795 = vset.pattern.permute.xlu0 %v4794
  %4796 = vperm.xlu0 %4795, %v4761
  %v4797 = vpop.permute.xlu0 %4796
  %v4798 = vlaneseq
  %v4799 = vshrl.u32 %v4798, 7
  %v4800 = vadd.s32 %v4799, 48
  %4801 = vset.pattern.permute.xlu0 %v4800
  %4802 = vperm.xlu0 %4801, %v4761
  %v4803 = vpop.permute.xlu0 %4802
  %v4804 = vlaneseq
  %v4805 = vshrl.u32 %v4804, 7
  %v4806 = vadd.s32 %v4805, 56
  %4807 = vset.pattern.permute.xlu0 %v4806
  %4808 = vperm.xlu0 %4807, %v4761
  %v4809 = vpop.permute.xlu0 %4808
  %v4810 = vlaneseq
  %v4811 = vshrl.u32 %v4810, 7
  %v4812 = vadd.s32 %v4811, 64
  %4813 = vset.pattern.permute.xlu0 %v4812
  %4814 = vperm.xlu0 %4813, %v4761
  %v4815 = vpop.permute.xlu0 %4814
  %v4816 = vlaneseq
  %v4817 = vshrl.u32 %v4816, 7
  %v4818 = vadd.s32 %v4817, 72
  %4819 = vset.pattern.permute.xlu0 %v4818
  %4820 = vperm.xlu0 %4819, %v4761
  %v4821 = vpop.permute.xlu0 %4820
  %v4822 = vlaneseq
  %v4823 = vshrl.u32 %v4822, 7
  %v4824 = vadd.s32 %v4823, 80
  %4825 = vset.pattern.permute.xlu0 %v4824
  %4826 = vperm.xlu0 %4825, %v4761
  %v4827 = vpop.permute.xlu0 %4826
  %v4828 = vlaneseq
  %v4829 = vshrl.u32 %v4828, 7
  %v4830 = vadd.s32 %v4829, 88
  %4831 = vset.pattern.permute.xlu0 %v4830
  %4832 = vperm.xlu0 %4831, %v4761
  %v4833 = vpop.permute.xlu0 %4832
  %v4834 = vlaneseq
  %v4835 = vshrl.u32 %v4834, 7
  %v4836 = vadd.s32 %v4835, 96
  %4837 = vset.pattern.permute.xlu0 %v4836
  %4838 = vperm.xlu0 %4837, %v4761
  %v4839 = vpop.permute.xlu0 %4838
  %v4840 = vlaneseq
  %v4841 = vshrl.u32 %v4840, 7
  %v4842 = vadd.s32 %v4841, 104
  %4843 = vset.pattern.permute.xlu0 %v4842
  %4844 = vperm.xlu0 %4843, %v4761
  %v4845 = vpop.permute.xlu0 %4844
  %v4846 = vlaneseq
  %v4847 = vshrl.u32 %v4846, 7
  %v4848 = vadd.s32 %v4847, 112
  %4849 = vset.pattern.permute.xlu0 %v4848
  %4850 = vperm.xlu0 %4849, %v4761
  %v4851 = vpop.permute.xlu0 %4850
  %v4852 = vlaneseq
  %v4853 = vshrl.u32 %v4852, 7
  %v4854 = vadd.s32 %v4853, 120
  %4855 = vset.pattern.permute.xlu0 %v4854
  %4856 = vperm.xlu0 %4855, %v4761
  %v4857 = vpop.permute.xlu0 %4856
  %v4858 = vperm.slane %v4430, 2
  %v4859 = vlaneseq
  %v4860 = vshrl.u32 %v4859, 7
  %4862 = vset.pattern.permute.xlu0 %v4860
  %4863 = vperm.xlu0 %4862, %v4858
  %v4864 = vpop.permute.xlu0 %4863
  %v4865 = vlaneseq
  %v4866 = vshrl.u32 %v4865, 7
  %v4867 = vadd.s32 %v4866, 8
  %4868 = vset.pattern.permute.xlu0 %v4867
  %4869 = vperm.xlu0 %4868, %v4858
  %v4870 = vpop.permute.xlu0 %4869
  %v4871 = vlaneseq
  %v4872 = vshrl.u32 %v4871, 7
  %v4873 = vadd.s32 %v4872, 16
  %4874 = vset.pattern.permute.xlu0 %v4873
  %4875 = vperm.xlu0 %4874, %v4858
  %v4876 = vpop.permute.xlu0 %4875
  %v4877 = vlaneseq
  %v4878 = vshrl.u32 %v4877, 7
  %v4879 = vadd.s32 %v4878, 24
  %4880 = vset.pattern.permute.xlu0 %v4879
  %4881 = vperm.xlu0 %4880, %v4858
  %v4882 = vpop.permute.xlu0 %4881
  %v4883 = vlaneseq
  %v4884 = vshrl.u32 %v4883, 7
  %v4885 = vadd.s32 %v4884, 32
  %4886 = vset.pattern.permute.xlu0 %v4885
  %4887 = vperm.xlu0 %4886, %v4858
  %v4888 = vpop.permute.xlu0 %4887
  %v4889 = vlaneseq
  %v4890 = vshrl.u32 %v4889, 7
  %v4891 = vadd.s32 %v4890, 40
  %4892 = vset.pattern.permute.xlu0 %v4891
  %4893 = vperm.xlu0 %4892, %v4858
  %v4894 = vpop.permute.xlu0 %4893
  %v4895 = vlaneseq
  %v4896 = vshrl.u32 %v4895, 7
  %v4897 = vadd.s32 %v4896, 48
  %4898 = vset.pattern.permute.xlu0 %v4897
  %4899 = vperm.xlu0 %4898, %v4858
  %v4900 = vpop.permute.xlu0 %4899
  %v4901 = vlaneseq
  %v4902 = vshrl.u32 %v4901, 7
  %v4903 = vadd.s32 %v4902, 56
  %4904 = vset.pattern.permute.xlu0 %v4903
  %4905 = vperm.xlu0 %4904, %v4858
  %v4906 = vpop.permute.xlu0 %4905
  %v4907 = vlaneseq
  %v4908 = vshrl.u32 %v4907, 7
  %v4909 = vadd.s32 %v4908, 64
  %4910 = vset.pattern.permute.xlu0 %v4909
  %4911 = vperm.xlu0 %4910, %v4858
  %v4912 = vpop.permute.xlu0 %4911
  %v4913 = vlaneseq
  %v4914 = vshrl.u32 %v4913, 7
  %v4915 = vadd.s32 %v4914, 72
  %4916 = vset.pattern.permute.xlu0 %v4915
  %4917 = vperm.xlu0 %4916, %v4858
  %v4918 = vpop.permute.xlu0 %4917
  %v4919 = vlaneseq
  %v4920 = vshrl.u32 %v4919, 7
  %v4921 = vadd.s32 %v4920, 80
  %4922 = vset.pattern.permute.xlu0 %v4921
  %4923 = vperm.xlu0 %4922, %v4858
  %v4924 = vpop.permute.xlu0 %4923
  %v4925 = vlaneseq
  %v4926 = vshrl.u32 %v4925, 7
  %v4927 = vadd.s32 %v4926, 88
  %4928 = vset.pattern.permute.xlu0 %v4927
  %4929 = vperm.xlu0 %4928, %v4858
  %v4930 = vpop.permute.xlu0 %4929
  %v4931 = vlaneseq
  %v4932 = vshrl.u32 %v4931, 7
  %v4933 = vadd.s32 %v4932, 96
  %4934 = vset.pattern.permute.xlu0 %v4933
  %4935 = vperm.xlu0 %4934, %v4858
  %v4936 = vpop.permute.xlu0 %4935
  %v4937 = vlaneseq
  %v4938 = vshrl.u32 %v4937, 7
  %v4939 = vadd.s32 %v4938, 104
  %4940 = vset.pattern.permute.xlu0 %v4939
  %4941 = vperm.xlu0 %4940, %v4858
  %v4942 = vpop.permute.xlu0 %4941
  %v4943 = vlaneseq
  %v4944 = vshrl.u32 %v4943, 7
  %v4945 = vadd.s32 %v4944, 112
  %4946 = vset.pattern.permute.xlu0 %v4945
  %4947 = vperm.xlu0 %4946, %v4858
  %v4948 = vpop.permute.xlu0 %4947
  %v4949 = vlaneseq
  %v4950 = vshrl.u32 %v4949, 7
  %v4951 = vadd.s32 %v4950, 120
  %4952 = vset.pattern.permute.xlu0 %v4951
  %4953 = vperm.xlu0 %4952, %v4858
  %v4954 = vpop.permute.xlu0 %4953
  %v4955 = vperm.slane %v4431, 2
  %v4956 = vlaneseq
  %v4957 = vshrl.u32 %v4956, 7
  %4959 = vset.pattern.permute.xlu0 %v4957
  %4960 = vperm.xlu0 %4959, %v4955
  %v4961 = vpop.permute.xlu0 %4960
  %v4962 = vlaneseq
  %v4963 = vshrl.u32 %v4962, 7
  %v4964 = vadd.s32 %v4963, 8
  %4965 = vset.pattern.permute.xlu0 %v4964
  %4966 = vperm.xlu0 %4965, %v4955
  %v4967 = vpop.permute.xlu0 %4966
  %v4968 = vlaneseq
  %v4969 = vshrl.u32 %v4968, 7
  %v4970 = vadd.s32 %v4969, 16
  %4971 = vset.pattern.permute.xlu0 %v4970
  %4972 = vperm.xlu0 %4971, %v4955
  %v4973 = vpop.permute.xlu0 %4972
  %v4974 = vlaneseq
  %v4975 = vshrl.u32 %v4974, 7
  %v4976 = vadd.s32 %v4975, 24
  %4977 = vset.pattern.permute.xlu0 %v4976
  %4978 = vperm.xlu0 %4977, %v4955
  %v4979 = vpop.permute.xlu0 %4978
  %v4980 = vlaneseq
  %v4981 = vshrl.u32 %v4980, 7
  %v4982 = vadd.s32 %v4981, 32
  %4983 = vset.pattern.permute.xlu0 %v4982
  %4984 = vperm.xlu0 %4983, %v4955
  %v4985 = vpop.permute.xlu0 %4984
  %v4986 = vlaneseq
  %v4987 = vshrl.u32 %v4986, 7
  %v4988 = vadd.s32 %v4987, 40
  %4989 = vset.pattern.permute.xlu0 %v4988
  %4990 = vperm.xlu0 %4989, %v4955
  %v4991 = vpop.permute.xlu0 %4990
  %v4992 = vlaneseq
  %v4993 = vshrl.u32 %v4992, 7
  %v4994 = vadd.s32 %v4993, 48
  %4995 = vset.pattern.permute.xlu0 %v4994
  %4996 = vperm.xlu0 %4995, %v4955
  %v4997 = vpop.permute.xlu0 %4996
  %v4998 = vlaneseq
  %v4999 = vshrl.u32 %v4998, 7
  %v5000 = vadd.s32 %v4999, 56
  %5001 = vset.pattern.permute.xlu0 %v5000
  %5002 = vperm.xlu0 %5001, %v4955
  %v5003 = vpop.permute.xlu0 %5002
  %v5004 = vlaneseq
  %v5005 = vshrl.u32 %v5004, 7
  %v5006 = vadd.s32 %v5005, 64
  %5007 = vset.pattern.permute.xlu0 %v5006
  %5008 = vperm.xlu0 %5007, %v4955
  %v5009 = vpop.permute.xlu0 %5008
  %v5010 = vlaneseq
  %v5011 = vshrl.u32 %v5010, 7
  %v5012 = vadd.s32 %v5011, 72
  %5013 = vset.pattern.permute.xlu0 %v5012
  %5014 = vperm.xlu0 %5013, %v4955
  %v5015 = vpop.permute.xlu0 %5014
  %v5016 = vlaneseq
  %v5017 = vshrl.u32 %v5016, 7
  %v5018 = vadd.s32 %v5017, 80
  %5019 = vset.pattern.permute.xlu0 %v5018
  %5020 = vperm.xlu0 %5019, %v4955
  %v5021 = vpop.permute.xlu0 %5020
  %v5022 = vlaneseq
  %v5023 = vshrl.u32 %v5022, 7
  %v5024 = vadd.s32 %v5023, 88
  %5025 = vset.pattern.permute.xlu0 %v5024
  %5026 = vperm.xlu0 %5025, %v4955
  %v5027 = vpop.permute.xlu0 %5026
  %v5028 = vlaneseq
  %v5029 = vshrl.u32 %v5028, 7
  %v5030 = vadd.s32 %v5029, 96
  %5031 = vset.pattern.permute.xlu0 %v5030
  %5032 = vperm.xlu0 %5031, %v4955
  %v5033 = vpop.permute.xlu0 %5032
  %v5034 = vlaneseq
  %v5035 = vshrl.u32 %v5034, 7
  %v5036 = vadd.s32 %v5035, 104
  %5037 = vset.pattern.permute.xlu0 %v5036
  %5038 = vperm.xlu0 %5037, %v4955
  %v5039 = vpop.permute.xlu0 %5038
  %v5040 = vlaneseq
  %v5041 = vshrl.u32 %v5040, 7
  %v5042 = vadd.s32 %v5041, 112
  %5043 = vset.pattern.permute.xlu0 %v5042
  %5044 = vperm.xlu0 %5043, %v4955
  %v5045 = vpop.permute.xlu0 %5044
  %v5046 = vlaneseq
  %v5047 = vshrl.u32 %v5046, 7
  %v5048 = vadd.s32 %v5047, 120
  %5049 = vset.pattern.permute.xlu0 %v5048
  %5050 = vperm.xlu0 %5049, %v4955
  %v5051 = vpop.permute.xlu0 %5050
  %v5052 = vperm.slane %v4430, 3
  %v5053 = vlaneseq
  %v5054 = vshrl.u32 %v5053, 7
  %5056 = vset.pattern.permute.xlu0 %v5054
  %5057 = vperm.xlu0 %5056, %v5052
  %v5058 = vpop.permute.xlu0 %5057
  %v5059 = vlaneseq
  %v5060 = vshrl.u32 %v5059, 7
  %v5061 = vadd.s32 %v5060, 8
  %5062 = vset.pattern.permute.xlu0 %v5061
  %5063 = vperm.xlu0 %5062, %v5052
  %v5064 = vpop.permute.xlu0 %5063
  %v5065 = vlaneseq
  %v5066 = vshrl.u32 %v5065, 7
  %v5067 = vadd.s32 %v5066, 16
  %5068 = vset.pattern.permute.xlu0 %v5067
  %5069 = vperm.xlu0 %5068, %v5052
  %v5070 = vpop.permute.xlu0 %5069
  %v5071 = vlaneseq
  %v5072 = vshrl.u32 %v5071, 7
  %v5073 = vadd.s32 %v5072, 24
  %5074 = vset.pattern.permute.xlu0 %v5073
  %5075 = vperm.xlu0 %5074, %v5052
  %v5076 = vpop.permute.xlu0 %5075
  %v5077 = vlaneseq
  %v5078 = vshrl.u32 %v5077, 7
  %v5079 = vadd.s32 %v5078, 32
  %5080 = vset.pattern.permute.xlu0 %v5079
  %5081 = vperm.xlu0 %5080, %v5052
  %v5082 = vpop.permute.xlu0 %5081
  %v5083 = vlaneseq
  %v5084 = vshrl.u32 %v5083, 7
  %v5085 = vadd.s32 %v5084, 40
  %5086 = vset.pattern.permute.xlu0 %v5085
  %5087 = vperm.xlu0 %5086, %v5052
  %v5088 = vpop.permute.xlu0 %5087
  %v5089 = vlaneseq
  %v5090 = vshrl.u32 %v5089, 7
  %v5091 = vadd.s32 %v5090, 48
  %5092 = vset.pattern.permute.xlu0 %v5091
  %5093 = vperm.xlu0 %5092, %v5052
  %v5094 = vpop.permute.xlu0 %5093
  %v5095 = vlaneseq
  %v5096 = vshrl.u32 %v5095, 7
  %v5097 = vadd.s32 %v5096, 56
  %5098 = vset.pattern.permute.xlu0 %v5097
  %5099 = vperm.xlu0 %5098, %v5052
  %v5100 = vpop.permute.xlu0 %5099
  %v5101 = vlaneseq
  %v5102 = vshrl.u32 %v5101, 7
  %v5103 = vadd.s32 %v5102, 64
  %5104 = vset.pattern.permute.xlu0 %v5103
  %5105 = vperm.xlu0 %5104, %v5052
  %v5106 = vpop.permute.xlu0 %5105
  %v5107 = vlaneseq
  %v5108 = vshrl.u32 %v5107, 7
  %v5109 = vadd.s32 %v5108, 72
  %5110 = vset.pattern.permute.xlu0 %v5109
  %5111 = vperm.xlu0 %5110, %v5052
  %v5112 = vpop.permute.xlu0 %5111
  %v5113 = vlaneseq
  %v5114 = vshrl.u32 %v5113, 7
  %v5115 = vadd.s32 %v5114, 80
  %5116 = vset.pattern.permute.xlu0 %v5115
  %5117 = vperm.xlu0 %5116, %v5052
  %v5118 = vpop.permute.xlu0 %5117
  %v5119 = vlaneseq
  %v5120 = vshrl.u32 %v5119, 7
  %v5121 = vadd.s32 %v5120, 88
  %5122 = vset.pattern.permute.xlu0 %v5121
  %5123 = vperm.xlu0 %5122, %v5052
  %v5124 = vpop.permute.xlu0 %5123
  %v5125 = vlaneseq
  %v5126 = vshrl.u32 %v5125, 7
  %v5127 = vadd.s32 %v5126, 96
  %5128 = vset.pattern.permute.xlu0 %v5127
  %5129 = vperm.xlu0 %5128, %v5052
  %v5130 = vpop.permute.xlu0 %5129
  %v5131 = vlaneseq
  %v5132 = vshrl.u32 %v5131, 7
  %v5133 = vadd.s32 %v5132, 104
  %5134 = vset.pattern.permute.xlu0 %v5133
  %5135 = vperm.xlu0 %5134, %v5052
  %v5136 = vpop.permute.xlu0 %5135
  %v5137 = vlaneseq
  %v5138 = vshrl.u32 %v5137, 7
  %v5139 = vadd.s32 %v5138, 112
  %5140 = vset.pattern.permute.xlu0 %v5139
  %5141 = vperm.xlu0 %5140, %v5052
  %v5142 = vpop.permute.xlu0 %5141
  %v5143 = vlaneseq
  %v5144 = vshrl.u32 %v5143, 7
  %v5145 = vadd.s32 %v5144, 120
  %5146 = vset.pattern.permute.xlu0 %v5145
  %5147 = vperm.xlu0 %5146, %v5052
  %v5148 = vpop.permute.xlu0 %5147
  %v5149 = vperm.slane %v4431, 3
  %v5150 = vlaneseq
  %v5151 = vshrl.u32 %v5150, 7
  %5153 = vset.pattern.permute.xlu0 %v5151
  %5154 = vperm.xlu0 %5153, %v5149
  %v5155 = vpop.permute.xlu0 %5154
  %v5156 = vlaneseq
  %v5157 = vshrl.u32 %v5156, 7
  %v5158 = vadd.s32 %v5157, 8
  %5159 = vset.pattern.permute.xlu0 %v5158
  %5160 = vperm.xlu0 %5159, %v5149
  %v5161 = vpop.permute.xlu0 %5160
  %v5162 = vlaneseq
  %v5163 = vshrl.u32 %v5162, 7
  %v5164 = vadd.s32 %v5163, 16
  %5165 = vset.pattern.permute.xlu0 %v5164
  %5166 = vperm.xlu0 %5165, %v5149
  %v5167 = vpop.permute.xlu0 %5166
  %v5168 = vlaneseq
  %v5169 = vshrl.u32 %v5168, 7
  %v5170 = vadd.s32 %v5169, 24
  %5171 = vset.pattern.permute.xlu0 %v5170
  %5172 = vperm.xlu0 %5171, %v5149
  %v5173 = vpop.permute.xlu0 %5172
  %v5174 = vlaneseq
  %v5175 = vshrl.u32 %v5174, 7
  %v5176 = vadd.s32 %v5175, 32
  %5177 = vset.pattern.permute.xlu0 %v5176
  %5178 = vperm.xlu0 %5177, %v5149
  %v5179 = vpop.permute.xlu0 %5178
  %v5180 = vlaneseq
  %v5181 = vshrl.u32 %v5180, 7
  %v5182 = vadd.s32 %v5181, 40
  %5183 = vset.pattern.permute.xlu0 %v5182
  %5184 = vperm.xlu0 %5183, %v5149
  %v5185 = vpop.permute.xlu0 %5184
  %v5186 = vlaneseq
  %v5187 = vshrl.u32 %v5186, 7
  %v5188 = vadd.s32 %v5187, 48
  %5189 = vset.pattern.permute.xlu0 %v5188
  %5190 = vperm.xlu0 %5189, %v5149
  %v5191 = vpop.permute.xlu0 %5190
  %v5192 = vlaneseq
  %v5193 = vshrl.u32 %v5192, 7
  %v5194 = vadd.s32 %v5193, 56
  %5195 = vset.pattern.permute.xlu0 %v5194
  %5196 = vperm.xlu0 %5195, %v5149
  %v5197 = vpop.permute.xlu0 %5196
  %v5198 = vlaneseq
  %v5199 = vshrl.u32 %v5198, 7
  %v5200 = vadd.s32 %v5199, 64
  %5201 = vset.pattern.permute.xlu0 %v5200
  %5202 = vperm.xlu0 %5201, %v5149
  %v5203 = vpop.permute.xlu0 %5202
  %v5204 = vlaneseq
  %v5205 = vshrl.u32 %v5204, 7
  %v5206 = vadd.s32 %v5205, 72
  %5207 = vset.pattern.permute.xlu0 %v5206
  %5208 = vperm.xlu0 %5207, %v5149
  %v5209 = vpop.permute.xlu0 %5208
  %v5210 = vlaneseq
  %v5211 = vshrl.u32 %v5210, 7
  %v5212 = vadd.s32 %v5211, 80
  %5213 = vset.pattern.permute.xlu0 %v5212
  %5214 = vperm.xlu0 %5213, %v5149
  %v5215 = vpop.permute.xlu0 %5214
  %v5216 = vlaneseq
  %v5217 = vshrl.u32 %v5216, 7
  %v5218 = vadd.s32 %v5217, 88
  %5219 = vset.pattern.permute.xlu0 %v5218
  %5220 = vperm.xlu0 %5219, %v5149
  %v5221 = vpop.permute.xlu0 %5220
  %v5222 = vlaneseq
  %v5223 = vshrl.u32 %v5222, 7
  %v5224 = vadd.s32 %v5223, 96
  %5225 = vset.pattern.permute.xlu0 %v5224
  %5226 = vperm.xlu0 %5225, %v5149
  %v5227 = vpop.permute.xlu0 %5226
  %v5228 = vlaneseq
  %v5229 = vshrl.u32 %v5228, 7
  %v5230 = vadd.s32 %v5229, 104
  %5231 = vset.pattern.permute.xlu0 %v5230
  %5232 = vperm.xlu0 %5231, %v5149
  %v5233 = vpop.permute.xlu0 %5232
  %v5234 = vlaneseq
  %v5235 = vshrl.u32 %v5234, 7
  %v5236 = vadd.s32 %v5235, 112
  %5237 = vset.pattern.permute.xlu0 %v5236
  %5238 = vperm.xlu0 %5237, %v5149
  %v5239 = vpop.permute.xlu0 %5238
  %v5240 = vlaneseq
  %v5241 = vshrl.u32 %v5240, 7
  %v5242 = vadd.s32 %v5241, 120
  %5243 = vset.pattern.permute.xlu0 %v5242
  %5244 = vperm.xlu0 %5243, %v5149
  %v5245 = vpop.permute.xlu0 %5244
  %v5246 = vperm.slane %v4430, 4
  %v5247 = vlaneseq
  %v5248 = vshrl.u32 %v5247, 7
  %5250 = vset.pattern.permute.xlu0 %v5248
  %5251 = vperm.xlu0 %5250, %v5246
  %v5252 = vpop.permute.xlu0 %5251
  %v5253 = vlaneseq
  %v5254 = vshrl.u32 %v5253, 7
  %v5255 = vadd.s32 %v5254, 8
  %5256 = vset.pattern.permute.xlu0 %v5255
  %5257 = vperm.xlu0 %5256, %v5246
  %v5258 = vpop.permute.xlu0 %5257
  %v5259 = vlaneseq
  %v5260 = vshrl.u32 %v5259, 7
  %v5261 = vadd.s32 %v5260, 16
  %5262 = vset.pattern.permute.xlu0 %v5261
  %5263 = vperm.xlu0 %5262, %v5246
  %v5264 = vpop.permute.xlu0 %5263
  %v5265 = vlaneseq
  %v5266 = vshrl.u32 %v5265, 7
  %v5267 = vadd.s32 %v5266, 24
  %5268 = vset.pattern.permute.xlu0 %v5267
  %5269 = vperm.xlu0 %5268, %v5246
  %v5270 = vpop.permute.xlu0 %5269
  %v5271 = vlaneseq
  %v5272 = vshrl.u32 %v5271, 7
  %v5273 = vadd.s32 %v5272, 32
  %5274 = vset.pattern.permute.xlu0 %v5273
  %5275 = vperm.xlu0 %5274, %v5246
  %v5276 = vpop.permute.xlu0 %5275
  %v5277 = vlaneseq
  %v5278 = vshrl.u32 %v5277, 7
  %v5279 = vadd.s32 %v5278, 40
  %5280 = vset.pattern.permute.xlu0 %v5279
  %5281 = vperm.xlu0 %5280, %v5246
  %v5282 = vpop.permute.xlu0 %5281
  %v5283 = vlaneseq
  %v5284 = vshrl.u32 %v5283, 7
  %v5285 = vadd.s32 %v5284, 48
  %5286 = vset.pattern.permute.xlu0 %v5285
  %5287 = vperm.xlu0 %5286, %v5246
  %v5288 = vpop.permute.xlu0 %5287
  %v5289 = vlaneseq
  %v5290 = vshrl.u32 %v5289, 7
  %v5291 = vadd.s32 %v5290, 56
  %5292 = vset.pattern.permute.xlu0 %v5291
  %5293 = vperm.xlu0 %5292, %v5246
  %v5294 = vpop.permute.xlu0 %5293
  %v5295 = vlaneseq
  %v5296 = vshrl.u32 %v5295, 7
  %v5297 = vadd.s32 %v5296, 64
  %5298 = vset.pattern.permute.xlu0 %v5297
  %5299 = vperm.xlu0 %5298, %v5246
  %v5300 = vpop.permute.xlu0 %5299
  %v5301 = vlaneseq
  %v5302 = vshrl.u32 %v5301, 7
  %v5303 = vadd.s32 %v5302, 72
  %5304 = vset.pattern.permute.xlu0 %v5303
  %5305 = vperm.xlu0 %5304, %v5246
  %v5306 = vpop.permute.xlu0 %5305
  %v5307 = vlaneseq
  %v5308 = vshrl.u32 %v5307, 7
  %v5309 = vadd.s32 %v5308, 80
  %5310 = vset.pattern.permute.xlu0 %v5309
  %5311 = vperm.xlu0 %5310, %v5246
  %v5312 = vpop.permute.xlu0 %5311
  %v5313 = vlaneseq
  %v5314 = vshrl.u32 %v5313, 7
  %v5315 = vadd.s32 %v5314, 88
  %5316 = vset.pattern.permute.xlu0 %v5315
  %5317 = vperm.xlu0 %5316, %v5246
  %v5318 = vpop.permute.xlu0 %5317
  %v5319 = vlaneseq
  %v5320 = vshrl.u32 %v5319, 7
  %v5321 = vadd.s32 %v5320, 96
  %5322 = vset.pattern.permute.xlu0 %v5321
  %5323 = vperm.xlu0 %5322, %v5246
  %v5324 = vpop.permute.xlu0 %5323
  %v5325 = vlaneseq
  %v5326 = vshrl.u32 %v5325, 7
  %v5327 = vadd.s32 %v5326, 104
  %5328 = vset.pattern.permute.xlu0 %v5327
  %5329 = vperm.xlu0 %5328, %v5246
  %v5330 = vpop.permute.xlu0 %5329
  %v5331 = vlaneseq
  %v5332 = vshrl.u32 %v5331, 7
  %v5333 = vadd.s32 %v5332, 112
  %5334 = vset.pattern.permute.xlu0 %v5333
  %5335 = vperm.xlu0 %5334, %v5246
  %v5336 = vpop.permute.xlu0 %5335
  %v5337 = vlaneseq
  %v5338 = vshrl.u32 %v5337, 7
  %v5339 = vadd.s32 %v5338, 120
  %5340 = vset.pattern.permute.xlu0 %v5339
  %5341 = vperm.xlu0 %5340, %v5246
  %v5342 = vpop.permute.xlu0 %5341
  %v5343 = vperm.slane %v4431, 4
  %v5344 = vlaneseq
  %v5345 = vshrl.u32 %v5344, 7
  %5347 = vset.pattern.permute.xlu0 %v5345
  %5348 = vperm.xlu0 %5347, %v5343
  %v5349 = vpop.permute.xlu0 %5348
  %v5350 = vlaneseq
  %v5351 = vshrl.u32 %v5350, 7
  %v5352 = vadd.s32 %v5351, 8
  %5353 = vset.pattern.permute.xlu0 %v5352
  %5354 = vperm.xlu0 %5353, %v5343
  %v5355 = vpop.permute.xlu0 %5354
  %v5356 = vlaneseq
  %v5357 = vshrl.u32 %v5356, 7
  %v5358 = vadd.s32 %v5357, 16
  %5359 = vset.pattern.permute.xlu0 %v5358
  %5360 = vperm.xlu0 %5359, %v5343
  %v5361 = vpop.permute.xlu0 %5360
  %v5362 = vlaneseq
  %v5363 = vshrl.u32 %v5362, 7
  %v5364 = vadd.s32 %v5363, 24
  %5365 = vset.pattern.permute.xlu0 %v5364
  %5366 = vperm.xlu0 %5365, %v5343
  %v5367 = vpop.permute.xlu0 %5366
  %v5368 = vlaneseq
  %v5369 = vshrl.u32 %v5368, 7
  %v5370 = vadd.s32 %v5369, 32
  %5371 = vset.pattern.permute.xlu0 %v5370
  %5372 = vperm.xlu0 %5371, %v5343
  %v5373 = vpop.permute.xlu0 %5372
  %v5374 = vlaneseq
  %v5375 = vshrl.u32 %v5374, 7
  %v5376 = vadd.s32 %v5375, 40
  %5377 = vset.pattern.permute.xlu0 %v5376
  %5378 = vperm.xlu0 %5377, %v5343
  %v5379 = vpop.permute.xlu0 %5378
  %v5380 = vlaneseq
  %v5381 = vshrl.u32 %v5380, 7
  %v5382 = vadd.s32 %v5381, 48
  %5383 = vset.pattern.permute.xlu0 %v5382
  %5384 = vperm.xlu0 %5383, %v5343
  %v5385 = vpop.permute.xlu0 %5384
  %v5386 = vlaneseq
  %v5387 = vshrl.u32 %v5386, 7
  %v5388 = vadd.s32 %v5387, 56
  %5389 = vset.pattern.permute.xlu0 %v5388
  %5390 = vperm.xlu0 %5389, %v5343
  %v5391 = vpop.permute.xlu0 %5390
  %v5392 = vlaneseq
  %v5393 = vshrl.u32 %v5392, 7
  %v5394 = vadd.s32 %v5393, 64
  %5395 = vset.pattern.permute.xlu0 %v5394
  %5396 = vperm.xlu0 %5395, %v5343
  %v5397 = vpop.permute.xlu0 %5396
  %v5398 = vlaneseq
  %v5399 = vshrl.u32 %v5398, 7
  %v5400 = vadd.s32 %v5399, 72
  %5401 = vset.pattern.permute.xlu0 %v5400
  %5402 = vperm.xlu0 %5401, %v5343
  %v5403 = vpop.permute.xlu0 %5402
  %v5404 = vlaneseq
  %v5405 = vshrl.u32 %v5404, 7
  %v5406 = vadd.s32 %v5405, 80
  %5407 = vset.pattern.permute.xlu0 %v5406
  %5408 = vperm.xlu0 %5407, %v5343
  %v5409 = vpop.permute.xlu0 %5408
  %v5410 = vlaneseq
  %v5411 = vshrl.u32 %v5410, 7
  %v5412 = vadd.s32 %v5411, 88
  %5413 = vset.pattern.permute.xlu0 %v5412
  %5414 = vperm.xlu0 %5413, %v5343
  %v5415 = vpop.permute.xlu0 %5414
  %v5416 = vlaneseq
  %v5417 = vshrl.u32 %v5416, 7
  %v5418 = vadd.s32 %v5417, 96
  %5419 = vset.pattern.permute.xlu0 %v5418
  %5420 = vperm.xlu0 %5419, %v5343
  %v5421 = vpop.permute.xlu0 %5420
  %v5422 = vlaneseq
  %v5423 = vshrl.u32 %v5422, 7
  %v5424 = vadd.s32 %v5423, 104
  %5425 = vset.pattern.permute.xlu0 %v5424
  %5426 = vperm.xlu0 %5425, %v5343
  %v5427 = vpop.permute.xlu0 %5426
  %v5428 = vlaneseq
  %v5429 = vshrl.u32 %v5428, 7
  %v5430 = vadd.s32 %v5429, 112
  %5431 = vset.pattern.permute.xlu0 %v5430
  %5432 = vperm.xlu0 %5431, %v5343
  %v5433 = vpop.permute.xlu0 %5432
  %v5434 = vlaneseq
  %v5435 = vshrl.u32 %v5434, 7
  %v5436 = vadd.s32 %v5435, 120
  %5437 = vset.pattern.permute.xlu0 %v5436
  %5438 = vperm.xlu0 %5437, %v5343
  %v5439 = vpop.permute.xlu0 %5438
  %v5440 = vperm.slane %v4430, 5
  %v5441 = vlaneseq
  %v5442 = vshrl.u32 %v5441, 7
  %5444 = vset.pattern.permute.xlu0 %v5442
  %5445 = vperm.xlu0 %5444, %v5440
  %v5446 = vpop.permute.xlu0 %5445
  %v5447 = vlaneseq
  %v5448 = vshrl.u32 %v5447, 7
  %v5449 = vadd.s32 %v5448, 8
  %5450 = vset.pattern.permute.xlu0 %v5449
  %5451 = vperm.xlu0 %5450, %v5440
  %v5452 = vpop.permute.xlu0 %5451
  %v5453 = vlaneseq
  %v5454 = vshrl.u32 %v5453, 7
  %v5455 = vadd.s32 %v5454, 16
  %5456 = vset.pattern.permute.xlu0 %v5455
  %5457 = vperm.xlu0 %5456, %v5440
  %v5458 = vpop.permute.xlu0 %5457
  %v5459 = vlaneseq
  %v5460 = vshrl.u32 %v5459, 7
  %v5461 = vadd.s32 %v5460, 24
  %5462 = vset.pattern.permute.xlu0 %v5461
  %5463 = vperm.xlu0 %5462, %v5440
  %v5464 = vpop.permute.xlu0 %5463
  %v5465 = vlaneseq
  %v5466 = vshrl.u32 %v5465, 7
  %v5467 = vadd.s32 %v5466, 32
  %5468 = vset.pattern.permute.xlu0 %v5467
  %5469 = vperm.xlu0 %5468, %v5440
  %v5470 = vpop.permute.xlu0 %5469
  %v5471 = vlaneseq
  %v5472 = vshrl.u32 %v5471, 7
  %v5473 = vadd.s32 %v5472, 40
  %5474 = vset.pattern.permute.xlu0 %v5473
  %5475 = vperm.xlu0 %5474, %v5440
  %v5476 = vpop.permute.xlu0 %5475
  %v5477 = vlaneseq
  %v5478 = vshrl.u32 %v5477, 7
  %v5479 = vadd.s32 %v5478, 48
  %5480 = vset.pattern.permute.xlu0 %v5479
  %5481 = vperm.xlu0 %5480, %v5440
  %v5482 = vpop.permute.xlu0 %5481
  %v5483 = vlaneseq
  %v5484 = vshrl.u32 %v5483, 7
  %v5485 = vadd.s32 %v5484, 56
  %5486 = vset.pattern.permute.xlu0 %v5485
  %5487 = vperm.xlu0 %5486, %v5440
  %v5488 = vpop.permute.xlu0 %5487
  %v5489 = vlaneseq
  %v5490 = vshrl.u32 %v5489, 7
  %v5491 = vadd.s32 %v5490, 64
  %5492 = vset.pattern.permute.xlu0 %v5491
  %5493 = vperm.xlu0 %5492, %v5440
  %v5494 = vpop.permute.xlu0 %5493
  %v5495 = vlaneseq
  %v5496 = vshrl.u32 %v5495, 7
  %v5497 = vadd.s32 %v5496, 72
  %5498 = vset.pattern.permute.xlu0 %v5497
  %5499 = vperm.xlu0 %5498, %v5440
  %v5500 = vpop.permute.xlu0 %5499
  %v5501 = vlaneseq
  %v5502 = vshrl.u32 %v5501, 7
  %v5503 = vadd.s32 %v5502, 80
  %5504 = vset.pattern.permute.xlu0 %v5503
  %5505 = vperm.xlu0 %5504, %v5440
  %v5506 = vpop.permute.xlu0 %5505
  %v5507 = vlaneseq
  %v5508 = vshrl.u32 %v5507, 7
  %v5509 = vadd.s32 %v5508, 88
  %5510 = vset.pattern.permute.xlu0 %v5509
  %5511 = vperm.xlu0 %5510, %v5440
  %v5512 = vpop.permute.xlu0 %5511
  %v5513 = vlaneseq
  %v5514 = vshrl.u32 %v5513, 7
  %v5515 = vadd.s32 %v5514, 96
  %5516 = vset.pattern.permute.xlu0 %v5515
  %5517 = vperm.xlu0 %5516, %v5440
  %v5518 = vpop.permute.xlu0 %5517
  %v5519 = vlaneseq
  %v5520 = vshrl.u32 %v5519, 7
  %v5521 = vadd.s32 %v5520, 104
  %5522 = vset.pattern.permute.xlu0 %v5521
  %5523 = vperm.xlu0 %5522, %v5440
  %v5524 = vpop.permute.xlu0 %5523
  %v5525 = vlaneseq
  %v5526 = vshrl.u32 %v5525, 7
  %v5527 = vadd.s32 %v5526, 112
  %5528 = vset.pattern.permute.xlu0 %v5527
  %5529 = vperm.xlu0 %5528, %v5440
  %v5530 = vpop.permute.xlu0 %5529
  %v5531 = vlaneseq
  %v5532 = vshrl.u32 %v5531, 7
  %v5533 = vadd.s32 %v5532, 120
  %5534 = vset.pattern.permute.xlu0 %v5533
  %5535 = vperm.xlu0 %5534, %v5440
  %v5536 = vpop.permute.xlu0 %5535
  %v5537 = vperm.slane %v4431, 5
  %v5538 = vlaneseq
  %v5539 = vshrl.u32 %v5538, 7
  %5541 = vset.pattern.permute.xlu0 %v5539
  %5542 = vperm.xlu0 %5541, %v5537
  %v5543 = vpop.permute.xlu0 %5542
  %v5544 = vlaneseq
  %v5545 = vshrl.u32 %v5544, 7
  %v5546 = vadd.s32 %v5545, 8
  %5547 = vset.pattern.permute.xlu0 %v5546
  %5548 = vperm.xlu0 %5547, %v5537
  %v5549 = vpop.permute.xlu0 %5548
  %v5550 = vlaneseq
  %v5551 = vshrl.u32 %v5550, 7
  %v5552 = vadd.s32 %v5551, 16
  %5553 = vset.pattern.permute.xlu0 %v5552
  %5554 = vperm.xlu0 %5553, %v5537
  %v5555 = vpop.permute.xlu0 %5554
  %v5556 = vlaneseq
  %v5557 = vshrl.u32 %v5556, 7
  %v5558 = vadd.s32 %v5557, 24
  %5559 = vset.pattern.permute.xlu0 %v5558
  %5560 = vperm.xlu0 %5559, %v5537
  %v5561 = vpop.permute.xlu0 %5560
  %v5562 = vlaneseq
  %v5563 = vshrl.u32 %v5562, 7
  %v5564 = vadd.s32 %v5563, 32
  %5565 = vset.pattern.permute.xlu0 %v5564
  %5566 = vperm.xlu0 %5565, %v5537
  %v5567 = vpop.permute.xlu0 %5566
  %v5568 = vlaneseq
  %v5569 = vshrl.u32 %v5568, 7
  %v5570 = vadd.s32 %v5569, 40
  %5571 = vset.pattern.permute.xlu0 %v5570
  %5572 = vperm.xlu0 %5571, %v5537
  %v5573 = vpop.permute.xlu0 %5572
  %v5574 = vlaneseq
  %v5575 = vshrl.u32 %v5574, 7
  %v5576 = vadd.s32 %v5575, 48
  %5577 = vset.pattern.permute.xlu0 %v5576
  %5578 = vperm.xlu0 %5577, %v5537
  %v5579 = vpop.permute.xlu0 %5578
  %v5580 = vlaneseq
  %v5581 = vshrl.u32 %v5580, 7
  %v5582 = vadd.s32 %v5581, 56
  %5583 = vset.pattern.permute.xlu0 %v5582
  %5584 = vperm.xlu0 %5583, %v5537
  %v5585 = vpop.permute.xlu0 %5584
  %v5586 = vlaneseq
  %v5587 = vshrl.u32 %v5586, 7
  %v5588 = vadd.s32 %v5587, 64
  %5589 = vset.pattern.permute.xlu0 %v5588
  %5590 = vperm.xlu0 %5589, %v5537
  %v5591 = vpop.permute.xlu0 %5590
  %v5592 = vlaneseq
  %v5593 = vshrl.u32 %v5592, 7
  %v5594 = vadd.s32 %v5593, 72
  %5595 = vset.pattern.permute.xlu0 %v5594
  %5596 = vperm.xlu0 %5595, %v5537
  %v5597 = vpop.permute.xlu0 %5596
  %v5598 = vlaneseq
  %v5599 = vshrl.u32 %v5598, 7
  %v5600 = vadd.s32 %v5599, 80
  %5601 = vset.pattern.permute.xlu0 %v5600
  %5602 = vperm.xlu0 %5601, %v5537
  %v5603 = vpop.permute.xlu0 %5602
  %v5604 = vlaneseq
  %v5605 = vshrl.u32 %v5604, 7
  %v5606 = vadd.s32 %v5605, 88
  %5607 = vset.pattern.permute.xlu0 %v5606
  %5608 = vperm.xlu0 %5607, %v5537
  %v5609 = vpop.permute.xlu0 %5608
  %v5610 = vlaneseq
  %v5611 = vshrl.u32 %v5610, 7
  %v5612 = vadd.s32 %v5611, 96
  %5613 = vset.pattern.permute.xlu0 %v5612
  %5614 = vperm.xlu0 %5613, %v5537
  %v5615 = vpop.permute.xlu0 %5614
  %v5616 = vlaneseq
  %v5617 = vshrl.u32 %v5616, 7
  %v5618 = vadd.s32 %v5617, 104
  %5619 = vset.pattern.permute.xlu0 %v5618
  %5620 = vperm.xlu0 %5619, %v5537
  %v5621 = vpop.permute.xlu0 %5620
  %v5622 = vlaneseq
  %v5623 = vshrl.u32 %v5622, 7
  %v5624 = vadd.s32 %v5623, 112
  %5625 = vset.pattern.permute.xlu0 %v5624
  %5626 = vperm.xlu0 %5625, %v5537
  %v5627 = vpop.permute.xlu0 %5626
  %v5628 = vlaneseq
  %v5629 = vshrl.u32 %v5628, 7
  %v5630 = vadd.s32 %v5629, 120
  %5631 = vset.pattern.permute.xlu0 %v5630
  %5632 = vperm.xlu0 %5631, %v5537
  %v5633 = vpop.permute.xlu0 %5632
  %v5634 = vperm.slane %v4430, 6
  %v5635 = vlaneseq
  %v5636 = vshrl.u32 %v5635, 7
  %5638 = vset.pattern.permute.xlu0 %v5636
  %5639 = vperm.xlu0 %5638, %v5634
  %v5640 = vpop.permute.xlu0 %5639
  %v5641 = vlaneseq
  %v5642 = vshrl.u32 %v5641, 7
  %v5643 = vadd.s32 %v5642, 8
  %5644 = vset.pattern.permute.xlu0 %v5643
  %5645 = vperm.xlu0 %5644, %v5634
  %v5646 = vpop.permute.xlu0 %5645
  %v5647 = vlaneseq
  %v5648 = vshrl.u32 %v5647, 7
  %v5649 = vadd.s32 %v5648, 16
  %5650 = vset.pattern.permute.xlu0 %v5649
  %5651 = vperm.xlu0 %5650, %v5634
  %v5652 = vpop.permute.xlu0 %5651
  %v5653 = vlaneseq
  %v5654 = vshrl.u32 %v5653, 7
  %v5655 = vadd.s32 %v5654, 24
  %5656 = vset.pattern.permute.xlu0 %v5655
  %5657 = vperm.xlu0 %5656, %v5634
  %v5658 = vpop.permute.xlu0 %5657
  %v5659 = vlaneseq
  %v5660 = vshrl.u32 %v5659, 7
  %v5661 = vadd.s32 %v5660, 32
  %5662 = vset.pattern.permute.xlu0 %v5661
  %5663 = vperm.xlu0 %5662, %v5634
  %v5664 = vpop.permute.xlu0 %5663
  %v5665 = vlaneseq
  %v5666 = vshrl.u32 %v5665, 7
  %v5667 = vadd.s32 %v5666, 40
  %5668 = vset.pattern.permute.xlu0 %v5667
  %5669 = vperm.xlu0 %5668, %v5634
  %v5670 = vpop.permute.xlu0 %5669
  %v5671 = vlaneseq
  %v5672 = vshrl.u32 %v5671, 7
  %v5673 = vadd.s32 %v5672, 48
  %5674 = vset.pattern.permute.xlu0 %v5673
  %5675 = vperm.xlu0 %5674, %v5634
  %v5676 = vpop.permute.xlu0 %5675
  %v5677 = vlaneseq
  %v5678 = vshrl.u32 %v5677, 7
  %v5679 = vadd.s32 %v5678, 56
  %5680 = vset.pattern.permute.xlu0 %v5679
  %5681 = vperm.xlu0 %5680, %v5634
  %v5682 = vpop.permute.xlu0 %5681
  %v5683 = vlaneseq
  %v5684 = vshrl.u32 %v5683, 7
  %v5685 = vadd.s32 %v5684, 64
  %5686 = vset.pattern.permute.xlu0 %v5685
  %5687 = vperm.xlu0 %5686, %v5634
  %v5688 = vpop.permute.xlu0 %5687
  %v5689 = vlaneseq
  %v5690 = vshrl.u32 %v5689, 7
  %v5691 = vadd.s32 %v5690, 72
  %5692 = vset.pattern.permute.xlu0 %v5691
  %5693 = vperm.xlu0 %5692, %v5634
  %v5694 = vpop.permute.xlu0 %5693
  %v5695 = vlaneseq
  %v5696 = vshrl.u32 %v5695, 7
  %v5697 = vadd.s32 %v5696, 80
  %5698 = vset.pattern.permute.xlu0 %v5697
  %5699 = vperm.xlu0 %5698, %v5634
  %v5700 = vpop.permute.xlu0 %5699
  %v5701 = vlaneseq
  %v5702 = vshrl.u32 %v5701, 7
  %v5703 = vadd.s32 %v5702, 88
  %5704 = vset.pattern.permute.xlu0 %v5703
  %5705 = vperm.xlu0 %5704, %v5634
  %v5706 = vpop.permute.xlu0 %5705
  %v5707 = vlaneseq
  %v5708 = vshrl.u32 %v5707, 7
  %v5709 = vadd.s32 %v5708, 96
  %5710 = vset.pattern.permute.xlu0 %v5709
  %5711 = vperm.xlu0 %5710, %v5634
  %v5712 = vpop.permute.xlu0 %5711
  %v5713 = vlaneseq
  %v5714 = vshrl.u32 %v5713, 7
  %v5715 = vadd.s32 %v5714, 104
  %5716 = vset.pattern.permute.xlu0 %v5715
  %5717 = vperm.xlu0 %5716, %v5634
  %v5718 = vpop.permute.xlu0 %5717
  %v5719 = vlaneseq
  %v5720 = vshrl.u32 %v5719, 7
  %v5721 = vadd.s32 %v5720, 112
  %5722 = vset.pattern.permute.xlu0 %v5721
  %5723 = vperm.xlu0 %5722, %v5634
  %v5724 = vpop.permute.xlu0 %5723
  %v5725 = vlaneseq
  %v5726 = vshrl.u32 %v5725, 7
  %v5727 = vadd.s32 %v5726, 120
  %5728 = vset.pattern.permute.xlu0 %v5727
  %5729 = vperm.xlu0 %5728, %v5634
  %v5730 = vpop.permute.xlu0 %5729
  %v5731 = vperm.slane %v4431, 6
  %v5732 = vlaneseq
  %v5733 = vshrl.u32 %v5732, 7
  %5735 = vset.pattern.permute.xlu0 %v5733
  %5736 = vperm.xlu0 %5735, %v5731
  %v5737 = vpop.permute.xlu0 %5736
  %v5738 = vlaneseq
  %v5739 = vshrl.u32 %v5738, 7
  %v5740 = vadd.s32 %v5739, 8
  %5741 = vset.pattern.permute.xlu0 %v5740
  %5742 = vperm.xlu0 %5741, %v5731
  %v5743 = vpop.permute.xlu0 %5742
  %v5744 = vlaneseq
  %v5745 = vshrl.u32 %v5744, 7
  %v5746 = vadd.s32 %v5745, 16
  %5747 = vset.pattern.permute.xlu0 %v5746
  %5748 = vperm.xlu0 %5747, %v5731
  %v5749 = vpop.permute.xlu0 %5748
  %v5750 = vlaneseq
  %v5751 = vshrl.u32 %v5750, 7
  %v5752 = vadd.s32 %v5751, 24
  %5753 = vset.pattern.permute.xlu0 %v5752
  %5754 = vperm.xlu0 %5753, %v5731
  %v5755 = vpop.permute.xlu0 %5754
  %v5756 = vlaneseq
  %v5757 = vshrl.u32 %v5756, 7
  %v5758 = vadd.s32 %v5757, 32
  %5759 = vset.pattern.permute.xlu0 %v5758
  %5760 = vperm.xlu0 %5759, %v5731
  %v5761 = vpop.permute.xlu0 %5760
  %v5762 = vlaneseq
  %v5763 = vshrl.u32 %v5762, 7
  %v5764 = vadd.s32 %v5763, 40
  %5765 = vset.pattern.permute.xlu0 %v5764
  %5766 = vperm.xlu0 %5765, %v5731
  %v5767 = vpop.permute.xlu0 %5766
  %v5768 = vlaneseq
  %v5769 = vshrl.u32 %v5768, 7
  %v5770 = vadd.s32 %v5769, 48
  %5771 = vset.pattern.permute.xlu0 %v5770
  %5772 = vperm.xlu0 %5771, %v5731
  %v5773 = vpop.permute.xlu0 %5772
  %v5774 = vlaneseq
  %v5775 = vshrl.u32 %v5774, 7
  %v5776 = vadd.s32 %v5775, 56
  %5777 = vset.pattern.permute.xlu0 %v5776
  %5778 = vperm.xlu0 %5777, %v5731
  %v5779 = vpop.permute.xlu0 %5778
  %v5780 = vlaneseq
  %v5781 = vshrl.u32 %v5780, 7
  %v5782 = vadd.s32 %v5781, 64
  %5783 = vset.pattern.permute.xlu0 %v5782
  %5784 = vperm.xlu0 %5783, %v5731
  %v5785 = vpop.permute.xlu0 %5784
  %v5786 = vlaneseq
  %v5787 = vshrl.u32 %v5786, 7
  %v5788 = vadd.s32 %v5787, 72
  %5789 = vset.pattern.permute.xlu0 %v5788
  %5790 = vperm.xlu0 %5789, %v5731
  %v5791 = vpop.permute.xlu0 %5790
  %v5792 = vlaneseq
  %v5793 = vshrl.u32 %v5792, 7
  %v5794 = vadd.s32 %v5793, 80
  %5795 = vset.pattern.permute.xlu0 %v5794
  %5796 = vperm.xlu0 %5795, %v5731
  %v5797 = vpop.permute.xlu0 %5796
  %v5798 = vlaneseq
  %v5799 = vshrl.u32 %v5798, 7
  %v5800 = vadd.s32 %v5799, 88
  %5801 = vset.pattern.permute.xlu0 %v5800
  %5802 = vperm.xlu0 %5801, %v5731
  %v5803 = vpop.permute.xlu0 %5802
  %v5804 = vlaneseq
  %v5805 = vshrl.u32 %v5804, 7
  %v5806 = vadd.s32 %v5805, 96
  %5807 = vset.pattern.permute.xlu0 %v5806
  %5808 = vperm.xlu0 %5807, %v5731
  %v5809 = vpop.permute.xlu0 %5808
  %v5810 = vlaneseq
  %v5811 = vshrl.u32 %v5810, 7
  %v5812 = vadd.s32 %v5811, 104
  %5813 = vset.pattern.permute.xlu0 %v5812
  %5814 = vperm.xlu0 %5813, %v5731
  %v5815 = vpop.permute.xlu0 %5814
  %v5816 = vlaneseq
  %v5817 = vshrl.u32 %v5816, 7
  %v5818 = vadd.s32 %v5817, 112
  %5819 = vset.pattern.permute.xlu0 %v5818
  %5820 = vperm.xlu0 %5819, %v5731
  %v5821 = vpop.permute.xlu0 %5820
  %v5822 = vlaneseq
  %v5823 = vshrl.u32 %v5822, 7
  %v5824 = vadd.s32 %v5823, 120
  %5825 = vset.pattern.permute.xlu0 %v5824
  %5826 = vperm.xlu0 %5825, %v5731
  %v5827 = vpop.permute.xlu0 %5826
  %v5828 = vperm.slane %v4430, 7
  %v5829 = vlaneseq
  %v5830 = vshrl.u32 %v5829, 7
  %5832 = vset.pattern.permute.xlu0 %v5830
  %5833 = vperm.xlu0 %5832, %v5828
  %v5834 = vpop.permute.xlu0 %5833
  %v5835 = vlaneseq
  %v5836 = vshrl.u32 %v5835, 7
  %v5837 = vadd.s32 %v5836, 8
  %5838 = vset.pattern.permute.xlu0 %v5837
  %5839 = vperm.xlu0 %5838, %v5828
  %v5840 = vpop.permute.xlu0 %5839
  %v5841 = vlaneseq
  %v5842 = vshrl.u32 %v5841, 7
  %v5843 = vadd.s32 %v5842, 16
  %5844 = vset.pattern.permute.xlu0 %v5843
  %5845 = vperm.xlu0 %5844, %v5828
  %v5846 = vpop.permute.xlu0 %5845
  %v5847 = vlaneseq
  %v5848 = vshrl.u32 %v5847, 7
  %v5849 = vadd.s32 %v5848, 24
  %5850 = vset.pattern.permute.xlu0 %v5849
  %5851 = vperm.xlu0 %5850, %v5828
  %v5852 = vpop.permute.xlu0 %5851
  %v5853 = vlaneseq
  %v5854 = vshrl.u32 %v5853, 7
  %v5855 = vadd.s32 %v5854, 32
  %5856 = vset.pattern.permute.xlu0 %v5855
  %5857 = vperm.xlu0 %5856, %v5828
  %v5858 = vpop.permute.xlu0 %5857
  %v5859 = vlaneseq
  %v5860 = vshrl.u32 %v5859, 7
  %v5861 = vadd.s32 %v5860, 40
  %5862 = vset.pattern.permute.xlu0 %v5861
  %5863 = vperm.xlu0 %5862, %v5828
  %v5864 = vpop.permute.xlu0 %5863
  %v5865 = vlaneseq
  %v5866 = vshrl.u32 %v5865, 7
  %v5867 = vadd.s32 %v5866, 48
  %5868 = vset.pattern.permute.xlu0 %v5867
  %5869 = vperm.xlu0 %5868, %v5828
  %v5870 = vpop.permute.xlu0 %5869
  %v5871 = vlaneseq
  %v5872 = vshrl.u32 %v5871, 7
  %v5873 = vadd.s32 %v5872, 56
  %5874 = vset.pattern.permute.xlu0 %v5873
  %5875 = vperm.xlu0 %5874, %v5828
  %v5876 = vpop.permute.xlu0 %5875
  %v5877 = vlaneseq
  %v5878 = vshrl.u32 %v5877, 7
  %v5879 = vadd.s32 %v5878, 64
  %5880 = vset.pattern.permute.xlu0 %v5879
  %5881 = vperm.xlu0 %5880, %v5828
  %v5882 = vpop.permute.xlu0 %5881
  %v5883 = vlaneseq
  %v5884 = vshrl.u32 %v5883, 7
  %v5885 = vadd.s32 %v5884, 72
  %5886 = vset.pattern.permute.xlu0 %v5885
  %5887 = vperm.xlu0 %5886, %v5828
  %v5888 = vpop.permute.xlu0 %5887
  %v5889 = vlaneseq
  %v5890 = vshrl.u32 %v5889, 7
  %v5891 = vadd.s32 %v5890, 80
  %5892 = vset.pattern.permute.xlu0 %v5891
  %5893 = vperm.xlu0 %5892, %v5828
  %v5894 = vpop.permute.xlu0 %5893
  %v5895 = vlaneseq
  %v5896 = vshrl.u32 %v5895, 7
  %v5897 = vadd.s32 %v5896, 88
  %5898 = vset.pattern.permute.xlu0 %v5897
  %5899 = vperm.xlu0 %5898, %v5828
  %v5900 = vpop.permute.xlu0 %5899
  %v5901 = vlaneseq
  %v5902 = vshrl.u32 %v5901, 7
  %v5903 = vadd.s32 %v5902, 96
  %5904 = vset.pattern.permute.xlu0 %v5903
  %5905 = vperm.xlu0 %5904, %v5828
  %v5906 = vpop.permute.xlu0 %5905
  %v5907 = vlaneseq
  %v5908 = vshrl.u32 %v5907, 7
  %v5909 = vadd.s32 %v5908, 104
  %5910 = vset.pattern.permute.xlu0 %v5909
  %5911 = vperm.xlu0 %5910, %v5828
  %v5912 = vpop.permute.xlu0 %5911
  %v5913 = vlaneseq
  %v5914 = vshrl.u32 %v5913, 7
  %v5915 = vadd.s32 %v5914, 112
  %5916 = vset.pattern.permute.xlu0 %v5915
  %5917 = vperm.xlu0 %5916, %v5828
  %v5918 = vpop.permute.xlu0 %5917
  %v5919 = vlaneseq
  %v5920 = vshrl.u32 %v5919, 7
  %v5921 = vadd.s32 %v5920, 120
  %5922 = vset.pattern.permute.xlu0 %v5921
  %5923 = vperm.xlu0 %5922, %v5828
  %v5924 = vpop.permute.xlu0 %5923
  %v5925 = vperm.slane %v4431, 7
  %v5926 = vlaneseq
  %v5927 = vshrl.u32 %v5926, 7
  %5929 = vset.pattern.permute.xlu0 %v5927
  %5930 = vperm.xlu0 %5929, %v5925
  %v5931 = vpop.permute.xlu0 %5930
  %v5932 = vlaneseq
  %v5933 = vshrl.u32 %v5932, 7
  %v5934 = vadd.s32 %v5933, 8
  %5935 = vset.pattern.permute.xlu0 %v5934
  %5936 = vperm.xlu0 %5935, %v5925
  %v5937 = vpop.permute.xlu0 %5936
  %v5938 = vlaneseq
  %v5939 = vshrl.u32 %v5938, 7
  %v5940 = vadd.s32 %v5939, 16
  %5941 = vset.pattern.permute.xlu0 %v5940
  %5942 = vperm.xlu0 %5941, %v5925
  %v5943 = vpop.permute.xlu0 %5942
  %v5944 = vlaneseq
  %v5945 = vshrl.u32 %v5944, 7
  %v5946 = vadd.s32 %v5945, 24
  %5947 = vset.pattern.permute.xlu0 %v5946
  %5948 = vperm.xlu0 %5947, %v5925
  %v5949 = vpop.permute.xlu0 %5948
  %v5950 = vlaneseq
  %v5951 = vshrl.u32 %v5950, 7
  %v5952 = vadd.s32 %v5951, 32
  %5953 = vset.pattern.permute.xlu0 %v5952
  %5954 = vperm.xlu0 %5953, %v5925
  %v5955 = vpop.permute.xlu0 %5954
  %v5956 = vlaneseq
  %v5957 = vshrl.u32 %v5956, 7
  %v5958 = vadd.s32 %v5957, 40
  %5959 = vset.pattern.permute.xlu0 %v5958
  %5960 = vperm.xlu0 %5959, %v5925
  %v5961 = vpop.permute.xlu0 %5960
  %v5962 = vlaneseq
  %v5963 = vshrl.u32 %v5962, 7
  %v5964 = vadd.s32 %v5963, 48
  %5965 = vset.pattern.permute.xlu0 %v5964
  %5966 = vperm.xlu0 %5965, %v5925
  %v5967 = vpop.permute.xlu0 %5966
  %v5968 = vlaneseq
  %v5969 = vshrl.u32 %v5968, 7
  %v5970 = vadd.s32 %v5969, 56
  %5971 = vset.pattern.permute.xlu0 %v5970
  %5972 = vperm.xlu0 %5971, %v5925
  %v5973 = vpop.permute.xlu0 %5972
  %v5974 = vlaneseq
  %v5975 = vshrl.u32 %v5974, 7
  %v5976 = vadd.s32 %v5975, 64
  %5977 = vset.pattern.permute.xlu0 %v5976
  %5978 = vperm.xlu0 %5977, %v5925
  %v5979 = vpop.permute.xlu0 %5978
  %v5980 = vlaneseq
  %v5981 = vshrl.u32 %v5980, 7
  %v5982 = vadd.s32 %v5981, 72
  %5983 = vset.pattern.permute.xlu0 %v5982
  %5984 = vperm.xlu0 %5983, %v5925
  %v5985 = vpop.permute.xlu0 %5984
  %v5986 = vlaneseq
  %v5987 = vshrl.u32 %v5986, 7
  %v5988 = vadd.s32 %v5987, 80
  %5989 = vset.pattern.permute.xlu0 %v5988
  %5990 = vperm.xlu0 %5989, %v5925
  %v5991 = vpop.permute.xlu0 %5990
  %v5992 = vlaneseq
  %v5993 = vshrl.u32 %v5992, 7
  %v5994 = vadd.s32 %v5993, 88
  %5995 = vset.pattern.permute.xlu0 %v5994
  %5996 = vperm.xlu0 %5995, %v5925
  %v5997 = vpop.permute.xlu0 %5996
  %v5998 = vlaneseq
  %v5999 = vshrl.u32 %v5998, 7
  %v6000 = vadd.s32 %v5999, 96
  %6001 = vset.pattern.permute.xlu0 %v6000
  %6002 = vperm.xlu0 %6001, %v5925
  %v6003 = vpop.permute.xlu0 %6002
  %v6004 = vlaneseq
  %v6005 = vshrl.u32 %v6004, 7
  %v6006 = vadd.s32 %v6005, 104
  %6007 = vset.pattern.permute.xlu0 %v6006
  %6008 = vperm.xlu0 %6007, %v5925
  %v6009 = vpop.permute.xlu0 %6008
  %v6010 = vlaneseq
  %v6011 = vshrl.u32 %v6010, 7
  %v6012 = vadd.s32 %v6011, 112
  %6013 = vset.pattern.permute.xlu0 %v6012
  %6014 = vperm.xlu0 %6013, %v5925
  %v6015 = vpop.permute.xlu0 %6014
  %v6016 = vlaneseq
  %v6017 = vshrl.u32 %v6016, 7
  %v6018 = vadd.s32 %v6017, 120
  %6019 = vset.pattern.permute.xlu0 %v6018
  %6020 = vperm.xlu0 %6019, %v5925
  %v6021 = vpop.permute.xlu0 %6020
  %v6022 = vperm.slane %v4455, 0
  %v6023 = vperm.slane %v4455, 1
  %v6024 = vperm.slane %v4457, 0
  %v6025 = vperm.slane %v4457, 1
  %v6026 = vperm.slane %v4459, 0
  %v6027 = vperm.slane %v4459, 1
  %v6028 = vperm.slane %v4461, 0
  %v6029 = vperm.slane %v4461, 1
  %v6030 = vperm.slane %v4463, 0
  %v6031 = vperm.slane %v4463, 1
  %v6032 = vperm.slane %v4465, 0
  %v6033 = vperm.slane %v4465, 1
  %v6034 = vperm.slane %v4467, 0
  %v6035 = vperm.slane %v4467, 1
  %v6036 = vperm.slane %v4469, 0
  %v6037 = vperm.slane %v4469, 1
  %vm6054 = vcmp.eq.f32.partialorder %v6022, %v4476
  %vm6055 = vcmp.eq.f32.partialorder %v6023, %v4476
  %vm6056 = vcmp.eq.f32.partialorder %v6022, %v4482
  %vm6057 = vcmp.eq.f32.partialorder %v6023, %v4482
  %vm6058 = vcmp.eq.f32.partialorder %v6022, %v4488
  %vm6059 = vcmp.eq.f32.partialorder %v6023, %v4488
  %vm6060 = vcmp.eq.f32.partialorder %v6022, %v4494
  %vm6061 = vcmp.eq.f32.partialorder %v6023, %v4494
  %vm6062 = vcmp.eq.f32.partialorder %v6022, %v4500
  %vm6063 = vcmp.eq.f32.partialorder %v6023, %v4500
  %vm6064 = vcmp.eq.f32.partialorder %v6022, %v4506
  %vm6065 = vcmp.eq.f32.partialorder %v6023, %v4506
  %vm6066 = vcmp.eq.f32.partialorder %v6022, %v4512
  %vm6067 = vcmp.eq.f32.partialorder %v6023, %v4512
  %vm6068 = vcmp.eq.f32.partialorder %v6022, %v4518
  %vm6069 = vcmp.eq.f32.partialorder %v6023, %v4518
  %vm6070 = vcmp.eq.f32.partialorder %v6022, %v4524
  %vm6071 = vcmp.eq.f32.partialorder %v6023, %v4524
  %vm6072 = vcmp.eq.f32.partialorder %v6022, %v4530
  %vm6073 = vcmp.eq.f32.partialorder %v6023, %v4530
  %vm6074 = vcmp.eq.f32.partialorder %v6022, %v4536
  %vm6075 = vcmp.eq.f32.partialorder %v6023, %v4536
  %vm6076 = vcmp.eq.f32.partialorder %v6022, %v4542
  %vm6077 = vcmp.eq.f32.partialorder %v6023, %v4542
  %vm6078 = vcmp.eq.f32.partialorder %v6022, %v4548
  %vm6079 = vcmp.eq.f32.partialorder %v6023, %v4548
  %vm6080 = vcmp.eq.f32.partialorder %v6022, %v4554
  %vm6081 = vcmp.eq.f32.partialorder %v6023, %v4554
  %vm6082 = vcmp.eq.f32.partialorder %v6022, %v4560
  %vm6083 = vcmp.eq.f32.partialorder %v6023, %v4560
  %vm6084 = vcmp.eq.f32.partialorder %v6022, %v4566
  %vm6085 = vcmp.eq.f32.partialorder %v6023, %v4566
  %vm6086 = vcmp.eq.f32.partialorder %v6022, %v4573
  %vm6087 = vcmp.eq.f32.partialorder %v6023, %v4573
  %vm6088 = vcmp.eq.f32.partialorder %v6022, %v4579
  %vm6089 = vcmp.eq.f32.partialorder %v6023, %v4579
  %vm6090 = vcmp.eq.f32.partialorder %v6022, %v4585
  %vm6091 = vcmp.eq.f32.partialorder %v6023, %v4585
  %vm6092 = vcmp.eq.f32.partialorder %v6022, %v4591
  %vm6093 = vcmp.eq.f32.partialorder %v6023, %v4591
  %vm6094 = vcmp.eq.f32.partialorder %v6022, %v4597
  %vm6095 = vcmp.eq.f32.partialorder %v6023, %v4597
  %vm6096 = vcmp.eq.f32.partialorder %v6022, %v4603
  %vm6097 = vcmp.eq.f32.partialorder %v6023, %v4603
  %vm6098 = vcmp.eq.f32.partialorder %v6022, %v4609
  %vm6099 = vcmp.eq.f32.partialorder %v6023, %v4609
  %vm6100 = vcmp.eq.f32.partialorder %v6022, %v4615
  %vm6101 = vcmp.eq.f32.partialorder %v6023, %v4615
  %vm6102 = vcmp.eq.f32.partialorder %v6022, %v4621
  %vm6103 = vcmp.eq.f32.partialorder %v6023, %v4621
  %vm6104 = vcmp.eq.f32.partialorder %v6022, %v4627
  %vm6105 = vcmp.eq.f32.partialorder %v6023, %v4627
  %vm6106 = vcmp.eq.f32.partialorder %v6022, %v4633
  %vm6107 = vcmp.eq.f32.partialorder %v6023, %v4633
  %vm6108 = vcmp.eq.f32.partialorder %v6022, %v4639
  %vm6109 = vcmp.eq.f32.partialorder %v6023, %v4639
  %vm6110 = vcmp.eq.f32.partialorder %v6022, %v4645
  %vm6111 = vcmp.eq.f32.partialorder %v6023, %v4645
  %vm6112 = vcmp.eq.f32.partialorder %v6022, %v4651
  %vm6113 = vcmp.eq.f32.partialorder %v6023, %v4651
  %vm6114 = vcmp.eq.f32.partialorder %v6022, %v4657
  %vm6115 = vcmp.eq.f32.partialorder %v6023, %v4657
  %vm6116 = vcmp.eq.f32.partialorder %v6022, %v4663
  %vm6117 = vcmp.eq.f32.partialorder %v6023, %v4663
  %vm6118 = vcmp.eq.f32.partialorder %v6024, %v4670
  %vm6119 = vcmp.eq.f32.partialorder %v6025, %v4670
  %vm6120 = vcmp.eq.f32.partialorder %v6024, %v4676
  %vm6121 = vcmp.eq.f32.partialorder %v6025, %v4676
  %vm6122 = vcmp.eq.f32.partialorder %v6024, %v4682
  %vm6123 = vcmp.eq.f32.partialorder %v6025, %v4682
  %vm6124 = vcmp.eq.f32.partialorder %v6024, %v4688
  %vm6125 = vcmp.eq.f32.partialorder %v6025, %v4688
  %vm6126 = vcmp.eq.f32.partialorder %v6024, %v4694
  %vm6127 = vcmp.eq.f32.partialorder %v6025, %v4694
  %vm6128 = vcmp.eq.f32.partialorder %v6024, %v4700
  %vm6129 = vcmp.eq.f32.partialorder %v6025, %v4700
  %vm6130 = vcmp.eq.f32.partialorder %v6024, %v4706
  %vm6131 = vcmp.eq.f32.partialorder %v6025, %v4706
  %vm6132 = vcmp.eq.f32.partialorder %v6024, %v4712
  %vm6133 = vcmp.eq.f32.partialorder %v6025, %v4712
  %vm6134 = vcmp.eq.f32.partialorder %v6024, %v4718
  %vm6135 = vcmp.eq.f32.partialorder %v6025, %v4718
  %vm6136 = vcmp.eq.f32.partialorder %v6024, %v4724
  %vm6137 = vcmp.eq.f32.partialorder %v6025, %v4724
  %vm6138 = vcmp.eq.f32.partialorder %v6024, %v4730
  %vm6139 = vcmp.eq.f32.partialorder %v6025, %v4730
  %vm6140 = vcmp.eq.f32.partialorder %v6024, %v4736
  %vm6141 = vcmp.eq.f32.partialorder %v6025, %v4736
  %vm6142 = vcmp.eq.f32.partialorder %v6024, %v4742
  %vm6143 = vcmp.eq.f32.partialorder %v6025, %v4742
  %vm6144 = vcmp.eq.f32.partialorder %v6024, %v4748
  %vm6145 = vcmp.eq.f32.partialorder %v6025, %v4748
  %vm6146 = vcmp.eq.f32.partialorder %v6024, %v4754
  %vm6147 = vcmp.eq.f32.partialorder %v6025, %v4754
  %vm6148 = vcmp.eq.f32.partialorder %v6024, %v4760
  %vm6149 = vcmp.eq.f32.partialorder %v6025, %v4760
  %vm6150 = vcmp.eq.f32.partialorder %v6024, %v4767
  %vm6151 = vcmp.eq.f32.partialorder %v6025, %v4767
  %vm6152 = vcmp.eq.f32.partialorder %v6024, %v4773
  %vm6153 = vcmp.eq.f32.partialorder %v6025, %v4773
  %vm6154 = vcmp.eq.f32.partialorder %v6024, %v4779
  %vm6155 = vcmp.eq.f32.partialorder %v6025, %v4779
  %vm6156 = vcmp.eq.f32.partialorder %v6024, %v4785
  %vm6157 = vcmp.eq.f32.partialorder %v6025, %v4785
  %vm6158 = vcmp.eq.f32.partialorder %v6024, %v4791
  %vm6159 = vcmp.eq.f32.partialorder %v6025, %v4791
  %vm6160 = vcmp.eq.f32.partialorder %v6024, %v4797
  %vm6161 = vcmp.eq.f32.partialorder %v6025, %v4797
  %vm6162 = vcmp.eq.f32.partialorder %v6024, %v4803
  %vm6163 = vcmp.eq.f32.partialorder %v6025, %v4803
  %vm6164 = vcmp.eq.f32.partialorder %v6024, %v4809
  %vm6165 = vcmp.eq.f32.partialorder %v6025, %v4809
  %vm6166 = vcmp.eq.f32.partialorder %v6024, %v4815
  %vm6167 = vcmp.eq.f32.partialorder %v6025, %v4815
  %vm6168 = vcmp.eq.f32.partialorder %v6024, %v4821
  %vm6169 = vcmp.eq.f32.partialorder %v6025, %v4821
  %vm6170 = vcmp.eq.f32.partialorder %v6024, %v4827
  %vm6171 = vcmp.eq.f32.partialorder %v6025, %v4827
  %vm6172 = vcmp.eq.f32.partialorder %v6024, %v4833
  %vm6173 = vcmp.eq.f32.partialorder %v6025, %v4833
  %vm6174 = vcmp.eq.f32.partialorder %v6024, %v4839
  %vm6175 = vcmp.eq.f32.partialorder %v6025, %v4839
  %vm6176 = vcmp.eq.f32.partialorder %v6024, %v4845
  %vm6177 = vcmp.eq.f32.partialorder %v6025, %v4845
  %vm6178 = vcmp.eq.f32.partialorder %v6024, %v4851
  %vm6179 = vcmp.eq.f32.partialorder %v6025, %v4851
  %vm6180 = vcmp.eq.f32.partialorder %v6024, %v4857
  %vm6181 = vcmp.eq.f32.partialorder %v6025, %v4857
  %vm6182 = vcmp.eq.f32.partialorder %v6026, %v4864
  %vm6183 = vcmp.eq.f32.partialorder %v6027, %v4864
  %vm6184 = vcmp.eq.f32.partialorder %v6026, %v4870
  %vm6185 = vcmp.eq.f32.partialorder %v6027, %v4870
  %vm6186 = vcmp.eq.f32.partialorder %v6026, %v4876
  %vm6187 = vcmp.eq.f32.partialorder %v6027, %v4876
  %vm6188 = vcmp.eq.f32.partialorder %v6026, %v4882
  %vm6189 = vcmp.eq.f32.partialorder %v6027, %v4882
  %vm6190 = vcmp.eq.f32.partialorder %v6026, %v4888
  %vm6191 = vcmp.eq.f32.partialorder %v6027, %v4888
  %vm6192 = vcmp.eq.f32.partialorder %v6026, %v4894
  %vm6193 = vcmp.eq.f32.partialorder %v6027, %v4894
  %vm6194 = vcmp.eq.f32.partialorder %v6026, %v4900
  %vm6195 = vcmp.eq.f32.partialorder %v6027, %v4900
  %vm6196 = vcmp.eq.f32.partialorder %v6026, %v4906
  %vm6197 = vcmp.eq.f32.partialorder %v6027, %v4906
  %vm6198 = vcmp.eq.f32.partialorder %v6026, %v4912
  %vm6199 = vcmp.eq.f32.partialorder %v6027, %v4912
  %vm6200 = vcmp.eq.f32.partialorder %v6026, %v4918
  %vm6201 = vcmp.eq.f32.partialorder %v6027, %v4918
  %vm6202 = vcmp.eq.f32.partialorder %v6026, %v4924
  %vm6203 = vcmp.eq.f32.partialorder %v6027, %v4924
  %vm6204 = vcmp.eq.f32.partialorder %v6026, %v4930
  %vm6205 = vcmp.eq.f32.partialorder %v6027, %v4930
  %vm6206 = vcmp.eq.f32.partialorder %v6026, %v4936
  %vm6207 = vcmp.eq.f32.partialorder %v6027, %v4936
  %vm6208 = vcmp.eq.f32.partialorder %v6026, %v4942
  %vm6209 = vcmp.eq.f32.partialorder %v6027, %v4942
  %vm6210 = vcmp.eq.f32.partialorder %v6026, %v4948
  %vm6211 = vcmp.eq.f32.partialorder %v6027, %v4948
  %vm6212 = vcmp.eq.f32.partialorder %v6026, %v4954
  %vm6213 = vcmp.eq.f32.partialorder %v6027, %v4954
  %vm6214 = vcmp.eq.f32.partialorder %v6026, %v4961
  %vm6215 = vcmp.eq.f32.partialorder %v6027, %v4961
  %vm6216 = vcmp.eq.f32.partialorder %v6026, %v4967
  %vm6217 = vcmp.eq.f32.partialorder %v6027, %v4967
  %vm6218 = vcmp.eq.f32.partialorder %v6026, %v4973
  %vm6219 = vcmp.eq.f32.partialorder %v6027, %v4973
  %vm6220 = vcmp.eq.f32.partialorder %v6026, %v4979
  %vm6221 = vcmp.eq.f32.partialorder %v6027, %v4979
  %vm6222 = vcmp.eq.f32.partialorder %v6026, %v4985
  %vm6223 = vcmp.eq.f32.partialorder %v6027, %v4985
  %vm6224 = vcmp.eq.f32.partialorder %v6026, %v4991
  %vm6225 = vcmp.eq.f32.partialorder %v6027, %v4991
  %vm6226 = vcmp.eq.f32.partialorder %v6026, %v4997
  %vm6227 = vcmp.eq.f32.partialorder %v6027, %v4997
  %vm6228 = vcmp.eq.f32.partialorder %v6026, %v5003
  %vm6229 = vcmp.eq.f32.partialorder %v6027, %v5003
  %vm6230 = vcmp.eq.f32.partialorder %v6026, %v5009
  %vm6231 = vcmp.eq.f32.partialorder %v6027, %v5009
  %vm6232 = vcmp.eq.f32.partialorder %v6026, %v5015
  %vm6233 = vcmp.eq.f32.partialorder %v6027, %v5015
  %vm6234 = vcmp.eq.f32.partialorder %v6026, %v5021
  %vm6235 = vcmp.eq.f32.partialorder %v6027, %v5021
  %vm6236 = vcmp.eq.f32.partialorder %v6026, %v5027
  %vm6237 = vcmp.eq.f32.partialorder %v6027, %v5027
  %vm6238 = vcmp.eq.f32.partialorder %v6026, %v5033
  %vm6239 = vcmp.eq.f32.partialorder %v6027, %v5033
  %vm6240 = vcmp.eq.f32.partialorder %v6026, %v5039
  %vm6241 = vcmp.eq.f32.partialorder %v6027, %v5039
  %vm6242 = vcmp.eq.f32.partialorder %v6026, %v5045
  %vm6243 = vcmp.eq.f32.partialorder %v6027, %v5045
  %vm6244 = vcmp.eq.f32.partialorder %v6026, %v5051
  %vm6245 = vcmp.eq.f32.partialorder %v6027, %v5051
  %vm6246 = vcmp.eq.f32.partialorder %v6028, %v5058
  %vm6247 = vcmp.eq.f32.partialorder %v6029, %v5058
  %vm6248 = vcmp.eq.f32.partialorder %v6028, %v5064
  %vm6249 = vcmp.eq.f32.partialorder %v6029, %v5064
  %vm6250 = vcmp.eq.f32.partialorder %v6028, %v5070
  %vm6251 = vcmp.eq.f32.partialorder %v6029, %v5070
  %vm6252 = vcmp.eq.f32.partialorder %v6028, %v5076
  %vm6253 = vcmp.eq.f32.partialorder %v6029, %v5076
  %vm6254 = vcmp.eq.f32.partialorder %v6028, %v5082
  %vm6255 = vcmp.eq.f32.partialorder %v6029, %v5082
  %vm6256 = vcmp.eq.f32.partialorder %v6028, %v5088
  %vm6257 = vcmp.eq.f32.partialorder %v6029, %v5088
  %vm6258 = vcmp.eq.f32.partialorder %v6028, %v5094
  %vm6259 = vcmp.eq.f32.partialorder %v6029, %v5094
  %vm6260 = vcmp.eq.f32.partialorder %v6028, %v5100
  %vm6261 = vcmp.eq.f32.partialorder %v6029, %v5100
  %vm6262 = vcmp.eq.f32.partialorder %v6028, %v5106
  %vm6263 = vcmp.eq.f32.partialorder %v6029, %v5106
  %vm6264 = vcmp.eq.f32.partialorder %v6028, %v5112
  %vm6265 = vcmp.eq.f32.partialorder %v6029, %v5112
  %vm6266 = vcmp.eq.f32.partialorder %v6028, %v5118
  %vm6267 = vcmp.eq.f32.partialorder %v6029, %v5118
  %vm6268 = vcmp.eq.f32.partialorder %v6028, %v5124
  %vm6269 = vcmp.eq.f32.partialorder %v6029, %v5124
  %vm6270 = vcmp.eq.f32.partialorder %v6028, %v5130
  %vm6271 = vcmp.eq.f32.partialorder %v6029, %v5130
  %vm6272 = vcmp.eq.f32.partialorder %v6028, %v5136
  %vm6273 = vcmp.eq.f32.partialorder %v6029, %v5136
  %vm6274 = vcmp.eq.f32.partialorder %v6028, %v5142
  %vm6275 = vcmp.eq.f32.partialorder %v6029, %v5142
  %vm6276 = vcmp.eq.f32.partialorder %v6028, %v5148
  %vm6277 = vcmp.eq.f32.partialorder %v6029, %v5148
  %vm6278 = vcmp.eq.f32.partialorder %v6028, %v5155
  %vm6279 = vcmp.eq.f32.partialorder %v6029, %v5155
  %vm6280 = vcmp.eq.f32.partialorder %v6028, %v5161
  %vm6281 = vcmp.eq.f32.partialorder %v6029, %v5161
  %vm6282 = vcmp.eq.f32.partialorder %v6028, %v5167
  %vm6283 = vcmp.eq.f32.partialorder %v6029, %v5167
  %vm6284 = vcmp.eq.f32.partialorder %v6028, %v5173
  %vm6285 = vcmp.eq.f32.partialorder %v6029, %v5173
  %vm6286 = vcmp.eq.f32.partialorder %v6028, %v5179
  %vm6287 = vcmp.eq.f32.partialorder %v6029, %v5179
  %vm6288 = vcmp.eq.f32.partialorder %v6028, %v5185
  %vm6289 = vcmp.eq.f32.partialorder %v6029, %v5185
  %vm6290 = vcmp.eq.f32.partialorder %v6028, %v5191
  %vm6291 = vcmp.eq.f32.partialorder %v6029, %v5191
  %vm6292 = vcmp.eq.f32.partialorder %v6028, %v5197
  %vm6293 = vcmp.eq.f32.partialorder %v6029, %v5197
  %vm6294 = vcmp.eq.f32.partialorder %v6028, %v5203
  %vm6295 = vcmp.eq.f32.partialorder %v6029, %v5203
  %vm6296 = vcmp.eq.f32.partialorder %v6028, %v5209
  %vm6297 = vcmp.eq.f32.partialorder %v6029, %v5209
  %vm6298 = vcmp.eq.f32.partialorder %v6028, %v5215
  %vm6299 = vcmp.eq.f32.partialorder %v6029, %v5215
  %vm6300 = vcmp.eq.f32.partialorder %v6028, %v5221
  %vm6301 = vcmp.eq.f32.partialorder %v6029, %v5221
  %vm6302 = vcmp.eq.f32.partialorder %v6028, %v5227
  %vm6303 = vcmp.eq.f32.partialorder %v6029, %v5227
  %vm6304 = vcmp.eq.f32.partialorder %v6028, %v5233
  %vm6305 = vcmp.eq.f32.partialorder %v6029, %v5233
  %vm6306 = vcmp.eq.f32.partialorder %v6028, %v5239
  %vm6307 = vcmp.eq.f32.partialorder %v6029, %v5239
  %vm6308 = vcmp.eq.f32.partialorder %v6028, %v5245
  %vm6309 = vcmp.eq.f32.partialorder %v6029, %v5245
  %vm6310 = vcmp.eq.f32.partialorder %v6030, %v5252
  %vm6311 = vcmp.eq.f32.partialorder %v6031, %v5252
  %vm6312 = vcmp.eq.f32.partialorder %v6030, %v5258
  %vm6313 = vcmp.eq.f32.partialorder %v6031, %v5258
  %vm6314 = vcmp.eq.f32.partialorder %v6030, %v5264
  %vm6315 = vcmp.eq.f32.partialorder %v6031, %v5264
  %vm6316 = vcmp.eq.f32.partialorder %v6030, %v5270
  %vm6317 = vcmp.eq.f32.partialorder %v6031, %v5270
  %vm6318 = vcmp.eq.f32.partialorder %v6030, %v5276
  %vm6319 = vcmp.eq.f32.partialorder %v6031, %v5276
  %vm6320 = vcmp.eq.f32.partialorder %v6030, %v5282
  %vm6321 = vcmp.eq.f32.partialorder %v6031, %v5282
  %vm6322 = vcmp.eq.f32.partialorder %v6030, %v5288
  %vm6323 = vcmp.eq.f32.partialorder %v6031, %v5288
  %vm6324 = vcmp.eq.f32.partialorder %v6030, %v5294
  %vm6325 = vcmp.eq.f32.partialorder %v6031, %v5294
  %vm6326 = vcmp.eq.f32.partialorder %v6030, %v5300
  %vm6327 = vcmp.eq.f32.partialorder %v6031, %v5300
  %vm6328 = vcmp.eq.f32.partialorder %v6030, %v5306
  %vm6329 = vcmp.eq.f32.partialorder %v6031, %v5306
  %vm6330 = vcmp.eq.f32.partialorder %v6030, %v5312
  %vm6331 = vcmp.eq.f32.partialorder %v6031, %v5312
  %vm6332 = vcmp.eq.f32.partialorder %v6030, %v5318
  %vm6333 = vcmp.eq.f32.partialorder %v6031, %v5318
  %vm6334 = vcmp.eq.f32.partialorder %v6030, %v5324
  %vm6335 = vcmp.eq.f32.partialorder %v6031, %v5324
  %vm6336 = vcmp.eq.f32.partialorder %v6030, %v5330
  %vm6337 = vcmp.eq.f32.partialorder %v6031, %v5330
  %vm6338 = vcmp.eq.f32.partialorder %v6030, %v5336
  %vm6339 = vcmp.eq.f32.partialorder %v6031, %v5336
  %vm6340 = vcmp.eq.f32.partialorder %v6030, %v5342
  %vm6341 = vcmp.eq.f32.partialorder %v6031, %v5342
  %vm6342 = vcmp.eq.f32.partialorder %v6030, %v5349
  %vm6343 = vcmp.eq.f32.partialorder %v6031, %v5349
  %vm6344 = vcmp.eq.f32.partialorder %v6030, %v5355
  %vm6345 = vcmp.eq.f32.partialorder %v6031, %v5355
  %vm6346 = vcmp.eq.f32.partialorder %v6030, %v5361
  %vm6347 = vcmp.eq.f32.partialorder %v6031, %v5361
  %vm6348 = vcmp.eq.f32.partialorder %v6030, %v5367
  %vm6349 = vcmp.eq.f32.partialorder %v6031, %v5367
  %vm6350 = vcmp.eq.f32.partialorder %v6030, %v5373
  %vm6351 = vcmp.eq.f32.partialorder %v6031, %v5373
  %vm6352 = vcmp.eq.f32.partialorder %v6030, %v5379
  %vm6353 = vcmp.eq.f32.partialorder %v6031, %v5379
  %vm6354 = vcmp.eq.f32.partialorder %v6030, %v5385
  %vm6355 = vcmp.eq.f32.partialorder %v6031, %v5385
  %vm6356 = vcmp.eq.f32.partialorder %v6030, %v5391
  %vm6357 = vcmp.eq.f32.partialorder %v6031, %v5391
  %vm6358 = vcmp.eq.f32.partialorder %v6030, %v5397
  %vm6359 = vcmp.eq.f32.partialorder %v6031, %v5397
  %vm6360 = vcmp.eq.f32.partialorder %v6030, %v5403
  %vm6361 = vcmp.eq.f32.partialorder %v6031, %v5403
  %vm6362 = vcmp.eq.f32.partialorder %v6030, %v5409
  %vm6363 = vcmp.eq.f32.partialorder %v6031, %v5409
  %vm6364 = vcmp.eq.f32.partialorder %v6030, %v5415
  %vm6365 = vcmp.eq.f32.partialorder %v6031, %v5415
  %vm6366 = vcmp.eq.f32.partialorder %v6030, %v5421
  %vm6367 = vcmp.eq.f32.partialorder %v6031, %v5421
  %vm6368 = vcmp.eq.f32.partialorder %v6030, %v5427
  %vm6369 = vcmp.eq.f32.partialorder %v6031, %v5427
  %vm6370 = vcmp.eq.f32.partialorder %v6030, %v5433
  %vm6371 = vcmp.eq.f32.partialorder %v6031, %v5433
  %vm6372 = vcmp.eq.f32.partialorder %v6030, %v5439
  %vm6373 = vcmp.eq.f32.partialorder %v6031, %v5439
  %vm6374 = vcmp.eq.f32.partialorder %v6032, %v5446
  %vm6375 = vcmp.eq.f32.partialorder %v6033, %v5446
  %vm6376 = vcmp.eq.f32.partialorder %v6032, %v5452
  %vm6377 = vcmp.eq.f32.partialorder %v6033, %v5452
  %vm6378 = vcmp.eq.f32.partialorder %v6032, %v5458
  %vm6379 = vcmp.eq.f32.partialorder %v6033, %v5458
  %vm6380 = vcmp.eq.f32.partialorder %v6032, %v5464
  %vm6381 = vcmp.eq.f32.partialorder %v6033, %v5464
  %vm6382 = vcmp.eq.f32.partialorder %v6032, %v5470
  %vm6383 = vcmp.eq.f32.partialorder %v6033, %v5470
  %vm6384 = vcmp.eq.f32.partialorder %v6032, %v5476
  %vm6385 = vcmp.eq.f32.partialorder %v6033, %v5476
  %vm6386 = vcmp.eq.f32.partialorder %v6032, %v5482
  %vm6387 = vcmp.eq.f32.partialorder %v6033, %v5482
  %vm6388 = vcmp.eq.f32.partialorder %v6032, %v5488
  %vm6389 = vcmp.eq.f32.partialorder %v6033, %v5488
  %vm6390 = vcmp.eq.f32.partialorder %v6032, %v5494
  %vm6391 = vcmp.eq.f32.partialorder %v6033, %v5494
  %vm6392 = vcmp.eq.f32.partialorder %v6032, %v5500
  %vm6393 = vcmp.eq.f32.partialorder %v6033, %v5500
  %vm6394 = vcmp.eq.f32.partialorder %v6032, %v5506
  %vm6395 = vcmp.eq.f32.partialorder %v6033, %v5506
  %vm6396 = vcmp.eq.f32.partialorder %v6032, %v5512
  %vm6397 = vcmp.eq.f32.partialorder %v6033, %v5512
  %vm6398 = vcmp.eq.f32.partialorder %v6032, %v5518
  %vm6399 = vcmp.eq.f32.partialorder %v6033, %v5518
  %vm6400 = vcmp.eq.f32.partialorder %v6032, %v5524
  %vm6401 = vcmp.eq.f32.partialorder %v6033, %v5524
  %vm6402 = vcmp.eq.f32.partialorder %v6032, %v5530
  %vm6403 = vcmp.eq.f32.partialorder %v6033, %v5530
  %vm6404 = vcmp.eq.f32.partialorder %v6032, %v5536
  %vm6405 = vcmp.eq.f32.partialorder %v6033, %v5536
  %vm6406 = vcmp.eq.f32.partialorder %v6032, %v5543
  %vm6407 = vcmp.eq.f32.partialorder %v6033, %v5543
  %vm6408 = vcmp.eq.f32.partialorder %v6032, %v5549
  %vm6409 = vcmp.eq.f32.partialorder %v6033, %v5549
  %vm6410 = vcmp.eq.f32.partialorder %v6032, %v5555
  %vm6411 = vcmp.eq.f32.partialorder %v6033, %v5555
  %vm6412 = vcmp.eq.f32.partialorder %v6032, %v5561
  %vm6413 = vcmp.eq.f32.partialorder %v6033, %v5561
  %vm6414 = vcmp.eq.f32.partialorder %v6032, %v5567
  %vm6415 = vcmp.eq.f32.partialorder %v6033, %v5567
  %vm6416 = vcmp.eq.f32.partialorder %v6032, %v5573
  %vm6417 = vcmp.eq.f32.partialorder %v6033, %v5573
  %vm6418 = vcmp.eq.f32.partialorder %v6032, %v5579
  %vm6419 = vcmp.eq.f32.partialorder %v6033, %v5579
  %vm6420 = vcmp.eq.f32.partialorder %v6032, %v5585
  %vm6421 = vcmp.eq.f32.partialorder %v6033, %v5585
  %vm6422 = vcmp.eq.f32.partialorder %v6032, %v5591
  %vm6423 = vcmp.eq.f32.partialorder %v6033, %v5591
  %vm6424 = vcmp.eq.f32.partialorder %v6032, %v5597
  %vm6425 = vcmp.eq.f32.partialorder %v6033, %v5597
  %vm6426 = vcmp.eq.f32.partialorder %v6032, %v5603
  %vm6427 = vcmp.eq.f32.partialorder %v6033, %v5603
  %vm6428 = vcmp.eq.f32.partialorder %v6032, %v5609
  %vm6429 = vcmp.eq.f32.partialorder %v6033, %v5609
  %vm6430 = vcmp.eq.f32.partialorder %v6032, %v5615
  %vm6431 = vcmp.eq.f32.partialorder %v6033, %v5615
  %vm6432 = vcmp.eq.f32.partialorder %v6032, %v5621
  %vm6433 = vcmp.eq.f32.partialorder %v6033, %v5621
  %vm6434 = vcmp.eq.f32.partialorder %v6032, %v5627
  %vm6435 = vcmp.eq.f32.partialorder %v6033, %v5627
  %vm6436 = vcmp.eq.f32.partialorder %v6032, %v5633
  %vm6437 = vcmp.eq.f32.partialorder %v6033, %v5633
  %vm6438 = vcmp.eq.f32.partialorder %v6034, %v5640
  %vm6439 = vcmp.eq.f32.partialorder %v6035, %v5640
  %vm6440 = vcmp.eq.f32.partialorder %v6034, %v5646
  %vm6441 = vcmp.eq.f32.partialorder %v6035, %v5646
  %vm6442 = vcmp.eq.f32.partialorder %v6034, %v5652
  %vm6443 = vcmp.eq.f32.partialorder %v6035, %v5652
  %vm6444 = vcmp.eq.f32.partialorder %v6034, %v5658
  %vm6445 = vcmp.eq.f32.partialorder %v6035, %v5658
  %vm6446 = vcmp.eq.f32.partialorder %v6034, %v5664
  %vm6447 = vcmp.eq.f32.partialorder %v6035, %v5664
  %vm6448 = vcmp.eq.f32.partialorder %v6034, %v5670
  %vm6449 = vcmp.eq.f32.partialorder %v6035, %v5670
  %vm6450 = vcmp.eq.f32.partialorder %v6034, %v5676
  %vm6451 = vcmp.eq.f32.partialorder %v6035, %v5676
  %vm6452 = vcmp.eq.f32.partialorder %v6034, %v5682
  %vm6453 = vcmp.eq.f32.partialorder %v6035, %v5682
  %vm6454 = vcmp.eq.f32.partialorder %v6034, %v5688
  %vm6455 = vcmp.eq.f32.partialorder %v6035, %v5688
  %vm6456 = vcmp.eq.f32.partialorder %v6034, %v5694
  %vm6457 = vcmp.eq.f32.partialorder %v6035, %v5694
  %vm6458 = vcmp.eq.f32.partialorder %v6034, %v5700
  %vm6459 = vcmp.eq.f32.partialorder %v6035, %v5700
  %vm6460 = vcmp.eq.f32.partialorder %v6034, %v5706
  %vm6461 = vcmp.eq.f32.partialorder %v6035, %v5706
  %vm6462 = vcmp.eq.f32.partialorder %v6034, %v5712
  %vm6463 = vcmp.eq.f32.partialorder %v6035, %v5712
  %vm6464 = vcmp.eq.f32.partialorder %v6034, %v5718
  %vm6465 = vcmp.eq.f32.partialorder %v6035, %v5718
  %vm6466 = vcmp.eq.f32.partialorder %v6034, %v5724
  %vm6467 = vcmp.eq.f32.partialorder %v6035, %v5724
  %vm6468 = vcmp.eq.f32.partialorder %v6034, %v5730
  %vm6469 = vcmp.eq.f32.partialorder %v6035, %v5730
  %vm6470 = vcmp.eq.f32.partialorder %v6034, %v5737
  %vm6471 = vcmp.eq.f32.partialorder %v6035, %v5737
  %vm6472 = vcmp.eq.f32.partialorder %v6034, %v5743
  %vm6473 = vcmp.eq.f32.partialorder %v6035, %v5743
  %vm6474 = vcmp.eq.f32.partialorder %v6034, %v5749
  %vm6475 = vcmp.eq.f32.partialorder %v6035, %v5749
  %vm6476 = vcmp.eq.f32.partialorder %v6034, %v5755
  %vm6477 = vcmp.eq.f32.partialorder %v6035, %v5755
  %vm6478 = vcmp.eq.f32.partialorder %v6034, %v5761
  %vm6479 = vcmp.eq.f32.partialorder %v6035, %v5761
  %vm6480 = vcmp.eq.f32.partialorder %v6034, %v5767
  %vm6481 = vcmp.eq.f32.partialorder %v6035, %v5767
  %vm6482 = vcmp.eq.f32.partialorder %v6034, %v5773
  %vm6483 = vcmp.eq.f32.partialorder %v6035, %v5773
  %vm6484 = vcmp.eq.f32.partialorder %v6034, %v5779
  %vm6485 = vcmp.eq.f32.partialorder %v6035, %v5779
  %vm6486 = vcmp.eq.f32.partialorder %v6034, %v5785
  %vm6487 = vcmp.eq.f32.partialorder %v6035, %v5785
  %vm6488 = vcmp.eq.f32.partialorder %v6034, %v5791
  %vm6489 = vcmp.eq.f32.partialorder %v6035, %v5791
  %vm6490 = vcmp.eq.f32.partialorder %v6034, %v5797
  %vm6491 = vcmp.eq.f32.partialorder %v6035, %v5797
  %vm6492 = vcmp.eq.f32.partialorder %v6034, %v5803
  %vm6493 = vcmp.eq.f32.partialorder %v6035, %v5803
  %vm6494 = vcmp.eq.f32.partialorder %v6034, %v5809
  %vm6495 = vcmp.eq.f32.partialorder %v6035, %v5809
  %vm6496 = vcmp.eq.f32.partialorder %v6034, %v5815
  %vm6497 = vcmp.eq.f32.partialorder %v6035, %v5815
  %vm6498 = vcmp.eq.f32.partialorder %v6034, %v5821
  %vm6499 = vcmp.eq.f32.partialorder %v6035, %v5821
  %vm6500 = vcmp.eq.f32.partialorder %v6034, %v5827
  %vm6501 = vcmp.eq.f32.partialorder %v6035, %v5827
  %vm6502 = vcmp.eq.f32.partialorder %v6036, %v5834
  %vm6503 = vcmp.eq.f32.partialorder %v6037, %v5834
  %vm6504 = vcmp.eq.f32.partialorder %v6036, %v5840
  %vm6505 = vcmp.eq.f32.partialorder %v6037, %v5840
  %vm6506 = vcmp.eq.f32.partialorder %v6036, %v5846
  %vm6507 = vcmp.eq.f32.partialorder %v6037, %v5846
  %vm6508 = vcmp.eq.f32.partialorder %v6036, %v5852
  %vm6509 = vcmp.eq.f32.partialorder %v6037, %v5852
  %vm6510 = vcmp.eq.f32.partialorder %v6036, %v5858
  %vm6511 = vcmp.eq.f32.partialorder %v6037, %v5858
  %vm6512 = vcmp.eq.f32.partialorder %v6036, %v5864
  %vm6513 = vcmp.eq.f32.partialorder %v6037, %v5864
  %vm6514 = vcmp.eq.f32.partialorder %v6036, %v5870
  %vm6515 = vcmp.eq.f32.partialorder %v6037, %v5870
  %vm6516 = vcmp.eq.f32.partialorder %v6036, %v5876
  %vm6517 = vcmp.eq.f32.partialorder %v6037, %v5876
  %vm6518 = vcmp.eq.f32.partialorder %v6036, %v5882
  %vm6519 = vcmp.eq.f32.partialorder %v6037, %v5882
  %vm6520 = vcmp.eq.f32.partialorder %v6036, %v5888
  %vm6521 = vcmp.eq.f32.partialorder %v6037, %v5888
  %vm6522 = vcmp.eq.f32.partialorder %v6036, %v5894
  %vm6523 = vcmp.eq.f32.partialorder %v6037, %v5894
  %vm6524 = vcmp.eq.f32.partialorder %v6036, %v5900
  %vm6525 = vcmp.eq.f32.partialorder %v6037, %v5900
  %vm6526 = vcmp.eq.f32.partialorder %v6036, %v5906
  %vm6527 = vcmp.eq.f32.partialorder %v6037, %v5906
  %vm6528 = vcmp.eq.f32.partialorder %v6036, %v5912
  %vm6529 = vcmp.eq.f32.partialorder %v6037, %v5912
  %vm6530 = vcmp.eq.f32.partialorder %v6036, %v5918
  %vm6531 = vcmp.eq.f32.partialorder %v6037, %v5918
  %vm6532 = vcmp.eq.f32.partialorder %v6036, %v5924
  %vm6533 = vcmp.eq.f32.partialorder %v6037, %v5924
  %vm6534 = vcmp.eq.f32.partialorder %v6036, %v5931
  %vm6535 = vcmp.eq.f32.partialorder %v6037, %v5931
  %vm6536 = vcmp.eq.f32.partialorder %v6036, %v5937
  %vm6537 = vcmp.eq.f32.partialorder %v6037, %v5937
  %vm6538 = vcmp.eq.f32.partialorder %v6036, %v5943
  %vm6539 = vcmp.eq.f32.partialorder %v6037, %v5943
  %vm6540 = vcmp.eq.f32.partialorder %v6036, %v5949
  %vm6541 = vcmp.eq.f32.partialorder %v6037, %v5949
  %vm6542 = vcmp.eq.f32.partialorder %v6036, %v5955
  %vm6543 = vcmp.eq.f32.partialorder %v6037, %v5955
  %vm6544 = vcmp.eq.f32.partialorder %v6036, %v5961
  %vm6545 = vcmp.eq.f32.partialorder %v6037, %v5961
  %vm6546 = vcmp.eq.f32.partialorder %v6036, %v5967
  %vm6547 = vcmp.eq.f32.partialorder %v6037, %v5967
  %vm6548 = vcmp.eq.f32.partialorder %v6036, %v5973
  %vm6549 = vcmp.eq.f32.partialorder %v6037, %v5973
  %vm6550 = vcmp.eq.f32.partialorder %v6036, %v5979
  %vm6551 = vcmp.eq.f32.partialorder %v6037, %v5979
  %vm6552 = vcmp.eq.f32.partialorder %v6036, %v5985
  %vm6553 = vcmp.eq.f32.partialorder %v6037, %v5985
  %vm6554 = vcmp.eq.f32.partialorder %v6036, %v5991
  %vm6555 = vcmp.eq.f32.partialorder %v6037, %v5991
  %vm6556 = vcmp.eq.f32.partialorder %v6036, %v5997
  %vm6557 = vcmp.eq.f32.partialorder %v6037, %v5997
  %vm6558 = vcmp.eq.f32.partialorder %v6036, %v6003
  %vm6559 = vcmp.eq.f32.partialorder %v6037, %v6003
  %vm6560 = vcmp.eq.f32.partialorder %v6036, %v6009
  %vm6561 = vcmp.eq.f32.partialorder %v6037, %v6009
  %vm6562 = vcmp.eq.f32.partialorder %v6036, %v6015
  %vm6563 = vcmp.eq.f32.partialorder %v6037, %v6015
  %vm6564 = vcmp.eq.f32.partialorder %v6036, %v6021
  %vm6565 = vcmp.eq.f32.partialorder %v6037, %v6021
  %v6566 = vsel %vm6054, 1, 0
  %v6567 = vsel %vm6055, 1, 0
  %v6568 = vsel %vm6056, 1, 0
  %v6569 = vsel %vm6057, 1, 0
  %v6570 = vsel %vm6058, 1, 0
  %v6571 = vsel %vm6059, 1, 0
  %v6572 = vsel %vm6060, 1, 0
  %v6573 = vsel %vm6061, 1, 0
  %v6574 = vsel %vm6062, 1, 0
  %v6575 = vsel %vm6063, 1, 0
  %v6576 = vsel %vm6064, 1, 0
  %v6577 = vsel %vm6065, 1, 0
  %v6578 = vsel %vm6066, 1, 0
  %v6579 = vsel %vm6067, 1, 0
  %v6580 = vsel %vm6068, 1, 0
  %v6581 = vsel %vm6069, 1, 0
  %v6582 = vsel %vm6070, 1, 0
  %v6583 = vsel %vm6071, 1, 0
  %v6584 = vsel %vm6072, 1, 0
  %v6585 = vsel %vm6073, 1, 0
  %v6586 = vsel %vm6074, 1, 0
  %v6587 = vsel %vm6075, 1, 0
  %v6588 = vsel %vm6076, 1, 0
  %v6589 = vsel %vm6077, 1, 0
  %v6590 = vsel %vm6078, 1, 0
  %v6591 = vsel %vm6079, 1, 0
  %v6592 = vsel %vm6080, 1, 0
  %v6593 = vsel %vm6081, 1, 0
  %v6594 = vsel %vm6082, 1, 0
  %v6595 = vsel %vm6083, 1, 0
  %v6596 = vsel %vm6084, 1, 0
  %v6597 = vsel %vm6085, 1, 0
  %v6598 = vsel %vm6086, 1, 0
  %v6599 = vsel %vm6087, 1, 0
  %v6600 = vsel %vm6088, 1, 0
  %v6601 = vsel %vm6089, 1, 0
  %v6602 = vsel %vm6090, 1, 0
  %v6603 = vsel %vm6091, 1, 0
  %v6604 = vsel %vm6092, 1, 0
  %v6605 = vsel %vm6093, 1, 0
  %v6606 = vsel %vm6094, 1, 0
  %v6607 = vsel %vm6095, 1, 0
  %v6608 = vsel %vm6096, 1, 0
  %v6609 = vsel %vm6097, 1, 0
  %v6610 = vsel %vm6098, 1, 0
  %v6611 = vsel %vm6099, 1, 0
  %v6612 = vsel %vm6100, 1, 0
  %v6613 = vsel %vm6101, 1, 0
  %v6614 = vsel %vm6102, 1, 0
  %v6615 = vsel %vm6103, 1, 0
  %v6616 = vsel %vm6104, 1, 0
  %v6617 = vsel %vm6105, 1, 0
  %v6618 = vsel %vm6106, 1, 0
  %v6619 = vsel %vm6107, 1, 0
  %v6620 = vsel %vm6108, 1, 0
  %v6621 = vsel %vm6109, 1, 0
  %v6622 = vsel %vm6110, 1, 0
  %v6623 = vsel %vm6111, 1, 0
  %v6624 = vsel %vm6112, 1, 0
  %v6625 = vsel %vm6113, 1, 0
  %v6626 = vsel %vm6114, 1, 0
  %v6627 = vsel %vm6115, 1, 0
  %v6628 = vsel %vm6116, 1, 0
  %v6629 = vsel %vm6117, 1, 0
  %v6630 = vsel %vm6118, 1, 0
  %v6631 = vsel %vm6119, 1, 0
  %v6632 = vsel %vm6120, 1, 0
  %v6633 = vsel %vm6121, 1, 0
  %v6634 = vsel %vm6122, 1, 0
  %v6635 = vsel %vm6123, 1, 0
  %v6636 = vsel %vm6124, 1, 0
  %v6637 = vsel %vm6125, 1, 0
  %v6638 = vsel %vm6126, 1, 0
  %v6639 = vsel %vm6127, 1, 0
  %v6640 = vsel %vm6128, 1, 0
  %v6641 = vsel %vm6129, 1, 0
  %v6642 = vsel %vm6130, 1, 0
  %v6643 = vsel %vm6131, 1, 0
  %v6644 = vsel %vm6132, 1, 0
  %v6645 = vsel %vm6133, 1, 0
  %v6646 = vsel %vm6134, 1, 0
  %v6647 = vsel %vm6135, 1, 0
  %v6648 = vsel %vm6136, 1, 0
  %v6649 = vsel %vm6137, 1, 0
  %v6650 = vsel %vm6138, 1, 0
  %v6651 = vsel %vm6139, 1, 0
  %v6652 = vsel %vm6140, 1, 0
  %v6653 = vsel %vm6141, 1, 0
  %v6654 = vsel %vm6142, 1, 0
  %v6655 = vsel %vm6143, 1, 0
  %v6656 = vsel %vm6144, 1, 0
  %v6657 = vsel %vm6145, 1, 0
  %v6658 = vsel %vm6146, 1, 0
  %v6659 = vsel %vm6147, 1, 0
  %v6660 = vsel %vm6148, 1, 0
  %v6661 = vsel %vm6149, 1, 0
  %v6662 = vsel %vm6150, 1, 0
  %v6663 = vsel %vm6151, 1, 0
  %v6664 = vsel %vm6152, 1, 0
  %v6665 = vsel %vm6153, 1, 0
  %v6666 = vsel %vm6154, 1, 0
  %v6667 = vsel %vm6155, 1, 0
  %v6668 = vsel %vm6156, 1, 0
  %v6669 = vsel %vm6157, 1, 0
  %v6670 = vsel %vm6158, 1, 0
  %v6671 = vsel %vm6159, 1, 0
  %v6672 = vsel %vm6160, 1, 0
  %v6673 = vsel %vm6161, 1, 0
  %v6674 = vsel %vm6162, 1, 0
  %v6675 = vsel %vm6163, 1, 0
  %v6676 = vsel %vm6164, 1, 0
  %v6677 = vsel %vm6165, 1, 0
  %v6678 = vsel %vm6166, 1, 0
  %v6679 = vsel %vm6167, 1, 0
  %v6680 = vsel %vm6168, 1, 0
  %v6681 = vsel %vm6169, 1, 0
  %v6682 = vsel %vm6170, 1, 0
  %v6683 = vsel %vm6171, 1, 0
  %v6684 = vsel %vm6172, 1, 0
  %v6685 = vsel %vm6173, 1, 0
  %v6686 = vsel %vm6174, 1, 0
  %v6687 = vsel %vm6175, 1, 0
  %v6688 = vsel %vm6176, 1, 0
  %v6689 = vsel %vm6177, 1, 0
  %v6690 = vsel %vm6178, 1, 0
  %v6691 = vsel %vm6179, 1, 0
  %v6692 = vsel %vm6180, 1, 0
  %v6693 = vsel %vm6181, 1, 0
  %v6694 = vsel %vm6182, 1, 0
  %v6695 = vsel %vm6183, 1, 0
  %v6696 = vsel %vm6184, 1, 0
  %v6697 = vsel %vm6185, 1, 0
  %v6698 = vsel %vm6186, 1, 0
  %v6699 = vsel %vm6187, 1, 0
  %v6700 = vsel %vm6188, 1, 0
  %v6701 = vsel %vm6189, 1, 0
  %v6702 = vsel %vm6190, 1, 0
  %v6703 = vsel %vm6191, 1, 0
  %v6704 = vsel %vm6192, 1, 0
  %v6705 = vsel %vm6193, 1, 0
  %v6706 = vsel %vm6194, 1, 0
  %v6707 = vsel %vm6195, 1, 0
  %v6708 = vsel %vm6196, 1, 0
  %v6709 = vsel %vm6197, 1, 0
  %v6710 = vsel %vm6198, 1, 0
  %v6711 = vsel %vm6199, 1, 0
  %v6712 = vsel %vm6200, 1, 0
  %v6713 = vsel %vm6201, 1, 0
  %v6714 = vsel %vm6202, 1, 0
  %v6715 = vsel %vm6203, 1, 0
  %v6716 = vsel %vm6204, 1, 0
  %v6717 = vsel %vm6205, 1, 0
  %v6718 = vsel %vm6206, 1, 0
  %v6719 = vsel %vm6207, 1, 0
  %v6720 = vsel %vm6208, 1, 0
  %v6721 = vsel %vm6209, 1, 0
  %v6722 = vsel %vm6210, 1, 0
  %v6723 = vsel %vm6211, 1, 0
  %v6724 = vsel %vm6212, 1, 0
  %v6725 = vsel %vm6213, 1, 0
  %v6726 = vsel %vm6214, 1, 0
  %v6727 = vsel %vm6215, 1, 0
  %v6728 = vsel %vm6216, 1, 0
  %v6729 = vsel %vm6217, 1, 0
  %v6730 = vsel %vm6218, 1, 0
  %v6731 = vsel %vm6219, 1, 0
  %v6732 = vsel %vm6220, 1, 0
  %v6733 = vsel %vm6221, 1, 0
  %v6734 = vsel %vm6222, 1, 0
  %v6735 = vsel %vm6223, 1, 0
  %v6736 = vsel %vm6224, 1, 0
  %v6737 = vsel %vm6225, 1, 0
  %v6738 = vsel %vm6226, 1, 0
  %v6739 = vsel %vm6227, 1, 0
  %v6740 = vsel %vm6228, 1, 0
  %v6741 = vsel %vm6229, 1, 0
  %v6742 = vsel %vm6230, 1, 0
  %v6743 = vsel %vm6231, 1, 0
  %v6744 = vsel %vm6232, 1, 0
  %v6745 = vsel %vm6233, 1, 0
  %v6746 = vsel %vm6234, 1, 0
  %v6747 = vsel %vm6235, 1, 0
  %v6748 = vsel %vm6236, 1, 0
  %v6749 = vsel %vm6237, 1, 0
  %v6750 = vsel %vm6238, 1, 0
  %v6751 = vsel %vm6239, 1, 0
  %v6752 = vsel %vm6240, 1, 0
  %v6753 = vsel %vm6241, 1, 0
  %v6754 = vsel %vm6242, 1, 0
  %v6755 = vsel %vm6243, 1, 0
  %v6756 = vsel %vm6244, 1, 0
  %v6757 = vsel %vm6245, 1, 0
  %v6758 = vsel %vm6246, 1, 0
  %v6759 = vsel %vm6247, 1, 0
  %v6760 = vsel %vm6248, 1, 0
  %v6761 = vsel %vm6249, 1, 0
  %v6762 = vsel %vm6250, 1, 0
  %v6763 = vsel %vm6251, 1, 0
  %v6764 = vsel %vm6252, 1, 0
  %v6765 = vsel %vm6253, 1, 0
  %v6766 = vsel %vm6254, 1, 0
  %v6767 = vsel %vm6255, 1, 0
  %v6768 = vsel %vm6256, 1, 0
  %v6769 = vsel %vm6257, 1, 0
  %v6770 = vsel %vm6258, 1, 0
  %v6771 = vsel %vm6259, 1, 0
  %v6772 = vsel %vm6260, 1, 0
  %v6773 = vsel %vm6261, 1, 0
  %v6774 = vsel %vm6262, 1, 0
  %v6775 = vsel %vm6263, 1, 0
  %v6776 = vsel %vm6264, 1, 0
  %v6777 = vsel %vm6265, 1, 0
  %v6778 = vsel %vm6266, 1, 0
  %v6779 = vsel %vm6267, 1, 0
  %v6780 = vsel %vm6268, 1, 0
  %v6781 = vsel %vm6269, 1, 0
  %v6782 = vsel %vm6270, 1, 0
  %v6783 = vsel %vm6271, 1, 0
  %v6784 = vsel %vm6272, 1, 0
  %v6785 = vsel %vm6273, 1, 0
  %v6786 = vsel %vm6274, 1, 0
  %v6787 = vsel %vm6275, 1, 0
  %v6788 = vsel %vm6276, 1, 0
  %v6789 = vsel %vm6277, 1, 0
  %v6790 = vsel %vm6278, 1, 0
  %v6791 = vsel %vm6279, 1, 0
  %v6792 = vsel %vm6280, 1, 0
  %v6793 = vsel %vm6281, 1, 0
  %v6794 = vsel %vm6282, 1, 0
  %v6795 = vsel %vm6283, 1, 0
  %v6796 = vsel %vm6284, 1, 0
  %v6797 = vsel %vm6285, 1, 0
  %v6798 = vsel %vm6286, 1, 0
  %v6799 = vsel %vm6287, 1, 0
  %v6800 = vsel %vm6288, 1, 0
  %v6801 = vsel %vm6289, 1, 0
  %v6802 = vsel %vm6290, 1, 0
  %v6803 = vsel %vm6291, 1, 0
  %v6804 = vsel %vm6292, 1, 0
  %v6805 = vsel %vm6293, 1, 0
  %v6806 = vsel %vm6294, 1, 0
  %v6807 = vsel %vm6295, 1, 0
  %v6808 = vsel %vm6296, 1, 0
  %v6809 = vsel %vm6297, 1, 0
  %v6810 = vsel %vm6298, 1, 0
  %v6811 = vsel %vm6299, 1, 0
  %v6812 = vsel %vm6300, 1, 0
  %v6813 = vsel %vm6301, 1, 0
  %v6814 = vsel %vm6302, 1, 0
  %v6815 = vsel %vm6303, 1, 0
  %v6816 = vsel %vm6304, 1, 0
  %v6817 = vsel %vm6305, 1, 0
  %v6818 = vsel %vm6306, 1, 0
  %v6819 = vsel %vm6307, 1, 0
  %v6820 = vsel %vm6308, 1, 0
  %v6821 = vsel %vm6309, 1, 0
  %v6822 = vsel %vm6310, 1, 0
  %v6823 = vsel %vm6311, 1, 0
  %v6824 = vsel %vm6312, 1, 0
  %v6825 = vsel %vm6313, 1, 0
  %v6826 = vsel %vm6314, 1, 0
  %v6827 = vsel %vm6315, 1, 0
  %v6828 = vsel %vm6316, 1, 0
  %v6829 = vsel %vm6317, 1, 0
  %v6830 = vsel %vm6318, 1, 0
  %v6831 = vsel %vm6319, 1, 0
  %v6832 = vsel %vm6320, 1, 0
  %v6833 = vsel %vm6321, 1, 0
  %v6834 = vsel %vm6322, 1, 0
  %v6835 = vsel %vm6323, 1, 0
  %v6836 = vsel %vm6324, 1, 0
  %v6837 = vsel %vm6325, 1, 0
  %v6838 = vsel %vm6326, 1, 0
  %v6839 = vsel %vm6327, 1, 0
  %v6840 = vsel %vm6328, 1, 0
  %v6841 = vsel %vm6329, 1, 0
  %v6842 = vsel %vm6330, 1, 0
  %v6843 = vsel %vm6331, 1, 0
  %v6844 = vsel %vm6332, 1, 0
  %v6845 = vsel %vm6333, 1, 0
  %v6846 = vsel %vm6334, 1, 0
  %v6847 = vsel %vm6335, 1, 0
  %v6848 = vsel %vm6336, 1, 0
  %v6849 = vsel %vm6337, 1, 0
  %v6850 = vsel %vm6338, 1, 0
  %v6851 = vsel %vm6339, 1, 0
  %v6852 = vsel %vm6340, 1, 0
  %v6853 = vsel %vm6341, 1, 0
  %v6854 = vsel %vm6342, 1, 0
  %v6855 = vsel %vm6343, 1, 0
  %v6856 = vsel %vm6344, 1, 0
  %v6857 = vsel %vm6345, 1, 0
  %v6858 = vsel %vm6346, 1, 0
  %v6859 = vsel %vm6347, 1, 0
  %v6860 = vsel %vm6348, 1, 0
  %v6861 = vsel %vm6349, 1, 0
  %v6862 = vsel %vm6350, 1, 0
  %v6863 = vsel %vm6351, 1, 0
  %v6864 = vsel %vm6352, 1, 0
  %v6865 = vsel %vm6353, 1, 0
  %v6866 = vsel %vm6354, 1, 0
  %v6867 = vsel %vm6355, 1, 0
  %v6868 = vsel %vm6356, 1, 0
  %v6869 = vsel %vm6357, 1, 0
  %v6870 = vsel %vm6358, 1, 0
  %v6871 = vsel %vm6359, 1, 0
  %v6872 = vsel %vm6360, 1, 0
  %v6873 = vsel %vm6361, 1, 0
  %v6874 = vsel %vm6362, 1, 0
  %v6875 = vsel %vm6363, 1, 0
  %v6876 = vsel %vm6364, 1, 0
  %v6877 = vsel %vm6365, 1, 0
  %v6878 = vsel %vm6366, 1, 0
  %v6879 = vsel %vm6367, 1, 0
  %v6880 = vsel %vm6368, 1, 0
  %v6881 = vsel %vm6369, 1, 0
  %v6882 = vsel %vm6370, 1, 0
  %v6883 = vsel %vm6371, 1, 0
  %v6884 = vsel %vm6372, 1, 0
  %v6885 = vsel %vm6373, 1, 0
  %v6886 = vsel %vm6374, 1, 0
  %v6887 = vsel %vm6375, 1, 0
  %v6888 = vsel %vm6376, 1, 0
  %v6889 = vsel %vm6377, 1, 0
  %v6890 = vsel %vm6378, 1, 0
  %v6891 = vsel %vm6379, 1, 0
  %v6892 = vsel %vm6380, 1, 0
  %v6893 = vsel %vm6381, 1, 0
  %v6894 = vsel %vm6382, 1, 0
  %v6895 = vsel %vm6383, 1, 0
  %v6896 = vsel %vm6384, 1, 0
  %v6897 = vsel %vm6385, 1, 0
  %v6898 = vsel %vm6386, 1, 0
  %v6899 = vsel %vm6387, 1, 0
  %v6900 = vsel %vm6388, 1, 0
  %v6901 = vsel %vm6389, 1, 0
  %v6902 = vsel %vm6390, 1, 0
  %v6903 = vsel %vm6391, 1, 0
  %v6904 = vsel %vm6392, 1, 0
  %v6905 = vsel %vm6393, 1, 0
  %v6906 = vsel %vm6394, 1, 0
  %v6907 = vsel %vm6395, 1, 0
  %v6908 = vsel %vm6396, 1, 0
  %v6909 = vsel %vm6397, 1, 0
  %v6910 = vsel %vm6398, 1, 0
  %v6911 = vsel %vm6399, 1, 0
  %v6912 = vsel %vm6400, 1, 0
  %v6913 = vsel %vm6401, 1, 0
  %v6914 = vsel %vm6402, 1, 0
  %v6915 = vsel %vm6403, 1, 0
  %v6916 = vsel %vm6404, 1, 0
  %v6917 = vsel %vm6405, 1, 0
  %v6918 = vsel %vm6406, 1, 0
  %v6919 = vsel %vm6407, 1, 0
  %v6920 = vsel %vm6408, 1, 0
  %v6921 = vsel %vm6409, 1, 0
  %v6922 = vsel %vm6410, 1, 0
  %v6923 = vsel %vm6411, 1, 0
  %v6924 = vsel %vm6412, 1, 0
  %v6925 = vsel %vm6413, 1, 0
  %v6926 = vsel %vm6414, 1, 0
  %v6927 = vsel %vm6415, 1, 0
  %v6928 = vsel %vm6416, 1, 0
  %v6929 = vsel %vm6417, 1, 0
  %v6930 = vsel %vm6418, 1, 0
  %v6931 = vsel %vm6419, 1, 0
  %v6932 = vsel %vm6420, 1, 0
  %v6933 = vsel %vm6421, 1, 0
  %v6934 = vsel %vm6422, 1, 0
  %v6935 = vsel %vm6423, 1, 0
  %v6936 = vsel %vm6424, 1, 0
  %v6937 = vsel %vm6425, 1, 0
  %v6938 = vsel %vm6426, 1, 0
  %v6939 = vsel %vm6427, 1, 0
  %v6940 = vsel %vm6428, 1, 0
  %v6941 = vsel %vm6429, 1, 0
  %v6942 = vsel %vm6430, 1, 0
  %v6943 = vsel %vm6431, 1, 0
  %v6944 = vsel %vm6432, 1, 0
  %v6945 = vsel %vm6433, 1, 0
  %v6946 = vsel %vm6434, 1, 0
  %v6947 = vsel %vm6435, 1, 0
  %v6948 = vsel %vm6436, 1, 0
  %v6949 = vsel %vm6437, 1, 0
  %v6950 = vsel %vm6438, 1, 0
  %v6951 = vsel %vm6439, 1, 0
  %v6952 = vsel %vm6440, 1, 0
  %v6953 = vsel %vm6441, 1, 0
  %v6954 = vsel %vm6442, 1, 0
  %v6955 = vsel %vm6443, 1, 0
  %v6956 = vsel %vm6444, 1, 0
  %v6957 = vsel %vm6445, 1, 0
  %v6958 = vsel %vm6446, 1, 0
  %v6959 = vsel %vm6447, 1, 0
  %v6960 = vsel %vm6448, 1, 0
  %v6961 = vsel %vm6449, 1, 0
  %v6962 = vsel %vm6450, 1, 0
  %v6963 = vsel %vm6451, 1, 0
  %v6964 = vsel %vm6452, 1, 0
  %v6965 = vsel %vm6453, 1, 0
  %v6966 = vsel %vm6454, 1, 0
  %v6967 = vsel %vm6455, 1, 0
  %v6968 = vsel %vm6456, 1, 0
  %v6969 = vsel %vm6457, 1, 0
  %v6970 = vsel %vm6458, 1, 0
  %v6971 = vsel %vm6459, 1, 0
  %v6972 = vsel %vm6460, 1, 0
  %v6973 = vsel %vm6461, 1, 0
  %v6974 = vsel %vm6462, 1, 0
  %v6975 = vsel %vm6463, 1, 0
  %v6976 = vsel %vm6464, 1, 0
  %v6977 = vsel %vm6465, 1, 0
  %v6978 = vsel %vm6466, 1, 0
  %v6979 = vsel %vm6467, 1, 0
  %v6980 = vsel %vm6468, 1, 0
  %v6981 = vsel %vm6469, 1, 0
  %v6982 = vsel %vm6470, 1, 0
  %v6983 = vsel %vm6471, 1, 0
  %v6984 = vsel %vm6472, 1, 0
  %v6985 = vsel %vm6473, 1, 0
  %v6986 = vsel %vm6474, 1, 0
  %v6987 = vsel %vm6475, 1, 0
  %v6988 = vsel %vm6476, 1, 0
  %v6989 = vsel %vm6477, 1, 0
  %v6990 = vsel %vm6478, 1, 0
  %v6991 = vsel %vm6479, 1, 0
  %v6992 = vsel %vm6480, 1, 0
  %v6993 = vsel %vm6481, 1, 0
  %v6994 = vsel %vm6482, 1, 0
  %v6995 = vsel %vm6483, 1, 0
  %v6996 = vsel %vm6484, 1, 0
  %v6997 = vsel %vm6485, 1, 0
  %v6998 = vsel %vm6486, 1, 0
  %v6999 = vsel %vm6487, 1, 0
  %v7000 = vsel %vm6488, 1, 0
  %v7001 = vsel %vm6489, 1, 0
  %v7002 = vsel %vm6490, 1, 0
  %v7003 = vsel %vm6491, 1, 0
  %v7004 = vsel %vm6492, 1, 0
  %v7005 = vsel %vm6493, 1, 0
  %v7006 = vsel %vm6494, 1, 0
  %v7007 = vsel %vm6495, 1, 0
  %v7008 = vsel %vm6496, 1, 0
  %v7009 = vsel %vm6497, 1, 0
  %v7010 = vsel %vm6498, 1, 0
  %v7011 = vsel %vm6499, 1, 0
  %v7012 = vsel %vm6500, 1, 0
  %v7013 = vsel %vm6501, 1, 0
  %v7014 = vsel %vm6502, 1, 0
  %v7015 = vsel %vm6503, 1, 0
  %v7016 = vsel %vm6504, 1, 0
  %v7017 = vsel %vm6505, 1, 0
  %v7018 = vsel %vm6506, 1, 0
  %v7019 = vsel %vm6507, 1, 0
  %v7020 = vsel %vm6508, 1, 0
  %v7021 = vsel %vm6509, 1, 0
  %v7022 = vsel %vm6510, 1, 0
  %v7023 = vsel %vm6511, 1, 0
  %v7024 = vsel %vm6512, 1, 0
  %v7025 = vsel %vm6513, 1, 0
  %v7026 = vsel %vm6514, 1, 0
  %v7027 = vsel %vm6515, 1, 0
  %v7028 = vsel %vm6516, 1, 0
  %v7029 = vsel %vm6517, 1, 0
  %v7030 = vsel %vm6518, 1, 0
  %v7031 = vsel %vm6519, 1, 0
  %v7032 = vsel %vm6520, 1, 0
  %v7033 = vsel %vm6521, 1, 0
  %v7034 = vsel %vm6522, 1, 0
  %v7035 = vsel %vm6523, 1, 0
  %v7036 = vsel %vm6524, 1, 0
  %v7037 = vsel %vm6525, 1, 0
  %v7038 = vsel %vm6526, 1, 0
  %v7039 = vsel %vm6527, 1, 0
  %v7040 = vsel %vm6528, 1, 0
  %v7041 = vsel %vm6529, 1, 0
  %v7042 = vsel %vm6530, 1, 0
  %v7043 = vsel %vm6531, 1, 0
  %v7044 = vsel %vm6532, 1, 0
  %v7045 = vsel %vm6533, 1, 0
  %v7046 = vsel %vm6534, 1, 0
  %v7047 = vsel %vm6535, 1, 0
  %v7048 = vsel %vm6536, 1, 0
  %v7049 = vsel %vm6537, 1, 0
  %v7050 = vsel %vm6538, 1, 0
  %v7051 = vsel %vm6539, 1, 0
  %v7052 = vsel %vm6540, 1, 0
  %v7053 = vsel %vm6541, 1, 0
  %v7054 = vsel %vm6542, 1, 0
  %v7055 = vsel %vm6543, 1, 0
  %v7056 = vsel %vm6544, 1, 0
  %v7057 = vsel %vm6545, 1, 0
  %v7058 = vsel %vm6546, 1, 0
  %v7059 = vsel %vm6547, 1, 0
  %v7060 = vsel %vm6548, 1, 0
  %v7061 = vsel %vm6549, 1, 0
  %v7062 = vsel %vm6550, 1, 0
  %v7063 = vsel %vm6551, 1, 0
  %v7064 = vsel %vm6552, 1, 0
  %v7065 = vsel %vm6553, 1, 0
  %v7066 = vsel %vm6554, 1, 0
  %v7067 = vsel %vm6555, 1, 0
  %v7068 = vsel %vm6556, 1, 0
  %v7069 = vsel %vm6557, 1, 0
  %v7070 = vsel %vm6558, 1, 0
  %v7071 = vsel %vm6559, 1, 0
  %v7072 = vsel %vm6560, 1, 0
  %v7073 = vsel %vm6561, 1, 0
  %v7074 = vsel %vm6562, 1, 0
  %v7075 = vsel %vm6563, 1, 0
  %v7076 = vsel %vm6564, 1, 0
  %v7077 = vsel %vm6565, 1, 0
  %v7078 = vcvt.s32.f32 %v6566
  %v7079 = vcvt.s32.f32 %v6567
  %v7080 = vcvt.s32.f32 %v6568
  %v7081 = vcvt.s32.f32 %v6569
  %v7082 = vcvt.s32.f32 %v6570
  %v7083 = vcvt.s32.f32 %v6571
  %v7084 = vcvt.s32.f32 %v6572
  %v7085 = vcvt.s32.f32 %v6573
  %v7086 = vcvt.s32.f32 %v6574
  %v7087 = vcvt.s32.f32 %v6575
  %v7088 = vcvt.s32.f32 %v6576
  %v7089 = vcvt.s32.f32 %v6577
  %v7090 = vcvt.s32.f32 %v6578
  %v7091 = vcvt.s32.f32 %v6579
  %v7092 = vcvt.s32.f32 %v6580
  %v7093 = vcvt.s32.f32 %v6581
  %v7094 = vcvt.s32.f32 %v6582
  %v7095 = vcvt.s32.f32 %v6583
  %v7096 = vcvt.s32.f32 %v6584
  %v7097 = vcvt.s32.f32 %v6585
  %v7098 = vcvt.s32.f32 %v6586
  %v7099 = vcvt.s32.f32 %v6587
  %v7100 = vcvt.s32.f32 %v6588
  %v7101 = vcvt.s32.f32 %v6589
  %v7102 = vcvt.s32.f32 %v6590
  %v7103 = vcvt.s32.f32 %v6591
  %v7104 = vcvt.s32.f32 %v6592
  %v7105 = vcvt.s32.f32 %v6593
  %v7106 = vcvt.s32.f32 %v6594
  %v7107 = vcvt.s32.f32 %v6595
  %v7108 = vcvt.s32.f32 %v6596
  %v7109 = vcvt.s32.f32 %v6597
  %v7110 = vcvt.s32.f32 %v6598
  %v7111 = vcvt.s32.f32 %v6599
  %v7112 = vcvt.s32.f32 %v6600
  %v7113 = vcvt.s32.f32 %v6601
  %v7114 = vcvt.s32.f32 %v6602
  %v7115 = vcvt.s32.f32 %v6603
  %v7116 = vcvt.s32.f32 %v6604
  %v7117 = vcvt.s32.f32 %v6605
  %v7118 = vcvt.s32.f32 %v6606
  %v7119 = vcvt.s32.f32 %v6607
  %v7120 = vcvt.s32.f32 %v6608
  %v7121 = vcvt.s32.f32 %v6609
  %v7122 = vcvt.s32.f32 %v6610
  %v7123 = vcvt.s32.f32 %v6611
  %v7124 = vcvt.s32.f32 %v6612
  %v7125 = vcvt.s32.f32 %v6613
  %v7126 = vcvt.s32.f32 %v6614
  %v7127 = vcvt.s32.f32 %v6615
  %v7128 = vcvt.s32.f32 %v6616
  %v7129 = vcvt.s32.f32 %v6617
  %v7130 = vcvt.s32.f32 %v6618
  %v7131 = vcvt.s32.f32 %v6619
  %v7132 = vcvt.s32.f32 %v6620
  %v7133 = vcvt.s32.f32 %v6621
  %v7134 = vcvt.s32.f32 %v6622
  %v7135 = vcvt.s32.f32 %v6623
  %v7136 = vcvt.s32.f32 %v6624
  %v7137 = vcvt.s32.f32 %v6625
  %v7138 = vcvt.s32.f32 %v6626
  %v7139 = vcvt.s32.f32 %v6627
  %v7140 = vcvt.s32.f32 %v6628
  %v7141 = vcvt.s32.f32 %v6629
  %v7142 = vcvt.s32.f32 %v6630
  %v7143 = vcvt.s32.f32 %v6631
  %v7144 = vcvt.s32.f32 %v6632
  %v7145 = vcvt.s32.f32 %v6633
  %v7146 = vcvt.s32.f32 %v6634
  %v7147 = vcvt.s32.f32 %v6635
  %v7148 = vcvt.s32.f32 %v6636
  %v7149 = vcvt.s32.f32 %v6637
  %v7150 = vcvt.s32.f32 %v6638
  %v7151 = vcvt.s32.f32 %v6639
  %v7152 = vcvt.s32.f32 %v6640
  %v7153 = vcvt.s32.f32 %v6641
  %v7154 = vcvt.s32.f32 %v6642
  %v7155 = vcvt.s32.f32 %v6643
  %v7156 = vcvt.s32.f32 %v6644
  %v7157 = vcvt.s32.f32 %v6645
  %v7158 = vcvt.s32.f32 %v6646
  %v7159 = vcvt.s32.f32 %v6647
  %v7160 = vcvt.s32.f32 %v6648
  %v7161 = vcvt.s32.f32 %v6649
  %v7162 = vcvt.s32.f32 %v6650
  %v7163 = vcvt.s32.f32 %v6651
  %v7164 = vcvt.s32.f32 %v6652
  %v7165 = vcvt.s32.f32 %v6653
  %v7166 = vcvt.s32.f32 %v6654
  %v7167 = vcvt.s32.f32 %v6655
  %v7168 = vcvt.s32.f32 %v6656
  %v7169 = vcvt.s32.f32 %v6657
  %v7170 = vcvt.s32.f32 %v6658
  %v7171 = vcvt.s32.f32 %v6659
  %v7172 = vcvt.s32.f32 %v6660
  %v7173 = vcvt.s32.f32 %v6661
  %v7174 = vcvt.s32.f32 %v6662
  %v7175 = vcvt.s32.f32 %v6663
  %v7176 = vcvt.s32.f32 %v6664
  %v7177 = vcvt.s32.f32 %v6665
  %v7178 = vcvt.s32.f32 %v6666
  %v7179 = vcvt.s32.f32 %v6667
  %v7180 = vcvt.s32.f32 %v6668
  %v7181 = vcvt.s32.f32 %v6669
  %v7182 = vcvt.s32.f32 %v6670
  %v7183 = vcvt.s32.f32 %v6671
  %v7184 = vcvt.s32.f32 %v6672
  %v7185 = vcvt.s32.f32 %v6673
  %v7186 = vcvt.s32.f32 %v6674
  %v7187 = vcvt.s32.f32 %v6675
  %v7188 = vcvt.s32.f32 %v6676
  %v7189 = vcvt.s32.f32 %v6677
  %v7190 = vcvt.s32.f32 %v6678
  %v7191 = vcvt.s32.f32 %v6679
  %v7192 = vcvt.s32.f32 %v6680
  %v7193 = vcvt.s32.f32 %v6681
  %v7194 = vcvt.s32.f32 %v6682
  %v7195 = vcvt.s32.f32 %v6683
  %v7196 = vcvt.s32.f32 %v6684
  %v7197 = vcvt.s32.f32 %v6685
  %v7198 = vcvt.s32.f32 %v6686
  %v7199 = vcvt.s32.f32 %v6687
  %v7200 = vcvt.s32.f32 %v6688
  %v7201 = vcvt.s32.f32 %v6689
  %v7202 = vcvt.s32.f32 %v6690
  %v7203 = vcvt.s32.f32 %v6691
  %v7204 = vcvt.s32.f32 %v6692
  %v7205 = vcvt.s32.f32 %v6693
  %v7206 = vcvt.s32.f32 %v6694
  %v7207 = vcvt.s32.f32 %v6695
  %v7208 = vcvt.s32.f32 %v6696
  %v7209 = vcvt.s32.f32 %v6697
  %v7210 = vcvt.s32.f32 %v6698
  %v7211 = vcvt.s32.f32 %v6699
  %v7212 = vcvt.s32.f32 %v6700
  %v7213 = vcvt.s32.f32 %v6701
  %v7214 = vcvt.s32.f32 %v6702
  %v7215 = vcvt.s32.f32 %v6703
  %v7216 = vcvt.s32.f32 %v6704
  %v7217 = vcvt.s32.f32 %v6705
  %v7218 = vcvt.s32.f32 %v6706
  %v7219 = vcvt.s32.f32 %v6707
  %v7220 = vcvt.s32.f32 %v6708
  %v7221 = vcvt.s32.f32 %v6709
  %v7222 = vcvt.s32.f32 %v6710
  %v7223 = vcvt.s32.f32 %v6711
  %v7224 = vcvt.s32.f32 %v6712
  %v7225 = vcvt.s32.f32 %v6713
  %v7226 = vcvt.s32.f32 %v6714
  %v7227 = vcvt.s32.f32 %v6715
  %v7228 = vcvt.s32.f32 %v6716
  %v7229 = vcvt.s32.f32 %v6717
  %v7230 = vcvt.s32.f32 %v6718
  %v7231 = vcvt.s32.f32 %v6719
  %v7232 = vcvt.s32.f32 %v6720
  %v7233 = vcvt.s32.f32 %v6721
  %v7234 = vcvt.s32.f32 %v6722
  %v7235 = vcvt.s32.f32 %v6723
  %v7236 = vcvt.s32.f32 %v6724
  %v7237 = vcvt.s32.f32 %v6725
  %v7238 = vcvt.s32.f32 %v6726
  %v7239 = vcvt.s32.f32 %v6727
  %v7240 = vcvt.s32.f32 %v6728
  %v7241 = vcvt.s32.f32 %v6729
  %v7242 = vcvt.s32.f32 %v6730
  %v7243 = vcvt.s32.f32 %v6731
  %v7244 = vcvt.s32.f32 %v6732
  %v7245 = vcvt.s32.f32 %v6733
  %v7246 = vcvt.s32.f32 %v6734
  %v7247 = vcvt.s32.f32 %v6735
  %v7248 = vcvt.s32.f32 %v6736
  %v7249 = vcvt.s32.f32 %v6737
  %v7250 = vcvt.s32.f32 %v6738
  %v7251 = vcvt.s32.f32 %v6739
  %v7252 = vcvt.s32.f32 %v6740
  %v7253 = vcvt.s32.f32 %v6741
  %v7254 = vcvt.s32.f32 %v6742
  %v7255 = vcvt.s32.f32 %v6743
  %v7256 = vcvt.s32.f32 %v6744
  %v7257 = vcvt.s32.f32 %v6745
  %v7258 = vcvt.s32.f32 %v6746
  %v7259 = vcvt.s32.f32 %v6747
  %v7260 = vcvt.s32.f32 %v6748
  %v7261 = vcvt.s32.f32 %v6749
  %v7262 = vcvt.s32.f32 %v6750
  %v7263 = vcvt.s32.f32 %v6751
  %v7264 = vcvt.s32.f32 %v6752
  %v7265 = vcvt.s32.f32 %v6753
  %v7266 = vcvt.s32.f32 %v6754
  %v7267 = vcvt.s32.f32 %v6755
  %v7268 = vcvt.s32.f32 %v6756
  %v7269 = vcvt.s32.f32 %v6757
  %v7270 = vcvt.s32.f32 %v6758
  %v7271 = vcvt.s32.f32 %v6759
  %v7272 = vcvt.s32.f32 %v6760
  %v7273 = vcvt.s32.f32 %v6761
  %v7274 = vcvt.s32.f32 %v6762
  %v7275 = vcvt.s32.f32 %v6763
  %v7276 = vcvt.s32.f32 %v6764
  %v7277 = vcvt.s32.f32 %v6765
  %v7278 = vcvt.s32.f32 %v6766
  %v7279 = vcvt.s32.f32 %v6767
  %v7280 = vcvt.s32.f32 %v6768
  %v7281 = vcvt.s32.f32 %v6769
  %v7282 = vcvt.s32.f32 %v6770
  %v7283 = vcvt.s32.f32 %v6771
  %v7284 = vcvt.s32.f32 %v6772
  %v7285 = vcvt.s32.f32 %v6773
  %v7286 = vcvt.s32.f32 %v6774
  %v7287 = vcvt.s32.f32 %v6775
  %v7288 = vcvt.s32.f32 %v6776
  %v7289 = vcvt.s32.f32 %v6777
  %v7290 = vcvt.s32.f32 %v6778
  %v7291 = vcvt.s32.f32 %v6779
  %v7292 = vcvt.s32.f32 %v6780
  %v7293 = vcvt.s32.f32 %v6781
  %v7294 = vcvt.s32.f32 %v6782
  %v7295 = vcvt.s32.f32 %v6783
  %v7296 = vcvt.s32.f32 %v6784
  %v7297 = vcvt.s32.f32 %v6785
  %v7298 = vcvt.s32.f32 %v6786
  %v7299 = vcvt.s32.f32 %v6787
  %v7300 = vcvt.s32.f32 %v6788
  %v7301 = vcvt.s32.f32 %v6789
  %v7302 = vcvt.s32.f32 %v6790
  %v7303 = vcvt.s32.f32 %v6791
  %v7304 = vcvt.s32.f32 %v6792
  %v7305 = vcvt.s32.f32 %v6793
  %v7306 = vcvt.s32.f32 %v6794
  %v7307 = vcvt.s32.f32 %v6795
  %v7308 = vcvt.s32.f32 %v6796
  %v7309 = vcvt.s32.f32 %v6797
  %v7310 = vcvt.s32.f32 %v6798
  %v7311 = vcvt.s32.f32 %v6799
  %v7312 = vcvt.s32.f32 %v6800
  %v7313 = vcvt.s32.f32 %v6801
  %v7314 = vcvt.s32.f32 %v6802
  %v7315 = vcvt.s32.f32 %v6803
  %v7316 = vcvt.s32.f32 %v6804
  %v7317 = vcvt.s32.f32 %v6805
  %v7318 = vcvt.s32.f32 %v6806
  %v7319 = vcvt.s32.f32 %v6807
  %v7320 = vcvt.s32.f32 %v6808
  %v7321 = vcvt.s32.f32 %v6809
  %v7322 = vcvt.s32.f32 %v6810
  %v7323 = vcvt.s32.f32 %v6811
  %v7324 = vcvt.s32.f32 %v6812
  %v7325 = vcvt.s32.f32 %v6813
  %v7326 = vcvt.s32.f32 %v6814
  %v7327 = vcvt.s32.f32 %v6815
  %v7328 = vcvt.s32.f32 %v6816
  %v7329 = vcvt.s32.f32 %v6817
  %v7330 = vcvt.s32.f32 %v6818
  %v7331 = vcvt.s32.f32 %v6819
  %v7332 = vcvt.s32.f32 %v6820
  %v7333 = vcvt.s32.f32 %v6821
  %v7334 = vcvt.s32.f32 %v6822
  %v7335 = vcvt.s32.f32 %v6823
  %v7336 = vcvt.s32.f32 %v6824
  %v7337 = vcvt.s32.f32 %v6825
  %v7338 = vcvt.s32.f32 %v6826
  %v7339 = vcvt.s32.f32 %v6827
  %v7340 = vcvt.s32.f32 %v6828
  %v7341 = vcvt.s32.f32 %v6829
  %v7342 = vcvt.s32.f32 %v6830
  %v7343 = vcvt.s32.f32 %v6831
  %v7344 = vcvt.s32.f32 %v6832
  %v7345 = vcvt.s32.f32 %v6833
  %v7346 = vcvt.s32.f32 %v6834
  %v7347 = vcvt.s32.f32 %v6835
  %v7348 = vcvt.s32.f32 %v6836
  %v7349 = vcvt.s32.f32 %v6837
  %v7350 = vcvt.s32.f32 %v6838
  %v7351 = vcvt.s32.f32 %v6839
  %v7352 = vcvt.s32.f32 %v6840
  %v7353 = vcvt.s32.f32 %v6841
  %v7354 = vcvt.s32.f32 %v6842
  %v7355 = vcvt.s32.f32 %v6843
  %v7356 = vcvt.s32.f32 %v6844
  %v7357 = vcvt.s32.f32 %v6845
  %v7358 = vcvt.s32.f32 %v6846
  %v7359 = vcvt.s32.f32 %v6847
  %v7360 = vcvt.s32.f32 %v6848
  %v7361 = vcvt.s32.f32 %v6849
  %v7362 = vcvt.s32.f32 %v6850
  %v7363 = vcvt.s32.f32 %v6851
  %v7364 = vcvt.s32.f32 %v6852
  %v7365 = vcvt.s32.f32 %v6853
  %v7366 = vcvt.s32.f32 %v6854
  %v7367 = vcvt.s32.f32 %v6855
  %v7368 = vcvt.s32.f32 %v6856
  %v7369 = vcvt.s32.f32 %v6857
  %v7370 = vcvt.s32.f32 %v6858
  %v7371 = vcvt.s32.f32 %v6859
  %v7372 = vcvt.s32.f32 %v6860
  %v7373 = vcvt.s32.f32 %v6861
  %v7374 = vcvt.s32.f32 %v6862
  %v7375 = vcvt.s32.f32 %v6863
  %v7376 = vcvt.s32.f32 %v6864
  %v7377 = vcvt.s32.f32 %v6865
  %v7378 = vcvt.s32.f32 %v6866
  %v7379 = vcvt.s32.f32 %v6867
  %v7380 = vcvt.s32.f32 %v6868
  %v7381 = vcvt.s32.f32 %v6869
  %v7382 = vcvt.s32.f32 %v6870
  %v7383 = vcvt.s32.f32 %v6871
  %v7384 = vcvt.s32.f32 %v6872
  %v7385 = vcvt.s32.f32 %v6873
  %v7386 = vcvt.s32.f32 %v6874
  %v7387 = vcvt.s32.f32 %v6875
  %v7388 = vcvt.s32.f32 %v6876
  %v7389 = vcvt.s32.f32 %v6877
  %v7390 = vcvt.s32.f32 %v6878
  %v7391 = vcvt.s32.f32 %v6879
  %v7392 = vcvt.s32.f32 %v6880
  %v7393 = vcvt.s32.f32 %v6881
  %v7394 = vcvt.s32.f32 %v6882
  %v7395 = vcvt.s32.f32 %v6883
  %v7396 = vcvt.s32.f32 %v6884
  %v7397 = vcvt.s32.f32 %v6885
  %v7398 = vcvt.s32.f32 %v6886
  %v7399 = vcvt.s32.f32 %v6887
  %v7400 = vcvt.s32.f32 %v6888
  %v7401 = vcvt.s32.f32 %v6889
  %v7402 = vcvt.s32.f32 %v6890
  %v7403 = vcvt.s32.f32 %v6891
  %v7404 = vcvt.s32.f32 %v6892
  %v7405 = vcvt.s32.f32 %v6893
  %v7406 = vcvt.s32.f32 %v6894
  %v7407 = vcvt.s32.f32 %v6895
  %v7408 = vcvt.s32.f32 %v6896
  %v7409 = vcvt.s32.f32 %v6897
  %v7410 = vcvt.s32.f32 %v6898
  %v7411 = vcvt.s32.f32 %v6899
  %v7412 = vcvt.s32.f32 %v6900
  %v7413 = vcvt.s32.f32 %v6901
  %v7414 = vcvt.s32.f32 %v6902
  %v7415 = vcvt.s32.f32 %v6903
  %v7416 = vcvt.s32.f32 %v6904
  %v7417 = vcvt.s32.f32 %v6905
  %v7418 = vcvt.s32.f32 %v6906
  %v7419 = vcvt.s32.f32 %v6907
  %v7420 = vcvt.s32.f32 %v6908
  %v7421 = vcvt.s32.f32 %v6909
  %v7422 = vcvt.s32.f32 %v6910
  %v7423 = vcvt.s32.f32 %v6911
  %v7424 = vcvt.s32.f32 %v6912
  %v7425 = vcvt.s32.f32 %v6913
  %v7426 = vcvt.s32.f32 %v6914
  %v7427 = vcvt.s32.f32 %v6915
  %v7428 = vcvt.s32.f32 %v6916
  %v7429 = vcvt.s32.f32 %v6917
  %v7430 = vcvt.s32.f32 %v6918
  %v7431 = vcvt.s32.f32 %v6919
  %v7432 = vcvt.s32.f32 %v6920
  %v7433 = vcvt.s32.f32 %v6921
  %v7434 = vcvt.s32.f32 %v6922
  %v7435 = vcvt.s32.f32 %v6923
  %v7436 = vcvt.s32.f32 %v6924
  %v7437 = vcvt.s32.f32 %v6925
  %v7438 = vcvt.s32.f32 %v6926
  %v7439 = vcvt.s32.f32 %v6927
  %v7440 = vcvt.s32.f32 %v6928
  %v7441 = vcvt.s32.f32 %v6929
  %v7442 = vcvt.s32.f32 %v6930
  %v7443 = vcvt.s32.f32 %v6931
  %v7444 = vcvt.s32.f32 %v6932
  %v7445 = vcvt.s32.f32 %v6933
  %v7446 = vcvt.s32.f32 %v6934
  %v7447 = vcvt.s32.f32 %v6935
  %v7448 = vcvt.s32.f32 %v6936
  %v7449 = vcvt.s32.f32 %v6937
  %v7450 = vcvt.s32.f32 %v6938
  %v7451 = vcvt.s32.f32 %v6939
  %v7452 = vcvt.s32.f32 %v6940
  %v7453 = vcvt.s32.f32 %v6941
  %v7454 = vcvt.s32.f32 %v6942
  %v7455 = vcvt.s32.f32 %v6943
  %v7456 = vcvt.s32.f32 %v6944
  %v7457 = vcvt.s32.f32 %v6945
  %v7458 = vcvt.s32.f32 %v6946
  %v7459 = vcvt.s32.f32 %v6947
  %v7460 = vcvt.s32.f32 %v6948
  %v7461 = vcvt.s32.f32 %v6949
  %v7462 = vcvt.s32.f32 %v6950
  %v7463 = vcvt.s32.f32 %v6951
  %v7464 = vcvt.s32.f32 %v6952
  %v7465 = vcvt.s32.f32 %v6953
  %v7466 = vcvt.s32.f32 %v6954
  %v7467 = vcvt.s32.f32 %v6955
  %v7468 = vcvt.s32.f32 %v6956
  %v7469 = vcvt.s32.f32 %v6957
  %v7470 = vcvt.s32.f32 %v6958
  %v7471 = vcvt.s32.f32 %v6959
  %v7472 = vcvt.s32.f32 %v6960
  %v7473 = vcvt.s32.f32 %v6961
  %v7474 = vcvt.s32.f32 %v6962
  %v7475 = vcvt.s32.f32 %v6963
  %v7476 = vcvt.s32.f32 %v6964
  %v7477 = vcvt.s32.f32 %v6965
  %v7478 = vcvt.s32.f32 %v6966
  %v7479 = vcvt.s32.f32 %v6967
  %v7480 = vcvt.s32.f32 %v6968
  %v7481 = vcvt.s32.f32 %v6969
  %v7482 = vcvt.s32.f32 %v6970
  %v7483 = vcvt.s32.f32 %v6971
  %v7484 = vcvt.s32.f32 %v6972
  %v7485 = vcvt.s32.f32 %v6973
  %v7486 = vcvt.s32.f32 %v6974
  %v7487 = vcvt.s32.f32 %v6975
  %v7488 = vcvt.s32.f32 %v6976
  %v7489 = vcvt.s32.f32 %v6977
  %v7490 = vcvt.s32.f32 %v6978
  %v7491 = vcvt.s32.f32 %v6979
  %v7492 = vcvt.s32.f32 %v6980
  %v7493 = vcvt.s32.f32 %v6981
  %v7494 = vcvt.s32.f32 %v6982
  %v7495 = vcvt.s32.f32 %v6983
  %v7496 = vcvt.s32.f32 %v6984
  %v7497 = vcvt.s32.f32 %v6985
  %v7498 = vcvt.s32.f32 %v6986
  %v7499 = vcvt.s32.f32 %v6987
  %v7500 = vcvt.s32.f32 %v6988
  %v7501 = vcvt.s32.f32 %v6989
  %v7502 = vcvt.s32.f32 %v6990
  %v7503 = vcvt.s32.f32 %v6991
  %v7504 = vcvt.s32.f32 %v6992
  %v7505 = vcvt.s32.f32 %v6993
  %v7506 = vcvt.s32.f32 %v6994
  %v7507 = vcvt.s32.f32 %v6995
  %v7508 = vcvt.s32.f32 %v6996
  %v7509 = vcvt.s32.f32 %v6997
  %v7510 = vcvt.s32.f32 %v6998
  %v7511 = vcvt.s32.f32 %v6999
  %v7512 = vcvt.s32.f32 %v7000
  %v7513 = vcvt.s32.f32 %v7001
  %v7514 = vcvt.s32.f32 %v7002
  %v7515 = vcvt.s32.f32 %v7003
  %v7516 = vcvt.s32.f32 %v7004
  %v7517 = vcvt.s32.f32 %v7005
  %v7518 = vcvt.s32.f32 %v7006
  %v7519 = vcvt.s32.f32 %v7007
  %v7520 = vcvt.s32.f32 %v7008
  %v7521 = vcvt.s32.f32 %v7009
  %v7522 = vcvt.s32.f32 %v7010
  %v7523 = vcvt.s32.f32 %v7011
  %v7524 = vcvt.s32.f32 %v7012
  %v7525 = vcvt.s32.f32 %v7013
  %v7526 = vcvt.s32.f32 %v7014
  %v7527 = vcvt.s32.f32 %v7015
  %v7528 = vcvt.s32.f32 %v7016
  %v7529 = vcvt.s32.f32 %v7017
  %v7530 = vcvt.s32.f32 %v7018
  %v7531 = vcvt.s32.f32 %v7019
  %v7532 = vcvt.s32.f32 %v7020
  %v7533 = vcvt.s32.f32 %v7021
  %v7534 = vcvt.s32.f32 %v7022
  %v7535 = vcvt.s32.f32 %v7023
  %v7536 = vcvt.s32.f32 %v7024
  %v7537 = vcvt.s32.f32 %v7025
  %v7538 = vcvt.s32.f32 %v7026
  %v7539 = vcvt.s32.f32 %v7027
  %v7540 = vcvt.s32.f32 %v7028
  %v7541 = vcvt.s32.f32 %v7029
  %v7542 = vcvt.s32.f32 %v7030
  %v7543 = vcvt.s32.f32 %v7031
  %v7544 = vcvt.s32.f32 %v7032
  %v7545 = vcvt.s32.f32 %v7033
  %v7546 = vcvt.s32.f32 %v7034
  %v7547 = vcvt.s32.f32 %v7035
  %v7548 = vcvt.s32.f32 %v7036
  %v7549 = vcvt.s32.f32 %v7037
  %v7550 = vcvt.s32.f32 %v7038
  %v7551 = vcvt.s32.f32 %v7039
  %v7552 = vcvt.s32.f32 %v7040
  %v7553 = vcvt.s32.f32 %v7041
  %v7554 = vcvt.s32.f32 %v7042
  %v7555 = vcvt.s32.f32 %v7043
  %v7556 = vcvt.s32.f32 %v7044
  %v7557 = vcvt.s32.f32 %v7045
  %v7558 = vcvt.s32.f32 %v7046
  %v7559 = vcvt.s32.f32 %v7047
  %v7560 = vcvt.s32.f32 %v7048
  %v7561 = vcvt.s32.f32 %v7049
  %v7562 = vcvt.s32.f32 %v7050
  %v7563 = vcvt.s32.f32 %v7051
  %v7564 = vcvt.s32.f32 %v7052
  %v7565 = vcvt.s32.f32 %v7053
  %v7566 = vcvt.s32.f32 %v7054
  %v7567 = vcvt.s32.f32 %v7055
  %v7568 = vcvt.s32.f32 %v7056
  %v7569 = vcvt.s32.f32 %v7057
  %v7570 = vcvt.s32.f32 %v7058
  %v7571 = vcvt.s32.f32 %v7059
  %v7572 = vcvt.s32.f32 %v7060
  %v7573 = vcvt.s32.f32 %v7061
  %v7574 = vcvt.s32.f32 %v7062
  %v7575 = vcvt.s32.f32 %v7063
  %v7576 = vcvt.s32.f32 %v7064
  %v7577 = vcvt.s32.f32 %v7065
  %v7578 = vcvt.s32.f32 %v7066
  %v7579 = vcvt.s32.f32 %v7067
  %v7580 = vcvt.s32.f32 %v7068
  %v7581 = vcvt.s32.f32 %v7069
  %v7582 = vcvt.s32.f32 %v7070
  %v7583 = vcvt.s32.f32 %v7071
  %v7584 = vcvt.s32.f32 %v7072
  %v7585 = vcvt.s32.f32 %v7073
  %v7586 = vcvt.s32.f32 %v7074
  %v7587 = vcvt.s32.f32 %v7075
  %v7588 = vcvt.s32.f32 %v7076
  %v7589 = vcvt.s32.f32 %v7077
  %v7590 = vperm.slane %v4437, 0
  %v7591 = vperm.slane %v4437, 1
  %7594 = vmatpush.xpose.msra.mxu0 %v7108
  %7595 = vmatpush.xpose.msra.mxu0 %v7106
  %7596 = vmatpush.xpose.msra.mxu0 %v7104
  %7597 = vmatpush.xpose.msra.mxu0 %v7102
  %7598 = vmatpush.xpose.msra.mxu0 %v7100
  %7599 = vmatpush.xpose.msra.mxu0 %v7098
  %7600 = vmatpush.xpose.msra.mxu0 %v7096
  %7601 = vmatpush.xpose.msra.mxu0 %v7094
  %7602 = vmatpush.xpose.msra.mxu0 %v7092
  %7603 = vmatpush.xpose.msra.mxu0 %v7090
  %7604 = vmatpush.xpose.msra.mxu0 %v7088
  %7605 = vmatpush.xpose.msra.mxu0 %v7086
  %7606 = vmatpush.xpose.msra.mxu0 %v7084
  %7607 = vmatpush.xpose.msra.mxu0 %v7082
  %7608 = vmatpush.xpose.msra.mxu0 %v7080
  %7609 = vmatpush.xpose.msra.mxu0 %v7078
  %7610 = vmatmul.f32.gmra.mxu0 %v7590
  %v7611 = vpop.f32.mrf.mxu0
  %v7612 = vadd.f32 0.0, %v7611
  %7613 = vdwg.mxu0
  %7614 = vmatpush.xpose.msra.mxu0 %v7109
  %7615 = vmatpush.xpose.msra.mxu0 %v7107
  %7616 = vmatpush.xpose.msra.mxu0 %v7105
  %7617 = vmatpush.xpose.msra.mxu0 %v7103
  %7618 = vmatpush.xpose.msra.mxu0 %v7101
  %7619 = vmatpush.xpose.msra.mxu0 %v7099
  %7620 = vmatpush.xpose.msra.mxu0 %v7097
  %7621 = vmatpush.xpose.msra.mxu0 %v7095
  %7622 = vmatpush.xpose.msra.mxu0 %v7093
  %7623 = vmatpush.xpose.msra.mxu0 %v7091
  %7624 = vmatpush.xpose.msra.mxu0 %v7089
  %7625 = vmatpush.xpose.msra.mxu0 %v7087
  %7626 = vmatpush.xpose.msra.mxu0 %v7085
  %7627 = vmatpush.xpose.msra.mxu0 %v7083
  %7628 = vmatpush.xpose.msra.mxu0 %v7081
  %7629 = vmatpush.xpose.msra.mxu0 %v7079
  %7630 = vmatmul.f32.gmra.mxu0 %v7591
  %v7631 = vpop.f32.mrf.mxu0
  %v7632 = vadd.f32 %v7612, %v7631
  %7633 = vdwg.mxu0
  %7634 = vmatpush.xpose.msra.mxu0 %v7140
  %7635 = vmatpush.xpose.msra.mxu0 %v7138
  %7636 = vmatpush.xpose.msra.mxu0 %v7136
  %7637 = vmatpush.xpose.msra.mxu0 %v7134
  %7638 = vmatpush.xpose.msra.mxu0 %v7132
  %7639 = vmatpush.xpose.msra.mxu0 %v7130
  %7640 = vmatpush.xpose.msra.mxu0 %v7128
  %7641 = vmatpush.xpose.msra.mxu0 %v7126
  %7642 = vmatpush.xpose.msra.mxu0 %v7124
  %7643 = vmatpush.xpose.msra.mxu0 %v7122
  %7644 = vmatpush.xpose.msra.mxu0 %v7120
  %7645 = vmatpush.xpose.msra.mxu0 %v7118
  %7646 = vmatpush.xpose.msra.mxu0 %v7116
  %7647 = vmatpush.xpose.msra.mxu0 %v7114
  %7648 = vmatpush.xpose.msra.mxu0 %v7112
  %7649 = vmatpush.xpose.msra.mxu0 %v7110
  %7650 = vmatmul.f32.gmra.mxu0 %v7590
  %v7651 = vpop.f32.mrf.mxu0
  %v7652 = vadd.f32 0.0, %v7651
  %7653 = vdwg.mxu0
  %7654 = vmatpush.xpose.msra.mxu0 %v7141
  %7655 = vmatpush.xpose.msra.mxu0 %v7139
  %7656 = vmatpush.xpose.msra.mxu0 %v7137
  %7657 = vmatpush.xpose.msra.mxu0 %v7135
  %7658 = vmatpush.xpose.msra.mxu0 %v7133
  %7659 = vmatpush.xpose.msra.mxu0 %v7131
  %7660 = vmatpush.xpose.msra.mxu0 %v7129
  %7661 = vmatpush.xpose.msra.mxu0 %v7127
  %7662 = vmatpush.xpose.msra.mxu0 %v7125
  %7663 = vmatpush.xpose.msra.mxu0 %v7123
  %7664 = vmatpush.xpose.msra.mxu0 %v7121
  %7665 = vmatpush.xpose.msra.mxu0 %v7119
  %7666 = vmatpush.xpose.msra.mxu0 %v7117
  %7667 = vmatpush.xpose.msra.mxu0 %v7115
  %7668 = vmatpush.xpose.msra.mxu0 %v7113
  %7669 = vmatpush.xpose.msra.mxu0 %v7111
  %7670 = vmatmul.f32.gmra.mxu0 %v7591
  %v7671 = vpop.f32.mrf.mxu0
  %v7672 = vadd.f32 %v7652, %v7671
  %7673 = vdwg.mxu0
  %v7674 = vperm.slane %v4439, 0
  %v7675 = vperm.slane %v4439, 1
  %7678 = vmatpush.xpose.msra.mxu0 %v7172
  %7679 = vmatpush.xpose.msra.mxu0 %v7170
  %7680 = vmatpush.xpose.msra.mxu0 %v7168
  %7681 = vmatpush.xpose.msra.mxu0 %v7166
  %7682 = vmatpush.xpose.msra.mxu0 %v7164
  %7683 = vmatpush.xpose.msra.mxu0 %v7162
  %7684 = vmatpush.xpose.msra.mxu0 %v7160
  %7685 = vmatpush.xpose.msra.mxu0 %v7158
  %7686 = vmatpush.xpose.msra.mxu0 %v7156
  %7687 = vmatpush.xpose.msra.mxu0 %v7154
  %7688 = vmatpush.xpose.msra.mxu0 %v7152
  %7689 = vmatpush.xpose.msra.mxu0 %v7150
  %7690 = vmatpush.xpose.msra.mxu0 %v7148
  %7691 = vmatpush.xpose.msra.mxu0 %v7146
  %7692 = vmatpush.xpose.msra.mxu0 %v7144
  %7693 = vmatpush.xpose.msra.mxu0 %v7142
  %7694 = vmatmul.f32.gmra.mxu0 %v7674
  %v7695 = vpop.f32.mrf.mxu0
  %v7696 = vadd.f32 0.0, %v7695
  %7697 = vdwg.mxu0
  %7698 = vmatpush.xpose.msra.mxu0 %v7173
  %7699 = vmatpush.xpose.msra.mxu0 %v7171
  %7700 = vmatpush.xpose.msra.mxu0 %v7169
  %7701 = vmatpush.xpose.msra.mxu0 %v7167
  %7702 = vmatpush.xpose.msra.mxu0 %v7165
  %7703 = vmatpush.xpose.msra.mxu0 %v7163
  %7704 = vmatpush.xpose.msra.mxu0 %v7161
  %7705 = vmatpush.xpose.msra.mxu0 %v7159
  %7706 = vmatpush.xpose.msra.mxu0 %v7157
  %7707 = vmatpush.xpose.msra.mxu0 %v7155
  %7708 = vmatpush.xpose.msra.mxu0 %v7153
  %7709 = vmatpush.xpose.msra.mxu0 %v7151
  %7710 = vmatpush.xpose.msra.mxu0 %v7149
  %7711 = vmatpush.xpose.msra.mxu0 %v7147
  %7712 = vmatpush.xpose.msra.mxu0 %v7145
  %7713 = vmatpush.xpose.msra.mxu0 %v7143
  %7714 = vmatmul.f32.gmra.mxu0 %v7675
  %v7715 = vpop.f32.mrf.mxu0
  %v7716 = vadd.f32 %v7696, %v7715
  %7717 = vdwg.mxu0
  %7718 = vmatpush.xpose.msra.mxu0 %v7204
  %7719 = vmatpush.xpose.msra.mxu0 %v7202
  %7720 = vmatpush.xpose.msra.mxu0 %v7200
  %7721 = vmatpush.xpose.msra.mxu0 %v7198
  %7722 = vmatpush.xpose.msra.mxu0 %v7196
  %7723 = vmatpush.xpose.msra.mxu0 %v7194
  %7724 = vmatpush.xpose.msra.mxu0 %v7192
  %7725 = vmatpush.xpose.msra.mxu0 %v7190
  %7726 = vmatpush.xpose.msra.mxu0 %v7188
  %7727 = vmatpush.xpose.msra.mxu0 %v7186
  %7728 = vmatpush.xpose.msra.mxu0 %v7184
  %7729 = vmatpush.xpose.msra.mxu0 %v7182
  %7730 = vmatpush.xpose.msra.mxu0 %v7180
  %7731 = vmatpush.xpose.msra.mxu0 %v7178
  %7732 = vmatpush.xpose.msra.mxu0 %v7176
  %7733 = vmatpush.xpose.msra.mxu0 %v7174
  %7734 = vmatmul.f32.gmra.mxu0 %v7674
  %v7735 = vpop.f32.mrf.mxu0
  %v7736 = vadd.f32 0.0, %v7735
  %7737 = vdwg.mxu0
  %7738 = vmatpush.xpose.msra.mxu0 %v7205
  %7739 = vmatpush.xpose.msra.mxu0 %v7203
  %7740 = vmatpush.xpose.msra.mxu0 %v7201
  %7741 = vmatpush.xpose.msra.mxu0 %v7199
  %7742 = vmatpush.xpose.msra.mxu0 %v7197
  %7743 = vmatpush.xpose.msra.mxu0 %v7195
  %7744 = vmatpush.xpose.msra.mxu0 %v7193
  %7745 = vmatpush.xpose.msra.mxu0 %v7191
  %7746 = vmatpush.xpose.msra.mxu0 %v7189
  %7747 = vmatpush.xpose.msra.mxu0 %v7187
  %7748 = vmatpush.xpose.msra.mxu0 %v7185
  %7749 = vmatpush.xpose.msra.mxu0 %v7183
  %7750 = vmatpush.xpose.msra.mxu0 %v7181
  %7751 = vmatpush.xpose.msra.mxu0 %v7179
  %7752 = vmatpush.xpose.msra.mxu0 %v7177
  %7753 = vmatpush.xpose.msra.mxu0 %v7175
  %7754 = vmatmul.f32.gmra.mxu0 %v7675
  %v7755 = vpop.f32.mrf.mxu0
  %v7756 = vadd.f32 %v7736, %v7755
  %7757 = vdwg.mxu0
  %v7758 = vperm.slane %v4441, 0
  %v7759 = vperm.slane %v4441, 1
  %7762 = vmatpush.xpose.msra.mxu0 %v7236
  %7763 = vmatpush.xpose.msra.mxu0 %v7234
  %7764 = vmatpush.xpose.msra.mxu0 %v7232
  %7765 = vmatpush.xpose.msra.mxu0 %v7230
  %7766 = vmatpush.xpose.msra.mxu0 %v7228
  %7767 = vmatpush.xpose.msra.mxu0 %v7226
  %7768 = vmatpush.xpose.msra.mxu0 %v7224
  %7769 = vmatpush.xpose.msra.mxu0 %v7222
  %7770 = vmatpush.xpose.msra.mxu0 %v7220
  %7771 = vmatpush.xpose.msra.mxu0 %v7218
  %7772 = vmatpush.xpose.msra.mxu0 %v7216
  %7773 = vmatpush.xpose.msra.mxu0 %v7214
  %7774 = vmatpush.xpose.msra.mxu0 %v7212
  %7775 = vmatpush.xpose.msra.mxu0 %v7210
  %7776 = vmatpush.xpose.msra.mxu0 %v7208
  %7777 = vmatpush.xpose.msra.mxu0 %v7206
  %7778 = vmatmul.f32.gmra.mxu0 %v7758
  %v7779 = vpop.f32.mrf.mxu0
  %v7780 = vadd.f32 0.0, %v7779
  %7781 = vdwg.mxu0
  %7782 = vmatpush.xpose.msra.mxu0 %v7237
  %7783 = vmatpush.xpose.msra.mxu0 %v7235
  %7784 = vmatpush.xpose.msra.mxu0 %v7233
  %7785 = vmatpush.xpose.msra.mxu0 %v7231
  %7786 = vmatpush.xpose.msra.mxu0 %v7229
  %7787 = vmatpush.xpose.msra.mxu0 %v7227
  %7788 = vmatpush.xpose.msra.mxu0 %v7225
  %7789 = vmatpush.xpose.msra.mxu0 %v7223
  %7790 = vmatpush.xpose.msra.mxu0 %v7221
  %7791 = vmatpush.xpose.msra.mxu0 %v7219
  %7792 = vmatpush.xpose.msra.mxu0 %v7217
  %7793 = vmatpush.xpose.msra.mxu0 %v7215
  %7794 = vmatpush.xpose.msra.mxu0 %v7213
  %7795 = vmatpush.xpose.msra.mxu0 %v7211
  %7796 = vmatpush.xpose.msra.mxu0 %v7209
  %7797 = vmatpush.xpose.msra.mxu0 %v7207
  %7798 = vmatmul.f32.gmra.mxu0 %v7759
  %v7799 = vpop.f32.mrf.mxu0
  %v7800 = vadd.f32 %v7780, %v7799
  %7801 = vdwg.mxu0
  %7802 = vmatpush.xpose.msra.mxu0 %v7268
  %7803 = vmatpush.xpose.msra.mxu0 %v7266
  %7804 = vmatpush.xpose.msra.mxu0 %v7264
  %7805 = vmatpush.xpose.msra.mxu0 %v7262
  %7806 = vmatpush.xpose.msra.mxu0 %v7260
  %7807 = vmatpush.xpose.msra.mxu0 %v7258
  %7808 = vmatpush.xpose.msra.mxu0 %v7256
  %7809 = vmatpush.xpose.msra.mxu0 %v7254
  %7810 = vmatpush.xpose.msra.mxu0 %v7252
  %7811 = vmatpush.xpose.msra.mxu0 %v7250
  %7812 = vmatpush.xpose.msra.mxu0 %v7248
  %7813 = vmatpush.xpose.msra.mxu0 %v7246
  %7814 = vmatpush.xpose.msra.mxu0 %v7244
  %7815 = vmatpush.xpose.msra.mxu0 %v7242
  %7816 = vmatpush.xpose.msra.mxu0 %v7240
  %7817 = vmatpush.xpose.msra.mxu0 %v7238
  %7818 = vmatmul.f32.gmra.mxu0 %v7758
  %v7819 = vpop.f32.mrf.mxu0
  %v7820 = vadd.f32 0.0, %v7819
  %7821 = vdwg.mxu0
  %7822 = vmatpush.xpose.msra.mxu0 %v7269
  %7823 = vmatpush.xpose.msra.mxu0 %v7267
  %7824 = vmatpush.xpose.msra.mxu0 %v7265
  %7825 = vmatpush.xpose.msra.mxu0 %v7263
  %7826 = vmatpush.xpose.msra.mxu0 %v7261
  %7827 = vmatpush.xpose.msra.mxu0 %v7259
  %7828 = vmatpush.xpose.msra.mxu0 %v7257
  %7829 = vmatpush.xpose.msra.mxu0 %v7255
  %7830 = vmatpush.xpose.msra.mxu0 %v7253
  %7831 = vmatpush.xpose.msra.mxu0 %v7251
  %7832 = vmatpush.xpose.msra.mxu0 %v7249
  %7833 = vmatpush.xpose.msra.mxu0 %v7247
  %7834 = vmatpush.xpose.msra.mxu0 %v7245
  %7835 = vmatpush.xpose.msra.mxu0 %v7243
  %7836 = vmatpush.xpose.msra.mxu0 %v7241
  %7837 = vmatpush.xpose.msra.mxu0 %v7239
  %7838 = vmatmul.f32.gmra.mxu0 %v7759
  %v7839 = vpop.f32.mrf.mxu0
  %v7840 = vadd.f32 %v7820, %v7839
  %7841 = vdwg.mxu0
  %v7842 = vperm.slane %v4443, 0
  %v7843 = vperm.slane %v4443, 1
  %7846 = vmatpush.xpose.msra.mxu0 %v7300
  %7847 = vmatpush.xpose.msra.mxu0 %v7298
  %7848 = vmatpush.xpose.msra.mxu0 %v7296
  %7849 = vmatpush.xpose.msra.mxu0 %v7294
  %7850 = vmatpush.xpose.msra.mxu0 %v7292
  %7851 = vmatpush.xpose.msra.mxu0 %v7290
  %7852 = vmatpush.xpose.msra.mxu0 %v7288
  %7853 = vmatpush.xpose.msra.mxu0 %v7286
  %7854 = vmatpush.xpose.msra.mxu0 %v7284
  %7855 = vmatpush.xpose.msra.mxu0 %v7282
  %7856 = vmatpush.xpose.msra.mxu0 %v7280
  %7857 = vmatpush.xpose.msra.mxu0 %v7278
  %7858 = vmatpush.xpose.msra.mxu0 %v7276
  %7859 = vmatpush.xpose.msra.mxu0 %v7274
  %7860 = vmatpush.xpose.msra.mxu0 %v7272
  %7861 = vmatpush.xpose.msra.mxu0 %v7270
  %7862 = vmatmul.f32.gmra.mxu0 %v7842
  %v7863 = vpop.f32.mrf.mxu0
  %v7864 = vadd.f32 0.0, %v7863
  %7865 = vdwg.mxu0
  %7866 = vmatpush.xpose.msra.mxu0 %v7301
  %7867 = vmatpush.xpose.msra.mxu0 %v7299
  %7868 = vmatpush.xpose.msra.mxu0 %v7297
  %7869 = vmatpush.xpose.msra.mxu0 %v7295
  %7870 = vmatpush.xpose.msra.mxu0 %v7293
  %7871 = vmatpush.xpose.msra.mxu0 %v7291
  %7872 = vmatpush.xpose.msra.mxu0 %v7289
  %7873 = vmatpush.xpose.msra.mxu0 %v7287
  %7874 = vmatpush.xpose.msra.mxu0 %v7285
  %7875 = vmatpush.xpose.msra.mxu0 %v7283
  %7876 = vmatpush.xpose.msra.mxu0 %v7281
  %7877 = vmatpush.xpose.msra.mxu0 %v7279
  %7878 = vmatpush.xpose.msra.mxu0 %v7277
  %7879 = vmatpush.xpose.msra.mxu0 %v7275
  %7880 = vmatpush.xpose.msra.mxu0 %v7273
  %7881 = vmatpush.xpose.msra.mxu0 %v7271
  %7882 = vmatmul.f32.gmra.mxu0 %v7843
  %v7883 = vpop.f32.mrf.mxu0
  %v7884 = vadd.f32 %v7864, %v7883
  %7885 = vdwg.mxu0
  %7886 = vmatpush.xpose.msra.mxu0 %v7332
  %7887 = vmatpush.xpose.msra.mxu0 %v7330
  %7888 = vmatpush.xpose.msra.mxu0 %v7328
  %7889 = vmatpush.xpose.msra.mxu0 %v7326
  %7890 = vmatpush.xpose.msra.mxu0 %v7324
  %7891 = vmatpush.xpose.msra.mxu0 %v7322
  %7892 = vmatpush.xpose.msra.mxu0 %v7320
  %7893 = vmatpush.xpose.msra.mxu0 %v7318
  %7894 = vmatpush.xpose.msra.mxu0 %v7316
  %7895 = vmatpush.xpose.msra.mxu0 %v7314
  %7896 = vmatpush.xpose.msra.mxu0 %v7312
  %7897 = vmatpush.xpose.msra.mxu0 %v7310
  %7898 = vmatpush.xpose.msra.mxu0 %v7308
  %7899 = vmatpush.xpose.msra.mxu0 %v7306
  %7900 = vmatpush.xpose.msra.mxu0 %v7304
  %7901 = vmatpush.xpose.msra.mxu0 %v7302
  %7902 = vmatmul.f32.gmra.mxu0 %v7842
  %v7903 = vpop.f32.mrf.mxu0
  %v7904 = vadd.f32 0.0, %v7903
  %7905 = vdwg.mxu0
  %7906 = vmatpush.xpose.msra.mxu0 %v7333
  %7907 = vmatpush.xpose.msra.mxu0 %v7331
  %7908 = vmatpush.xpose.msra.mxu0 %v7329
  %7909 = vmatpush.xpose.msra.mxu0 %v7327
  %7910 = vmatpush.xpose.msra.mxu0 %v7325
  %7911 = vmatpush.xpose.msra.mxu0 %v7323
  %7912 = vmatpush.xpose.msra.mxu0 %v7321
  %7913 = vmatpush.xpose.msra.mxu0 %v7319
  %7914 = vmatpush.xpose.msra.mxu0 %v7317
  %7915 = vmatpush.xpose.msra.mxu0 %v7315
  %7916 = vmatpush.xpose.msra.mxu0 %v7313
  %7917 = vmatpush.xpose.msra.mxu0 %v7311
  %7918 = vmatpush.xpose.msra.mxu0 %v7309
  %7919 = vmatpush.xpose.msra.mxu0 %v7307
  %7920 = vmatpush.xpose.msra.mxu0 %v7305
  %7921 = vmatpush.xpose.msra.mxu0 %v7303
  %7922 = vmatmul.f32.gmra.mxu0 %v7843
  %v7923 = vpop.f32.mrf.mxu0
  %v7924 = vadd.f32 %v7904, %v7923
  %7925 = vdwg.mxu0
  %v7926 = vperm.slane %v4445, 0
  %v7927 = vperm.slane %v4445, 1
  %7930 = vmatpush.xpose.msra.mxu0 %v7364
  %7931 = vmatpush.xpose.msra.mxu0 %v7362
  %7932 = vmatpush.xpose.msra.mxu0 %v7360
  %7933 = vmatpush.xpose.msra.mxu0 %v7358
  %7934 = vmatpush.xpose.msra.mxu0 %v7356
  %7935 = vmatpush.xpose.msra.mxu0 %v7354
  %7936 = vmatpush.xpose.msra.mxu0 %v7352
  %7937 = vmatpush.xpose.msra.mxu0 %v7350
  %7938 = vmatpush.xpose.msra.mxu0 %v7348
  %7939 = vmatpush.xpose.msra.mxu0 %v7346
  %7940 = vmatpush.xpose.msra.mxu0 %v7344
  %7941 = vmatpush.xpose.msra.mxu0 %v7342
  %7942 = vmatpush.xpose.msra.mxu0 %v7340
  %7943 = vmatpush.xpose.msra.mxu0 %v7338
  %7944 = vmatpush.xpose.msra.mxu0 %v7336
  %7945 = vmatpush.xpose.msra.mxu0 %v7334
  %7946 = vmatmul.f32.gmra.mxu0 %v7926
  %v7947 = vpop.f32.mrf.mxu0
  %v7948 = vadd.f32 0.0, %v7947
  %7949 = vdwg.mxu0
  %7950 = vmatpush.xpose.msra.mxu0 %v7365
  %7951 = vmatpush.xpose.msra.mxu0 %v7363
  %7952 = vmatpush.xpose.msra.mxu0 %v7361
  %7953 = vmatpush.xpose.msra.mxu0 %v7359
  %7954 = vmatpush.xpose.msra.mxu0 %v7357
  %7955 = vmatpush.xpose.msra.mxu0 %v7355
  %7956 = vmatpush.xpose.msra.mxu0 %v7353
  %7957 = vmatpush.xpose.msra.mxu0 %v7351
  %7958 = vmatpush.xpose.msra.mxu0 %v7349
  %7959 = vmatpush.xpose.msra.mxu0 %v7347
  %7960 = vmatpush.xpose.msra.mxu0 %v7345
  %7961 = vmatpush.xpose.msra.mxu0 %v7343
  %7962 = vmatpush.xpose.msra.mxu0 %v7341
  %7963 = vmatpush.xpose.msra.mxu0 %v7339
  %7964 = vmatpush.xpose.msra.mxu0 %v7337
  %7965 = vmatpush.xpose.msra.mxu0 %v7335
  %7966 = vmatmul.f32.gmra.mxu0 %v7927
  %v7967 = vpop.f32.mrf.mxu0
  %v7968 = vadd.f32 %v7948, %v7967
  %7969 = vdwg.mxu0
  %7970 = vmatpush.xpose.msra.mxu0 %v7396
  %7971 = vmatpush.xpose.msra.mxu0 %v7394
  %7972 = vmatpush.xpose.msra.mxu0 %v7392
  %7973 = vmatpush.xpose.msra.mxu0 %v7390
  %7974 = vmatpush.xpose.msra.mxu0 %v7388
  %7975 = vmatpush.xpose.msra.mxu0 %v7386
  %7976 = vmatpush.xpose.msra.mxu0 %v7384
  %7977 = vmatpush.xpose.msra.mxu0 %v7382
  %7978 = vmatpush.xpose.msra.mxu0 %v7380
  %7979 = vmatpush.xpose.msra.mxu0 %v7378
  %7980 = vmatpush.xpose.msra.mxu0 %v7376
  %7981 = vmatpush.xpose.msra.mxu0 %v7374
  %7982 = vmatpush.xpose.msra.mxu0 %v7372
  %7983 = vmatpush.xpose.msra.mxu0 %v7370
  %7984 = vmatpush.xpose.msra.mxu0 %v7368
  %7985 = vmatpush.xpose.msra.mxu0 %v7366
  %7986 = vmatmul.f32.gmra.mxu0 %v7926
  %v7987 = vpop.f32.mrf.mxu0
  %v7988 = vadd.f32 0.0, %v7987
  %7989 = vdwg.mxu0
  %7990 = vmatpush.xpose.msra.mxu0 %v7397
  %7991 = vmatpush.xpose.msra.mxu0 %v7395
  %7992 = vmatpush.xpose.msra.mxu0 %v7393
  %7993 = vmatpush.xpose.msra.mxu0 %v7391
  %7994 = vmatpush.xpose.msra.mxu0 %v7389
  %7995 = vmatpush.xpose.msra.mxu0 %v7387
  %7996 = vmatpush.xpose.msra.mxu0 %v7385
  %7997 = vmatpush.xpose.msra.mxu0 %v7383
  %7998 = vmatpush.xpose.msra.mxu0 %v7381
  %7999 = vmatpush.xpose.msra.mxu0 %v7379
  %8000 = vmatpush.xpose.msra.mxu0 %v7377
  %8001 = vmatpush.xpose.msra.mxu0 %v7375
  %8002 = vmatpush.xpose.msra.mxu0 %v7373
  %8003 = vmatpush.xpose.msra.mxu0 %v7371
  %8004 = vmatpush.xpose.msra.mxu0 %v7369
  %8005 = vmatpush.xpose.msra.mxu0 %v7367
  %8006 = vmatmul.f32.gmra.mxu0 %v7927
  %v8007 = vpop.f32.mrf.mxu0
  %v8008 = vadd.f32 %v7988, %v8007
  %8009 = vdwg.mxu0
  %v8010 = vperm.slane %v4447, 0
  %v8011 = vperm.slane %v4447, 1
  %8014 = vmatpush.xpose.msra.mxu0 %v7428
  %8015 = vmatpush.xpose.msra.mxu0 %v7426
  %8016 = vmatpush.xpose.msra.mxu0 %v7424
  %8017 = vmatpush.xpose.msra.mxu0 %v7422
  %8018 = vmatpush.xpose.msra.mxu0 %v7420
  %8019 = vmatpush.xpose.msra.mxu0 %v7418
  %8020 = vmatpush.xpose.msra.mxu0 %v7416
  %8021 = vmatpush.xpose.msra.mxu0 %v7414
  %8022 = vmatpush.xpose.msra.mxu0 %v7412
  %8023 = vmatpush.xpose.msra.mxu0 %v7410
  %8024 = vmatpush.xpose.msra.mxu0 %v7408
  %8025 = vmatpush.xpose.msra.mxu0 %v7406
  %8026 = vmatpush.xpose.msra.mxu0 %v7404
  %8027 = vmatpush.xpose.msra.mxu0 %v7402
  %8028 = vmatpush.xpose.msra.mxu0 %v7400
  %8029 = vmatpush.xpose.msra.mxu0 %v7398
  %8030 = vmatmul.f32.gmra.mxu0 %v8010
  %v8031 = vpop.f32.mrf.mxu0
  %v8032 = vadd.f32 0.0, %v8031
  %8033 = vdwg.mxu0
  %8034 = vmatpush.xpose.msra.mxu0 %v7429
  %8035 = vmatpush.xpose.msra.mxu0 %v7427
  %8036 = vmatpush.xpose.msra.mxu0 %v7425
  %8037 = vmatpush.xpose.msra.mxu0 %v7423
  %8038 = vmatpush.xpose.msra.mxu0 %v7421
  %8039 = vmatpush.xpose.msra.mxu0 %v7419
  %8040 = vmatpush.xpose.msra.mxu0 %v7417
  %8041 = vmatpush.xpose.msra.mxu0 %v7415
  %8042 = vmatpush.xpose.msra.mxu0 %v7413
  %8043 = vmatpush.xpose.msra.mxu0 %v7411
  %8044 = vmatpush.xpose.msra.mxu0 %v7409
  %8045 = vmatpush.xpose.msra.mxu0 %v7407
  %8046 = vmatpush.xpose.msra.mxu0 %v7405
  %8047 = vmatpush.xpose.msra.mxu0 %v7403
  %8048 = vmatpush.xpose.msra.mxu0 %v7401
  %8049 = vmatpush.xpose.msra.mxu0 %v7399
  %8050 = vmatmul.f32.gmra.mxu0 %v8011
  %v8051 = vpop.f32.mrf.mxu0
  %v8052 = vadd.f32 %v8032, %v8051
  %8053 = vdwg.mxu0
  %8054 = vmatpush.xpose.msra.mxu0 %v7460
  %8055 = vmatpush.xpose.msra.mxu0 %v7458
  %8056 = vmatpush.xpose.msra.mxu0 %v7456
  %8057 = vmatpush.xpose.msra.mxu0 %v7454
  %8058 = vmatpush.xpose.msra.mxu0 %v7452
  %8059 = vmatpush.xpose.msra.mxu0 %v7450
  %8060 = vmatpush.xpose.msra.mxu0 %v7448
  %8061 = vmatpush.xpose.msra.mxu0 %v7446
  %8062 = vmatpush.xpose.msra.mxu0 %v7444
  %8063 = vmatpush.xpose.msra.mxu0 %v7442
  %8064 = vmatpush.xpose.msra.mxu0 %v7440
  %8065 = vmatpush.xpose.msra.mxu0 %v7438
  %8066 = vmatpush.xpose.msra.mxu0 %v7436
  %8067 = vmatpush.xpose.msra.mxu0 %v7434
  %8068 = vmatpush.xpose.msra.mxu0 %v7432
  %8069 = vmatpush.xpose.msra.mxu0 %v7430
  %8070 = vmatmul.f32.gmra.mxu0 %v8010
  %v8071 = vpop.f32.mrf.mxu0
  %v8072 = vadd.f32 0.0, %v8071
  %8073 = vdwg.mxu0
  %8074 = vmatpush.xpose.msra.mxu0 %v7461
  %8075 = vmatpush.xpose.msra.mxu0 %v7459
  %8076 = vmatpush.xpose.msra.mxu0 %v7457
  %8077 = vmatpush.xpose.msra.mxu0 %v7455
  %8078 = vmatpush.xpose.msra.mxu0 %v7453
  %8079 = vmatpush.xpose.msra.mxu0 %v7451
  %8080 = vmatpush.xpose.msra.mxu0 %v7449
  %8081 = vmatpush.xpose.msra.mxu0 %v7447
  %8082 = vmatpush.xpose.msra.mxu0 %v7445
  %8083 = vmatpush.xpose.msra.mxu0 %v7443
  %8084 = vmatpush.xpose.msra.mxu0 %v7441
  %8085 = vmatpush.xpose.msra.mxu0 %v7439
  %8086 = vmatpush.xpose.msra.mxu0 %v7437
  %8087 = vmatpush.xpose.msra.mxu0 %v7435
  %8088 = vmatpush.xpose.msra.mxu0 %v7433
  %8089 = vmatpush.xpose.msra.mxu0 %v7431
  %8090 = vmatmul.f32.gmra.mxu0 %v8011
  %v8091 = vpop.f32.mrf.mxu0
  %v8092 = vadd.f32 %v8072, %v8091
  %8093 = vdwg.mxu0
  %v8094 = vperm.slane %v4449, 0
  %v8095 = vperm.slane %v4449, 1
  %8098 = vmatpush.xpose.msra.mxu0 %v7492
  %8099 = vmatpush.xpose.msra.mxu0 %v7490
  %8100 = vmatpush.xpose.msra.mxu0 %v7488
  %8101 = vmatpush.xpose.msra.mxu0 %v7486
  %8102 = vmatpush.xpose.msra.mxu0 %v7484
  %8103 = vmatpush.xpose.msra.mxu0 %v7482
  %8104 = vmatpush.xpose.msra.mxu0 %v7480
  %8105 = vmatpush.xpose.msra.mxu0 %v7478
  %8106 = vmatpush.xpose.msra.mxu0 %v7476
  %8107 = vmatpush.xpose.msra.mxu0 %v7474
  %8108 = vmatpush.xpose.msra.mxu0 %v7472
  %8109 = vmatpush.xpose.msra.mxu0 %v7470
  %8110 = vmatpush.xpose.msra.mxu0 %v7468
  %8111 = vmatpush.xpose.msra.mxu0 %v7466
  %8112 = vmatpush.xpose.msra.mxu0 %v7464
  %8113 = vmatpush.xpose.msra.mxu0 %v7462
  %8114 = vmatmul.f32.gmra.mxu0 %v8094
  %v8115 = vpop.f32.mrf.mxu0
  %v8116 = vadd.f32 0.0, %v8115
  %8117 = vdwg.mxu0
  %8118 = vmatpush.xpose.msra.mxu0 %v7493
  %8119 = vmatpush.xpose.msra.mxu0 %v7491
  %8120 = vmatpush.xpose.msra.mxu0 %v7489
  %8121 = vmatpush.xpose.msra.mxu0 %v7487
  %8122 = vmatpush.xpose.msra.mxu0 %v7485
  %8123 = vmatpush.xpose.msra.mxu0 %v7483
  %8124 = vmatpush.xpose.msra.mxu0 %v7481
  %8125 = vmatpush.xpose.msra.mxu0 %v7479
  %8126 = vmatpush.xpose.msra.mxu0 %v7477
  %8127 = vmatpush.xpose.msra.mxu0 %v7475
  %8128 = vmatpush.xpose.msra.mxu0 %v7473
  %8129 = vmatpush.xpose.msra.mxu0 %v7471
  %8130 = vmatpush.xpose.msra.mxu0 %v7469
  %8131 = vmatpush.xpose.msra.mxu0 %v7467
  %8132 = vmatpush.xpose.msra.mxu0 %v7465
  %8133 = vmatpush.xpose.msra.mxu0 %v7463
  %8134 = vmatmul.f32.gmra.mxu0 %v8095
  %v8135 = vpop.f32.mrf.mxu0
  %v8136 = vadd.f32 %v8116, %v8135
  %8137 = vdwg.mxu0
  %8138 = vmatpush.xpose.msra.mxu0 %v7524
  %8139 = vmatpush.xpose.msra.mxu0 %v7522
  %8140 = vmatpush.xpose.msra.mxu0 %v7520
  %8141 = vmatpush.xpose.msra.mxu0 %v7518
  %8142 = vmatpush.xpose.msra.mxu0 %v7516
  %8143 = vmatpush.xpose.msra.mxu0 %v7514
  %8144 = vmatpush.xpose.msra.mxu0 %v7512
  %8145 = vmatpush.xpose.msra.mxu0 %v7510
  %8146 = vmatpush.xpose.msra.mxu0 %v7508
  %8147 = vmatpush.xpose.msra.mxu0 %v7506
  %8148 = vmatpush.xpose.msra.mxu0 %v7504
  %8149 = vmatpush.xpose.msra.mxu0 %v7502
  %8150 = vmatpush.xpose.msra.mxu0 %v7500
  %8151 = vmatpush.xpose.msra.mxu0 %v7498
  %8152 = vmatpush.xpose.msra.mxu0 %v7496
  %8153 = vmatpush.xpose.msra.mxu0 %v7494
  %8154 = vmatmul.f32.gmra.mxu0 %v8094
  %v8155 = vpop.f32.mrf.mxu0
  %v8156 = vadd.f32 0.0, %v8155
  %8157 = vdwg.mxu0
  %8158 = vmatpush.xpose.msra.mxu0 %v7525
  %8159 = vmatpush.xpose.msra.mxu0 %v7523
  %8160 = vmatpush.xpose.msra.mxu0 %v7521
  %8161 = vmatpush.xpose.msra.mxu0 %v7519
  %8162 = vmatpush.xpose.msra.mxu0 %v7517
  %8163 = vmatpush.xpose.msra.mxu0 %v7515
  %8164 = vmatpush.xpose.msra.mxu0 %v7513
  %8165 = vmatpush.xpose.msra.mxu0 %v7511
  %8166 = vmatpush.xpose.msra.mxu0 %v7509
  %8167 = vmatpush.xpose.msra.mxu0 %v7507
  %8168 = vmatpush.xpose.msra.mxu0 %v7505
  %8169 = vmatpush.xpose.msra.mxu0 %v7503
  %8170 = vmatpush.xpose.msra.mxu0 %v7501
  %8171 = vmatpush.xpose.msra.mxu0 %v7499
  %8172 = vmatpush.xpose.msra.mxu0 %v7497
  %8173 = vmatpush.xpose.msra.mxu0 %v7495
  %8174 = vmatmul.f32.gmra.mxu0 %v8095
  %v8175 = vpop.f32.mrf.mxu0
  %v8176 = vadd.f32 %v8156, %v8175
  %8177 = vdwg.mxu0
  %v8178 = vperm.slane %v4451, 0
  %v8179 = vperm.slane %v4451, 1
  %8182 = vmatpush.xpose.msra.mxu0 %v7556
  %8183 = vmatpush.xpose.msra.mxu0 %v7554
  %8184 = vmatpush.xpose.msra.mxu0 %v7552
  %8185 = vmatpush.xpose.msra.mxu0 %v7550
  %8186 = vmatpush.xpose.msra.mxu0 %v7548
  %8187 = vmatpush.xpose.msra.mxu0 %v7546
  %8188 = vmatpush.xpose.msra.mxu0 %v7544
  %8189 = vmatpush.xpose.msra.mxu0 %v7542
  %8190 = vmatpush.xpose.msra.mxu0 %v7540
  %8191 = vmatpush.xpose.msra.mxu0 %v7538
  %8192 = vmatpush.xpose.msra.mxu0 %v7536
  %8193 = vmatpush.xpose.msra.mxu0 %v7534
  %8194 = vmatpush.xpose.msra.mxu0 %v7532
  %8195 = vmatpush.xpose.msra.mxu0 %v7530
  %8196 = vmatpush.xpose.msra.mxu0 %v7528
  %8197 = vmatpush.xpose.msra.mxu0 %v7526
  %8198 = vmatmul.f32.gmra.mxu0 %v8178
  %v8199 = vpop.f32.mrf.mxu0
  %v8200 = vadd.f32 0.0, %v8199
  %8201 = vdwg.mxu0
  %8202 = vmatpush.xpose.msra.mxu0 %v7557
  %8203 = vmatpush.xpose.msra.mxu0 %v7555
  %8204 = vmatpush.xpose.msra.mxu0 %v7553
  %8205 = vmatpush.xpose.msra.mxu0 %v7551
  %8206 = vmatpush.xpose.msra.mxu0 %v7549
  %8207 = vmatpush.xpose.msra.mxu0 %v7547
  %8208 = vmatpush.xpose.msra.mxu0 %v7545
  %8209 = vmatpush.xpose.msra.mxu0 %v7543
  %8210 = vmatpush.xpose.msra.mxu0 %v7541
  %8211 = vmatpush.xpose.msra.mxu0 %v7539
  %8212 = vmatpush.xpose.msra.mxu0 %v7537
  %8213 = vmatpush.xpose.msra.mxu0 %v7535
  %8214 = vmatpush.xpose.msra.mxu0 %v7533
  %8215 = vmatpush.xpose.msra.mxu0 %v7531
  %8216 = vmatpush.xpose.msra.mxu0 %v7529
  %8217 = vmatpush.xpose.msra.mxu0 %v7527
  %8218 = vmatmul.f32.gmra.mxu0 %v8179
  %v8219 = vpop.f32.mrf.mxu0
  %v8220 = vadd.f32 %v8200, %v8219
  %8221 = vdwg.mxu0
  %8222 = vmatpush.xpose.msra.mxu0 %v7588
  %8223 = vmatpush.xpose.msra.mxu0 %v7586
  %8224 = vmatpush.xpose.msra.mxu0 %v7584
  %8225 = vmatpush.xpose.msra.mxu0 %v7582
  %8226 = vmatpush.xpose.msra.mxu0 %v7580
  %8227 = vmatpush.xpose.msra.mxu0 %v7578
  %8228 = vmatpush.xpose.msra.mxu0 %v7576
  %8229 = vmatpush.xpose.msra.mxu0 %v7574
  %8230 = vmatpush.xpose.msra.mxu0 %v7572
  %8231 = vmatpush.xpose.msra.mxu0 %v7570
  %8232 = vmatpush.xpose.msra.mxu0 %v7568
  %8233 = vmatpush.xpose.msra.mxu0 %v7566
  %8234 = vmatpush.xpose.msra.mxu0 %v7564
  %8235 = vmatpush.xpose.msra.mxu0 %v7562
  %8236 = vmatpush.xpose.msra.mxu0 %v7560
  %8237 = vmatpush.xpose.msra.mxu0 %v7558
  %8238 = vmatmul.f32.gmra.mxu0 %v8178
  %v8239 = vpop.f32.mrf.mxu0
  %v8240 = vadd.f32 0.0, %v8239
  %8241 = vdwg.mxu0
  %8242 = vmatpush.xpose.msra.mxu0 %v7589
  %8243 = vmatpush.xpose.msra.mxu0 %v7587
  %8244 = vmatpush.xpose.msra.mxu0 %v7585
  %8245 = vmatpush.xpose.msra.mxu0 %v7583
  %8246 = vmatpush.xpose.msra.mxu0 %v7581
  %8247 = vmatpush.xpose.msra.mxu0 %v7579
  %8248 = vmatpush.xpose.msra.mxu0 %v7577
  %8249 = vmatpush.xpose.msra.mxu0 %v7575
  %8250 = vmatpush.xpose.msra.mxu0 %v7573
  %8251 = vmatpush.xpose.msra.mxu0 %v7571
  %8252 = vmatpush.xpose.msra.mxu0 %v7569
  %8253 = vmatpush.xpose.msra.mxu0 %v7567
  %8254 = vmatpush.xpose.msra.mxu0 %v7565
  %8255 = vmatpush.xpose.msra.mxu0 %v7563
  %8256 = vmatpush.xpose.msra.mxu0 %v7561
  %8257 = vmatpush.xpose.msra.mxu0 %v7559
  %8258 = vmatmul.f32.gmra.mxu0 %v8179
  %v8259 = vpop.f32.mrf.mxu0
  %v8260 = vadd.f32 %v8240, %v8259
  %8261 = vdwg.mxu0
  %vm8262 = vcmp.lt.f32.partialorder %v4343, 0.5
  %v8263 = vsel %vm8262, 1, 0
  %vm8264 = vcmp.eq.s32.totalorder %v8263, 1
  %v8281 = vrot.slane %v7716, 7
  %v8282 = vsel %vm448, %v8281, %v7632
  %v8283 = vrot.slane %v7800, 6
  %v8284 = vsel %vm451, %v8283, %v8282
  %v8285 = vrot.slane %v7884, 5
  %v8286 = vsel %vm454, %v8285, %v8284
  %v8287 = vrot.slane %v7968, 4
  %v8288 = vsel %vm457, %v8287, %v8286
  %v8289 = vrot.slane %v8052, 3
  %v8290 = vsel %vm460, %v8289, %v8288
  %v8291 = vrot.slane %v8136, 2
  %v8292 = vsel %vm463, %v8291, %v8290
  %v8293 = vrot.slane %v8220, 1
  %v8294 = vsel %vm4311, %v8293, %v8292
  %v8295 = vrot.slane %v7756, 7
  %v8296 = vsel %vm448, %v8295, %v7672
  %v8297 = vrot.slane %v7840, 6
  %v8298 = vsel %vm451, %v8297, %v8296
  %v8299 = vrot.slane %v7924, 5
  %v8300 = vsel %vm454, %v8299, %v8298
  %v8301 = vrot.slane %v8008, 4
  %v8302 = vsel %vm457, %v8301, %v8300
  %v8303 = vrot.slane %v8092, 3
  %v8304 = vsel %vm460, %v8303, %v8302
  %v8305 = vrot.slane %v8176, 2
  %v8306 = vsel %vm463, %v8305, %v8304
  %v8307 = vrot.slane %v8260, 1
  %v8308 = vsel %vm4311, %v8307, %v8306
  %v8311 = vsel %vm8264, -5.0, %v8294
  %v8312 = vsel %vm8264, -5.0, %v8308
  %8314 = vset.pattern.permute.xlu0 0
  %8315 = vperm.xlu0 %8314, %v24
  %v8316 = vpop.permute.xlu0 %8315
  %v8318 = vmul.f32 %v8316, %v4333
  %v8319 = vmul.f32 %v8316, %v4334
  %v8320 = vmul.f32 %v4329, %v20
  %v8321 = vmul.f32 %v4330, %v21
  %v8322 = vmax.f32 %v8320, 0.0
  %v8323 = vmax.f32 %v8321, 0.0
  %v8324 = vmul.f32 %v8320, %v22
  %v8325 = vmul.f32 %v8321, %v23
  %v8326 = vsub.f32 %v8322, %v8324
  %v8327 = vsub.f32 %v8323, %v8325
  %v8328 = vand.u32 2147483647, %v8320
  %v8329 = vand.u32 2147483647, %v8321
  %v8330 = vsub.f32 0.0, %v8328
  %v8331 = vsub.f32 0.0, %v8329
  %v8332 = vmul.f32 %v8330, 1.442695
  %v8333 = vpow.pop %v8332
  %v8334 = vmul.f32 %v8331, 1.442695
  %v8335 = vpow.pop %v8334
  %v8336 = vadd.f32 %v8333, 1.0
  %v8337 = vadd.f32 %v8335, 1.0
  %v8338 = vlog2.pop %v8336
  %v8339 = vmul.f32 %v8338, 0.6931472
  %v8340 = vlog2.pop %v8337
  %v8341 = vmul.f32 %v8340, 0.6931472
  %v8342 = vadd.f32 %v8326, %v8339
  %v8343 = vadd.f32 %v8327, %v8341
  %v8344 = vmax.f32 %v4329, 0.0
  %v8345 = vmax.f32 %v4330, 0.0
  %v8346 = vsub.f32 %v8344, %v4329
  %v8347 = vsub.f32 %v8345, %v4330
  %v8348 = vand.u32 2147483647, %v4329
  %v8349 = vand.u32 2147483647, %v4330
  %v8350 = vsub.f32 0.0, %v8348
  %v8351 = vsub.f32 0.0, %v8349
  %v8352 = vmul.f32 %v8350, 1.442695
  %v8353 = vpow.pop %v8352
  %v8354 = vmul.f32 %v8351, 1.442695
  %v8355 = vpow.pop %v8354
  %v8356 = vadd.f32 %v8353, 1.0
  %v8357 = vadd.f32 %v8355, 1.0
  %v8358 = vlog2.pop %v8356
  %v8359 = vmul.f32 %v8358, 0.6931472
  %v8360 = vlog2.pop %v8357
  %v8361 = vmul.f32 %v8360, 0.6931472
  %v8362 = vadd.f32 %v8346, %v8359
  %v8363 = vadd.f32 %v8347, %v8361
  %v8364 = vmul.f32 %v4329, %v8311
  %v8365 = vmul.f32 %v4330, %v8312
  %v8366 = vmax.f32 %v8364, 0.0
  %v8367 = vmax.f32 %v8365, 0.0
  %v8368 = vmul.f32 %v8364, 0.0
  %v8369 = vmul.f32 %v8365, 0.0
  %v8370 = vsub.f32 %v8366, %v8368
  %v8371 = vsub.f32 %v8367, %v8369
  %v8372 = vand.u32 2147483647, %v8364
  %v8373 = vand.u32 2147483647, %v8365
  %v8374 = vsub.f32 0.0, %v8372
  %v8375 = vsub.f32 0.0, %v8373
  %v8376 = vmul.f32 %v8374, 1.442695
  %v8377 = vpow.pop %v8376
  %v8378 = vmul.f32 %v8375, 1.442695
  %v8379 = vpow.pop %v8378
  %v8380 = vadd.f32 %v8377, 1.0
  %v8381 = vadd.f32 %v8379, 1.0
  %v8382 = vlog2.pop %v8380
  %v8383 = vmul.f32 %v8382, 0.6931472
  %v8384 = vlog2.pop %v8381
  %v8385 = vmul.f32 %v8384, 0.6931472
  %v8386 = vadd.f32 %v8370, %v8383
  %v8387 = vadd.f32 %v8371, %v8385
  %v8388 = vmul.f32 %v8342, %v8318
  %v8389 = vmul.f32 %v8343, %v8319
  %v8390 = vrot.slane %v8388, 4
  %v8391 = vadd.f32 %v8388, %v8390
  %v8392 = vrot.slane %v8391, 2
  %v8393 = vadd.f32 %v8391, %v8392
  %v8394 = vrot.slane %v8393, 1
  %v8395 = vadd.f32 %v8393, %v8394
  %v8396 = vrot.slane %v8389, 4
  %v8397 = vadd.f32 %v8389, %v8396
  %v8398 = vrot.slane %v8397, 2
  %v8399 = vadd.f32 %v8397, %v8398
  %v8400 = vrot.slane %v8399, 1
  %v8401 = vadd.f32 %v8399, %v8400
  %v8404 = vrot.slane %v8401, 7
  %v8405 = vsel %vm446, %v8395, %v8404
  %v8407 = vlaneseq
  %vm8408 = vcmp.ge.s32.totalorder %v8407, 0
  %vm8409 = vcmp.lt.s32.totalorder %v8407, 256
  %vm8410 = vmand %vm8408, %vm8409
  %8411 = vst.msk [vmem:[%s5] ss:$4 sm:$0x3] %vm8410, %v8405
  %v8412 = vmul.f32 %v8362, %v8318
  %v8413 = vmul.f32 %v8363, %v8319
  %v8414 = vrot.slane %v8412, 4
  %v8415 = vadd.f32 %v8412, %v8414
  %v8416 = vrot.slane %v8415, 2
  %v8417 = vadd.f32 %v8415, %v8416
  %v8418 = vrot.slane %v8417, 1
  %v8419 = vadd.f32 %v8417, %v8418
  %v8420 = vrot.slane %v8413, 4
  %v8421 = vadd.f32 %v8413, %v8420
  %v8422 = vrot.slane %v8421, 2
  %v8423 = vadd.f32 %v8421, %v8422
  %v8424 = vrot.slane %v8423, 1
  %v8425 = vadd.f32 %v8423, %v8424
  %v8428 = vrot.slane %v8425, 7
  %v8429 = vsel %vm446, %v8419, %v8428
  %s8431 = scalar_lea.vmem %s5, 1
  %8432 = vst.msk [vmem:[%s8431] ss:$4 sm:$0x3] %vm8410, %v8429
  %v8433 = vmul.f32 %v8386, %v8318
  %v8434 = vmul.f32 %v8387, %v8319
  %v8435 = vrot.slane %v8433, 4
  %v8436 = vadd.f32 %v8433, %v8435
  %v8437 = vrot.slane %v8436, 2
  %v8438 = vadd.f32 %v8436, %v8437
  %v8439 = vrot.slane %v8438, 1
  %v8440 = vadd.f32 %v8438, %v8439
  %v8441 = vrot.slane %v8434, 4
  %v8442 = vadd.f32 %v8434, %v8441
  %v8443 = vrot.slane %v8442, 2
  %v8444 = vadd.f32 %v8442, %v8443
  %v8445 = vrot.slane %v8444, 1
  %v8446 = vadd.f32 %v8444, %v8445
  %v8449 = vrot.slane %v8446, 7
  %v8450 = vsel %vm446, %v8440, %v8449
  %s8452 = scalar_lea.vmem %s5, 2
  %8453 = vst.msk [vmem:[%s8452] ss:$4 sm:$0x3] %vm8410, %v8450
  // Predicated region
  $region22: #{sim_loss.1} parent=0 // pred_check
    _
  $region23: #{sim_loss.1} parent=0 // pred_check_branch
    %8455 = sbr.rel (0) target = $region25
  $region24: #{sim_loss.1} parent=0 // pred_region
    _
  $region25: #{sim_loss.1} parent=0 // pred_fallthru
    _
  // Predicated region
  $region26: #{sim_loss.1} parent=0 // pred_check
    _
  $region27: #{sim_loss.1} parent=0 // pred_check_branch
    %8457 = sbr.rel (0) target = $region29
  $region28: #{sim_loss.1} parent=0 // pred_region
    _
  $region29: #{sim_loss.1} parent=0 // pred_fallthru
    _

</llo_original>
